<compile_context>
chip_gen: v7x
topology: tpu7x:2x2x1
jax: 0.10.0
libtpu: 0.0.40
codegen_flags: <defaults>
</compile_context>

<pallas_src>
import functools

import jax
import jax.numpy as jnp
from jax import lax
from jax.experimental import pallas as pl
from jax.experimental.pallas import tpu as pltpu

LANE = 128


# ------------------------------- small helpers --------------------------------

def _round_up(x, m):
    return (x + m - 1) // m * m


def _num_tensorcores():
    """2 TensorCores per device on v4/v5p/v7x, 1 on v5e/v6e (tiling hint only)."""
    try:
        kind = str(getattr(jax.devices()[0], "device_kind", "")).lower()
    except Exception:
        return 1
    if "v4" in kind or "v5p" in kind or "v7" in kind or "tpu7" in kind:
        return 2
    return 1


_NUM_TC = _num_tensorcores()


def _largest_div(m, cap):
    for t in (1024, 512, 256, 128, 64, 32, 16, 8):
        if t <= cap and m % t == 0:
            return t
    return m


def _choose_tiles(mp, n):
    """Generation-aware tiling.
    1 TC (v5e/v6e): one big M tile (grid is a sequential loop; extra steps are pure overhead).
    2 TC (v7x):     >=2 parallel grid steps: split M when M allows, else split N (TN=256)."""
    if _NUM_TC <= 1:
        tm = mp if mp <= 512 else _largest_div(mp, 512)
        return tm, n
    if mp >= 16:
        return _largest_div(mp, max(8, mp // 2)), n
    if n >= 512 and n % 256 == 0:
        return mp, 256
    return mp, n


def _vmem_limit(block_bytes):
    """Per-call VMEM limit: block bytes x3 (double-buffer + slack) + margin, clamped."""
    need = 3 * int(block_bytes) + (4 << 20)
    return int(min(max(need, 16 << 20), 48 << 20))


def _cparams(sem, block_bytes):
    return pltpu.CompilerParams(dimension_semantics=sem,
                                vmem_limit_bytes=_vmem_limit(block_bytes))


def _to_bf16(x):
    return x if x.dtype == jnp.bfloat16 else x.astype(jnp.bfloat16)


# ----------------------------- Pallas kernels --------------------------------

def _mm_bias_kernel(a_ref, b_ref, shift_ref, o_ref, *, relu):
    """out = relu?( A @ B + shift ); BN scale is pre-folded into B at init."""
    acc = jnp.dot(a_ref[...], b_ref[...], preferred_element_type=jnp.float32)
    acc = acc + shift_ref[...]
    if relu:
        acc = jnp.maximum(acc, 0.0)
    o_ref[...] = acc.astype(o_ref.dtype)


def _bottleneck_tail_kernel(a1_ref, b1_ref, a2_ref, b2_ref, shift_ref, o_ref):
    """Fused Bottleneck tail: relu( out2 @ W3 + x_s @ W_sc + (b3 + b_sc) )."""
    acc = jnp.dot(a1_ref[...], b1_ref[...], preferred_element_type=jnp.float32)
    acc = acc + jnp.dot(a2_ref[...], b2_ref[...], preferred_element_type=jnp.float32)
    acc = acc + shift_ref[...]
    o_ref[...] = jnp.maximum(acc, 0.0).astype(o_ref.dtype)


def _pool_w_kernel(ev_ref, od_ref, o_ref, *, ow):
    """W-direction of the 3x3/s2 maxpool: out[..., j, :] = max(ev[j], od[j], ev[j+1]).
    Only static contiguous ref slices (no strided in-kernel access)."""
    m = jnp.maximum(ev_ref[:, :, :ow, :], od_ref[:, :, :ow, :])
    o_ref[...] = jnp.maximum(m, ev_ref[:, :, 1:ow + 1, :])


def _cam_kernel(x_ref, gamma_ref, o32_ref, o16_ref):
    """CAM_Module, channels-last. x block (1, HW, C) bf16, C lane-dense.
    Emits an f32 copy (returned intermediate) and a bf16 copy (backbone2 input)."""
    x = x_ref[0]                                                      # (HW, C) bf16
    # energy[c, c'] = sum_n x[n, c] * x[n, c']  (contract dim 0 of both; no explicit x.T)
    energy = lax.dot_general(x, x, (((0,), (0,)), ((), ())),
                             preferred_element_type=jnp.float32)      # (C, C) f32
    e_new = jnp.max(energy, axis=-1, keepdims=True) - energy
    m = jnp.max(e_new, axis=-1, keepdims=True)
    p = jnp.exp(e_new - m)
    attn = p * pl.reciprocal(jnp.sum(p, axis=-1, keepdims=True), approx=True)
    # out[n, c] = sum_{c'} attn[c, c'] * x[n, c']   (A @ B^T form, bf16 operands)
    out = lax.dot_general(x, attn.astype(jnp.bfloat16), (((1,), (1,)), ((), ())),
                          preferred_element_type=jnp.float32)         # (HW, C) f32
    y = gamma_ref[0, 0] * out + x.astype(jnp.float32)
    o32_ref[0] = y
    o16_ref[0] = y.astype(jnp.bfloat16)


# ------------------------------ Pallas wrappers -------------------------------

def matmul_bn_act(a, w, shift, *, relu):
    """(M,K)@(K,Np) + shift (+ReLU). Weights are pre-folded/padded/bf16 from init.
    Output is bf16 and keeps the lane-padded N (carried through downstream)."""
    a = _to_bf16(a)
    M, K = a.shape
    Np = w.shape[1]
    Mp = _round_up(M, 8)
    if Mp != M:
        a = jnp.pad(a, ((0, Mp - M), (0, 0)))
    TM, TN = _choose_tiles(Mp, Np)
    block_bytes = (TM * K + K * TN + TM * TN) * 2 + TN * 4
    out = pl.pallas_call(
        functools.partial(_mm_bias_kernel, relu=relu),
        grid=(Mp // TM, Np // TN),
        in_specs=[pl.BlockSpec((TM, K), lambda i, j: (i, 0)),
                  pl.BlockSpec((K, TN), lambda i, j: (0, j)),
                  pl.BlockSpec((1, TN), lambda i, j: (0, j))],
        out_specs=pl.BlockSpec((TM, TN), lambda i, j: (i, j)),
        out_shape=jax.ShapeDtypeStruct((Mp, Np), jnp.bfloat16),
        compiler_params=_cparams(("parallel", "parallel"), block_bytes),
        cost_estimate=pl.CostEstimate(
            flops=2 * Mp * K * Np, transcendentals=0,
            bytes_accessed=(Mp * K + K * Np + Mp * Np) * 2 + Np * 4),
    )(a, w, shift)
    return out[:M] if Mp != M else out


def fused_bottleneck_tail(a1, w3, a2, wd, shift):
    """relu(a1 @ w3 + a2 @ wd + shift): conv3+bn3 fused with the projection shortcut,
    residual add and final ReLU; bf16 output."""
    a1 = _to_bf16(a1)
    a2 = _to_bf16(a2)
    M, K1 = a1.shape
    K2 = a2.shape[1]
    N = w3.shape[1]
    Mp = _round_up(M, 8)
    if Mp != M:
        a1 = jnp.pad(a1, ((0, Mp - M), (0, 0)))
        a2 = jnp.pad(a2, ((0, Mp - M), (0, 0)))
    TM, TN = _choose_tiles(Mp, N)
    block_bytes = (TM * K1 + K1 * TN + TM * K2 + K2 * TN + TM * TN) * 2 + TN * 4
    out = pl.pallas_call(
        _bottleneck_tail_kernel,
        grid=(Mp // TM, N // TN),
        in_specs=[pl.BlockSpec((TM, K1), lambda i, j: (i, 0)),
                  pl.BlockSpec((K1, TN), lambda i, j: (0, j)),
                  pl.BlockSpec((TM, K2), lambda i, j: (i, 0)),
                  pl.BlockSpec((K2, TN), lambda i, j: (0, j)),
                  pl.BlockSpec((1, TN), lambda i, j: (0, j))],
        out_specs=pl.BlockSpec((TM, TN), lambda i, j: (i, j)),
        out_shape=jax.ShapeDtypeStruct((Mp, N), jnp.bfloat16),
        compiler_params=_cparams(("parallel", "parallel"), block_bytes),
        cost_estimate=pl.CostEstimate(
            flops=2 * Mp * (K1 + K2) * N, transcendentals=0,
            bytes_accessed=(Mp * (K1 + K2) + (K1 + K2) * N + Mp * N) * 2 + N * 4),
    )(a1, w3, a2, wd, shift)
    return out[:M] if Mp != M else out


def _im2col(x, KH, KW, stride, pad):
    """NHWC -> (B*OH*OW, KH*KW*Cin); tap order matches w.reshape(KH*KW*Cin, Cout)."""
    # TODO(synk): replace with in-kernel per-tap accumulation for real resolutions.
    B, H, W, Cin = x.shape
    OH = (H + 2 * pad - KH) // stride + 1
    OW = (W + 2 * pad - KW) // stride + 1
    if KH == 1 and KW == 1 and pad == 0:               # 1x1 conv: pure reshape / subsample
        xs = x[:, ::stride, ::stride, :]
        return xs.reshape(B * OH * OW, Cin), OH, OW
    xp = jnp.pad(x, ((0, 0), (pad, pad), (pad, pad), (0, 0)))
    cols = []
    for i in range(KH):
        for j in range(KW):
            cols.append(xp[:, i:i + stride * (OH - 1) + 1:stride,
                           j:j + stride * (OW - 1) + 1:stride, :])
    patches = jnp.concatenate(cols, axis=-1)
    return patches.reshape(B * OH * OW, KH * KW * Cin), OH, OW


def conv_bn(x, w_mat, shift, *, kh, kw, stride, pad, relu):
    """NHWC conv + folded BN (+ ReLU) via im2col + Pallas matmul. bf16 in/out."""
    B = x.shape[0]
    a, OH, OW = _im2col(_to_bf16(x), kh, kw, stride, pad)
    out = matmul_bn_act(a, w_mat, shift, relu=relu)
    return out.reshape(B, OH, OW, w_mat.shape[1])


def maxpool_3x3_s2_p1(x):
    """MaxPool2d(kernel=3, stride=2, padding=1) on NHWC (bf16).
    XLA does one fused pass for the H-direction max + stride-2 row subsample and the
    even/odd column split; the Pallas kernel finishes the W-direction with contiguous
    slices + max (no 9 materialized HBM views, no in-kernel strided loads)."""
    B, H, W, C = x.shape
    OH = (H + 2 - 3) // 2 + 1
    OW = (W + 2 - 3) // 2 + 1
    xp = jnp.pad(x, ((0, 0), (1, 1), (1, 1), (0, 0)), constant_values=-jnp.inf)
    # H-direction max over the 3 row taps, already subsampled to the OH output rows.
    hmax = jnp.maximum(jnp.maximum(xp[:, 0:2 * OH - 1:2], xp[:, 1:2 * OH:2]),
                       xp[:, 2:2 * OH + 1:2])                     # (B, OH, W+2, C)
    ev = hmax[:, :, 0::2, :]                                      # (B, OH, OW+1, C)
    od = hmax[:, :, 1::2, :]                                      # (B, OH, OW+1, C)
    block_bytes = (2 * OH * (OW + 1) * C + OH * OW * C) * 2
    out = pl.pallas_call(
        functools.partial(_pool_w_kernel, ow=OW),
        grid=(B,),
        in_specs=[pl.BlockSpec((1, OH, OW + 1, C), lambda b: (b, 0, 0, 0)),
                  pl.BlockSpec((1, OH, OW + 1, C), lambda b: (b, 0, 0, 0))],
        out_specs=pl.BlockSpec((1, OH, OW, C), lambda b: (b, 0, 0, 0)),
        out_shape=jax.ShapeDtypeStruct((B, OH, OW, C), jnp.bfloat16),
        compiler_params=_cparams(("parallel",), block_bytes),
    )(ev, od)
    return out


def cam_module_nhwc(x, gamma):
    """ShallowCAM / CAM_Module on NHWC input. Returns (f32 copy, bf16 copy)."""
    B, H, W, C = x.shape
    HW = H * W
    xf = _to_bf16(x).reshape(B, HW, C)
    gamma2 = jnp.reshape(gamma, (1, 1)).astype(jnp.float32)
    block_bytes = HW * C * (2 + 4 + 2) + C * C * 4
    o32, o16 = pl.pallas_call(
        _cam_kernel,
        grid=(B,),
        in_specs=[pl.BlockSpec((1, HW, C), lambda b: (b, 0, 0)),
                  pl.BlockSpec(memory_space=pltpu.MemorySpace.SMEM)],
        out_specs=(pl.BlockSpec((1, HW, C), lambda b: (b, 0, 0)),
                   pl.BlockSpec((1, HW, C), lambda b: (b, 0, 0))),
        out_shape=(jax.ShapeDtypeStruct((B, HW, C), jnp.float32),
                   jax.ShapeDtypeStruct((B, HW, C), jnp.bfloat16)),
        compiler_params=_cparams(("parallel",), block_bytes),
    )(xf, gamma2)
    return o32.reshape(B, H, W, C), o16.reshape(B, H, W, C)


# ------------------------------ Model composition -----------------------------

def bottleneck(x, p, stride):
    """torchvision Bottleneck (expansion 4, stride on the 3x3 conv, projection shortcut).
    conv3+bn3 + shortcut conv+bn + residual + final ReLU are fused in one kernel."""
    out = conv_bn(x, p['w1'], p['b1'], kh=1, kw=1, stride=1, pad=0, relu=True)
    out = conv_bn(out, p['w2'], p['b2'], kh=3, kw=3, stride=stride, pad=1, relu=True)
    B, OH, OW, cp = out.shape
    M = B * OH * OW
    a1 = out.reshape(M, cp)                                   # conv3 input
    a2 = x[:, ::stride, ::stride, :].reshape(M, -1)           # 1x1/stride shortcut input
    y = fused_bottleneck_tail(a1, p['w3'], a2, p['wd'], p['b3d'])
    return y.reshape(B, OH, OW, p['w3'].shape[1])


def resnet_common_branch(params, x_nchw):
    """Returns (x, intermediate) like ResNetCommonBranch.forward (both NCHW, f32)."""
    x = jnp.transpose(x_nchw, (0, 2, 3, 1)).astype(jnp.bfloat16)   # NCHW -> NHWC, bf16
    # ---- backbone1: conv1/bn1/relu/maxpool/layer1 (stem channels carried lane-padded) ----
    st = params['stem']
    x = conv_bn(x, st['w'], st['b'], kh=7, kw=7, stride=2, pad=3, relu=True)
    x = maxpool_3x3_s2_p1(x)
    for bp in params['layer1']:
        x = bottleneck(x, bp, stride=1)
    # ---- shallow_cam (channels-last; f32 copy is the returned intermediate) ----
    inter_f32, x = cam_module_nhwc(x, params['cam_gamma'])
    intermediate_nchw = jnp.transpose(inter_f32, (0, 3, 1, 2))
    # ---- backbone2: layer2, layer3 ----
    for bi, bp in enumerate(params['layer2']):
        x = bottleneck(x, bp, stride=2 if bi == 0 else 1)
    for bi, bp in enumerate(params['layer3']):
        x = bottleneck(x, bp, stride=2 if bi == 0 else 1)
    out_nchw = jnp.transpose(x, (0, 3, 1, 2)).astype(jnp.float32)
    return out_nchw, intermediate_nchw


# ------------------------------ Parameter init --------------------------------

def _conv_w(key, kh, kw, cin, cout):
    std = (2.0 / (kh * kw * cin)) ** 0.5
    return (std * jax.random.normal(key, (kh, kw, cin, cout))).astype(jnp.float32)


def _bn_folded(key, c, eps=1e-5):
    k1, k2, k3, k4 = jax.random.split(key, 4)
    gamma = jax.random.uniform(k1, (c,), minval=0.5, maxval=1.5)
    beta = 0.1 * jax.random.normal(k2, (c,))
    mean = 0.1 * jax.random.normal(k3, (c,))
    var = jax.random.uniform(k4, (c,), minval=0.5, maxval=1.5)
    scale = gamma / jnp.sqrt(var + eps)
    shift = beta - mean * scale
    return scale.astype(jnp.float32), shift.astype(jnp.float32)


def _raw_bottleneck(key, inplanes, planes):
    ks = jax.random.split(key, 8)
    p = {}
    p['c1w'] = _conv_w(ks[0], 1, 1, inplanes, planes)
    p['s1'], p['b1'] = _bn_folded(ks[1], planes)
    p['c2w'] = _conv_w(ks[2], 3, 3, planes, planes)
    p['s2'], p['b2'] = _bn_folded(ks[3], planes)
    p['c3w'] = _conv_w(ks[4], 1, 1, planes, planes * 4)
    p['s3'], p['b3'] = _bn_folded(ks[5], planes * 4)
    p['dw'] = _conv_w(ks[6], 1, 1, inplanes, planes * 4)       # projection shortcut
    p['ds'], p['db'] = _bn_folded(ks[7], planes * 4)
    return p


def init_raw_params(key):
    ks = jax.random.split(key, 7)
    params = {}
    params['stem'] = {'w': _conv_w(ks[0], 7, 7, 3, 64)}
    params['stem']['s'], params['stem']['b'] = _bn_folded(ks[1], 64)
    params['layer1'] = [_raw_bottleneck(ks[2], 64, 64)]      # -> 256 ch
    params['layer2'] = [_raw_bottleneck(ks[3], 256, 128)]    # -> 512 ch, /2
    params['layer3'] = [_raw_bottleneck(ks[4], 512, 256)]    # -> 1024 ch, /2
    # torch inits CAM gamma to 0 (identity); use a nonzero deterministic value so the
    # attention path is actually exercised.
    params['cam_gamma'] = (0.5 + 0.1 * jax.random.normal(ks[5], (1,))).astype(jnp.float32)
    return params


# --- one-time (eager) weight prep: fold BN scale, pad channels to 128 lanes, cast bf16 ---

def _fold_conv(w, scale, cin_pad, cout_pad):
    kh, kw, cin, cout = w.shape
    wf = w * scale[None, None, None, :]
    wf = jnp.pad(wf, ((0, 0), (0, 0), (0, cin_pad - cin), (0, cout_pad - cout)))
    return wf.reshape(kh * kw * cin_pad, cout_pad).astype(jnp.bfloat16)


def _pad_shift(shift, cout_pad):
    c = shift.shape[0]
    return jnp.pad(shift, (0, cout_pad - c)).reshape(1, cout_pad).astype(jnp.float32)


def _prep_bottleneck(rb, inplanes_p, planes_p):
    planes = rb['c1w'].shape[-1]
    return {
        'w1': _fold_conv(rb['c1w'], rb['s1'], inplanes_p, planes_p),
        'b1': _pad_shift(rb['b1'], planes_p),
        'w2': _fold_conv(rb['c2w'], rb['s2'], planes_p, planes_p),
        'b2': _pad_shift(rb['b2'], planes_p),
        'w3': _fold_conv(rb['c3w'], rb['s3'], planes_p, 4 * planes),
        'wd': _fold_conv(rb['dw'], rb['ds'], inplanes_p, 4 * planes),
        'b3d': (rb['b3'] + rb['db']).reshape(1, 4 * planes).astype(jnp.float32),
    }


def prepare_params(raw):
    p = {}
    # Stem output is carried lane-padded to 128 channels (zero weight cols / bias) so the
    # maxpool + layer1 inputs stay lane-dense; layer1's K rows for those channels are zero.
    p['stem'] = {'w': _fold_conv(raw['stem']['w'], raw['stem']['s'], 3, LANE),
                 'b': _pad_shift(raw['stem']['b'], LANE)}
    p['layer1'] = [_prep_bottleneck(b, LANE, LANE) for b in raw['layer1']]   # 64 -> 128 pad
    p['layer2'] = [_prep_bottleneck(b, 256, 128) for b in raw['layer2']]
    p['layer3'] = [_prep_bottleneck(b, 512, 256) for b in raw['layer3']]
    p['cam_gamma'] = raw['cam_gamma']
    return p


# ----------------------------------- main --------------------------------------

if __name__ == "__main__":
    key = jax.random.PRNGKey(0)
    # PyTorch-style NCHW input (B=2, C=3, 32x32).
    x = jax.random.normal(key, (2, 3, 32, 32), dtype=jnp.float32)
    # Weight prep (BN fold / lane pad / bf16 cast) runs eagerly, once, outside jit.
    params = prepare_params(init_raw_params(jax.random.PRNGKey(1)))

    fwd = jax.jit(resnet_common_branch)
    out, intermediate = fwd(params, x)
    jax.block_until_ready((out, intermediate))

    assert out.shape == (2, 1024, 2, 2), out.shape
    assert intermediate.shape == (2, 256, 8, 8), intermediate.shape
    assert out.dtype == jnp.float32 and intermediate.dtype == jnp.float32
    assert bool(jnp.all(jnp.isfinite(out))) and bool(jnp.all(jnp.isfinite(intermediate)))
    print("KERNEL_OK")
</pallas_src>

<mosaic_0001>
module attributes {stable_mosaic.version = 11 : i64} {
  func.func @_mm_bias_kernel(%arg0: i32, %arg1: i32, %arg2: memref<512x147xbf16, #tpu.memory_space<vmem>>, %arg3: memref<147x128xbf16, #tpu.memory_space<vmem>>, %arg4: memref<1x128xf32, #tpu.memory_space<vmem>>, %arg5: memref<512x128xbf16, #tpu.memory_space<vmem>>) attributes {dimension_semantics = [#tpu.dimension_semantics<parallel>, #tpu.dimension_semantics<parallel>], iteration_bounds = array<i64: 1, 1>, scalar_prefetch = 0 : i64, scratch_operands = 0 : i64, tpu.core_type = #tpu.core_type<tc>, window_params = [{transform_indices = @transform_0, window_bounds = array<i64: 512, 147>}, {transform_indices = @transform_1, window_bounds = array<i64: 147, 128>}, {transform_indices = @transform_2, window_bounds = array<i64: 1, 128>}, {transform_indices = @transform_3, window_bounds = array<i64: 512, 128>}]} {
    %c0 = arith.constant 0 : index
    %c0_0 = arith.constant 0 : index
    %0 = vector.load %arg2[%c0, %c0_0] : memref<512x147xbf16, #tpu.memory_space<vmem>>, vector<512x147xbf16>
    %c0_1 = arith.constant 0 : index
    %c0_2 = arith.constant 0 : index
    %1 = vector.load %arg3[%c0_1, %c0_2] : memref<147x128xbf16, #tpu.memory_space<vmem>>, vector<147x128xbf16>
    %cst = arith.constant dense<0.000000e+00> : vector<512x128xf32>
    %2 = tpu.matmul %0, %1, %cst {dimension_numbers = #tpu.dot_dimension_numbers<[1], [0], [0], [1], [0, 0, 1, 1], [], []>} : vector<512x147xbf16>, vector<147x128xbf16>, vector<512x128xf32> -> vector<512x128xf32>
    %c0_3 = arith.constant 0 : index
    %c0_4 = arith.constant 0 : index
    %3 = vector.load %arg4[%c0_3, %c0_4] : memref<1x128xf32, #tpu.memory_space<vmem>>, vector<1x128xf32>
    %4 = vector.broadcast %3 : vector<1x128xf32> to vector<512x128xf32>
    %5 = arith.addf %2, %4 : vector<512x128xf32>
    %cst_5 = arith.constant 0.000000e+00 : f32
    %6 = vector.broadcast %cst_5 : f32 to vector<512x128xf32>
    %7 = arith.maximumf %5, %6 : vector<512x128xf32>
    %8 = arith.truncf %7 : vector<512x128xf32> to vector<512x128xbf16>
    %c0_6 = arith.constant 0 : index
    %c0_7 = arith.constant 0 : index
    %9 = vector.load %arg5[%c0_6, %c0_7] : memref<512x128xbf16, #tpu.memory_space<vmem>>, vector<512x128xbf16>
    tpu.vector_store %arg5[%c0_6, %c0_7], %8 {strides = array<i32>} : memref<512x128xbf16, #tpu.memory_space<vmem>>, vector<512x128xbf16>,
    return
  }
  func.func @transform_0(%arg0: i32, %arg1: i32) -> (i32, i32) {
    %c0_i32 = arith.constant 0 : i32
    %c0_i32_0 = arith.constant 0 : i32
    return %arg0, %c0_i32 : i32, i32
  }
  func.func @transform_1(%arg0: i32, %arg1: i32) -> (i32, i32) {
    %c0_i32 = arith.constant 0 : i32
    %c0_i32_0 = arith.constant 0 : i32
    return %c0_i32, %arg1 : i32, i32
  }
  func.func @transform_2(%arg0: i32, %arg1: i32) -> (i32, i32) {
    %c0_i32 = arith.constant 0 : i32
    %c0_i32_0 = arith.constant 0 : i32
    return %c0_i32, %arg1 : i32, i32
  }
  func.func @transform_3(%arg0: i32, %arg1: i32) -> (i32, i32) {
    %c0_i32 = arith.constant 0 : i32
    return %arg0, %arg1 : i32, i32
  }
}

module attributes {stable_mosaic.version = 11 : i64} {
  func.func @_pool_w_kernel(%arg0: i32, %arg1: memref<1x8x9x128xbf16, #tpu.memory_space<vmem>>, %arg2: memref<1x8x9x128xbf16, #tpu.memory_space<vmem>>, %arg3: memref<1x8x8x128xbf16, #tpu.memory_space<vmem>>) attributes {dimension_semantics = [#tpu.dimension_semantics<parallel>], iteration_bounds = array<i64: 2>, scalar_prefetch = 0 : i64, scratch_operands = 0 : i64, tpu.core_type = #tpu.core_type<tc>, window_params = [{transform_indices = @transform_0, window_bounds = array<i64: 1, 8, 9, 128>}, {transform_indices = @transform_1, window_bounds = array<i64: 1, 8, 9, 128>}, {transform_indices = @transform_2, window_bounds = array<i64: 1, 8, 8, 128>}]} {
    %c0 = arith.constant 0 : index
    %c0_0 = arith.constant 0 : index
    %c0_1 = arith.constant 0 : index
    %c0_2 = arith.constant 0 : index
    %0 = vector.load %arg1[%c0, %c0_0, %c0_1, %c0_2] : memref<1x8x9x128xbf16, #tpu.memory_space<vmem>>, vector<1x8x8x128xbf16>
    %c0_3 = arith.constant 0 : index
    %c0_4 = arith.constant 0 : index
    %c0_5 = arith.constant 0 : index
    %c0_6 = arith.constant 0 : index
    %1 = vector.load %arg2[%c0_3, %c0_4, %c0_5, %c0_6] : memref<1x8x9x128xbf16, #tpu.memory_space<vmem>>, vector<1x8x8x128xbf16>
    %2 = arith.maximumf %0, %1 : vector<1x8x8x128xbf16>
    %c0_7 = arith.constant 0 : index
    %c0_8 = arith.constant 0 : index
    %c1 = arith.constant 1 : index
    %c0_9 = arith.constant 0 : index
    %3 = vector.load %arg1[%c0_7, %c0_8, %c1, %c0_9] : memref<1x8x9x128xbf16, #tpu.memory_space<vmem>>, vector<1x8x8x128xbf16>
    %4 = arith.maximumf %2, %3 : vector<1x8x8x128xbf16>
    %c0_10 = arith.constant 0 : index
    %c0_11 = arith.constant 0 : index
    %c0_12 = arith.constant 0 : index
    %c0_13 = arith.constant 0 : index
    %5 = vector.load %arg3[%c0_10, %c0_11, %c0_12, %c0_13] : memref<1x8x8x128xbf16, #tpu.memory_space<vmem>>, vector<1x8x8x128xbf16>
    tpu.vector_store %arg3[%c0_10, %c0_11, %c0_12, %c0_13], %4 {strides = array<i32>} : memref<1x8x8x128xbf16, #tpu.memory_space<vmem>>, vector<1x8x8x128xbf16>,
    return
  }
  func.func @transform_0(%arg0: i32) -> (i32, i32, i32, i32) {
    %c0_i32 = arith.constant 0 : i32
    %c0_i32_0 = arith.constant 0 : i32
    %c0_i32_1 = arith.constant 0 : i32
    %c0_i32_2 = arith.constant 0 : i32
    return %arg0, %c0_i32, %c0_i32_0, %c0_i32_1 : i32, i32, i32, i32
  }
  func.func @transform_1(%arg0: i32) -> (i32, i32, i32, i32) {
    %c0_i32 = arith.constant 0 : i32
    %c0_i32_0 = arith.constant 0 : i32
    %c0_i32_1 = arith.constant 0 : i32
    %c0_i32_2 = arith.constant 0 : i32
    return %arg0, %c0_i32, %c0_i32_0, %c0_i32_1 : i32, i32, i32, i32
  }
  func.func @transform_2(%arg0: i32) -> (i32, i32, i32, i32) {
    %c0_i32 = arith.constant 0 : i32
    %c0_i32_0 = arith.constant 0 : i32
    %c0_i32_1 = arith.constant 0 : i32
    %c0_i32_2 = arith.constant 0 : i32
    return %arg0, %c0_i32, %c0_i32_0, %c0_i32_1 : i32, i32, i32, i32
  }
}

module attributes {stable_mosaic.version = 11 : i64} {
  func.func @_mm_bias_kernel(%arg0: i32, %arg1: i32, %arg2: memref<128x128xbf16, #tpu.memory_space<vmem>>, %arg3: memref<128x128xbf16, #tpu.memory_space<vmem>>, %arg4: memref<1x128xf32, #tpu.memory_space<vmem>>, %arg5: memref<128x128xbf16, #tpu.memory_space<vmem>>) attributes {dimension_semantics = [#tpu.dimension_semantics<parallel>, #tpu.dimension_semantics<parallel>], iteration_bounds = array<i64: 1, 1>, scalar_prefetch = 0 : i64, scratch_operands = 0 : i64, tpu.core_type = #tpu.core_type<tc>, window_params = [{transform_indices = @transform_0, window_bounds = array<i64: 128, 128>}, {transform_indices = @transform_1, window_bounds = array<i64: 128, 128>}, {transform_indices = @transform_2, window_bounds = array<i64: 1, 128>}, {transform_indices = @transform_3, window_bounds = array<i64: 128, 128>}]} {
    %c0 = arith.constant 0 : index
    %c0_0 = arith.constant 0 : index
    %0 = vector.load %arg2[%c0, %c0_0] : memref<128x128xbf16, #tpu.memory_space<vmem>>, vector<128x128xbf16>
    %c0_1 = arith.constant 0 : index
    %c0_2 = arith.constant 0 : index
    %1 = vector.load %arg3[%c0_1, %c0_2] : memref<128x128xbf16, #tpu.memory_space<vmem>>, vector<128x128xbf16>
    %cst = arith.constant dense<0.000000e+00> : vector<128x128xf32>
    %2 = tpu.matmul %0, %1, %cst {dimension_numbers = #tpu.dot_dimension_numbers<[1], [0], [0], [1], [0, 0, 1, 1], [], []>} : vector<128x128xbf16>, vector<128x128xbf16>, vector<128x128xf32> -> vector<128x128xf32>
    %c0_3 = arith.constant 0 : index
    %c0_4 = arith.constant 0 : index
    %3 = vector.load %arg4[%c0_3, %c0_4] : memref<1x128xf32, #tpu.memory_space<vmem>>, vector<1x128xf32>
    %4 = vector.broadcast %3 : vector<1x128xf32> to vector<128x128xf32>
    %5 = arith.addf %2, %4 : vector<128x128xf32>
    %cst_5 = arith.constant 0.000000e+00 : f32
    %6 = vector.broadcast %cst_5 : f32 to vector<128x128xf32>
    %7 = arith.maximumf %5, %6 : vector<128x128xf32>
    %8 = arith.truncf %7 : vector<128x128xf32> to vector<128x128xbf16>
    %c0_6 = arith.constant 0 : index
    %c0_7 = arith.constant 0 : index
    %9 = vector.load %arg5[%c0_6, %c0_7] : memref<128x128xbf16, #tpu.memory_space<vmem>>, vector<128x128xbf16>
    tpu.vector_store %arg5[%c0_6, %c0_7], %8 {strides = array<i32>} : memref<128x128xbf16, #tpu.memory_space<vmem>>, vector<128x128xbf16>,
    return
  }
  func.func @transform_0(%arg0: i32, %arg1: i32) -> (i32, i32) {
    %c0_i32 = arith.constant 0 : i32
    %c0_i32_0 = arith.constant 0 : i32
    return %arg0, %c0_i32 : i32, i32
  }
  func.func @transform_1(%arg0: i32, %arg1: i32) -> (i32, i32) {
    %c0_i32 = arith.constant 0 : i32
    %c0_i32_0 = arith.constant 0 : i32
    return %c0_i32, %arg1 : i32, i32
  }
  func.func @transform_2(%arg0: i32, %arg1: i32) -> (i32, i32) {
    %c0_i32 = arith.constant 0 : i32
    %c0_i32_0 = arith.constant 0 : i32
    return %c0_i32, %arg1 : i32, i32
  }
  func.func @transform_3(%arg0: i32, %arg1: i32) -> (i32, i32) {
    %c0_i32 = arith.constant 0 : i32
    return %arg0, %arg1 : i32, i32
  }
}

module attributes {stable_mosaic.version = 11 : i64} {
  func.func @_cam_kernel(%arg0: i32, %arg1: memref<1x64x256xbf16, #tpu.memory_space<vmem>>, %arg2: memref<1x1xf32, #tpu.memory_space<smem>>, %arg3: memref<1x64x256xf32, #tpu.memory_space<vmem>>, %arg4: memref<1x64x256xbf16, #tpu.memory_space<vmem>>) attributes {dimension_semantics = [#tpu.dimension_semantics<parallel>], iteration_bounds = array<i64: 2>, scalar_prefetch = 0 : i64, scratch_operands = 0 : i64, tpu.core_type = #tpu.core_type<tc>, window_params = [{transform_indices = @transform_0, window_bounds = array<i64: 1, 64, 256>}, {transform_indices = @transform_1, window_bounds = array<i64: 1, 1>}, {transform_indices = @transform_2, window_bounds = array<i64: 1, 64, 256>}, {transform_indices = @transform_3, window_bounds = array<i64: 1, 64, 256>}]} {
    %c0 = arith.constant 0 : index
    %c0_0 = arith.constant 0 : index
    %c0_1 = arith.constant 0 : index
    %0 = vector.load %arg1[%c0, %c0_0, %c0_1] : memref<1x64x256xbf16, #tpu.memory_space<vmem>>, vector<1x64x256xbf16>
    %1 = vector.shape_cast %0 : vector<1x64x256xbf16> to vector<64x256xbf16>
    %cst = arith.constant dense<0.000000e+00> : vector<256x256xf32>
    %2 = tpu.matmul %1, %1, %cst {dimension_numbers = #tpu.dot_dimension_numbers<[0], [0], [1], [1], [0, 1, 1, 1], [], []>} : vector<64x256xbf16>, vector<64x256xbf16>, vector<256x256xf32> -> vector<256x256xf32>
    %cst_2 = arith.constant dense<0xFF800000> : vector<256xf32>
    %3 = vector.multi_reduction <maximumf>, %2, %cst_2 [1] : vector<256x256xf32> to vector<256xf32>
    %4 = vector.shape_cast %3 : vector<256xf32> to vector<256x1xf32>
    %5 = vector.broadcast %4 : vector<256x1xf32> to vector<256x256xf32>
    %6 = arith.subf %5, %2 : vector<256x256xf32>
    %cst_3 = arith.constant dense<0xFF800000> : vector<256xf32>
    %7 = vector.multi_reduction <maximumf>, %6, %cst_3 [1] : vector<256x256xf32> to vector<256xf32>
    %8 = vector.shape_cast %7 : vector<256xf32> to vector<256x1xf32>
    %9 = vector.broadcast %8 : vector<256x1xf32> to vector<256x256xf32>
    %10 = arith.subf %6, %9 : vector<256x256xf32>
    %11 = math.exp %10 : vector<256x256xf32>
    %cst_4 = arith.constant dense<0.000000e+00> : vector<256xf32>
    %12 = vector.multi_reduction <add>, %11, %cst_4 [1] : vector<256x256xf32> to vector<256xf32>
    %13 = vector.shape_cast %12 : vector<256xf32> to vector<256x1xf32>
    %14 = tpu.reciprocal %13 {approx = true} : vector<256x1xf32> -> vector<256x1xf32>
    %15 = vector.broadcast %14 : vector<256x1xf32> to vector<256x256xf32>
    %16 = arith.mulf %11, %15 : vector<256x256xf32>
    %17 = arith.truncf %16 : vector<256x256xf32> to vector<256x256xbf16>
    %cst_5 = arith.constant dense<0.000000e+00> : vector<64x256xf32>
    %18 = tpu.matmul %1, %17, %cst_5 {dimension_numbers = #tpu.dot_dimension_numbers<[1], [1], [0], [0], [0, 0, 1, 0], [], []>} : vector<64x256xbf16>, vector<256x256xbf16>, vector<64x256xf32> -> vector<64x256xf32>
    %c0_6 = arith.constant 0 : index
    %c0_7 = arith.constant 0 : index
    %19 = memref.load %arg2[%c0_6, %c0_7] : memref<1x1xf32, #tpu.memory_space<smem>>
    %20 = vector.broadcast %19 : f32 to vector<64x256xf32>
    %21 = arith.mulf %20, %18 : vector<64x256xf32>
    %22 = arith.extf %1 : vector<64x256xbf16> to vector<64x256xf32>
    %23 = arith.addf %21, %22 : vector<64x256xf32>
    %c0_8 = arith.constant 0 : index
    %c0_9 = arith.constant 0 : index
    %c0_10 = arith.constant 0 : index
    %24 = vector.load %arg3[%c0_8, %c0_9, %c0_10] : memref<1x64x256xf32, #tpu.memory_space<vmem>>, vector<1x64x256xf32>
    %25 = vector.shape_cast %24 : vector<1x64x256xf32> to vector<64x256xf32>
    %26 = vector.shape_cast %23 : vector<64x256xf32> to vector<1x64x256xf32>
    tpu.vector_store %arg3[%c0_8, %c0_9, %c0_10], %26 {strides = array<i32>} : memref<1x64x256xf32, #tpu.memory_space<vmem>>, vector<1x64x256xf32>,
    %27 = arith.truncf %23 : vector<64x256xf32> to vector<64x256xbf16>
    %c0_11 = arith.constant 0 : index
    %c0_12 = arith.constant 0 : index
    %c0_13 = arith.constant 0 : index
    %28 = vector.load %arg4[%c0_11, %c0_12, %c0_13] : memref<1x64x256xbf16, #tpu.memory_space<vmem>>, vector<1x64x256xbf16>
    %29 = vector.shape_cast %28 : vector<1x64x256xbf16> to vector<64x256xbf16>
    %30 = vector.shape_cast %27 : vector<64x256xbf16> to vector<1x64x256xbf16>
    tpu.vector_store %arg4[%c0_11, %c0_12, %c0_13], %30 {strides = array<i32>} : memref<1x64x256xbf16, #tpu.memory_space<vmem>>, vector<1x64x256xbf16>,
    return
  }
  func.func @transform_0(%arg0: i32) -> (i32, i32, i32) {
    %c0_i32 = arith.constant 0 : i32
    %c0_i32_0 = arith.constant 0 : i32
    %c0_i32_1 = arith.constant 0 : i32
    return %arg0, %c0_i32, %c0_i32_0 : i32, i32, i32
  }
  func.func @transform_1(%arg0: i32) -> (i32, i32) {
    %c0_i32 = arith.constant 0 : i32
    %c0_i32_0 = arith.constant 0 : i32
    %c0_i32_1 = arith.constant 0 : i32
    return %c0_i32, %c0_i32_0 : i32, i32
  }
  func.func @transform_2(%arg0: i32) -> (i32, i32, i32) {
    %c0_i32 = arith.constant 0 : i32
    %c0_i32_0 = arith.constant 0 : i32
    %c0_i32_1 = arith.constant 0 : i32
    return %arg0, %c0_i32, %c0_i32_0 : i32, i32, i32
  }
  func.func @transform_3(%arg0: i32) -> (i32, i32, i32) {
    %c0_i32 = arith.constant 0 : i32
    %c0_i32_0 = arith.constant 0 : i32
    %c0_i32_1 = arith.constant 0 : i32
    return %arg0, %c0_i32, %c0_i32_0 : i32, i32, i32
  }
}

module attributes {stable_mosaic.version = 11 : i64} {
  func.func @_bottleneck_tail_kernel(%arg0: i32, %arg1: i32, %arg2: memref<128x128xbf16, #tpu.memory_space<vmem>>, %arg3: memref<128x256xbf16, #tpu.memory_space<vmem>>, %arg4: memref<128x128xbf16, #tpu.memory_space<vmem>>, %arg5: memref<128x256xbf16, #tpu.memory_space<vmem>>, %arg6: memref<1x256xf32, #tpu.memory_space<vmem>>, %arg7: memref<128x256xbf16, #tpu.memory_space<vmem>>) attributes {dimension_semantics = [#tpu.dimension_semantics<parallel>, #tpu.dimension_semantics<parallel>], iteration_bounds = array<i64: 1, 1>, scalar_prefetch = 0 : i64, scratch_operands = 0 : i64, tpu.core_type = #tpu.core_type<tc>, window_params = [{transform_indices = @transform_0, window_bounds = array<i64: 128, 128>}, {transform_indices = @transform_1, window_bounds = array<i64: 128, 256>}, {transform_indices = @transform_2, window_bounds = array<i64: 128, 128>}, {transform_indices = @transform_3, window_bounds = array<i64: 128, 256>}, {transform_indices = @transform_4, window_bounds = array<i64: 1, 256>}, {transform_indices = @transform_5, window_bounds = array<i64: 128, 256>}]} {
    %c0 = arith.constant 0 : index
    %c0_0 = arith.constant 0 : index
    %0 = vector.load %arg2[%c0, %c0_0] : memref<128x128xbf16, #tpu.memory_space<vmem>>, vector<128x128xbf16>
    %c0_1 = arith.constant 0 : index
    %c0_2 = arith.constant 0 : index
    %1 = vector.load %arg3[%c0_1, %c0_2] : memref<128x256xbf16, #tpu.memory_space<vmem>>, vector<128x256xbf16>
    %cst = arith.constant dense<0.000000e+00> : vector<128x256xf32>
    %2 = tpu.matmul %0, %1, %cst {dimension_numbers = #tpu.dot_dimension_numbers<[1], [0], [0], [1], [0, 0, 1, 1], [], []>} : vector<128x128xbf16>, vector<128x256xbf16>, vector<128x256xf32> -> vector<128x256xf32>
    %c0_3 = arith.constant 0 : index
    %c0_4 = arith.constant 0 : index
    %3 = vector.load %arg4[%c0_3, %c0_4] : memref<128x128xbf16, #tpu.memory_space<vmem>>, vector<128x128xbf16>
    %c0_5 = arith.constant 0 : index
    %c0_6 = arith.constant 0 : index
    %4 = vector.load %arg5[%c0_5, %c0_6] : memref<128x256xbf16, #tpu.memory_space<vmem>>, vector<128x256xbf16>
    %cst_7 = arith.constant dense<0.000000e+00> : vector<128x256xf32>
    %5 = tpu.matmul %3, %4, %cst_7 {dimension_numbers = #tpu.dot_dimension_numbers<[1], [0], [0], [1], [0, 0, 1, 1], [], []>} : vector<128x128xbf16>, vector<128x256xbf16>, vector<128x256xf32> -> vector<128x256xf32>
    %6 = arith.addf %2, %5 : vector<128x256xf32>
    %c0_8 = arith.constant 0 : index
    %c0_9 = arith.constant 0 : index
    %7 = vector.load %arg6[%c0_8, %c0_9] : memref<1x256xf32, #tpu.memory_space<vmem>>, vector<1x256xf32>
    %8 = vector.broadcast %7 : vector<1x256xf32> to vector<128x256xf32>
    %9 = arith.addf %6, %8 : vector<128x256xf32>
    %cst_10 = arith.constant 0.000000e+00 : f32
    %10 = vector.broadcast %cst_10 : f32 to vector<128x256xf32>
    %11 = arith.maximumf %9, %10 : vector<128x256xf32>
    %12 = arith.truncf %11 : vector<128x256xf32> to vector<128x256xbf16>
    %c0_11 = arith.constant 0 : index
    %c0_12 = arith.constant 0 : index
    %13 = vector.load %arg7[%c0_11, %c0_12] : memref<128x256xbf16, #tpu.memory_space<vmem>>, vector<128x256xbf16>
    tpu.vector_store %arg7[%c0_11, %c0_12], %12 {strides = array<i32>} : memref<128x256xbf16, #tpu.memory_space<vmem>>, vector<128x256xbf16>,
    return
  }
  func.func @transform_0(%arg0: i32, %arg1: i32) -> (i32, i32) {
    %c0_i32 = arith.constant 0 : i32
    %c0_i32_0 = arith.constant 0 : i32
    return %arg0, %c0_i32 : i32, i32
  }
  func.func @transform_1(%arg0: i32, %arg1: i32) -> (i32, i32) {
    %c0_i32 = arith.constant 0 : i32
    %c0_i32_0 = arith.constant 0 : i32
    return %c0_i32, %arg1 : i32, i32
  }
  func.func @transform_2(%arg0: i32, %arg1: i32) -> (i32, i32) {
    %c0_i32 = arith.constant 0 : i32
    %c0_i32_0 = arith.constant 0 : i32
    return %arg0, %c0_i32 : i32, i32
  }
  func.func @transform_3(%arg0: i32, %arg1: i32) -> (i32, i32) {
    %c0_i32 = arith.constant 0 : i32
    %c0_i32_0 = arith.constant 0 : i32
    return %c0_i32, %arg1 : i32, i32
  }
  func.func @transform_4(%arg0: i32, %arg1: i32) -> (i32, i32) {
    %c0_i32 = arith.constant 0 : i32
    %c0_i32_0 = arith.constant 0 : i32
    return %c0_i32, %arg1 : i32, i32
  }
  func.func @transform_5(%arg0: i32, %arg1: i32) -> (i32, i32) {
    %c0_i32 = arith.constant 0 : i32
    return %arg0, %arg1 : i32, i32
  }
}

module attributes {stable_mosaic.version = 11 : i64} {
  func.func @_mm_bias_kernel(%arg0: i32, %arg1: i32, %arg2: memref<128x256xbf16, #tpu.memory_space<vmem>>, %arg3: memref<256x128xbf16, #tpu.memory_space<vmem>>, %arg4: memref<1x128xf32, #tpu.memory_space<vmem>>, %arg5: memref<128x128xbf16, #tpu.memory_space<vmem>>) attributes {dimension_semantics = [#tpu.dimension_semantics<parallel>, #tpu.dimension_semantics<parallel>], iteration_bounds = array<i64: 1, 1>, scalar_prefetch = 0 : i64, scratch_operands = 0 : i64, tpu.core_type = #tpu.core_type<tc>, window_params = [{transform_indices = @transform_0, window_bounds = array<i64: 128, 256>}, {transform_indices = @transform_1, window_bounds = array<i64: 256, 128>}, {transform_indices = @transform_2, window_bounds = array<i64: 1, 128>}, {transform_indices = @transform_3, window_bounds = array<i64: 128, 128>}]} {
    %c0 = arith.constant 0 : index
    %c0_0 = arith.constant 0 : index
    %0 = vector.load %arg2[%c0, %c0_0] : memref<128x256xbf16, #tpu.memory_space<vmem>>, vector<128x256xbf16>
    %c0_1 = arith.constant 0 : index
    %c0_2 = arith.constant 0 : index
    %1 = vector.load %arg3[%c0_1, %c0_2] : memref<256x128xbf16, #tpu.memory_space<vmem>>, vector<256x128xbf16>
    %cst = arith.constant dense<0.000000e+00> : vector<128x128xf32>
    %2 = tpu.matmul %0, %1, %cst {dimension_numbers = #tpu.dot_dimension_numbers<[1], [0], [0], [1], [0, 0, 1, 1], [], []>} : vector<128x256xbf16>, vector<256x128xbf16>, vector<128x128xf32> -> vector<128x128xf32>
    %c0_3 = arith.constant 0 : index
    %c0_4 = arith.constant 0 : index
    %3 = vector.load %arg4[%c0_3, %c0_4] : memref<1x128xf32, #tpu.memory_space<vmem>>, vector<1x128xf32>
    %4 = vector.broadcast %3 : vector<1x128xf32> to vector<128x128xf32>
    %5 = arith.addf %2, %4 : vector<128x128xf32>
    %cst_5 = arith.constant 0.000000e+00 : f32
    %6 = vector.broadcast %cst_5 : f32 to vector<128x128xf32>
    %7 = arith.maximumf %5, %6 : vector<128x128xf32>
    %8 = arith.truncf %7 : vector<128x128xf32> to vector<128x128xbf16>
    %c0_6 = arith.constant 0 : index
    %c0_7 = arith.constant 0 : index
    %9 = vector.load %arg5[%c0_6, %c0_7] : memref<128x128xbf16, #tpu.memory_space<vmem>>, vector<128x128xbf16>
    tpu.vector_store %arg5[%c0_6, %c0_7], %8 {strides = array<i32>} : memref<128x128xbf16, #tpu.memory_space<vmem>>, vector<128x128xbf16>,
    return
  }
  func.func @transform_0(%arg0: i32, %arg1: i32) -> (i32, i32) {
    %c0_i32 = arith.constant 0 : i32
    %c0_i32_0 = arith.constant 0 : i32
    return %arg0, %c0_i32 : i32, i32
  }
  func.func @transform_1(%arg0: i32, %arg1: i32) -> (i32, i32) {
    %c0_i32 = arith.constant 0 : i32
    %c0_i32_0 = arith.constant 0 : i32
    return %c0_i32, %arg1 : i32, i32
  }
  func.func @transform_2(%arg0: i32, %arg1: i32) -> (i32, i32) {
    %c0_i32 = arith.constant 0 : i32
    %c0_i32_0 = arith.constant 0 : i32
    return %c0_i32, %arg1 : i32, i32
  }
  func.func @transform_3(%arg0: i32, %arg1: i32) -> (i32, i32) {
    %c0_i32 = arith.constant 0 : i32
    return %arg0, %arg1 : i32, i32
  }
}

module attributes {stable_mosaic.version = 11 : i64} {
  func.func @_mm_bias_kernel(%arg0: i32, %arg1: i32, %arg2: memref<128x1152xbf16, #tpu.memory_space<vmem>>, %arg3: memref<1152x128xbf16, #tpu.memory_space<vmem>>, %arg4: memref<1x128xf32, #tpu.memory_space<vmem>>, %arg5: memref<128x128xbf16, #tpu.memory_space<vmem>>) attributes {dimension_semantics = [#tpu.dimension_semantics<parallel>, #tpu.dimension_semantics<parallel>], iteration_bounds = array<i64: 1, 1>, scalar_prefetch = 0 : i64, scratch_operands = 0 : i64, tpu.core_type = #tpu.core_type<tc>, window_params = [{transform_indices = @transform_0, window_bounds = array<i64: 128, 1152>}, {transform_indices = @transform_1, window_bounds = array<i64: 1152, 128>}, {transform_indices = @transform_2, window_bounds = array<i64: 1, 128>}, {transform_indices = @transform_3, window_bounds = array<i64: 128, 128>}]} {
    %c0 = arith.constant 0 : index
    %c0_0 = arith.constant 0 : index
    %0 = vector.load %arg2[%c0, %c0_0] : memref<128x1152xbf16, #tpu.memory_space<vmem>>, vector<128x1152xbf16>
    %c0_1 = arith.constant 0 : index
    %c0_2 = arith.constant 0 : index
    %1 = vector.load %arg3[%c0_1, %c0_2] : memref<1152x128xbf16, #tpu.memory_space<vmem>>, vector<1152x128xbf16>
    %cst = arith.constant dense<0.000000e+00> : vector<128x128xf32>
    %2 = tpu.matmul %0, %1, %cst {dimension_numbers = #tpu.dot_dimension_numbers<[1], [0], [0], [1], [0, 0, 1, 1], [], []>} : vector<128x1152xbf16>, vector<1152x128xbf16>, vector<128x128xf32> -> vector<128x128xf32>
    %c0_3 = arith.constant 0 : index
    %c0_4 = arith.constant 0 : index
    %3 = vector.load %arg4[%c0_3, %c0_4] : memref<1x128xf32, #tpu.memory_space<vmem>>, vector<1x128xf32>
    %4 = vector.broadcast %3 : vector<1x128xf32> to vector<128x128xf32>
    %5 = arith.addf %2, %4 : vector<128x128xf32>
    %cst_5 = arith.constant 0.000000e+00 : f32
    %6 = vector.broadcast %cst_5 : f32 to vector<128x128xf32>
    %7 = arith.maximumf %5, %6 : vector<128x128xf32>
    %8 = arith.truncf %7 : vector<128x128xf32> to vector<128x128xbf16>
    %c0_6 = arith.constant 0 : index
    %c0_7 = arith.constant 0 : index
    %9 = vector.load %arg5[%c0_6, %c0_7] : memref<128x128xbf16, #tpu.memory_space<vmem>>, vector<128x128xbf16>
    tpu.vector_store %arg5[%c0_6, %c0_7], %8 {strides = array<i32>} : memref<128x128xbf16, #tpu.memory_space<vmem>>, vector<128x128xbf16>,
    return
  }
  func.func @transform_0(%arg0: i32, %arg1: i32) -> (i32, i32) {
    %c0_i32 = arith.constant 0 : i32
    %c0_i32_0 = arith.constant 0 : i32
    return %arg0, %c0_i32 : i32, i32
  }
  func.func @transform_1(%arg0: i32, %arg1: i32) -> (i32, i32) {
    %c0_i32 = arith.constant 0 : i32
    %c0_i32_0 = arith.constant 0 : i32
    return %c0_i32, %arg1 : i32, i32
  }
  func.func @transform_2(%arg0: i32, %arg1: i32) -> (i32, i32) {
    %c0_i32 = arith.constant 0 : i32
    %c0_i32_0 = arith.constant 0 : i32
    return %c0_i32, %arg1 : i32, i32
  }
  func.func @transform_3(%arg0: i32, %arg1: i32) -> (i32, i32) {
    %c0_i32 = arith.constant 0 : i32
    return %arg0, %arg1 : i32, i32
  }
}

module attributes {stable_mosaic.version = 11 : i64} {
  func.func @_mm_bias_kernel(%arg0: i32, %arg1: i32, %arg2: memref<32x1152xbf16, #tpu.memory_space<vmem>>, %arg3: memref<1152x128xbf16, #tpu.memory_space<vmem>>, %arg4: memref<1x128xf32, #tpu.memory_space<vmem>>, %arg5: memref<32x128xbf16, #tpu.memory_space<vmem>>) attributes {dimension_semantics = [#tpu.dimension_semantics<parallel>, #tpu.dimension_semantics<parallel>], iteration_bounds = array<i64: 1, 1>, scalar_prefetch = 0 : i64, scratch_operands = 0 : i64, tpu.core_type = #tpu.core_type<tc>, window_params = [{transform_indices = @transform_0, window_bounds = array<i64: 32, 1152>}, {transform_indices = @transform_1, window_bounds = array<i64: 1152, 128>}, {transform_indices = @transform_2, window_bounds = array<i64: 1, 128>}, {transform_indices = @transform_3, window_bounds = array<i64: 32, 128>}]} {
    %c0 = arith.constant 0 : index
    %c0_0 = arith.constant 0 : index
    %0 = vector.load %arg2[%c0, %c0_0] : memref<32x1152xbf16, #tpu.memory_space<vmem>>, vector<32x1152xbf16>
    %c0_1 = arith.constant 0 : index
    %c0_2 = arith.constant 0 : index
    %1 = vector.load %arg3[%c0_1, %c0_2] : memref<1152x128xbf16, #tpu.memory_space<vmem>>, vector<1152x128xbf16>
    %cst = arith.constant dense<0.000000e+00> : vector<32x128xf32>
    %2 = tpu.matmul %0, %1, %cst {dimension_numbers = #tpu.dot_dimension_numbers<[1], [0], [0], [1], [0, 0, 1, 1], [], []>} : vector<32x1152xbf16>, vector<1152x128xbf16>, vector<32x128xf32> -> vector<32x128xf32>
    %c0_3 = arith.constant 0 : index
    %c0_4 = arith.constant 0 : index
    %3 = vector.load %arg4[%c0_3, %c0_4] : memref<1x128xf32, #tpu.memory_space<vmem>>, vector<1x128xf32>
    %4 = vector.broadcast %3 : vector<1x128xf32> to vector<32x128xf32>
    %5 = arith.addf %2, %4 : vector<32x128xf32>
    %cst_5 = arith.constant 0.000000e+00 : f32
    %6 = vector.broadcast %cst_5 : f32 to vector<32x128xf32>
    %7 = arith.maximumf %5, %6 : vector<32x128xf32>
    %8 = arith.truncf %7 : vector<32x128xf32> to vector<32x128xbf16>
    %c0_6 = arith.constant 0 : index
    %c0_7 = arith.constant 0 : index
    %9 = vector.load %arg5[%c0_6, %c0_7] : memref<32x128xbf16, #tpu.memory_space<vmem>>, vector<32x128xbf16>
    tpu.vector_store %arg5[%c0_6, %c0_7], %8 {strides = array<i32>} : memref<32x128xbf16, #tpu.memory_space<vmem>>, vector<32x128xbf16>,
    return
  }
  func.func @transform_0(%arg0: i32, %arg1: i32) -> (i32, i32) {
    %c0_i32 = arith.constant 0 : i32
    %c0_i32_0 = arith.constant 0 : i32
    return %arg0, %c0_i32 : i32, i32
  }
  func.func @transform_1(%arg0: i32, %arg1: i32) -> (i32, i32) {
    %c0_i32 = arith.constant 0 : i32
    %c0_i32_0 = arith.constant 0 : i32
    return %c0_i32, %arg1 : i32, i32
  }
  func.func @transform_2(%arg0: i32, %arg1: i32) -> (i32, i32) {
    %c0_i32 = arith.constant 0 : i32
    %c0_i32_0 = arith.constant 0 : i32
    return %c0_i32, %arg1 : i32, i32
  }
  func.func @transform_3(%arg0: i32, %arg1: i32) -> (i32, i32) {
    %c0_i32 = arith.constant 0 : i32
    return %arg0, %arg1 : i32, i32
  }
}

module attributes {stable_mosaic.version = 11 : i64} {
  func.func @_bottleneck_tail_kernel(%arg0: i32, %arg1: i32, %arg2: memref<32x128xbf16, #tpu.memory_space<vmem>>, %arg3: memref<128x512xbf16, #tpu.memory_space<vmem>>, %arg4: memref<32x256xbf16, #tpu.memory_space<vmem>>, %arg5: memref<256x512xbf16, #tpu.memory_space<vmem>>, %arg6: memref<1x512xf32, #tpu.memory_space<vmem>>, %arg7: memref<32x512xbf16, #tpu.memory_space<vmem>>) attributes {dimension_semantics = [#tpu.dimension_semantics<parallel>, #tpu.dimension_semantics<parallel>], iteration_bounds = array<i64: 1, 1>, scalar_prefetch = 0 : i64, scratch_operands = 0 : i64, tpu.core_type = #tpu.core_type<tc>, window_params = [{transform_indices = @transform_0, window_bounds = array<i64: 32, 128>}, {transform_indices = @transform_1, window_bounds = array<i64: 128, 512>}, {transform_indices = @transform_2, window_bounds = array<i64: 32, 256>}, {transform_indices = @transform_3, window_bounds = array<i64: 256, 512>}, {transform_indices = @transform_4, window_bounds = array<i64: 1, 512>}, {transform_indices = @transform_5, window_bounds = array<i64: 32, 512>}]} {
    %c0 = arith.constant 0 : index
    %c0_0 = arith.constant 0 : index
    %0 = vector.load %arg2[%c0, %c0_0] : memref<32x128xbf16, #tpu.memory_space<vmem>>, vector<32x128xbf16>
    %c0_1 = arith.constant 0 : index
    %c0_2 = arith.constant 0 : index
    %1 = vector.load %arg3[%c0_1, %c0_2] : memref<128x512xbf16, #tpu.memory_space<vmem>>, vector<128x512xbf16>
    %cst = arith.constant dense<0.000000e+00> : vector<32x512xf32>
    %2 = tpu.matmul %0, %1, %cst {dimension_numbers = #tpu.dot_dimension_numbers<[1], [0], [0], [1], [0, 0, 1, 1], [], []>} : vector<32x128xbf16>, vector<128x512xbf16>, vector<32x512xf32> -> vector<32x512xf32>
    %c0_3 = arith.constant 0 : index
    %c0_4 = arith.constant 0 : index
    %3 = vector.load %arg4[%c0_3, %c0_4] : memref<32x256xbf16, #tpu.memory_space<vmem>>, vector<32x256xbf16>
    %c0_5 = arith.constant 0 : index
    %c0_6 = arith.constant 0 : index
    %4 = vector.load %arg5[%c0_5, %c0_6] : memref<256x512xbf16, #tpu.memory_space<vmem>>, vector<256x512xbf16>
    %cst_7 = arith.constant dense<0.000000e+00> : vector<32x512xf32>
    %5 = tpu.matmul %3, %4, %cst_7 {dimension_numbers = #tpu.dot_dimension_numbers<[1], [0], [0], [1], [0, 0, 1, 1], [], []>} : vector<32x256xbf16>, vector<256x512xbf16>, vector<32x512xf32> -> vector<32x512xf32>
    %6 = arith.addf %2, %5 : vector<32x512xf32>
    %c0_8 = arith.constant 0 : index
    %c0_9 = arith.constant 0 : index
    %7 = vector.load %arg6[%c0_8, %c0_9] : memref<1x512xf32, #tpu.memory_space<vmem>>, vector<1x512xf32>
    %8 = vector.broadcast %7 : vector<1x512xf32> to vector<32x512xf32>
    %9 = arith.addf %6, %8 : vector<32x512xf32>
    %cst_10 = arith.constant 0.000000e+00 : f32
    %10 = vector.broadcast %cst_10 : f32 to vector<32x512xf32>
    %11 = arith.maximumf %9, %10 : vector<32x512xf32>
    %12 = arith.truncf %11 : vector<32x512xf32> to vector<32x512xbf16>
    %c0_11 = arith.constant 0 : index
    %c0_12 = arith.constant 0 : index
    %13 = vector.load %arg7[%c0_11, %c0_12] : memref<32x512xbf16, #tpu.memory_space<vmem>>, vector<32x512xbf16>
    tpu.vector_store %arg7[%c0_11, %c0_12], %12 {strides = array<i32>} : memref<32x512xbf16, #tpu.memory_space<vmem>>, vector<32x512xbf16>,
    return
  }
  func.func @transform_0(%arg0: i32, %arg1: i32) -> (i32, i32) {
    %c0_i32 = arith.constant 0 : i32
    %c0_i32_0 = arith.constant 0 : i32
    return %arg0, %c0_i32 : i32, i32
  }
  func.func @transform_1(%arg0: i32, %arg1: i32) -> (i32, i32) {
    %c0_i32 = arith.constant 0 : i32
    %c0_i32_0 = arith.constant 0 : i32
    return %c0_i32, %arg1 : i32, i32
  }
  func.func @transform_2(%arg0: i32, %arg1: i32) -> (i32, i32) {
    %c0_i32 = arith.constant 0 : i32
    %c0_i32_0 = arith.constant 0 : i32
    return %arg0, %c0_i32 : i32, i32
  }
  func.func @transform_3(%arg0: i32, %arg1: i32) -> (i32, i32) {
    %c0_i32 = arith.constant 0 : i32
    %c0_i32_0 = arith.constant 0 : i32
    return %c0_i32, %arg1 : i32, i32
  }
  func.func @transform_4(%arg0: i32, %arg1: i32) -> (i32, i32) {
    %c0_i32 = arith.constant 0 : i32
    %c0_i32_0 = arith.constant 0 : i32
    return %c0_i32, %arg1 : i32, i32
  }
  func.func @transform_5(%arg0: i32, %arg1: i32) -> (i32, i32) {
    %c0_i32 = arith.constant 0 : i32
    return %arg0, %arg1 : i32, i32
  }
}

module attributes {stable_mosaic.version = 11 : i64} {
  func.func @_mm_bias_kernel(%arg0: i32, %arg1: i32, %arg2: memref<32x512xbf16, #tpu.memory_space<vmem>>, %arg3: memref<512x256xbf16, #tpu.memory_space<vmem>>, %arg4: memref<1x256xf32, #tpu.memory_space<vmem>>, %arg5: memref<32x256xbf16, #tpu.memory_space<vmem>>) attributes {dimension_semantics = [#tpu.dimension_semantics<parallel>, #tpu.dimension_semantics<parallel>], iteration_bounds = array<i64: 1, 1>, scalar_prefetch = 0 : i64, scratch_operands = 0 : i64, tpu.core_type = #tpu.core_type<tc>, window_params = [{transform_indices = @transform_0, window_bounds = array<i64: 32, 512>}, {transform_indices = @transform_1, window_bounds = array<i64: 512, 256>}, {transform_indices = @transform_2, window_bounds = array<i64: 1, 256>}, {transform_indices = @transform_3, window_bounds = array<i64: 32, 256>}]} {
    %c0 = arith.constant 0 : index
    %c0_0 = arith.constant 0 : index
    %0 = vector.load %arg2[%c0, %c0_0] : memref<32x512xbf16, #tpu.memory_space<vmem>>, vector<32x512xbf16>
    %c0_1 = arith.constant 0 : index
    %c0_2 = arith.constant 0 : index
    %1 = vector.load %arg3[%c0_1, %c0_2] : memref<512x256xbf16, #tpu.memory_space<vmem>>, vector<512x256xbf16>
    %cst = arith.constant dense<0.000000e+00> : vector<32x256xf32>
    %2 = tpu.matmul %0, %1, %cst {dimension_numbers = #tpu.dot_dimension_numbers<[1], [0], [0], [1], [0, 0, 1, 1], [], []>} : vector<32x512xbf16>, vector<512x256xbf16>, vector<32x256xf32> -> vector<32x256xf32>
    %c0_3 = arith.constant 0 : index
    %c0_4 = arith.constant 0 : index
    %3 = vector.load %arg4[%c0_3, %c0_4] : memref<1x256xf32, #tpu.memory_space<vmem>>, vector<1x256xf32>
    %4 = vector.broadcast %3 : vector<1x256xf32> to vector<32x256xf32>
    %5 = arith.addf %2, %4 : vector<32x256xf32>
    %cst_5 = arith.constant 0.000000e+00 : f32
    %6 = vector.broadcast %cst_5 : f32 to vector<32x256xf32>
    %7 = arith.maximumf %5, %6 : vector<32x256xf32>
    %8 = arith.truncf %7 : vector<32x256xf32> to vector<32x256xbf16>
    %c0_6 = arith.constant 0 : index
    %c0_7 = arith.constant 0 : index
    %9 = vector.load %arg5[%c0_6, %c0_7] : memref<32x256xbf16, #tpu.memory_space<vmem>>, vector<32x256xbf16>
    tpu.vector_store %arg5[%c0_6, %c0_7], %8 {strides = array<i32>} : memref<32x256xbf16, #tpu.memory_space<vmem>>, vector<32x256xbf16>,
    return
  }
  func.func @transform_0(%arg0: i32, %arg1: i32) -> (i32, i32) {
    %c0_i32 = arith.constant 0 : i32
    %c0_i32_0 = arith.constant 0 : i32
    return %arg0, %c0_i32 : i32, i32
  }
  func.func @transform_1(%arg0: i32, %arg1: i32) -> (i32, i32) {
    %c0_i32 = arith.constant 0 : i32
    %c0_i32_0 = arith.constant 0 : i32
    return %c0_i32, %arg1 : i32, i32
  }
  func.func @transform_2(%arg0: i32, %arg1: i32) -> (i32, i32) {
    %c0_i32 = arith.constant 0 : i32
    %c0_i32_0 = arith.constant 0 : i32
    return %c0_i32, %arg1 : i32, i32
  }
  func.func @transform_3(%arg0: i32, %arg1: i32) -> (i32, i32) {
    %c0_i32 = arith.constant 0 : i32
    return %arg0, %arg1 : i32, i32
  }
}

module attributes {stable_mosaic.version = 11 : i64} {
  func.func @_mm_bias_kernel(%arg0: i32, %arg1: i32, %arg2: memref<8x2304xbf16, #tpu.memory_space<vmem>>, %arg3: memref<2304x256xbf16, #tpu.memory_space<vmem>>, %arg4: memref<1x256xf32, #tpu.memory_space<vmem>>, %arg5: memref<8x256xbf16, #tpu.memory_space<vmem>>) attributes {dimension_semantics = [#tpu.dimension_semantics<parallel>, #tpu.dimension_semantics<parallel>], iteration_bounds = array<i64: 1, 1>, scalar_prefetch = 0 : i64, scratch_operands = 0 : i64, tpu.core_type = #tpu.core_type<tc>, window_params = [{transform_indices = @transform_0, window_bounds = array<i64: 8, 2304>}, {transform_indices = @transform_1, window_bounds = array<i64: 2304, 256>}, {transform_indices = @transform_2, window_bounds = array<i64: 1, 256>}, {transform_indices = @transform_3, window_bounds = array<i64: 8, 256>}]} {
    %c0 = arith.constant 0 : index
    %c0_0 = arith.constant 0 : index
    %0 = vector.load %arg2[%c0, %c0_0] : memref<8x2304xbf16, #tpu.memory_space<vmem>>, vector<8x2304xbf16>
    %c0_1 = arith.constant 0 : index
    %c0_2 = arith.constant 0 : index
    %1 = vector.load %arg3[%c0_1, %c0_2] : memref<2304x256xbf16, #tpu.memory_space<vmem>>, vector<2304x256xbf16>
    %cst = arith.constant dense<0.000000e+00> : vector<8x256xf32>
    %2 = tpu.matmul %0, %1, %cst {dimension_numbers = #tpu.dot_dimension_numbers<[1], [0], [0], [1], [0, 0, 1, 1], [], []>} : vector<8x2304xbf16>, vector<2304x256xbf16>, vector<8x256xf32> -> vector<8x256xf32>
    %c0_3 = arith.constant 0 : index
    %c0_4 = arith.constant 0 : index
    %3 = vector.load %arg4[%c0_3, %c0_4] : memref<1x256xf32, #tpu.memory_space<vmem>>, vector<1x256xf32>
    %4 = vector.broadcast %3 : vector<1x256xf32> to vector<8x256xf32>
    %5 = arith.addf %2, %4 : vector<8x256xf32>
    %cst_5 = arith.constant 0.000000e+00 : f32
    %6 = vector.broadcast %cst_5 : f32 to vector<8x256xf32>
    %7 = arith.maximumf %5, %6 : vector<8x256xf32>
    %8 = arith.truncf %7 : vector<8x256xf32> to vector<8x256xbf16>
    %c0_6 = arith.constant 0 : index
    %c0_7 = arith.constant 0 : index
    %9 = vector.load %arg5[%c0_6, %c0_7] : memref<8x256xbf16, #tpu.memory_space<vmem>>, vector<8x256xbf16>
    tpu.vector_store %arg5[%c0_6, %c0_7], %8 {strides = array<i32>} : memref<8x256xbf16, #tpu.memory_space<vmem>>, vector<8x256xbf16>,
    return
  }
  func.func @transform_0(%arg0: i32, %arg1: i32) -> (i32, i32) {
    %c0_i32 = arith.constant 0 : i32
    %c0_i32_0 = arith.constant 0 : i32
    return %arg0, %c0_i32 : i32, i32
  }
  func.func @transform_1(%arg0: i32, %arg1: i32) -> (i32, i32) {
    %c0_i32 = arith.constant 0 : i32
    %c0_i32_0 = arith.constant 0 : i32
    return %c0_i32, %arg1 : i32, i32
  }
  func.func @transform_2(%arg0: i32, %arg1: i32) -> (i32, i32) {
    %c0_i32 = arith.constant 0 : i32
    %c0_i32_0 = arith.constant 0 : i32
    return %c0_i32, %arg1 : i32, i32
  }
  func.func @transform_3(%arg0: i32, %arg1: i32) -> (i32, i32) {
    %c0_i32 = arith.constant 0 : i32
    return %arg0, %arg1 : i32, i32
  }
}

module attributes {stable_mosaic.version = 11 : i64} {
  func.func @_bottleneck_tail_kernel(%arg0: i32, %arg1: i32, %arg2: memref<8x256xbf16, #tpu.memory_space<vmem>>, %arg3: memref<256x1024xbf16, #tpu.memory_space<vmem>>, %arg4: memref<8x512xbf16, #tpu.memory_space<vmem>>, %arg5: memref<512x1024xbf16, #tpu.memory_space<vmem>>, %arg6: memref<1x1024xf32, #tpu.memory_space<vmem>>, %arg7: memref<8x1024xbf16, #tpu.memory_space<vmem>>) attributes {dimension_semantics = [#tpu.dimension_semantics<parallel>, #tpu.dimension_semantics<parallel>], iteration_bounds = array<i64: 1, 1>, scalar_prefetch = 0 : i64, scratch_operands = 0 : i64, tpu.core_type = #tpu.core_type<tc>, window_params = [{transform_indices = @transform_0, window_bounds = array<i64: 8, 256>}, {transform_indices = @transform_1, window_bounds = array<i64: 256, 1024>}, {transform_indices = @transform_2, window_bounds = array<i64: 8, 512>}, {transform_indices = @transform_3, window_bounds = array<i64: 512, 1024>}, {transform_indices = @transform_4, window_bounds = array<i64: 1, 1024>}, {transform_indices = @transform_5, window_bounds = array<i64: 8, 1024>}]} {
    %c0 = arith.constant 0 : index
    %c0_0 = arith.constant 0 : index
    %0 = vector.load %arg2[%c0, %c0_0] : memref<8x256xbf16, #tpu.memory_space<vmem>>, vector<8x256xbf16>
    %c0_1 = arith.constant 0 : index
    %c0_2 = arith.constant 0 : index
    %1 = vector.load %arg3[%c0_1, %c0_2] : memref<256x1024xbf16, #tpu.memory_space<vmem>>, vector<256x1024xbf16>
    %cst = arith.constant dense<0.000000e+00> : vector<8x1024xf32>
    %2 = tpu.matmul %0, %1, %cst {dimension_numbers = #tpu.dot_dimension_numbers<[1], [0], [0], [1], [0, 0, 1, 1], [], []>} : vector<8x256xbf16>, vector<256x1024xbf16>, vector<8x1024xf32> -> vector<8x1024xf32>
    %c0_3 = arith.constant 0 : index
    %c0_4 = arith.constant 0 : index
    %3 = vector.load %arg4[%c0_3, %c0_4] : memref<8x512xbf16, #tpu.memory_space<vmem>>, vector<8x512xbf16>
    %c0_5 = arith.constant 0 : index
    %c0_6 = arith.constant 0 : index
    %4 = vector.load %arg5[%c0_5, %c0_6] : memref<512x1024xbf16, #tpu.memory_space<vmem>>, vector<512x1024xbf16>
    %cst_7 = arith.constant dense<0.000000e+00> : vector<8x1024xf32>
    %5 = tpu.matmul %3, %4, %cst_7 {dimension_numbers = #tpu.dot_dimension_numbers<[1], [0], [0], [1], [0, 0, 1, 1], [], []>} : vector<8x512xbf16>, vector<512x1024xbf16>, vector<8x1024xf32> -> vector<8x1024xf32>
    %6 = arith.addf %2, %5 : vector<8x1024xf32>
    %c0_8 = arith.constant 0 : index
    %c0_9 = arith.constant 0 : index
    %7 = vector.load %arg6[%c0_8, %c0_9] : memref<1x1024xf32, #tpu.memory_space<vmem>>, vector<1x1024xf32>
    %8 = vector.broadcast %7 : vector<1x1024xf32> to vector<8x1024xf32>
    %9 = arith.addf %6, %8 : vector<8x1024xf32>
    %cst_10 = arith.constant 0.000000e+00 : f32
    %10 = vector.broadcast %cst_10 : f32 to vector<8x1024xf32>
    %11 = arith.maximumf %9, %10 : vector<8x1024xf32>
    %12 = arith.truncf %11 : vector<8x1024xf32> to vector<8x1024xbf16>
    %c0_11 = arith.constant 0 : index
    %c0_12 = arith.constant 0 : index
    %13 = vector.load %arg7[%c0_11, %c0_12] : memref<8x1024xbf16, #tpu.memory_space<vmem>>, vector<8x1024xbf16>
    tpu.vector_store %arg7[%c0_11, %c0_12], %12 {strides = array<i32>} : memref<8x1024xbf16, #tpu.memory_space<vmem>>, vector<8x1024xbf16>,
    return
  }
  func.func @transform_0(%arg0: i32, %arg1: i32) -> (i32, i32) {
    %c0_i32 = arith.constant 0 : i32
    %c0_i32_0 = arith.constant 0 : i32
    return %arg0, %c0_i32 : i32, i32
  }
  func.func @transform_1(%arg0: i32, %arg1: i32) -> (i32, i32) {
    %c0_i32 = arith.constant 0 : i32
    %c0_i32_0 = arith.constant 0 : i32
    return %c0_i32, %arg1 : i32, i32
  }
  func.func @transform_2(%arg0: i32, %arg1: i32) -> (i32, i32) {
    %c0_i32 = arith.constant 0 : i32
    %c0_i32_0 = arith.constant 0 : i32
    return %arg0, %c0_i32 : i32, i32
  }
  func.func @transform_3(%arg0: i32, %arg1: i32) -> (i32, i32) {
    %c0_i32 = arith.constant 0 : i32
    %c0_i32_0 = arith.constant 0 : i32
    return %c0_i32, %arg1 : i32, i32
  }
  func.func @transform_4(%arg0: i32, %arg1: i32) -> (i32, i32) {
    %c0_i32 = arith.constant 0 : i32
    %c0_i32_0 = arith.constant 0 : i32
    return %c0_i32, %arg1 : i32, i32
  }
  func.func @transform_5(%arg0: i32, %arg1: i32) -> (i32, i32) {
    %c0_i32 = arith.constant 0 : i32
    return %arg0, %arg1 : i32, i32
  }
}

</mosaic_0001>

<llo_original>
// kernel: resnet_common_branch.13
$region0: #{resnet_common_branch.13}
  #allocation0 [shape = 'u32[]', space=smem, size = 0x4, offset = 0x4, fixed_abs, tag = 'smem constant byte address 0x4 - core index']
  #allocation1 [shape = 'u32[144,128]{1,0:T(1,128)}', space=vmem, size = 0x12000, scoped, tag = 'internal scratch']
  %s0 = inlined_call_operand.vmem [shape: bf16[2,8,9,128], index: 0, kind: input, shape index: {}]
  %s1 = inlined_call_operand.vmem [shape: bf16[2,8,9,128], index: 1, kind: input, shape index: {}]
  %s2 = inlined_call_operand.vmem [shape: bf16[2,8,8,128], index: 2, kind: output, shape index: {}]
  %s3 = sld [smem:[#allocation0]]
  $region41: #{resnet_common_branch.13} parent=0
    _
  %s5 = ssub.s32 1, %s3
  %s6 = scalar_select 0, %s5, %s3
  loop: start=0, step=1, limit=4
  $region2: #{resnet_common_branch.13} parent=0 // loop_pre_header
    _
  $region3: #{resnet_common_branch.13} parent=0 // loop_header
    %s8 = sphi 0, %s12
    %p9 = scmp.ge.s32.totalorder %s8, 4
    %s18 = sphi 0, %s20
    %s21 = sphi 0, %s18
    %s22 = sphi 0, %s21
    %s38 = sphi 0, %s22
    %s44 = sphi 0, %s46
    %s47 = sphi 0, %s44
    %s48 = sphi 0, %s47
    %s64 = sphi 0, %s48
    %s70 = sphi 0, %s72
    %s73 = sphi 0, %s70
    %s74 = sphi 0, %s73
    %s90 = sphi 0, %s74
  $region4: #{resnet_common_branch.13} parent=0 // loop_header_branch
    %11 = sbr.rel (%p9) target = $region8
  $region5: #{resnet_common_branch.13} parent=0 // loop_body
    %s13 = ssub.s32 %s8, 1
    %s14 = ssub.s32 %s8, 2
    %s15 = sadd.s32 %s8, 1
    %s16 = ssub.s32 %s8, %s15
    %p17 = scmp.eq.s32.totalorder %s16, 0
    %s19 = sadd.s32 %s18, 1
    %s20 = scalar_select %p17, %s18, %s19
    %p23 = pneg %p17
    %p24 = scmp.eq.s32.totalorder %s8, 1
    %p25 = por %p23, %p24
    %p26 = scmp.ne.s32.totalorder %s18, %s21
    %p27 = scmp.eq.s32.totalorder %s8, 0
    %p28 = por %p26, %p27
    %p29 = scmp.ne.s32.totalorder %s18, %s21
    %p30 = scmp.eq.s32.totalorder %s13, 1
    %p31 = por %p29, %p30
    %p32 = scmp.ne.s32.totalorder %s21, %s22
    %p33 = scmp.eq.s32.totalorder %s13, 0
    %p34 = por %p32, %p33
    %p35 = scmp.ne.s32.totalorder %s21, %s22
    %p36 = scmp.eq.s32.totalorder %s14, 1
    %p37 = por %p35, %p36
    %p39 = scmp.ne.s32.totalorder %s22, %s38
    %p40 = scmp.eq.s32.totalorder %s14, 0
    %p41 = por %p39, %p40
    %s42 = ssub.s32 %s8, %s15
    %p43 = scmp.eq.s32.totalorder %s42, 0
    %s45 = sadd.s32 %s44, 1
    %s46 = scalar_select %p43, %s44, %s45
    %p49 = pneg %p43
    %p50 = scmp.eq.s32.totalorder %s8, 1
    %p51 = por %p49, %p50
    %p52 = scmp.ne.s32.totalorder %s44, %s47
    %p53 = scmp.eq.s32.totalorder %s8, 0
    %p54 = por %p52, %p53
    %p55 = scmp.ne.s32.totalorder %s44, %s47
    %p56 = scmp.eq.s32.totalorder %s13, 1
    %p57 = por %p55, %p56
    %p58 = scmp.ne.s32.totalorder %s47, %s48
    %p59 = scmp.eq.s32.totalorder %s13, 0
    %p60 = por %p58, %p59
    %p61 = scmp.ne.s32.totalorder %s47, %s48
    %p62 = scmp.eq.s32.totalorder %s14, 1
    %p63 = por %p61, %p62
    %p65 = scmp.ne.s32.totalorder %s48, %s64
    %p66 = scmp.eq.s32.totalorder %s14, 0
    %p67 = por %p65, %p66
    %s68 = ssub.s32 %s8, %s15
    %p69 = scmp.eq.s32.totalorder %s68, 0
    %s71 = sadd.s32 %s70, 1
    %s72 = scalar_select %p69, %s70, %s71
    %p75 = pneg %p69
    %p76 = scmp.eq.s32.totalorder %s8, 1
    %p77 = por %p75, %p76
    %p78 = scmp.ne.s32.totalorder %s70, %s73
    %p79 = scmp.eq.s32.totalorder %s8, 0
    %p80 = por %p78, %p79
    %p81 = scmp.ne.s32.totalorder %s70, %s73
    %p82 = scmp.eq.s32.totalorder %s13, 1
    %p83 = por %p81, %p82
    %p84 = scmp.ne.s32.totalorder %s73, %s74
    %p85 = scmp.eq.s32.totalorder %s13, 0
    %p86 = por %p84, %p85
    %p87 = scmp.ne.s32.totalorder %s73, %s74
    %p88 = scmp.eq.s32.totalorder %s14, 1
    %p89 = por %p87, %p88
    %p91 = scmp.ne.s32.totalorder %s74, %s90
    %p92 = scmp.eq.s32.totalorder %s14, 0
    %p93 = por %p91, %p92
    %p94 = scmp.le.s32.totalorder 1, %s8
    %p95 = scmp.lt.s32.totalorder %s8, 3
    %p96 = pnand %p94, %p95
    %p97 = pneg %p96
    // Predicated region
    $region9: #{resnet_common_branch.13} parent=5 // pred_check
      _
    $region10: #{resnet_common_branch.13} parent=5 // pred_check_branch
      %99 = sbr.rel (%p96) target = $region12
    $region11: #{resnet_common_branch.13} parent=5 // pred_region
      %s100 = ssub.s32 %s8, 1
    $region12: #{resnet_common_branch.13} parent=5 // pred_fallthru
      _
    %p101 = scmp.lt.s32.totalorder %s8, 2
    // Predicated region
    $region13: #{resnet_common_branch.13} parent=5 // pred_check
      %p102 = pneg %p101
    $region14: #{resnet_common_branch.13} parent=5 // pred_check_branch
      %104 = sbr.rel (%p102) target = $region16
    $region15: #{resnet_common_branch.13} parent=5 // pred_region
      // Predicated region
      $region17: #{resnet_common_branch.13} parent=15 // pred_check
        %p105 = pneg %p28
      $region18: #{resnet_common_branch.13} parent=15 // pred_check_branch
        %107 = sbr.rel (%p105) target = $region20
      $region19: #{resnet_common_branch.13} parent=15 // pred_region
        %p108 = scmp.lt.s32.totalorder %s8, 1
        %s109 = scalar_select %p108, %s8, 1
        %s110 = smul.addr %s109, 16
        %s111 = smul.addr %s110, 4
        %s112 = scalar_lea.vmem %s0, %s111
      $region20: #{resnet_common_branch.13} parent=15 // pred_fallthru
        _
      // Predicated region
      $region21: #{resnet_common_branch.13} parent=15 // pred_check
        %p113 = pneg %p54
      $region22: #{resnet_common_branch.13} parent=15 // pred_check_branch
        %115 = sbr.rel (%p113) target = $region24
      $region23: #{resnet_common_branch.13} parent=15 // pred_region
        %p116 = scmp.lt.s32.totalorder %s8, 1
        %s117 = scalar_select %p116, %s8, 1
        %s118 = smul.addr %s117, 16
        %s119 = smul.addr %s118, 4
        %s120 = scalar_lea.vmem %s1, %s119
      $region24: #{resnet_common_branch.13} parent=15 // pred_fallthru
        _
    $region16: #{resnet_common_branch.13} parent=5 // pred_fallthru
      _
    %p121 = scmp.le.s32.totalorder 1, %s8
    %p122 = scmp.lt.s32.totalorder %s8, 3
    %p123 = pnand %p121, %p122
    %p124 = pneg %p123
    // Predicated region
    $region25: #{resnet_common_branch.13} parent=5 // pred_check
      _
    $region26: #{resnet_common_branch.13} parent=5 // pred_check_branch
      %126 = sbr.rel (%p123) target = $region28
    $region27: #{resnet_common_branch.13} parent=5 // pred_region
      %s127 = ssub.s32 %s8, 1
      %p128 = scmp.lt.s32.totalorder %s13, 1
      %s129 = scalar_select %p128, %s13, 1
      %s130 = smul.addr %s129, 16
      %s131 = smul.addr %s130, 4
      %s132 = scalar_lea.vmem %s0, %s131
      %p133 = pneg %p34
      %p134 = pneg %p31
      %p135 = scmp.lt.s32.totalorder %s13, 1
      %s136 = scalar_select %p135, %s13, 1
      %s137 = smul.addr %s136, 16
      %s138 = smul.addr %s137, 4
      %s139 = scalar_lea.vmem %s1, %s138
      %p140 = pneg %p60
      %p141 = pneg %p57
      %p142 = pneg %p86
      %p143 = pneg %p83
      %p144 = scmp.lt.s32.totalorder %s13, 1
      %s145 = scalar_select %p144, %s13, 1
      %s146 = smul.addr %s145, 8
      %s147 = smul.addr %s146, 4
      %s148 = scalar_lea.vmem %s2, %s147
      %p149 = scmp.lt.s32.totalorder %s13, 1
      %s150 = scalar_select %p149, %s13, 1
      %s151 = smul.addr %s150, 16
      %s152 = smul.addr %s151, 4
      %s153 = scalar_lea.vmem %s0, %s152
      %p154 = scmp.lt.s32.totalorder %s13, 1
      %s155 = scalar_select %p154, %s13, 1
      %s156 = smul.addr %s155, 16
      %s157 = smul.addr %s156, 4
      %s158 = scalar_lea.vmem %s1, %s157
      %p159 = scmp.lt.s32.totalorder %s13, 1
      %s160 = scalar_select %p159, %s13, 1
      %s161 = smul.addr %s160, 8
      %s162 = smul.addr %s161, 4
      %s163 = scalar_lea.vmem %s2, %s162
      %v164 = vld [vmem:[%s153] sm:$0xf]
      %v165 = vld [vmem:[%s153 + $0x8] sm:$0xf]
      %v166 = vld [vmem:[%s153 + $0x10] sm:$0xf]
      %v167 = vld [vmem:[%s153 + $0x18] sm:$0xf]
      %v168 = vld [vmem:[%s153 + $0x20] sm:$0xf]
      %v169 = vld [vmem:[%s153 + $0x28] sm:$0xf]
      %v170 = vld [vmem:[%s153 + $0x30] sm:$0xf]
      %v171 = vld [vmem:[%s153 + $0x38] sm:$0xf]
      %v172 = vld [vmem:[%s158] sm:$0xf]
      %v173 = vld [vmem:[%s158 + $0x8] sm:$0xf]
      %v174 = vld [vmem:[%s158 + $0x10] sm:$0xf]
      %v175 = vld [vmem:[%s158 + $0x18] sm:$0xf]
      %v176 = vld [vmem:[%s158 + $0x20] sm:$0xf]
      %v177 = vld [vmem:[%s158 + $0x28] sm:$0xf]
      %v178 = vld [vmem:[%s158 + $0x30] sm:$0xf]
      %v179 = vld [vmem:[%s158 + $0x38] sm:$0xf]
      %v180 = vmax.bf16 %v164, %v172
      %v181 = vmax.bf16 %v165, %v173
      %v182 = vmax.bf16 %v166, %v174
      %v183 = vmax.bf16 %v167, %v175
      %v184 = vmax.bf16 %v168, %v176
      %v185 = vmax.bf16 %v169, %v177
      %v186 = vmax.bf16 %v170, %v178
      %v187 = vmax.bf16 %v171, %v179
      %v188 = vld [vmem:[%s153 + $0x4] sm:$0x1]
      %v189 = vld [vmem:[%s153 + $0xc] sm:$0x1]
      %v190 = vld [vmem:[%s153 + $0x14] sm:$0x1]
      %v191 = vld [vmem:[%s153 + $0x1c] sm:$0x1]
      %v192 = vld [vmem:[%s153 + $0x24] sm:$0x1]
      %v193 = vld [vmem:[%s153 + $0x2c] sm:$0x1]
      %v194 = vld [vmem:[%s153 + $0x34] sm:$0x1]
      %v195 = vld [vmem:[%s153 + $0x3c] sm:$0x1]
      %vm196 = vsmask.f32 3328
      %vm197 = vsmask.f32 7440
      %vm198 = vmor %vm196, %vm197
      %v200 = vshrl.u32 %v164, 16
      %v202 = vrot.slane %v200, 4
      %v203 = vshll.u32 %v164, 16
      %v205 = vrot.slane %v203, 5
      %v206 = vor.u32 %v202, %v205
      %v207 = vrot.slane %v206, 4
      %v209 = vshll.u32 %v188, 16
      %v211 = vrot.slane %v209, 5
      %v212 = vsel %vm198, %v207, %v211
      %v214 = vshrl.u32 %v165, 16
      %v216 = vrot.slane %v214, 4
      %v217 = vshll.u32 %v165, 16
      %v219 = vrot.slane %v217, 5
      %v220 = vor.u32 %v216, %v219
      %v221 = vrot.slane %v220, 4
      %v223 = vshll.u32 %v189, 16
      %v225 = vrot.slane %v223, 5
      %v226 = vsel %vm198, %v221, %v225
      %v228 = vshrl.u32 %v166, 16
      %v230 = vrot.slane %v228, 4
      %v231 = vshll.u32 %v166, 16
      %v233 = vrot.slane %v231, 5
      %v234 = vor.u32 %v230, %v233
      %v235 = vrot.slane %v234, 4
      %v237 = vshll.u32 %v190, 16
      %v239 = vrot.slane %v237, 5
      %v240 = vsel %vm198, %v235, %v239
      %v242 = vshrl.u32 %v167, 16
      %v244 = vrot.slane %v242, 4
      %v245 = vshll.u32 %v167, 16
      %v247 = vrot.slane %v245, 5
      %v248 = vor.u32 %v244, %v247
      %v249 = vrot.slane %v248, 4
      %v251 = vshll.u32 %v191, 16
      %v253 = vrot.slane %v251, 5
      %v254 = vsel %vm198, %v249, %v253
      %v256 = vshrl.u32 %v168, 16
      %v258 = vrot.slane %v256, 4
      %v259 = vshll.u32 %v168, 16
      %v261 = vrot.slane %v259, 5
      %v262 = vor.u32 %v258, %v261
      %v263 = vrot.slane %v262, 4
      %v265 = vshll.u32 %v192, 16
      %v267 = vrot.slane %v265, 5
      %v268 = vsel %vm198, %v263, %v267
      %v270 = vshrl.u32 %v169, 16
      %v272 = vrot.slane %v270, 4
      %v273 = vshll.u32 %v169, 16
      %v275 = vrot.slane %v273, 5
      %v276 = vor.u32 %v272, %v275
      %v277 = vrot.slane %v276, 4
      %v279 = vshll.u32 %v193, 16
      %v281 = vrot.slane %v279, 5
      %v282 = vsel %vm198, %v277, %v281
      %v284 = vshrl.u32 %v170, 16
      %v286 = vrot.slane %v284, 4
      %v287 = vshll.u32 %v170, 16
      %v289 = vrot.slane %v287, 5
      %v290 = vor.u32 %v286, %v289
      %v291 = vrot.slane %v290, 4
      %v293 = vshll.u32 %v194, 16
      %v295 = vrot.slane %v293, 5
      %v296 = vsel %vm198, %v291, %v295
      %v298 = vshrl.u32 %v171, 16
      %v300 = vrot.slane %v298, 4
      %v301 = vshll.u32 %v171, 16
      %v303 = vrot.slane %v301, 5
      %v304 = vor.u32 %v300, %v303
      %v305 = vrot.slane %v304, 4
      %v307 = vshll.u32 %v195, 16
      %v309 = vrot.slane %v307, 5
      %v310 = vsel %vm198, %v305, %v309
      %v319 = vmax.bf16 %v180, %v212
      %v320 = vmax.bf16 %v181, %v226
      %v321 = vmax.bf16 %v182, %v240
      %v322 = vmax.bf16 %v183, %v254
      %v323 = vmax.bf16 %v184, %v268
      %v324 = vmax.bf16 %v185, %v282
      %v325 = vmax.bf16 %v186, %v296
      %v326 = vmax.bf16 %v187, %v310
      %327 = vst [vmem:[%s163] sm:$0xf] %v319
      %328 = vst [vmem:[%s163 + $0x4] sm:$0xf] %v320
      %329 = vst [vmem:[%s163 + $0x8] sm:$0xf] %v321
      %330 = vst [vmem:[%s163 + $0xc] sm:$0xf] %v322
      %331 = vst [vmem:[%s163 + $0x10] sm:$0xf] %v323
      %332 = vst [vmem:[%s163 + $0x14] sm:$0xf] %v324
      %333 = vst [vmem:[%s163 + $0x18] sm:$0xf] %v325
      %334 = vst [vmem:[%s163 + $0x1c] sm:$0xf] %v326
      %p335 = scmp.lt.s32.totalorder %s13, 1
      %s336 = scalar_select %p335, %s13, 1
      %s337 = smul.addr %s336, 8
      %s338 = smul.addr %s337, 4
      %s339 = scalar_lea.vmem %s2, %s338
      // Predicated region
      $region29: #{resnet_common_branch.13} parent=27 // pred_check
        %p340 = pneg %p83
      $region30: #{resnet_common_branch.13} parent=27 // pred_check_branch
        %342 = sbr.rel (%p340) target = $region32
      $region31: #{resnet_common_branch.13} parent=27 // pred_region
        _
      $region32: #{resnet_common_branch.13} parent=27 // pred_fallthru
        _
    $region28: #{resnet_common_branch.13} parent=5 // pred_fallthru
      _
    %p343 = scmp.le.s32.totalorder 2, %s8
    // Predicated region
    $region33: #{resnet_common_branch.13} parent=5 // pred_check
      %p344 = pneg %p343
    $region34: #{resnet_common_branch.13} parent=5 // pred_check_branch
      %346 = sbr.rel (%p344) target = $region36
    $region35: #{resnet_common_branch.13} parent=5 // pred_region
      %s347 = ssub.s32 %s8, 2
      // Predicated region
      $region37: #{resnet_common_branch.13} parent=35 // pred_check
        %p348 = pneg %p89
      $region38: #{resnet_common_branch.13} parent=35 // pred_check_branch
        %350 = sbr.rel (%p348) target = $region40
      $region39: #{resnet_common_branch.13} parent=35 // pred_region
        %p351 = scmp.lt.s32.totalorder %s14, 1
        %s352 = scalar_select %p351, %s14, 1
        %s353 = smul.addr %s352, 8
        %s354 = smul.addr %s353, 4
        %s355 = scalar_lea.vmem %s2, %s354
      $region40: #{resnet_common_branch.13} parent=35 // pred_fallthru
        _
    $region36: #{resnet_common_branch.13} parent=5 // pred_fallthru
      _
  $region6: #{resnet_common_branch.13} parent=0 // loop_footer
    %s12 = sadd.s32 1, %s8
  $region7: #{resnet_common_branch.13} parent=0 // loop_footer_branch
    %7 = sbr.rel target = $region3
  $region8: #{resnet_common_branch.13} parent=0 // loop_exit
    _

// kernel: resnet_common_branch.14
$region0: #{resnet_common_branch.14}
  #allocation0 [shape = 'u32[]', space=smem, size = 0x4, offset = 0x4, fixed_abs, tag = 'smem constant byte address 0x4 - core index']
  #allocation1 [shape = 'u32[144,128]{1,0:T(1,128)}', space=vmem, size = 0x12000, scoped, tag = 'internal scratch']
  %s0 = inlined_call_operand.vmem [shape: bf16[128,128], index: 0, kind: input, shape index: {}]
  %s1 = inlined_call_operand.vmem [shape: bf16[128,128], index: 1, kind: input, shape index: {}]
  %s2 = inlined_call_operand.vmem [shape: f32[1,128], index: 2, kind: input, shape index: {}]
  %s3 = inlined_call_operand.vmem [shape: bf16[128,128], index: 3, kind: output, shape index: {}]
  %s4 = sld [smem:[#allocation0]]
  $region22: #{resnet_common_branch.14} parent=0
    _
  %s6 = ssub.s32 1, %s4
  %s7 = scalar_select 0, %s6, %s4
  // Predicated region
  $region2: #{resnet_common_branch.14} parent=0 // pred_check
    _
  $region3: #{resnet_common_branch.14} parent=0 // pred_check_branch
    %9 = sbr.rel (0) target = $region5
  $region4: #{resnet_common_branch.14} parent=0 // pred_region
    _
  $region5: #{resnet_common_branch.14} parent=0 // pred_fallthru
    _
  // Predicated region
  $region6: #{resnet_common_branch.14} parent=0 // pred_check
    _
  $region7: #{resnet_common_branch.14} parent=0 // pred_check_branch
    %11 = sbr.rel (0) target = $region9
  $region8: #{resnet_common_branch.14} parent=0 // pred_region
    _
  $region9: #{resnet_common_branch.14} parent=0 // pred_fallthru
    _
  // Predicated region
  $region10: #{resnet_common_branch.14} parent=0 // pred_check
    _
  $region11: #{resnet_common_branch.14} parent=0 // pred_check_branch
    %13 = sbr.rel (0) target = $region13
  $region12: #{resnet_common_branch.14} parent=0 // pred_region
    _
  $region13: #{resnet_common_branch.14} parent=0 // pred_fallthru
    _
  %v15 = vld [vmem:[%s0] sm:$0xf]
  %v16 = vld [vmem:[%s0 + $0x4] sm:$0xf]
  %v17 = vld [vmem:[%s0 + $0x8] sm:$0xf]
  %v18 = vld [vmem:[%s0 + $0xc] sm:$0xf]
  %v19 = vld [vmem:[%s0 + $0x10] sm:$0xf]
  %v20 = vld [vmem:[%s0 + $0x14] sm:$0xf]
  %v21 = vld [vmem:[%s0 + $0x18] sm:$0xf]
  %v22 = vld [vmem:[%s0 + $0x1c] sm:$0xf]
  %v23 = vld [vmem:[%s0 + $0x20] sm:$0xf]
  %v24 = vld [vmem:[%s0 + $0x24] sm:$0xf]
  %v25 = vld [vmem:[%s0 + $0x28] sm:$0xf]
  %v26 = vld [vmem:[%s0 + $0x2c] sm:$0xf]
  %v27 = vld [vmem:[%s0 + $0x30] sm:$0xf]
  %v28 = vld [vmem:[%s0 + $0x34] sm:$0xf]
  %v29 = vld [vmem:[%s0 + $0x38] sm:$0xf]
  %v30 = vld [vmem:[%s0 + $0x3c] sm:$0xf]
  %v31 = vld [vmem:[%s1] sm:$0xf]
  %v32 = vld [vmem:[%s1 + $0x4] sm:$0xf]
  %v33 = vld [vmem:[%s1 + $0x8] sm:$0xf]
  %v34 = vld [vmem:[%s1 + $0xc] sm:$0xf]
  %v35 = vld [vmem:[%s1 + $0x10] sm:$0xf]
  %v36 = vld [vmem:[%s1 + $0x14] sm:$0xf]
  %v37 = vld [vmem:[%s1 + $0x18] sm:$0xf]
  %v38 = vld [vmem:[%s1 + $0x1c] sm:$0xf]
  %v39 = vld [vmem:[%s1 + $0x20] sm:$0xf]
  %v40 = vld [vmem:[%s1 + $0x24] sm:$0xf]
  %v41 = vld [vmem:[%s1 + $0x28] sm:$0xf]
  %v42 = vld [vmem:[%s1 + $0x2c] sm:$0xf]
  %v43 = vld [vmem:[%s1 + $0x30] sm:$0xf]
  %v44 = vld [vmem:[%s1 + $0x34] sm:$0xf]
  %v45 = vld [vmem:[%s1 + $0x38] sm:$0xf]
  %v46 = vld [vmem:[%s1 + $0x3c] sm:$0xf]
  %v47 = vld [vmem:[%s2] sm:$0x1]
  %v49 = vlaneseq
  %v50 = vshrl.u32 %v49, 7
  %v51 = vsub.s32 0, %v50
  %v52 = vrot.slane %v47, %v51
  %v70 = vunpack.c.l.b16 %v15
  %v71 = vunpack.c.l.b16 %v16
  %v72 = vunpack.c.l.b16 %v17
  %v73 = vunpack.c.l.b16 %v18
  %v74 = vunpack.c.l.b16 %v19
  %v75 = vunpack.c.l.b16 %v20
  %v76 = vunpack.c.l.b16 %v21
  %v77 = vunpack.c.l.b16 %v22
  %v78 = vunpack.c.l.b16 %v23
  %v79 = vunpack.c.l.b16 %v24
  %v80 = vunpack.c.l.b16 %v25
  %v81 = vunpack.c.l.b16 %v26
  %v82 = vunpack.c.l.b16 %v27
  %v83 = vunpack.c.l.b16 %v28
  %v84 = vunpack.c.l.b16 %v29
  %v85 = vunpack.c.l.b16 %v30
  %v86 = vpack.c.b16 %v71, %v70
  %v87 = vpack.c.b16 %v73, %v72
  %v88 = vpack.c.b16 %v75, %v74
  %v89 = vpack.c.b16 %v77, %v76
  %v90 = vpack.c.b16 %v79, %v78
  %v91 = vpack.c.b16 %v81, %v80
  %v92 = vpack.c.b16 %v83, %v82
  %v93 = vpack.c.b16 %v85, %v84
  %v118 = vunpack.c.l.b16 %v31
  %v119 = vunpack.c.l.b16 %v32
  %v120 = vunpack.c.l.b16 %v33
  %v121 = vunpack.c.l.b16 %v34
  %v122 = vunpack.c.l.b16 %v35
  %v123 = vunpack.c.l.b16 %v36
  %v124 = vunpack.c.l.b16 %v37
  %v125 = vunpack.c.l.b16 %v38
  %v126 = vunpack.c.l.b16 %v39
  %v127 = vunpack.c.l.b16 %v40
  %v128 = vunpack.c.l.b16 %v41
  %v129 = vunpack.c.l.b16 %v42
  %v130 = vunpack.c.l.b16 %v43
  %v131 = vunpack.c.l.b16 %v44
  %v132 = vunpack.c.l.b16 %v45
  %v133 = vunpack.c.l.b16 %v46
  %v134 = vpack.c.b16 %v119, %v118
  %v135 = vpack.c.b16 %v121, %v120
  %v136 = vpack.c.b16 %v123, %v122
  %v137 = vpack.c.b16 %v125, %v124
  %v138 = vpack.c.b16 %v127, %v126
  %v139 = vpack.c.b16 %v129, %v128
  %v140 = vpack.c.b16 %v131, %v130
  %v141 = vpack.c.b16 %v133, %v132
  %150 = vmatprep.subr.bf16.mxu0 0
  %151 = vmatpush1.bf16.msra.mxu0 %v134
  %152 = vmatprep.subr.bf16.mxu0 0
  %153 = vmatpush1.bf16.msra.mxu0 %v135
  %154 = vmatprep.subr.bf16.mxu0 0
  %155 = vmatpush1.bf16.msra.mxu0 %v136
  %156 = vmatprep.subr.bf16.mxu0 0
  %157 = vmatpush1.bf16.msra.mxu0 %v137
  %158 = vmatprep.subr.bf16.mxu0 0
  %159 = vmatpush1.bf16.msra.mxu0 %v138
  %160 = vmatprep.subr.bf16.mxu0 0
  %161 = vmatpush1.bf16.msra.mxu0 %v139
  %162 = vmatprep.subr.bf16.mxu0 0
  %163 = vmatpush1.bf16.msra.mxu0 %v140
  %164 = vmatprep.subr.bf16.mxu0 0
  %165 = vmatpush1.bf16.msra.mxu0 %v141
  %166 = vmatprep.subr.bf16.mxu0 0
  %167 = vmatpush1.bf16.msra.mxu0 0
  %168 = vmatprep.subr.bf16.mxu0 0
  %169 = vmatpush1.bf16.msra.mxu0 0
  %170 = vmatprep.subr.bf16.mxu0 0
  %171 = vmatpush1.bf16.msra.mxu0 0
  %172 = vmatprep.subr.bf16.mxu0 0
  %173 = vmatpush1.bf16.msra.mxu0 0
  %174 = vmatprep.subr.bf16.mxu0 0
  %175 = vmatpush1.bf16.msra.mxu0 0
  %176 = vmatprep.subr.bf16.mxu0 0
  %177 = vmatpush1.bf16.msra.mxu0 0
  %178 = vmatprep.subr.bf16.mxu0 0
  %179 = vmatpush1.bf16.msra.mxu0 0
  %180 = vmatprep.subr.bf16.mxu0 0
  %181 = vmatpush1.bf16.msra.mxu0 0
  %182 = vmatprep.mubr.bf16.mxu0 0
  %183 = vmatmul.mubr.bf16.gmra.mrb[0].mxu0 %v86
  %v184 = vpop.f32.mrb[0].mxu0
  %v185 = vadd.f32 %v52, %v184
  %v186 = vpop.f32.mrb[0].mxu0
  %v187 = vpop.f32.mrb[0].mxu0
  %v188 = vadd.f32 %v52, %v187
  %v189 = vpop.f32.mrb[0].mxu0
  %190 = vmatprep.mubr.bf16.mxu0 0
  %191 = vmatmul.mubr.bf16.gmra.mrb[0].mxu0 %v87
  %v192 = vpop.f32.mrb[0].mxu0
  %v193 = vadd.f32 %v52, %v192
  %v194 = vpop.f32.mrb[0].mxu0
  %v195 = vpop.f32.mrb[0].mxu0
  %v196 = vadd.f32 %v52, %v195
  %v197 = vpop.f32.mrb[0].mxu0
  %198 = vmatprep.mubr.bf16.mxu0 0
  %199 = vmatmul.mubr.bf16.gmra.mrb[0].mxu0 %v88
  %v200 = vpop.f32.mrb[0].mxu0
  %v201 = vadd.f32 %v52, %v200
  %v202 = vpop.f32.mrb[0].mxu0
  %v203 = vpop.f32.mrb[0].mxu0
  %v204 = vadd.f32 %v52, %v203
  %v205 = vpop.f32.mrb[0].mxu0
  %206 = vmatprep.mubr.bf16.mxu0 0
  %207 = vmatmul.mubr.bf16.gmra.mrb[0].mxu0 %v89
  %v208 = vpop.f32.mrb[0].mxu0
  %v209 = vadd.f32 %v52, %v208
  %v210 = vpop.f32.mrb[0].mxu0
  %v211 = vpop.f32.mrb[0].mxu0
  %v212 = vadd.f32 %v52, %v211
  %v213 = vpop.f32.mrb[0].mxu0
  %214 = vmatprep.mubr.bf16.mxu0 0
  %215 = vmatmul.mubr.bf16.gmra.mrb[0].mxu0 %v90
  %v216 = vpop.f32.mrb[0].mxu0
  %v217 = vadd.f32 %v52, %v216
  %v218 = vpop.f32.mrb[0].mxu0
  %v219 = vpop.f32.mrb[0].mxu0
  %v220 = vadd.f32 %v52, %v219
  %v221 = vpop.f32.mrb[0].mxu0
  %222 = vmatprep.mubr.bf16.mxu0 0
  %223 = vmatmul.mubr.bf16.gmra.mrb[0].mxu0 %v91
  %v224 = vpop.f32.mrb[0].mxu0
  %v225 = vadd.f32 %v52, %v224
  %v226 = vpop.f32.mrb[0].mxu0
  %v227 = vpop.f32.mrb[0].mxu0
  %v228 = vadd.f32 %v52, %v227
  %v229 = vpop.f32.mrb[0].mxu0
  %230 = vmatprep.mubr.bf16.mxu0 0
  %231 = vmatmul.mubr.bf16.gmra.mrb[0].mxu0 %v92
  %v232 = vpop.f32.mrb[0].mxu0
  %v233 = vadd.f32 %v52, %v232
  %v234 = vpop.f32.mrb[0].mxu0
  %v235 = vpop.f32.mrb[0].mxu0
  %v236 = vadd.f32 %v52, %v235
  %v237 = vpop.f32.mrb[0].mxu0
  %238 = vmatprep.mubr.bf16.mxu0 0
  %239 = vmatmul.mubr.bf16.gmra.mrb[0].mxu0 %v93
  %v240 = vpop.f32.mrb[0].mxu0
  %v241 = vadd.f32 %v52, %v240
  %v242 = vpop.f32.mrb[0].mxu0
  %v243 = vpop.f32.mrb[0].mxu0
  %v244 = vadd.f32 %v52, %v243
  %v245 = vpop.f32.mrb[0].mxu0
  %246 = vdwg.mxu0
  %v247 = vmax.f32 %v185, 0.0
  %v248 = vmax.f32 %v188, 0.0
  %v249 = vmax.f32 %v193, 0.0
  %v250 = vmax.f32 %v196, 0.0
  %v251 = vmax.f32 %v201, 0.0
  %v252 = vmax.f32 %v204, 0.0
  %v253 = vmax.f32 %v209, 0.0
  %v254 = vmax.f32 %v212, 0.0
  %v255 = vmax.f32 %v217, 0.0
  %v256 = vmax.f32 %v220, 0.0
  %v257 = vmax.f32 %v225, 0.0
  %v258 = vmax.f32 %v228, 0.0
  %v259 = vmax.f32 %v233, 0.0
  %v260 = vmax.f32 %v236, 0.0
  %v261 = vmax.f32 %v241, 0.0
  %v262 = vmax.f32 %v244, 0.0
  %v263 = vpack.c.bf16 %v248, %v247
  %v264 = vpack.c.bf16 %v250, %v249
  %v265 = vpack.c.bf16 %v252, %v251
  %v266 = vpack.c.bf16 %v254, %v253
  %v267 = vpack.c.bf16 %v256, %v255
  %v268 = vpack.c.bf16 %v258, %v257
  %v269 = vpack.c.bf16 %v260, %v259
  %v270 = vpack.c.bf16 %v262, %v261
  %v279 = vunpack.c.l.b16 %v263
  %v280 = vunpack.c.h.b16 %v263
  %v281 = vunpack.c.l.b16 %v264
  %v282 = vunpack.c.h.b16 %v264
  %v283 = vunpack.c.l.b16 %v265
  %v284 = vunpack.c.h.b16 %v265
  %v285 = vunpack.c.l.b16 %v266
  %v286 = vunpack.c.h.b16 %v266
  %v287 = vunpack.c.l.b16 %v267
  %v288 = vunpack.c.h.b16 %v267
  %v289 = vunpack.c.l.b16 %v268
  %v290 = vunpack.c.h.b16 %v268
  %v291 = vunpack.c.l.b16 %v269
  %v292 = vunpack.c.h.b16 %v269
  %v293 = vunpack.c.l.b16 %v270
  %v294 = vunpack.c.h.b16 %v270
  %v295 = vpack.c.b16 %v279, %v279
  %v296 = vpack.c.b16 %v280, %v280
  %v297 = vpack.c.b16 %v281, %v281
  %v298 = vpack.c.b16 %v282, %v282
  %v299 = vpack.c.b16 %v283, %v283
  %v300 = vpack.c.b16 %v284, %v284
  %v301 = vpack.c.b16 %v285, %v285
  %v302 = vpack.c.b16 %v286, %v286
  %v303 = vpack.c.b16 %v287, %v287
  %v304 = vpack.c.b16 %v288, %v288
  %v305 = vpack.c.b16 %v289, %v289
  %v306 = vpack.c.b16 %v290, %v290
  %v307 = vpack.c.b16 %v291, %v291
  %v308 = vpack.c.b16 %v292, %v292
  %v309 = vpack.c.b16 %v293, %v293
  %v310 = vpack.c.b16 %v294, %v294
  %327 = vst [vmem:[%s3] sm:$0xf] %v295
  %328 = vst [vmem:[%s3 + $0x4] sm:$0xf] %v296
  %329 = vst [vmem:[%s3 + $0x8] sm:$0xf] %v297
  %330 = vst [vmem:[%s3 + $0xc] sm:$0xf] %v298
  %331 = vst [vmem:[%s3 + $0x10] sm:$0xf] %v299
  %332 = vst [vmem:[%s3 + $0x14] sm:$0xf] %v300
  %333 = vst [vmem:[%s3 + $0x18] sm:$0xf] %v301
  %334 = vst [vmem:[%s3 + $0x1c] sm:$0xf] %v302
  %335 = vst [vmem:[%s3 + $0x20] sm:$0xf] %v303
  %336 = vst [vmem:[%s3 + $0x24] sm:$0xf] %v304
  %337 = vst [vmem:[%s3 + $0x28] sm:$0xf] %v305
  %338 = vst [vmem:[%s3 + $0x2c] sm:$0xf] %v306
  %339 = vst [vmem:[%s3 + $0x30] sm:$0xf] %v307
  %340 = vst [vmem:[%s3 + $0x34] sm:$0xf] %v308
  %341 = vst [vmem:[%s3 + $0x38] sm:$0xf] %v309
  %342 = vst [vmem:[%s3 + $0x3c] sm:$0xf] %v310
  // Predicated region
  $region14: #{resnet_common_branch.14} parent=0 // pred_check
    _
  $region15: #{resnet_common_branch.14} parent=0 // pred_check_branch
    %344 = sbr.rel (0) target = $region17
  $region16: #{resnet_common_branch.14} parent=0 // pred_region
    _
  $region17: #{resnet_common_branch.14} parent=0 // pred_fallthru
    _
  // Predicated region
  $region18: #{resnet_common_branch.14} parent=0 // pred_check
    _
  $region19: #{resnet_common_branch.14} parent=0 // pred_check_branch
    %346 = sbr.rel (0) target = $region21
  $region20: #{resnet_common_branch.14} parent=0 // pred_region
    _
  $region21: #{resnet_common_branch.14} parent=0 // pred_fallthru
    _

// kernel: resnet_common_branch.12
$region0: #{resnet_common_branch.12}
  #allocation0 [shape = 'u32[]', space=smem, size = 0x4, offset = 0x4, fixed_abs, tag = 'smem constant byte address 0x4 - core index']
  #allocation1 [shape = 'u32[144,128]{1,0:T(1,128)}', space=vmem, size = 0x12000, scoped, tag = 'internal scratch']
  %s0 = inlined_call_operand.vmem [shape: bf16[512,147], index: 0, kind: input, shape index: {}]
  %s1 = inlined_call_operand.vmem [shape: bf16[147,128], index: 1, kind: input, shape index: {}]
  %s2 = inlined_call_operand.vmem [shape: f32[1,128], index: 2, kind: input, shape index: {}]
  %s3 = inlined_call_operand.vmem [shape: bf16[512,128], index: 3, kind: output, shape index: {}]
  %s4 = sld [smem:[#allocation0]]
  $region22: #{resnet_common_branch.12} parent=0
    _
  %s6 = ssub.s32 1, %s4
  %s7 = scalar_select 0, %s6, %s4
  // Predicated region
  $region2: #{resnet_common_branch.12} parent=0 // pred_check
    _
  $region3: #{resnet_common_branch.12} parent=0 // pred_check_branch
    %9 = sbr.rel (0) target = $region5
  $region4: #{resnet_common_branch.12} parent=0 // pred_region
    _
  $region5: #{resnet_common_branch.12} parent=0 // pred_fallthru
    _
  // Predicated region
  $region6: #{resnet_common_branch.12} parent=0 // pred_check
    _
  $region7: #{resnet_common_branch.12} parent=0 // pred_check_branch
    %11 = sbr.rel (0) target = $region9
  $region8: #{resnet_common_branch.12} parent=0 // pred_region
    _
  $region9: #{resnet_common_branch.12} parent=0 // pred_fallthru
    _
  // Predicated region
  $region10: #{resnet_common_branch.12} parent=0 // pred_check
    _
  $region11: #{resnet_common_branch.12} parent=0 // pred_check_branch
    %13 = sbr.rel (0) target = $region13
  $region12: #{resnet_common_branch.12} parent=0 // pred_region
    _
  $region13: #{resnet_common_branch.12} parent=0 // pred_fallthru
    _
  %v15 = vld [vmem:[%s0] sm:$0xff]
  %v16 = vld [vmem:[%s0 + $0x8] sm:$0xff]
  %v17 = vld [vmem:[%s0 + $0x10] sm:$0xff]
  %v18 = vld [vmem:[%s0 + $0x18] sm:$0xff]
  %v19 = vld [vmem:[%s0 + $0x20] sm:$0xff]
  %v20 = vld [vmem:[%s0 + $0x28] sm:$0xff]
  %v21 = vld [vmem:[%s0 + $0x30] sm:$0xff]
  %v22 = vld [vmem:[%s0 + $0x38] sm:$0xff]
  %v23 = vld [vmem:[%s0 + $0x40] sm:$0xff]
  %v24 = vld [vmem:[%s0 + $0x48] sm:$0xff]
  %v25 = vld [vmem:[%s0 + $0x50] sm:$0xff]
  %v26 = vld [vmem:[%s0 + $0x58] sm:$0xff]
  %v27 = vld [vmem:[%s0 + $0x60] sm:$0xff]
  %v28 = vld [vmem:[%s0 + $0x68] sm:$0xff]
  %v29 = vld [vmem:[%s0 + $0x70] sm:$0xff]
  %v30 = vld [vmem:[%s0 + $0x78] sm:$0xff]
  %v31 = vld [vmem:[%s0 + $0x80] sm:$0xff]
  %v32 = vld [vmem:[%s0 + $0x88] sm:$0xff]
  %v33 = vld [vmem:[%s0 + $0x90] sm:$0xff]
  %v34 = vld [vmem:[%s0 + $0x98] sm:$0xff]
  %v35 = vld [vmem:[%s0 + $0xa0] sm:$0xff]
  %v36 = vld [vmem:[%s0 + $0xa8] sm:$0xff]
  %v37 = vld [vmem:[%s0 + $0xb0] sm:$0xff]
  %v38 = vld [vmem:[%s0 + $0xb8] sm:$0xff]
  %v39 = vld [vmem:[%s0 + $0xc0] sm:$0xff]
  %v40 = vld [vmem:[%s0 + $0xc8] sm:$0xff]
  %v41 = vld [vmem:[%s0 + $0xd0] sm:$0xff]
  %v42 = vld [vmem:[%s0 + $0xd8] sm:$0xff]
  %v43 = vld [vmem:[%s0 + $0xe0] sm:$0xff]
  %v44 = vld [vmem:[%s0 + $0xe8] sm:$0xff]
  %v45 = vld [vmem:[%s0 + $0xf0] sm:$0xff]
  %v46 = vld [vmem:[%s0 + $0xf8] sm:$0xff]
  %v47 = vld [vmem:[%s0 + $0x100] sm:$0xff]
  %v48 = vld [vmem:[%s0 + $0x108] sm:$0xff]
  %v49 = vld [vmem:[%s0 + $0x110] sm:$0xff]
  %v50 = vld [vmem:[%s0 + $0x118] sm:$0xff]
  %v51 = vld [vmem:[%s0 + $0x120] sm:$0xff]
  %v52 = vld [vmem:[%s0 + $0x128] sm:$0xff]
  %v53 = vld [vmem:[%s0 + $0x130] sm:$0xff]
  %v54 = vld [vmem:[%s0 + $0x138] sm:$0xff]
  %v55 = vld [vmem:[%s0 + $0x140] sm:$0xff]
  %v56 = vld [vmem:[%s0 + $0x148] sm:$0xff]
  %v57 = vld [vmem:[%s0 + $0x150] sm:$0xff]
  %v58 = vld [vmem:[%s0 + $0x158] sm:$0xff]
  %v59 = vld [vmem:[%s0 + $0x160] sm:$0xff]
  %v60 = vld [vmem:[%s0 + $0x168] sm:$0xff]
  %v61 = vld [vmem:[%s0 + $0x170] sm:$0xff]
  %v62 = vld [vmem:[%s0 + $0x178] sm:$0xff]
  %v63 = vld [vmem:[%s0 + $0x180] sm:$0xff]
  %v64 = vld [vmem:[%s0 + $0x188] sm:$0xff]
  %v65 = vld [vmem:[%s0 + $0x190] sm:$0xff]
  %v66 = vld [vmem:[%s0 + $0x198] sm:$0xff]
  %v67 = vld [vmem:[%s0 + $0x1a0] sm:$0xff]
  %v68 = vld [vmem:[%s0 + $0x1a8] sm:$0xff]
  %v69 = vld [vmem:[%s0 + $0x1b0] sm:$0xff]
  %v70 = vld [vmem:[%s0 + $0x1b8] sm:$0xff]
  %v71 = vld [vmem:[%s0 + $0x1c0] sm:$0xff]
  %v72 = vld [vmem:[%s0 + $0x1c8] sm:$0xff]
  %v73 = vld [vmem:[%s0 + $0x1d0] sm:$0xff]
  %v74 = vld [vmem:[%s0 + $0x1d8] sm:$0xff]
  %v75 = vld [vmem:[%s0 + $0x1e0] sm:$0xff]
  %v76 = vld [vmem:[%s0 + $0x1e8] sm:$0xff]
  %v77 = vld [vmem:[%s0 + $0x1f0] sm:$0xff]
  %v78 = vld [vmem:[%s0 + $0x1f8] sm:$0xff]
  %v79 = vld [vmem:[%s1] sm:$0xf]
  %v80 = vld [vmem:[%s1 + $0x4] sm:$0xf]
  %v81 = vld [vmem:[%s1 + $0x8] sm:$0xf]
  %v82 = vld [vmem:[%s1 + $0xc] sm:$0xf]
  %v83 = vld [vmem:[%s1 + $0x10] sm:$0xf]
  %v84 = vld [vmem:[%s1 + $0x14] sm:$0xf]
  %v85 = vld [vmem:[%s1 + $0x18] sm:$0xf]
  %v86 = vld [vmem:[%s1 + $0x1c] sm:$0xf]
  %v87 = vld [vmem:[%s1 + $0x20] sm:$0xf]
  %v88 = vld [vmem:[%s1 + $0x24] sm:$0xf]
  %v89 = vld [vmem:[%s1 + $0x28] sm:$0xf]
  %v90 = vld [vmem:[%s1 + $0x2c] sm:$0xf]
  %v91 = vld [vmem:[%s1 + $0x30] sm:$0xf]
  %v92 = vld [vmem:[%s1 + $0x34] sm:$0xf]
  %v93 = vld [vmem:[%s1 + $0x38] sm:$0xf]
  %v94 = vld [vmem:[%s1 + $0x3c] sm:$0xf]
  %v95 = vld [vmem:[%s1 + $0x40] sm:$0xf]
  %v96 = vld [vmem:[%s1 + $0x44] sm:$0xf]
  %v97 = vld [vmem:[%s1 + $0x48] sm:$0x3]
  %v98 = vld [vmem:[%s2] sm:$0x1]
  %v100 = vlaneseq
  %v101 = vshrl.u32 %v100, 7
  %v102 = vsub.s32 0, %v101
  %v103 = vrot.slane %v98, %v102
  %v169 = vunpack.c.l.b16 %v15
  %v170 = vunpack.c.h.b16 %v15
  %v171 = vunpack.c.l.b16 %v16
  %v172 = vunpack.c.h.b16 %v16
  %v173 = vunpack.c.l.b16 %v17
  %v174 = vunpack.c.h.b16 %v17
  %v175 = vunpack.c.l.b16 %v18
  %v176 = vunpack.c.h.b16 %v18
  %v177 = vunpack.c.l.b16 %v19
  %v178 = vunpack.c.h.b16 %v19
  %v179 = vunpack.c.l.b16 %v20
  %v180 = vunpack.c.h.b16 %v20
  %v181 = vunpack.c.l.b16 %v21
  %v182 = vunpack.c.h.b16 %v21
  %v183 = vunpack.c.l.b16 %v22
  %v184 = vunpack.c.h.b16 %v22
  %v185 = vunpack.c.l.b16 %v23
  %v186 = vunpack.c.h.b16 %v23
  %v187 = vunpack.c.l.b16 %v24
  %v188 = vunpack.c.h.b16 %v24
  %v189 = vunpack.c.l.b16 %v25
  %v190 = vunpack.c.h.b16 %v25
  %v191 = vunpack.c.l.b16 %v26
  %v192 = vunpack.c.h.b16 %v26
  %v193 = vunpack.c.l.b16 %v27
  %v194 = vunpack.c.h.b16 %v27
  %v195 = vunpack.c.l.b16 %v28
  %v196 = vunpack.c.h.b16 %v28
  %v197 = vunpack.c.l.b16 %v29
  %v198 = vunpack.c.h.b16 %v29
  %v199 = vunpack.c.l.b16 %v30
  %v200 = vunpack.c.h.b16 %v30
  %v201 = vunpack.c.l.b16 %v31
  %v202 = vunpack.c.h.b16 %v31
  %v203 = vunpack.c.l.b16 %v32
  %v204 = vunpack.c.h.b16 %v32
  %v205 = vunpack.c.l.b16 %v33
  %v206 = vunpack.c.h.b16 %v33
  %v207 = vunpack.c.l.b16 %v34
  %v208 = vunpack.c.h.b16 %v34
  %v209 = vunpack.c.l.b16 %v35
  %v210 = vunpack.c.h.b16 %v35
  %v211 = vunpack.c.l.b16 %v36
  %v212 = vunpack.c.h.b16 %v36
  %v213 = vunpack.c.l.b16 %v37
  %v214 = vunpack.c.h.b16 %v37
  %v215 = vunpack.c.l.b16 %v38
  %v216 = vunpack.c.h.b16 %v38
  %v217 = vunpack.c.l.b16 %v39
  %v218 = vunpack.c.h.b16 %v39
  %v219 = vunpack.c.l.b16 %v40
  %v220 = vunpack.c.h.b16 %v40
  %v221 = vunpack.c.l.b16 %v41
  %v222 = vunpack.c.h.b16 %v41
  %v223 = vunpack.c.l.b16 %v42
  %v224 = vunpack.c.h.b16 %v42
  %v225 = vunpack.c.l.b16 %v43
  %v226 = vunpack.c.h.b16 %v43
  %v227 = vunpack.c.l.b16 %v44
  %v228 = vunpack.c.h.b16 %v44
  %v229 = vunpack.c.l.b16 %v45
  %v230 = vunpack.c.h.b16 %v45
  %v231 = vunpack.c.l.b16 %v46
  %v232 = vunpack.c.h.b16 %v46
  %v233 = vunpack.c.l.b16 %v47
  %v234 = vunpack.c.h.b16 %v47
  %v235 = vunpack.c.l.b16 %v48
  %v236 = vunpack.c.h.b16 %v48
  %v237 = vunpack.c.l.b16 %v49
  %v238 = vunpack.c.h.b16 %v49
  %v239 = vunpack.c.l.b16 %v50
  %v240 = vunpack.c.h.b16 %v50
  %v241 = vunpack.c.l.b16 %v51
  %v242 = vunpack.c.h.b16 %v51
  %v243 = vunpack.c.l.b16 %v52
  %v244 = vunpack.c.h.b16 %v52
  %v245 = vunpack.c.l.b16 %v53
  %v246 = vunpack.c.h.b16 %v53
  %v247 = vunpack.c.l.b16 %v54
  %v248 = vunpack.c.h.b16 %v54
  %v249 = vunpack.c.l.b16 %v55
  %v250 = vunpack.c.h.b16 %v55
  %v251 = vunpack.c.l.b16 %v56
  %v252 = vunpack.c.h.b16 %v56
  %v253 = vunpack.c.l.b16 %v57
  %v254 = vunpack.c.h.b16 %v57
  %v255 = vunpack.c.l.b16 %v58
  %v256 = vunpack.c.h.b16 %v58
  %v257 = vunpack.c.l.b16 %v59
  %v258 = vunpack.c.h.b16 %v59
  %v259 = vunpack.c.l.b16 %v60
  %v260 = vunpack.c.h.b16 %v60
  %v261 = vunpack.c.l.b16 %v61
  %v262 = vunpack.c.h.b16 %v61
  %v263 = vunpack.c.l.b16 %v62
  %v264 = vunpack.c.h.b16 %v62
  %v265 = vunpack.c.l.b16 %v63
  %v266 = vunpack.c.h.b16 %v63
  %v267 = vunpack.c.l.b16 %v64
  %v268 = vunpack.c.h.b16 %v64
  %v269 = vunpack.c.l.b16 %v65
  %v270 = vunpack.c.h.b16 %v65
  %v271 = vunpack.c.l.b16 %v66
  %v272 = vunpack.c.h.b16 %v66
  %v273 = vunpack.c.l.b16 %v67
  %v274 = vunpack.c.h.b16 %v67
  %v275 = vunpack.c.l.b16 %v68
  %v276 = vunpack.c.h.b16 %v68
  %v277 = vunpack.c.l.b16 %v69
  %v278 = vunpack.c.h.b16 %v69
  %v279 = vunpack.c.l.b16 %v70
  %v280 = vunpack.c.h.b16 %v70
  %v281 = vunpack.c.l.b16 %v71
  %v282 = vunpack.c.h.b16 %v71
  %v283 = vunpack.c.l.b16 %v72
  %v284 = vunpack.c.h.b16 %v72
  %v285 = vunpack.c.l.b16 %v73
  %v286 = vunpack.c.h.b16 %v73
  %v287 = vunpack.c.l.b16 %v74
  %v288 = vunpack.c.h.b16 %v74
  %v289 = vunpack.c.l.b16 %v75
  %v290 = vunpack.c.h.b16 %v75
  %v291 = vunpack.c.l.b16 %v76
  %v292 = vunpack.c.h.b16 %v76
  %v293 = vunpack.c.l.b16 %v77
  %v294 = vunpack.c.h.b16 %v77
  %v295 = vunpack.c.l.b16 %v78
  %v296 = vunpack.c.h.b16 %v78
  %v297 = vpack.c.b16 %v171, %v169
  %v298 = vpack.c.b16 %v172, %v170
  %v299 = vpack.c.b16 %v175, %v173
  %v300 = vpack.c.b16 %v176, %v174
  %v301 = vpack.c.b16 %v179, %v177
  %v302 = vpack.c.b16 %v180, %v178
  %v303 = vpack.c.b16 %v183, %v181
  %v304 = vpack.c.b16 %v184, %v182
  %v305 = vpack.c.b16 %v187, %v185
  %v306 = vpack.c.b16 %v188, %v186
  %v307 = vpack.c.b16 %v191, %v189
  %v308 = vpack.c.b16 %v192, %v190
  %v309 = vpack.c.b16 %v195, %v193
  %v310 = vpack.c.b16 %v196, %v194
  %v311 = vpack.c.b16 %v199, %v197
  %v312 = vpack.c.b16 %v200, %v198
  %v313 = vpack.c.b16 %v203, %v201
  %v314 = vpack.c.b16 %v204, %v202
  %v315 = vpack.c.b16 %v207, %v205
  %v316 = vpack.c.b16 %v208, %v206
  %v317 = vpack.c.b16 %v211, %v209
  %v318 = vpack.c.b16 %v212, %v210
  %v319 = vpack.c.b16 %v215, %v213
  %v320 = vpack.c.b16 %v216, %v214
  %v321 = vpack.c.b16 %v219, %v217
  %v322 = vpack.c.b16 %v220, %v218
  %v323 = vpack.c.b16 %v223, %v221
  %v324 = vpack.c.b16 %v224, %v222
  %v325 = vpack.c.b16 %v227, %v225
  %v326 = vpack.c.b16 %v228, %v226
  %v327 = vpack.c.b16 %v231, %v229
  %v328 = vpack.c.b16 %v232, %v230
  %v329 = vpack.c.b16 %v235, %v233
  %v330 = vpack.c.b16 %v236, %v234
  %v331 = vpack.c.b16 %v239, %v237
  %v332 = vpack.c.b16 %v240, %v238
  %v333 = vpack.c.b16 %v243, %v241
  %v334 = vpack.c.b16 %v244, %v242
  %v335 = vpack.c.b16 %v247, %v245
  %v336 = vpack.c.b16 %v248, %v246
  %v337 = vpack.c.b16 %v251, %v249
  %v338 = vpack.c.b16 %v252, %v250
  %v339 = vpack.c.b16 %v255, %v253
  %v340 = vpack.c.b16 %v256, %v254
  %v341 = vpack.c.b16 %v259, %v257
  %v342 = vpack.c.b16 %v260, %v258
  %v343 = vpack.c.b16 %v263, %v261
  %v344 = vpack.c.b16 %v264, %v262
  %v345 = vpack.c.b16 %v267, %v265
  %v346 = vpack.c.b16 %v268, %v266
  %v347 = vpack.c.b16 %v271, %v269
  %v348 = vpack.c.b16 %v272, %v270
  %v349 = vpack.c.b16 %v275, %v273
  %v350 = vpack.c.b16 %v276, %v274
  %v351 = vpack.c.b16 %v279, %v277
  %v352 = vpack.c.b16 %v280, %v278
  %v353 = vpack.c.b16 %v283, %v281
  %v354 = vpack.c.b16 %v284, %v282
  %v355 = vpack.c.b16 %v287, %v285
  %v356 = vpack.c.b16 %v288, %v286
  %v357 = vpack.c.b16 %v291, %v289
  %v358 = vpack.c.b16 %v292, %v290
  %v359 = vpack.c.b16 %v295, %v293
  %v360 = vpack.c.b16 %v296, %v294
  %v412 = vunpack.c.l.b16 %v79
  %v413 = vunpack.c.l.b16 %v80
  %v414 = vunpack.c.l.b16 %v81
  %v415 = vunpack.c.l.b16 %v82
  %v416 = vunpack.c.l.b16 %v83
  %v417 = vunpack.c.l.b16 %v84
  %v418 = vunpack.c.l.b16 %v85
  %v419 = vunpack.c.l.b16 %v86
  %v420 = vunpack.c.l.b16 %v87
  %v421 = vunpack.c.l.b16 %v88
  %v422 = vunpack.c.l.b16 %v89
  %v423 = vunpack.c.l.b16 %v90
  %v424 = vunpack.c.l.b16 %v91
  %v425 = vunpack.c.l.b16 %v92
  %v426 = vunpack.c.l.b16 %v93
  %v427 = vunpack.c.l.b16 %v94
  %v428 = vunpack.c.l.b16 %v95
  %v429 = vunpack.c.l.b16 %v96
  %v430 = vunpack.c.l.b16 %v97
  %v431 = vpack.c.b16 %v413, %v412
  %v432 = vpack.c.b16 %v415, %v414
  %v433 = vpack.c.b16 %v417, %v416
  %v434 = vpack.c.b16 %v419, %v418
  %v435 = vpack.c.b16 %v421, %v420
  %v436 = vpack.c.b16 %v423, %v422
  %v437 = vpack.c.b16 %v425, %v424
  %v438 = vpack.c.b16 %v427, %v426
  %v439 = vpack.c.b16 %v429, %v428
  %v440 = vpack.c.b16 %v430, %v430
  %vm450 = vcmask 154624
  %v452 = vsel %vm450, %v298, 0
  %v455 = vsel %vm450, %v300, 0
  %v458 = vsel %vm450, %v302, 0
  %v461 = vsel %vm450, %v304, 0
  %v464 = vsel %vm450, %v306, 0
  %v467 = vsel %vm450, %v308, 0
  %v470 = vsel %vm450, %v310, 0
  %v473 = vsel %vm450, %v312, 0
  %v476 = vsel %vm450, %v314, 0
  %v479 = vsel %vm450, %v316, 0
  %v482 = vsel %vm450, %v318, 0
  %v485 = vsel %vm450, %v320, 0
  %v488 = vsel %vm450, %v322, 0
  %v491 = vsel %vm450, %v324, 0
  %v494 = vsel %vm450, %v326, 0
  %v497 = vsel %vm450, %v328, 0
  %v500 = vsel %vm450, %v330, 0
  %v503 = vsel %vm450, %v332, 0
  %v506 = vsel %vm450, %v334, 0
  %v509 = vsel %vm450, %v336, 0
  %v512 = vsel %vm450, %v338, 0
  %v515 = vsel %vm450, %v340, 0
  %v518 = vsel %vm450, %v342, 0
  %v521 = vsel %vm450, %v344, 0
  %v524 = vsel %vm450, %v346, 0
  %v527 = vsel %vm450, %v348, 0
  %v530 = vsel %vm450, %v350, 0
  %v533 = vsel %vm450, %v352, 0
  %v536 = vsel %vm450, %v354, 0
  %v539 = vsel %vm450, %v356, 0
  %v542 = vsel %vm450, %v358, 0
  %v545 = vsel %vm450, %v360, 0
  %vm547 = vcmask 1040384
  %vm548 = vcmask 1041408
  %v549 = vsel %vm547, 4294967295, 65535
  %v550 = vsel %vm548, %v549, 0
  %v552 = vand.u32 %v440, %v550
  %554 = vmatprep.subr.bf16.mxu0 0
  %555 = vmatpush1.bf16.msra.mxu0 %v431
  %556 = vmatprep.subr.bf16.mxu0 0
  %557 = vmatpush1.bf16.msra.mxu0 %v432
  %558 = vmatprep.subr.bf16.mxu0 0
  %559 = vmatpush1.bf16.msra.mxu0 %v433
  %560 = vmatprep.subr.bf16.mxu0 0
  %561 = vmatpush1.bf16.msra.mxu0 %v434
  %562 = vmatprep.subr.bf16.mxu0 0
  %563 = vmatpush1.bf16.msra.mxu0 %v435
  %564 = vmatprep.subr.bf16.mxu0 0
  %565 = vmatpush1.bf16.msra.mxu0 %v436
  %566 = vmatprep.subr.bf16.mxu0 0
  %567 = vmatpush1.bf16.msra.mxu0 %v437
  %568 = vmatprep.subr.bf16.mxu0 0
  %569 = vmatpush1.bf16.msra.mxu0 %v438
  %570 = vmatprep.subr.bf16.mxu0 0
  %571 = vmatpush1.bf16.msra.mxu0 %v439
  %572 = vmatprep.subr.bf16.mxu0 0
  %573 = vmatpush1.bf16.msra.mxu0 %v552
  %574 = vmatprep.subr.bf16.mxu0 0
  %575 = vmatpush1.bf16.msra.mxu0 0
  %576 = vmatprep.subr.bf16.mxu0 0
  %577 = vmatpush1.bf16.msra.mxu0 0
  %578 = vmatprep.subr.bf16.mxu0 0
  %579 = vmatpush1.bf16.msra.mxu0 0
  %580 = vmatprep.subr.bf16.mxu0 0
  %581 = vmatpush1.bf16.msra.mxu0 0
  %582 = vmatprep.subr.bf16.mxu0 0
  %583 = vmatpush1.bf16.msra.mxu0 0
  %584 = vmatprep.subr.bf16.mxu0 0
  %585 = vmatpush1.bf16.msra.mxu0 0
  %586 = vmatprep.mubr.bf16.mxu0 %v452
  %587 = vmatmul.mubr.bf16.gmra.mrb[0].mxu0 %v297
  %v588 = vpop.f32.mrb[0].mxu0
  %v589 = vadd.f32 %v103, %v588
  %v590 = vpop.f32.mrb[0].mxu0
  %v591 = vpop.f32.mrb[0].mxu0
  %v592 = vadd.f32 %v103, %v591
  %v593 = vpop.f32.mrb[0].mxu0
  %594 = vmatprep.mubr.bf16.mxu0 %v455
  %595 = vmatmul.mubr.bf16.gmra.mrb[0].mxu0 %v299
  %v596 = vpop.f32.mrb[0].mxu0
  %v597 = vadd.f32 %v103, %v596
  %v598 = vpop.f32.mrb[0].mxu0
  %v599 = vpop.f32.mrb[0].mxu0
  %v600 = vadd.f32 %v103, %v599
  %v601 = vpop.f32.mrb[0].mxu0
  %602 = vmatprep.mubr.bf16.mxu0 %v458
  %603 = vmatmul.mubr.bf16.gmra.mrb[0].mxu0 %v301
  %v604 = vpop.f32.mrb[0].mxu0
  %v605 = vadd.f32 %v103, %v604
  %v606 = vpop.f32.mrb[0].mxu0
  %v607 = vpop.f32.mrb[0].mxu0
  %v608 = vadd.f32 %v103, %v607
  %v609 = vpop.f32.mrb[0].mxu0
  %610 = vmatprep.mubr.bf16.mxu0 %v461
  %611 = vmatmul.mubr.bf16.gmra.mrb[0].mxu0 %v303
  %v612 = vpop.f32.mrb[0].mxu0
  %v613 = vadd.f32 %v103, %v612
  %v614 = vpop.f32.mrb[0].mxu0
  %v615 = vpop.f32.mrb[0].mxu0
  %v616 = vadd.f32 %v103, %v615
  %v617 = vpop.f32.mrb[0].mxu0
  %618 = vmatprep.mubr.bf16.mxu0 %v464
  %619 = vmatmul.mubr.bf16.gmra.mrb[0].mxu0 %v305
  %v620 = vpop.f32.mrb[0].mxu0
  %v621 = vadd.f32 %v103, %v620
  %v622 = vpop.f32.mrb[0].mxu0
  %v623 = vpop.f32.mrb[0].mxu0
  %v624 = vadd.f32 %v103, %v623
  %v625 = vpop.f32.mrb[0].mxu0
  %626 = vmatprep.mubr.bf16.mxu0 %v467
  %627 = vmatmul.mubr.bf16.gmra.mrb[0].mxu0 %v307
  %v628 = vpop.f32.mrb[0].mxu0
  %v629 = vadd.f32 %v103, %v628
  %v630 = vpop.f32.mrb[0].mxu0
  %v631 = vpop.f32.mrb[0].mxu0
  %v632 = vadd.f32 %v103, %v631
  %v633 = vpop.f32.mrb[0].mxu0
  %634 = vmatprep.mubr.bf16.mxu0 %v470
  %635 = vmatmul.mubr.bf16.gmra.mrb[0].mxu0 %v309
  %v636 = vpop.f32.mrb[0].mxu0
  %v637 = vadd.f32 %v103, %v636
  %v638 = vpop.f32.mrb[0].mxu0
  %v639 = vpop.f32.mrb[0].mxu0
  %v640 = vadd.f32 %v103, %v639
  %v641 = vpop.f32.mrb[0].mxu0
  %642 = vmatprep.mubr.bf16.mxu0 %v473
  %643 = vmatmul.mubr.bf16.gmra.mrb[0].mxu0 %v311
  %v644 = vpop.f32.mrb[0].mxu0
  %v645 = vadd.f32 %v103, %v644
  %v646 = vpop.f32.mrb[0].mxu0
  %v647 = vpop.f32.mrb[0].mxu0
  %v648 = vadd.f32 %v103, %v647
  %v649 = vpop.f32.mrb[0].mxu0
  %650 = vmatprep.mubr.bf16.mxu0 %v476
  %651 = vmatmul.mubr.bf16.gmra.mrb[0].mxu0 %v313
  %v652 = vpop.f32.mrb[0].mxu0
  %v653 = vadd.f32 %v103, %v652
  %v654 = vpop.f32.mrb[0].mxu0
  %v655 = vpop.f32.mrb[0].mxu0
  %v656 = vadd.f32 %v103, %v655
  %v657 = vpop.f32.mrb[0].mxu0
  %658 = vmatprep.mubr.bf16.mxu0 %v479
  %659 = vmatmul.mubr.bf16.gmra.mrb[0].mxu0 %v315
  %v660 = vpop.f32.mrb[0].mxu0
  %v661 = vadd.f32 %v103, %v660
  %v662 = vpop.f32.mrb[0].mxu0
  %v663 = vpop.f32.mrb[0].mxu0
  %v664 = vadd.f32 %v103, %v663
  %v665 = vpop.f32.mrb[0].mxu0
  %666 = vmatprep.mubr.bf16.mxu0 %v482
  %667 = vmatmul.mubr.bf16.gmra.mrb[0].mxu0 %v317
  %v668 = vpop.f32.mrb[0].mxu0
  %v669 = vadd.f32 %v103, %v668
  %v670 = vpop.f32.mrb[0].mxu0
  %v671 = vpop.f32.mrb[0].mxu0
  %v672 = vadd.f32 %v103, %v671
  %v673 = vpop.f32.mrb[0].mxu0
  %674 = vmatprep.mubr.bf16.mxu0 %v485
  %675 = vmatmul.mubr.bf16.gmra.mrb[0].mxu0 %v319
  %v676 = vpop.f32.mrb[0].mxu0
  %v677 = vadd.f32 %v103, %v676
  %v678 = vpop.f32.mrb[0].mxu0
  %v679 = vpop.f32.mrb[0].mxu0
  %v680 = vadd.f32 %v103, %v679
  %v681 = vpop.f32.mrb[0].mxu0
  %682 = vmatprep.mubr.bf16.mxu0 %v488
  %683 = vmatmul.mubr.bf16.gmra.mrb[0].mxu0 %v321
  %v684 = vpop.f32.mrb[0].mxu0
  %v685 = vadd.f32 %v103, %v684
  %v686 = vpop.f32.mrb[0].mxu0
  %v687 = vpop.f32.mrb[0].mxu0
  %v688 = vadd.f32 %v103, %v687
  %v689 = vpop.f32.mrb[0].mxu0
  %690 = vmatprep.mubr.bf16.mxu0 %v491
  %691 = vmatmul.mubr.bf16.gmra.mrb[0].mxu0 %v323
  %v692 = vpop.f32.mrb[0].mxu0
  %v693 = vadd.f32 %v103, %v692
  %v694 = vpop.f32.mrb[0].mxu0
  %v695 = vpop.f32.mrb[0].mxu0
  %v696 = vadd.f32 %v103, %v695
  %v697 = vpop.f32.mrb[0].mxu0
  %698 = vmatprep.mubr.bf16.mxu0 %v494
  %699 = vmatmul.mubr.bf16.gmra.mrb[0].mxu0 %v325
  %v700 = vpop.f32.mrb[0].mxu0
  %v701 = vadd.f32 %v103, %v700
  %v702 = vpop.f32.mrb[0].mxu0
  %v703 = vpop.f32.mrb[0].mxu0
  %v704 = vadd.f32 %v103, %v703
  %v705 = vpop.f32.mrb[0].mxu0
  %706 = vmatprep.mubr.bf16.mxu0 %v497
  %707 = vmatmul.mubr.bf16.gmra.mrb[0].mxu0 %v327
  %v708 = vpop.f32.mrb[0].mxu0
  %v709 = vadd.f32 %v103, %v708
  %v710 = vpop.f32.mrb[0].mxu0
  %v711 = vpop.f32.mrb[0].mxu0
  %v712 = vadd.f32 %v103, %v711
  %v713 = vpop.f32.mrb[0].mxu0
  %714 = vmatprep.mubr.bf16.mxu0 %v500
  %715 = vmatmul.mubr.bf16.gmra.mrb[0].mxu0 %v329
  %v716 = vpop.f32.mrb[0].mxu0
  %v717 = vadd.f32 %v103, %v716
  %v718 = vpop.f32.mrb[0].mxu0
  %v719 = vpop.f32.mrb[0].mxu0
  %v720 = vadd.f32 %v103, %v719
  %v721 = vpop.f32.mrb[0].mxu0
  %722 = vmatprep.mubr.bf16.mxu0 %v503
  %723 = vmatmul.mubr.bf16.gmra.mrb[0].mxu0 %v331
  %v724 = vpop.f32.mrb[0].mxu0
  %v725 = vadd.f32 %v103, %v724
  %v726 = vpop.f32.mrb[0].mxu0
  %v727 = vpop.f32.mrb[0].mxu0
  %v728 = vadd.f32 %v103, %v727
  %v729 = vpop.f32.mrb[0].mxu0
  %730 = vmatprep.mubr.bf16.mxu0 %v506
  %731 = vmatmul.mubr.bf16.gmra.mrb[0].mxu0 %v333
  %v732 = vpop.f32.mrb[0].mxu0
  %v733 = vadd.f32 %v103, %v732
  %v734 = vpop.f32.mrb[0].mxu0
  %v735 = vpop.f32.mrb[0].mxu0
  %v736 = vadd.f32 %v103, %v735
  %v737 = vpop.f32.mrb[0].mxu0
  %738 = vmatprep.mubr.bf16.mxu0 %v509
  %739 = vmatmul.mubr.bf16.gmra.mrb[0].mxu0 %v335
  %v740 = vpop.f32.mrb[0].mxu0
  %v741 = vadd.f32 %v103, %v740
  %v742 = vpop.f32.mrb[0].mxu0
  %v743 = vpop.f32.mrb[0].mxu0
  %v744 = vadd.f32 %v103, %v743
  %v745 = vpop.f32.mrb[0].mxu0
  %746 = vmatprep.mubr.bf16.mxu0 %v512
  %747 = vmatmul.mubr.bf16.gmra.mrb[0].mxu0 %v337
  %v748 = vpop.f32.mrb[0].mxu0
  %v749 = vadd.f32 %v103, %v748
  %v750 = vpop.f32.mrb[0].mxu0
  %v751 = vpop.f32.mrb[0].mxu0
  %v752 = vadd.f32 %v103, %v751
  %v753 = vpop.f32.mrb[0].mxu0
  %754 = vmatprep.mubr.bf16.mxu0 %v515
  %755 = vmatmul.mubr.bf16.gmra.mrb[0].mxu0 %v339
  %v756 = vpop.f32.mrb[0].mxu0
  %v757 = vadd.f32 %v103, %v756
  %v758 = vpop.f32.mrb[0].mxu0
  %v759 = vpop.f32.mrb[0].mxu0
  %v760 = vadd.f32 %v103, %v759
  %v761 = vpop.f32.mrb[0].mxu0
  %762 = vmatprep.mubr.bf16.mxu0 %v518
  %763 = vmatmul.mubr.bf16.gmra.mrb[0].mxu0 %v341
  %v764 = vpop.f32.mrb[0].mxu0
  %v765 = vadd.f32 %v103, %v764
  %v766 = vpop.f32.mrb[0].mxu0
  %v767 = vpop.f32.mrb[0].mxu0
  %v768 = vadd.f32 %v103, %v767
  %v769 = vpop.f32.mrb[0].mxu0
  %770 = vmatprep.mubr.bf16.mxu0 %v521
  %771 = vmatmul.mubr.bf16.gmra.mrb[0].mxu0 %v343
  %v772 = vpop.f32.mrb[0].mxu0
  %v773 = vadd.f32 %v103, %v772
  %v774 = vpop.f32.mrb[0].mxu0
  %v775 = vpop.f32.mrb[0].mxu0
  %v776 = vadd.f32 %v103, %v775
  %v777 = vpop.f32.mrb[0].mxu0
  %778 = vmatprep.mubr.bf16.mxu0 %v524
  %779 = vmatmul.mubr.bf16.gmra.mrb[0].mxu0 %v345
  %v780 = vpop.f32.mrb[0].mxu0
  %v781 = vadd.f32 %v103, %v780
  %v782 = vpop.f32.mrb[0].mxu0
  %v783 = vpop.f32.mrb[0].mxu0
  %v784 = vadd.f32 %v103, %v783
  %v785 = vpop.f32.mrb[0].mxu0
  %786 = vmatprep.mubr.bf16.mxu0 %v527
  %787 = vmatmul.mubr.bf16.gmra.mrb[0].mxu0 %v347
  %v788 = vpop.f32.mrb[0].mxu0
  %v789 = vadd.f32 %v103, %v788
  %v790 = vpop.f32.mrb[0].mxu0
  %v791 = vpop.f32.mrb[0].mxu0
  %v792 = vadd.f32 %v103, %v791
  %v793 = vpop.f32.mrb[0].mxu0
  %794 = vmatprep.mubr.bf16.mxu0 %v530
  %795 = vmatmul.mubr.bf16.gmra.mrb[0].mxu0 %v349
  %v796 = vpop.f32.mrb[0].mxu0
  %v797 = vadd.f32 %v103, %v796
  %v798 = vpop.f32.mrb[0].mxu0
  %v799 = vpop.f32.mrb[0].mxu0
  %v800 = vadd.f32 %v103, %v799
  %v801 = vpop.f32.mrb[0].mxu0
  %802 = vmatprep.mubr.bf16.mxu0 %v533
  %803 = vmatmul.mubr.bf16.gmra.mrb[0].mxu0 %v351
  %v804 = vpop.f32.mrb[0].mxu0
  %v805 = vadd.f32 %v103, %v804
  %v806 = vpop.f32.mrb[0].mxu0
  %v807 = vpop.f32.mrb[0].mxu0
  %v808 = vadd.f32 %v103, %v807
  %v809 = vpop.f32.mrb[0].mxu0
  %810 = vmatprep.mubr.bf16.mxu0 %v536
  %811 = vmatmul.mubr.bf16.gmra.mrb[0].mxu0 %v353
  %v812 = vpop.f32.mrb[0].mxu0
  %v813 = vadd.f32 %v103, %v812
  %v814 = vpop.f32.mrb[0].mxu0
  %v815 = vpop.f32.mrb[0].mxu0
  %v816 = vadd.f32 %v103, %v815
  %v817 = vpop.f32.mrb[0].mxu0
  %818 = vmatprep.mubr.bf16.mxu0 %v539
  %819 = vmatmul.mubr.bf16.gmra.mrb[0].mxu0 %v355
  %v820 = vpop.f32.mrb[0].mxu0
  %v821 = vadd.f32 %v103, %v820
  %v822 = vpop.f32.mrb[0].mxu0
  %v823 = vpop.f32.mrb[0].mxu0
  %v824 = vadd.f32 %v103, %v823
  %v825 = vpop.f32.mrb[0].mxu0
  %826 = vmatprep.mubr.bf16.mxu0 %v542
  %827 = vmatmul.mubr.bf16.gmra.mrb[0].mxu0 %v357
  %v828 = vpop.f32.mrb[0].mxu0
  %v829 = vadd.f32 %v103, %v828
  %v830 = vpop.f32.mrb[0].mxu0
  %v831 = vpop.f32.mrb[0].mxu0
  %v832 = vadd.f32 %v103, %v831
  %v833 = vpop.f32.mrb[0].mxu0
  %834 = vmatprep.mubr.bf16.mxu0 %v545
  %835 = vmatmul.mubr.bf16.gmra.mrb[0].mxu0 %v359
  %v836 = vpop.f32.mrb[0].mxu0
  %v837 = vadd.f32 %v103, %v836
  %v838 = vpop.f32.mrb[0].mxu0
  %v839 = vpop.f32.mrb[0].mxu0
  %v840 = vadd.f32 %v103, %v839
  %v841 = vpop.f32.mrb[0].mxu0
  %842 = vdwg.mxu0
  %v843 = vmax.f32 %v589, 0.0
  %v844 = vmax.f32 %v592, 0.0
  %v845 = vmax.f32 %v597, 0.0
  %v846 = vmax.f32 %v600, 0.0
  %v847 = vmax.f32 %v605, 0.0
  %v848 = vmax.f32 %v608, 0.0
  %v849 = vmax.f32 %v613, 0.0
  %v850 = vmax.f32 %v616, 0.0
  %v851 = vmax.f32 %v621, 0.0
  %v852 = vmax.f32 %v624, 0.0
  %v853 = vmax.f32 %v629, 0.0
  %v854 = vmax.f32 %v632, 0.0
  %v855 = vmax.f32 %v637, 0.0
  %v856 = vmax.f32 %v640, 0.0
  %v857 = vmax.f32 %v645, 0.0
  %v858 = vmax.f32 %v648, 0.0
  %v859 = vmax.f32 %v653, 0.0
  %v860 = vmax.f32 %v656, 0.0
  %v861 = vmax.f32 %v661, 0.0
  %v862 = vmax.f32 %v664, 0.0
  %v863 = vmax.f32 %v669, 0.0
  %v864 = vmax.f32 %v672, 0.0
  %v865 = vmax.f32 %v677, 0.0
  %v866 = vmax.f32 %v680, 0.0
  %v867 = vmax.f32 %v685, 0.0
  %v868 = vmax.f32 %v688, 0.0
  %v869 = vmax.f32 %v693, 0.0
  %v870 = vmax.f32 %v696, 0.0
  %v871 = vmax.f32 %v701, 0.0
  %v872 = vmax.f32 %v704, 0.0
  %v873 = vmax.f32 %v709, 0.0
  %v874 = vmax.f32 %v712, 0.0
  %v875 = vmax.f32 %v717, 0.0
  %v876 = vmax.f32 %v720, 0.0
  %v877 = vmax.f32 %v725, 0.0
  %v878 = vmax.f32 %v728, 0.0
  %v879 = vmax.f32 %v733, 0.0
  %v880 = vmax.f32 %v736, 0.0
  %v881 = vmax.f32 %v741, 0.0
  %v882 = vmax.f32 %v744, 0.0
  %v883 = vmax.f32 %v749, 0.0
  %v884 = vmax.f32 %v752, 0.0
  %v885 = vmax.f32 %v757, 0.0
  %v886 = vmax.f32 %v760, 0.0
  %v887 = vmax.f32 %v765, 0.0
  %v888 = vmax.f32 %v768, 0.0
  %v889 = vmax.f32 %v773, 0.0
  %v890 = vmax.f32 %v776, 0.0
  %v891 = vmax.f32 %v781, 0.0
  %v892 = vmax.f32 %v784, 0.0
  %v893 = vmax.f32 %v789, 0.0
  %v894 = vmax.f32 %v792, 0.0
  %v895 = vmax.f32 %v797, 0.0
  %v896 = vmax.f32 %v800, 0.0
  %v897 = vmax.f32 %v805, 0.0
  %v898 = vmax.f32 %v808, 0.0
  %v899 = vmax.f32 %v813, 0.0
  %v900 = vmax.f32 %v816, 0.0
  %v901 = vmax.f32 %v821, 0.0
  %v902 = vmax.f32 %v824, 0.0
  %v903 = vmax.f32 %v829, 0.0
  %v904 = vmax.f32 %v832, 0.0
  %v905 = vmax.f32 %v837, 0.0
  %v906 = vmax.f32 %v840, 0.0
  %v907 = vpack.c.bf16 %v844, %v843
  %v908 = vpack.c.bf16 %v846, %v845
  %v909 = vpack.c.bf16 %v848, %v847
  %v910 = vpack.c.bf16 %v850, %v849
  %v911 = vpack.c.bf16 %v852, %v851
  %v912 = vpack.c.bf16 %v854, %v853
  %v913 = vpack.c.bf16 %v856, %v855
  %v914 = vpack.c.bf16 %v858, %v857
  %v915 = vpack.c.bf16 %v860, %v859
  %v916 = vpack.c.bf16 %v862, %v861
  %v917 = vpack.c.bf16 %v864, %v863
  %v918 = vpack.c.bf16 %v866, %v865
  %v919 = vpack.c.bf16 %v868, %v867
  %v920 = vpack.c.bf16 %v870, %v869
  %v921 = vpack.c.bf16 %v872, %v871
  %v922 = vpack.c.bf16 %v874, %v873
  %v923 = vpack.c.bf16 %v876, %v875
  %v924 = vpack.c.bf16 %v878, %v877
  %v925 = vpack.c.bf16 %v880, %v879
  %v926 = vpack.c.bf16 %v882, %v881
  %v927 = vpack.c.bf16 %v884, %v883
  %v928 = vpack.c.bf16 %v886, %v885
  %v929 = vpack.c.bf16 %v888, %v887
  %v930 = vpack.c.bf16 %v890, %v889
  %v931 = vpack.c.bf16 %v892, %v891
  %v932 = vpack.c.bf16 %v894, %v893
  %v933 = vpack.c.bf16 %v896, %v895
  %v934 = vpack.c.bf16 %v898, %v897
  %v935 = vpack.c.bf16 %v900, %v899
  %v936 = vpack.c.bf16 %v902, %v901
  %v937 = vpack.c.bf16 %v904, %v903
  %v938 = vpack.c.bf16 %v906, %v905
  %v971 = vunpack.c.l.b16 %v907
  %v972 = vunpack.c.h.b16 %v907
  %v973 = vunpack.c.l.b16 %v908
  %v974 = vunpack.c.h.b16 %v908
  %v975 = vunpack.c.l.b16 %v909
  %v976 = vunpack.c.h.b16 %v909
  %v977 = vunpack.c.l.b16 %v910
  %v978 = vunpack.c.h.b16 %v910
  %v979 = vunpack.c.l.b16 %v911
  %v980 = vunpack.c.h.b16 %v911
  %v981 = vunpack.c.l.b16 %v912
  %v982 = vunpack.c.h.b16 %v912
  %v983 = vunpack.c.l.b16 %v913
  %v984 = vunpack.c.h.b16 %v913
  %v985 = vunpack.c.l.b16 %v914
  %v986 = vunpack.c.h.b16 %v914
  %v987 = vunpack.c.l.b16 %v915
  %v988 = vunpack.c.h.b16 %v915
  %v989 = vunpack.c.l.b16 %v916
  %v990 = vunpack.c.h.b16 %v916
  %v991 = vunpack.c.l.b16 %v917
  %v992 = vunpack.c.h.b16 %v917
  %v993 = vunpack.c.l.b16 %v918
  %v994 = vunpack.c.h.b16 %v918
  %v995 = vunpack.c.l.b16 %v919
  %v996 = vunpack.c.h.b16 %v919
  %v997 = vunpack.c.l.b16 %v920
  %v998 = vunpack.c.h.b16 %v920
  %v999 = vunpack.c.l.b16 %v921
  %v1000 = vunpack.c.h.b16 %v921
  %v1001 = vunpack.c.l.b16 %v922
  %v1002 = vunpack.c.h.b16 %v922
  %v1003 = vunpack.c.l.b16 %v923
  %v1004 = vunpack.c.h.b16 %v923
  %v1005 = vunpack.c.l.b16 %v924
  %v1006 = vunpack.c.h.b16 %v924
  %v1007 = vunpack.c.l.b16 %v925
  %v1008 = vunpack.c.h.b16 %v925
  %v1009 = vunpack.c.l.b16 %v926
  %v1010 = vunpack.c.h.b16 %v926
  %v1011 = vunpack.c.l.b16 %v927
  %v1012 = vunpack.c.h.b16 %v927
  %v1013 = vunpack.c.l.b16 %v928
  %v1014 = vunpack.c.h.b16 %v928
  %v1015 = vunpack.c.l.b16 %v929
  %v1016 = vunpack.c.h.b16 %v929
  %v1017 = vunpack.c.l.b16 %v930
  %v1018 = vunpack.c.h.b16 %v930
  %v1019 = vunpack.c.l.b16 %v931
  %v1020 = vunpack.c.h.b16 %v931
  %v1021 = vunpack.c.l.b16 %v932
  %v1022 = vunpack.c.h.b16 %v932
  %v1023 = vunpack.c.l.b16 %v933
  %v1024 = vunpack.c.h.b16 %v933
  %v1025 = vunpack.c.l.b16 %v934
  %v1026 = vunpack.c.h.b16 %v934
  %v1027 = vunpack.c.l.b16 %v935
  %v1028 = vunpack.c.h.b16 %v935
  %v1029 = vunpack.c.l.b16 %v936
  %v1030 = vunpack.c.h.b16 %v936
  %v1031 = vunpack.c.l.b16 %v937
  %v1032 = vunpack.c.h.b16 %v937
  %v1033 = vunpack.c.l.b16 %v938
  %v1034 = vunpack.c.h.b16 %v938
  %v1035 = vpack.c.b16 %v971, %v971
  %v1036 = vpack.c.b16 %v972, %v972
  %v1037 = vpack.c.b16 %v973, %v973
  %v1038 = vpack.c.b16 %v974, %v974
  %v1039 = vpack.c.b16 %v975, %v975
  %v1040 = vpack.c.b16 %v976, %v976
  %v1041 = vpack.c.b16 %v977, %v977
  %v1042 = vpack.c.b16 %v978, %v978
  %v1043 = vpack.c.b16 %v979, %v979
  %v1044 = vpack.c.b16 %v980, %v980
  %v1045 = vpack.c.b16 %v981, %v981
  %v1046 = vpack.c.b16 %v982, %v982
  %v1047 = vpack.c.b16 %v983, %v983
  %v1048 = vpack.c.b16 %v984, %v984
  %v1049 = vpack.c.b16 %v985, %v985
  %v1050 = vpack.c.b16 %v986, %v986
  %v1051 = vpack.c.b16 %v987, %v987
  %v1052 = vpack.c.b16 %v988, %v988
  %v1053 = vpack.c.b16 %v989, %v989
  %v1054 = vpack.c.b16 %v990, %v990
  %v1055 = vpack.c.b16 %v991, %v991
  %v1056 = vpack.c.b16 %v992, %v992
  %v1057 = vpack.c.b16 %v993, %v993
  %v1058 = vpack.c.b16 %v994, %v994
  %v1059 = vpack.c.b16 %v995, %v995
  %v1060 = vpack.c.b16 %v996, %v996
  %v1061 = vpack.c.b16 %v997, %v997
  %v1062 = vpack.c.b16 %v998, %v998
  %v1063 = vpack.c.b16 %v999, %v999
  %v1064 = vpack.c.b16 %v1000, %v1000
  %v1065 = vpack.c.b16 %v1001, %v1001
  %v1066 = vpack.c.b16 %v1002, %v1002
  %v1067 = vpack.c.b16 %v1003, %v1003
  %v1068 = vpack.c.b16 %v1004, %v1004
  %v1069 = vpack.c.b16 %v1005, %v1005
  %v1070 = vpack.c.b16 %v1006, %v1006
  %v1071 = vpack.c.b16 %v1007, %v1007
  %v1072 = vpack.c.b16 %v1008, %v1008
  %v1073 = vpack.c.b16 %v1009, %v1009
  %v1074 = vpack.c.b16 %v1010, %v1010
  %v1075 = vpack.c.b16 %v1011, %v1011
  %v1076 = vpack.c.b16 %v1012, %v1012
  %v1077 = vpack.c.b16 %v1013, %v1013
  %v1078 = vpack.c.b16 %v1014, %v1014
  %v1079 = vpack.c.b16 %v1015, %v1015
  %v1080 = vpack.c.b16 %v1016, %v1016
  %v1081 = vpack.c.b16 %v1017, %v1017
  %v1082 = vpack.c.b16 %v1018, %v1018
  %v1083 = vpack.c.b16 %v1019, %v1019
  %v1084 = vpack.c.b16 %v1020, %v1020
  %v1085 = vpack.c.b16 %v1021, %v1021
  %v1086 = vpack.c.b16 %v1022, %v1022
  %v1087 = vpack.c.b16 %v1023, %v1023
  %v1088 = vpack.c.b16 %v1024, %v1024
  %v1089 = vpack.c.b16 %v1025, %v1025
  %v1090 = vpack.c.b16 %v1026, %v1026
  %v1091 = vpack.c.b16 %v1027, %v1027
  %v1092 = vpack.c.b16 %v1028, %v1028
  %v1093 = vpack.c.b16 %v1029, %v1029
  %v1094 = vpack.c.b16 %v1030, %v1030
  %v1095 = vpack.c.b16 %v1031, %v1031
  %v1096 = vpack.c.b16 %v1032, %v1032
  %v1097 = vpack.c.b16 %v1033, %v1033
  %v1098 = vpack.c.b16 %v1034, %v1034
  %1163 = vst [vmem:[%s3] sm:$0xf] %v1035
  %1164 = vst [vmem:[%s3 + $0x4] sm:$0xf] %v1036
  %1165 = vst [vmem:[%s3 + $0x8] sm:$0xf] %v1037
  %1166 = vst [vmem:[%s3 + $0xc] sm:$0xf] %v1038
  %1167 = vst [vmem:[%s3 + $0x10] sm:$0xf] %v1039
  %1168 = vst [vmem:[%s3 + $0x14] sm:$0xf] %v1040
  %1169 = vst [vmem:[%s3 + $0x18] sm:$0xf] %v1041
  %1170 = vst [vmem:[%s3 + $0x1c] sm:$0xf] %v1042
  %1171 = vst [vmem:[%s3 + $0x20] sm:$0xf] %v1043
  %1172 = vst [vmem:[%s3 + $0x24] sm:$0xf] %v1044
  %1173 = vst [vmem:[%s3 + $0x28] sm:$0xf] %v1045
  %1174 = vst [vmem:[%s3 + $0x2c] sm:$0xf] %v1046
  %1175 = vst [vmem:[%s3 + $0x30] sm:$0xf] %v1047
  %1176 = vst [vmem:[%s3 + $0x34] sm:$0xf] %v1048
  %1177 = vst [vmem:[%s3 + $0x38] sm:$0xf] %v1049
  %1178 = vst [vmem:[%s3 + $0x3c] sm:$0xf] %v1050
  %1179 = vst [vmem:[%s3 + $0x40] sm:$0xf] %v1051
  %1180 = vst [vmem:[%s3 + $0x44] sm:$0xf] %v1052
  %1181 = vst [vmem:[%s3 + $0x48] sm:$0xf] %v1053
  %1182 = vst [vmem:[%s3 + $0x4c] sm:$0xf] %v1054
  %1183 = vst [vmem:[%s3 + $0x50] sm:$0xf] %v1055
  %1184 = vst [vmem:[%s3 + $0x54] sm:$0xf] %v1056
  %1185 = vst [vmem:[%s3 + $0x58] sm:$0xf] %v1057
  %1186 = vst [vmem:[%s3 + $0x5c] sm:$0xf] %v1058
  %1187 = vst [vmem:[%s3 + $0x60] sm:$0xf] %v1059
  %1188 = vst [vmem:[%s3 + $0x64] sm:$0xf] %v1060
  %1189 = vst [vmem:[%s3 + $0x68] sm:$0xf] %v1061
  %1190 = vst [vmem:[%s3 + $0x6c] sm:$0xf] %v1062
  %1191 = vst [vmem:[%s3 + $0x70] sm:$0xf] %v1063
  %1192 = vst [vmem:[%s3 + $0x74] sm:$0xf] %v1064
  %1193 = vst [vmem:[%s3 + $0x78] sm:$0xf] %v1065
  %1194 = vst [vmem:[%s3 + $0x7c] sm:$0xf] %v1066
  %1195 = vst [vmem:[%s3 + $0x80] sm:$0xf] %v1067
  %1196 = vst [vmem:[%s3 + $0x84] sm:$0xf] %v1068
  %1197 = vst [vmem:[%s3 + $0x88] sm:$0xf] %v1069
  %1198 = vst [vmem:[%s3 + $0x8c] sm:$0xf] %v1070
  %1199 = vst [vmem:[%s3 + $0x90] sm:$0xf] %v1071
  %1200 = vst [vmem:[%s3 + $0x94] sm:$0xf] %v1072
  %1201 = vst [vmem:[%s3 + $0x98] sm:$0xf] %v1073
  %1202 = vst [vmem:[%s3 + $0x9c] sm:$0xf] %v1074
  %1203 = vst [vmem:[%s3 + $0xa0] sm:$0xf] %v1075
  %1204 = vst [vmem:[%s3 + $0xa4] sm:$0xf] %v1076
  %1205 = vst [vmem:[%s3 + $0xa8] sm:$0xf] %v1077
  %1206 = vst [vmem:[%s3 + $0xac] sm:$0xf] %v1078
  %1207 = vst [vmem:[%s3 + $0xb0] sm:$0xf] %v1079
  %1208 = vst [vmem:[%s3 + $0xb4] sm:$0xf] %v1080
  %1209 = vst [vmem:[%s3 + $0xb8] sm:$0xf] %v1081
  %1210 = vst [vmem:[%s3 + $0xbc] sm:$0xf] %v1082
  %1211 = vst [vmem:[%s3 + $0xc0] sm:$0xf] %v1083
  %1212 = vst [vmem:[%s3 + $0xc4] sm:$0xf] %v1084
  %1213 = vst [vmem:[%s3 + $0xc8] sm:$0xf] %v1085
  %1214 = vst [vmem:[%s3 + $0xcc] sm:$0xf] %v1086
  %1215 = vst [vmem:[%s3 + $0xd0] sm:$0xf] %v1087
  %1216 = vst [vmem:[%s3 + $0xd4] sm:$0xf] %v1088
  %1217 = vst [vmem:[%s3 + $0xd8] sm:$0xf] %v1089
  %1218 = vst [vmem:[%s3 + $0xdc] sm:$0xf] %v1090
  %1219 = vst [vmem:[%s3 + $0xe0] sm:$0xf] %v1091
  %1220 = vst [vmem:[%s3 + $0xe4] sm:$0xf] %v1092
  %1221 = vst [vmem:[%s3 + $0xe8] sm:$0xf] %v1093
  %1222 = vst [vmem:[%s3 + $0xec] sm:$0xf] %v1094
  %1223 = vst [vmem:[%s3 + $0xf0] sm:$0xf] %v1095
  %1224 = vst [vmem:[%s3 + $0xf4] sm:$0xf] %v1096
  %1225 = vst [vmem:[%s3 + $0xf8] sm:$0xf] %v1097
  %1226 = vst [vmem:[%s3 + $0xfc] sm:$0xf] %v1098
  // Predicated region
  $region14: #{resnet_common_branch.12} parent=0 // pred_check
    _
  $region15: #{resnet_common_branch.12} parent=0 // pred_check_branch
    %1228 = sbr.rel (0) target = $region17
  $region16: #{resnet_common_branch.12} parent=0 // pred_region
    _
  $region17: #{resnet_common_branch.12} parent=0 // pred_fallthru
    _
  // Predicated region
  $region18: #{resnet_common_branch.12} parent=0 // pred_check
    _
  $region19: #{resnet_common_branch.12} parent=0 // pred_check_branch
    %1230 = sbr.rel (0) target = $region21
  $region20: #{resnet_common_branch.12} parent=0 // pred_region
    _
  $region21: #{resnet_common_branch.12} parent=0 // pred_fallthru
    _

// kernel: resnet_common_branch.18
$region0: #{resnet_common_branch.18}
  #allocation0 [shape = 'u32[]', space=smem, size = 0x4, offset = 0x4, fixed_abs, tag = 'smem constant byte address 0x4 - core index']
  #allocation1 [shape = 'u32[144,128]{1,0:T(1,128)}', space=vmem, size = 0x12000, scoped, tag = 'internal scratch']
  %s0 = inlined_call_operand.vmem [shape: bf16[128,256], index: 0, kind: input, shape index: {}]
  %s1 = inlined_call_operand.vmem [shape: bf16[256,128], index: 1, kind: input, shape index: {}]
  %s2 = inlined_call_operand.vmem [shape: f32[1,128], index: 2, kind: input, shape index: {}]
  %s3 = inlined_call_operand.vmem [shape: bf16[128,128], index: 3, kind: output, shape index: {}]
  %s4 = sld [smem:[#allocation0]]
  $region22: #{resnet_common_branch.18} parent=0
    _
  %s6 = ssub.s32 1, %s4
  %s7 = scalar_select 0, %s6, %s4
  // Predicated region
  $region2: #{resnet_common_branch.18} parent=0 // pred_check
    _
  $region3: #{resnet_common_branch.18} parent=0 // pred_check_branch
    %9 = sbr.rel (0) target = $region5
  $region4: #{resnet_common_branch.18} parent=0 // pred_region
    _
  $region5: #{resnet_common_branch.18} parent=0 // pred_fallthru
    _
  // Predicated region
  $region6: #{resnet_common_branch.18} parent=0 // pred_check
    _
  $region7: #{resnet_common_branch.18} parent=0 // pred_check_branch
    %11 = sbr.rel (0) target = $region9
  $region8: #{resnet_common_branch.18} parent=0 // pred_region
    _
  $region9: #{resnet_common_branch.18} parent=0 // pred_fallthru
    _
  // Predicated region
  $region10: #{resnet_common_branch.18} parent=0 // pred_check
    _
  $region11: #{resnet_common_branch.18} parent=0 // pred_check_branch
    %13 = sbr.rel (0) target = $region13
  $region12: #{resnet_common_branch.18} parent=0 // pred_region
    _
  $region13: #{resnet_common_branch.18} parent=0 // pred_fallthru
    _
  %v15 = vld [vmem:[%s0] sm:$0xff]
  %v16 = vld [vmem:[%s0 + $0x8] sm:$0xff]
  %v17 = vld [vmem:[%s0 + $0x10] sm:$0xff]
  %v18 = vld [vmem:[%s0 + $0x18] sm:$0xff]
  %v19 = vld [vmem:[%s0 + $0x20] sm:$0xff]
  %v20 = vld [vmem:[%s0 + $0x28] sm:$0xff]
  %v21 = vld [vmem:[%s0 + $0x30] sm:$0xff]
  %v22 = vld [vmem:[%s0 + $0x38] sm:$0xff]
  %v23 = vld [vmem:[%s0 + $0x40] sm:$0xff]
  %v24 = vld [vmem:[%s0 + $0x48] sm:$0xff]
  %v25 = vld [vmem:[%s0 + $0x50] sm:$0xff]
  %v26 = vld [vmem:[%s0 + $0x58] sm:$0xff]
  %v27 = vld [vmem:[%s0 + $0x60] sm:$0xff]
  %v28 = vld [vmem:[%s0 + $0x68] sm:$0xff]
  %v29 = vld [vmem:[%s0 + $0x70] sm:$0xff]
  %v30 = vld [vmem:[%s0 + $0x78] sm:$0xff]
  %v31 = vld [vmem:[%s1] sm:$0xf]
  %v32 = vld [vmem:[%s1 + $0x4] sm:$0xf]
  %v33 = vld [vmem:[%s1 + $0x8] sm:$0xf]
  %v34 = vld [vmem:[%s1 + $0xc] sm:$0xf]
  %v35 = vld [vmem:[%s1 + $0x10] sm:$0xf]
  %v36 = vld [vmem:[%s1 + $0x14] sm:$0xf]
  %v37 = vld [vmem:[%s1 + $0x18] sm:$0xf]
  %v38 = vld [vmem:[%s1 + $0x1c] sm:$0xf]
  %v39 = vld [vmem:[%s1 + $0x20] sm:$0xf]
  %v40 = vld [vmem:[%s1 + $0x24] sm:$0xf]
  %v41 = vld [vmem:[%s1 + $0x28] sm:$0xf]
  %v42 = vld [vmem:[%s1 + $0x2c] sm:$0xf]
  %v43 = vld [vmem:[%s1 + $0x30] sm:$0xf]
  %v44 = vld [vmem:[%s1 + $0x34] sm:$0xf]
  %v45 = vld [vmem:[%s1 + $0x38] sm:$0xf]
  %v46 = vld [vmem:[%s1 + $0x3c] sm:$0xf]
  %v47 = vld [vmem:[%s1 + $0x40] sm:$0xf]
  %v48 = vld [vmem:[%s1 + $0x44] sm:$0xf]
  %v49 = vld [vmem:[%s1 + $0x48] sm:$0xf]
  %v50 = vld [vmem:[%s1 + $0x4c] sm:$0xf]
  %v51 = vld [vmem:[%s1 + $0x50] sm:$0xf]
  %v52 = vld [vmem:[%s1 + $0x54] sm:$0xf]
  %v53 = vld [vmem:[%s1 + $0x58] sm:$0xf]
  %v54 = vld [vmem:[%s1 + $0x5c] sm:$0xf]
  %v55 = vld [vmem:[%s1 + $0x60] sm:$0xf]
  %v56 = vld [vmem:[%s1 + $0x64] sm:$0xf]
  %v57 = vld [vmem:[%s1 + $0x68] sm:$0xf]
  %v58 = vld [vmem:[%s1 + $0x6c] sm:$0xf]
  %v59 = vld [vmem:[%s1 + $0x70] sm:$0xf]
  %v60 = vld [vmem:[%s1 + $0x74] sm:$0xf]
  %v61 = vld [vmem:[%s1 + $0x78] sm:$0xf]
  %v62 = vld [vmem:[%s1 + $0x7c] sm:$0xf]
  %v63 = vld [vmem:[%s2] sm:$0x1]
  %v65 = vlaneseq
  %v66 = vshrl.u32 %v65, 7
  %v67 = vsub.s32 0, %v66
  %v68 = vrot.slane %v63, %v67
  %v86 = vunpack.c.l.b16 %v15
  %v87 = vunpack.c.h.b16 %v15
  %v88 = vunpack.c.l.b16 %v16
  %v89 = vunpack.c.h.b16 %v16
  %v90 = vunpack.c.l.b16 %v17
  %v91 = vunpack.c.h.b16 %v17
  %v92 = vunpack.c.l.b16 %v18
  %v93 = vunpack.c.h.b16 %v18
  %v94 = vunpack.c.l.b16 %v19
  %v95 = vunpack.c.h.b16 %v19
  %v96 = vunpack.c.l.b16 %v20
  %v97 = vunpack.c.h.b16 %v20
  %v98 = vunpack.c.l.b16 %v21
  %v99 = vunpack.c.h.b16 %v21
  %v100 = vunpack.c.l.b16 %v22
  %v101 = vunpack.c.h.b16 %v22
  %v102 = vunpack.c.l.b16 %v23
  %v103 = vunpack.c.h.b16 %v23
  %v104 = vunpack.c.l.b16 %v24
  %v105 = vunpack.c.h.b16 %v24
  %v106 = vunpack.c.l.b16 %v25
  %v107 = vunpack.c.h.b16 %v25
  %v108 = vunpack.c.l.b16 %v26
  %v109 = vunpack.c.h.b16 %v26
  %v110 = vunpack.c.l.b16 %v27
  %v111 = vunpack.c.h.b16 %v27
  %v112 = vunpack.c.l.b16 %v28
  %v113 = vunpack.c.h.b16 %v28
  %v114 = vunpack.c.l.b16 %v29
  %v115 = vunpack.c.h.b16 %v29
  %v116 = vunpack.c.l.b16 %v30
  %v117 = vunpack.c.h.b16 %v30
  %v118 = vpack.c.b16 %v88, %v86
  %v119 = vpack.c.b16 %v89, %v87
  %v120 = vpack.c.b16 %v92, %v90
  %v121 = vpack.c.b16 %v93, %v91
  %v122 = vpack.c.b16 %v96, %v94
  %v123 = vpack.c.b16 %v97, %v95
  %v124 = vpack.c.b16 %v100, %v98
  %v125 = vpack.c.b16 %v101, %v99
  %v126 = vpack.c.b16 %v104, %v102
  %v127 = vpack.c.b16 %v105, %v103
  %v128 = vpack.c.b16 %v108, %v106
  %v129 = vpack.c.b16 %v109, %v107
  %v130 = vpack.c.b16 %v112, %v110
  %v131 = vpack.c.b16 %v113, %v111
  %v132 = vpack.c.b16 %v116, %v114
  %v133 = vpack.c.b16 %v117, %v115
  %v182 = vunpack.c.l.b16 %v31
  %v183 = vunpack.c.l.b16 %v32
  %v184 = vunpack.c.l.b16 %v33
  %v185 = vunpack.c.l.b16 %v34
  %v186 = vunpack.c.l.b16 %v35
  %v187 = vunpack.c.l.b16 %v36
  %v188 = vunpack.c.l.b16 %v37
  %v189 = vunpack.c.l.b16 %v38
  %v190 = vunpack.c.l.b16 %v39
  %v191 = vunpack.c.l.b16 %v40
  %v192 = vunpack.c.l.b16 %v41
  %v193 = vunpack.c.l.b16 %v42
  %v194 = vunpack.c.l.b16 %v43
  %v195 = vunpack.c.l.b16 %v44
  %v196 = vunpack.c.l.b16 %v45
  %v197 = vunpack.c.l.b16 %v46
  %v198 = vunpack.c.l.b16 %v47
  %v199 = vunpack.c.l.b16 %v48
  %v200 = vunpack.c.l.b16 %v49
  %v201 = vunpack.c.l.b16 %v50
  %v202 = vunpack.c.l.b16 %v51
  %v203 = vunpack.c.l.b16 %v52
  %v204 = vunpack.c.l.b16 %v53
  %v205 = vunpack.c.l.b16 %v54
  %v206 = vunpack.c.l.b16 %v55
  %v207 = vunpack.c.l.b16 %v56
  %v208 = vunpack.c.l.b16 %v57
  %v209 = vunpack.c.l.b16 %v58
  %v210 = vunpack.c.l.b16 %v59
  %v211 = vunpack.c.l.b16 %v60
  %v212 = vunpack.c.l.b16 %v61
  %v213 = vunpack.c.l.b16 %v62
  %v214 = vpack.c.b16 %v183, %v182
  %v215 = vpack.c.b16 %v185, %v184
  %v216 = vpack.c.b16 %v187, %v186
  %v217 = vpack.c.b16 %v189, %v188
  %v218 = vpack.c.b16 %v191, %v190
  %v219 = vpack.c.b16 %v193, %v192
  %v220 = vpack.c.b16 %v195, %v194
  %v221 = vpack.c.b16 %v197, %v196
  %v222 = vpack.c.b16 %v199, %v198
  %v223 = vpack.c.b16 %v201, %v200
  %v224 = vpack.c.b16 %v203, %v202
  %v225 = vpack.c.b16 %v205, %v204
  %v226 = vpack.c.b16 %v207, %v206
  %v227 = vpack.c.b16 %v209, %v208
  %v228 = vpack.c.b16 %v211, %v210
  %v229 = vpack.c.b16 %v213, %v212
  %246 = vmatprep.subr.bf16.mxu0 0
  %247 = vmatpush1.bf16.msra.mxu0 %v214
  %248 = vmatprep.subr.bf16.mxu0 0
  %249 = vmatpush1.bf16.msra.mxu0 %v215
  %250 = vmatprep.subr.bf16.mxu0 0
  %251 = vmatpush1.bf16.msra.mxu0 %v216
  %252 = vmatprep.subr.bf16.mxu0 0
  %253 = vmatpush1.bf16.msra.mxu0 %v217
  %254 = vmatprep.subr.bf16.mxu0 0
  %255 = vmatpush1.bf16.msra.mxu0 %v218
  %256 = vmatprep.subr.bf16.mxu0 0
  %257 = vmatpush1.bf16.msra.mxu0 %v219
  %258 = vmatprep.subr.bf16.mxu0 0
  %259 = vmatpush1.bf16.msra.mxu0 %v220
  %260 = vmatprep.subr.bf16.mxu0 0
  %261 = vmatpush1.bf16.msra.mxu0 %v221
  %262 = vmatprep.subr.bf16.mxu0 0
  %263 = vmatpush1.bf16.msra.mxu0 %v222
  %264 = vmatprep.subr.bf16.mxu0 0
  %265 = vmatpush1.bf16.msra.mxu0 %v223
  %266 = vmatprep.subr.bf16.mxu0 0
  %267 = vmatpush1.bf16.msra.mxu0 %v224
  %268 = vmatprep.subr.bf16.mxu0 0
  %269 = vmatpush1.bf16.msra.mxu0 %v225
  %270 = vmatprep.subr.bf16.mxu0 0
  %271 = vmatpush1.bf16.msra.mxu0 %v226
  %272 = vmatprep.subr.bf16.mxu0 0
  %273 = vmatpush1.bf16.msra.mxu0 %v227
  %274 = vmatprep.subr.bf16.mxu0 0
  %275 = vmatpush1.bf16.msra.mxu0 %v228
  %276 = vmatprep.subr.bf16.mxu0 0
  %277 = vmatpush1.bf16.msra.mxu0 %v229
  %278 = vmatprep.mubr.bf16.mxu0 %v119
  %279 = vmatmul.mubr.bf16.gmra.mrb[0].mxu0 %v118
  %v280 = vpop.f32.mrb[0].mxu0
  %v281 = vadd.f32 %v68, %v280
  %v282 = vpop.f32.mrb[0].mxu0
  %v283 = vpop.f32.mrb[0].mxu0
  %v284 = vadd.f32 %v68, %v283
  %v285 = vpop.f32.mrb[0].mxu0
  %286 = vmatprep.mubr.bf16.mxu0 %v121
  %287 = vmatmul.mubr.bf16.gmra.mrb[0].mxu0 %v120
  %v288 = vpop.f32.mrb[0].mxu0
  %v289 = vadd.f32 %v68, %v288
  %v290 = vpop.f32.mrb[0].mxu0
  %v291 = vpop.f32.mrb[0].mxu0
  %v292 = vadd.f32 %v68, %v291
  %v293 = vpop.f32.mrb[0].mxu0
  %294 = vmatprep.mubr.bf16.mxu0 %v123
  %295 = vmatmul.mubr.bf16.gmra.mrb[0].mxu0 %v122
  %v296 = vpop.f32.mrb[0].mxu0
  %v297 = vadd.f32 %v68, %v296
  %v298 = vpop.f32.mrb[0].mxu0
  %v299 = vpop.f32.mrb[0].mxu0
  %v300 = vadd.f32 %v68, %v299
  %v301 = vpop.f32.mrb[0].mxu0
  %302 = vmatprep.mubr.bf16.mxu0 %v125
  %303 = vmatmul.mubr.bf16.gmra.mrb[0].mxu0 %v124
  %v304 = vpop.f32.mrb[0].mxu0
  %v305 = vadd.f32 %v68, %v304
  %v306 = vpop.f32.mrb[0].mxu0
  %v307 = vpop.f32.mrb[0].mxu0
  %v308 = vadd.f32 %v68, %v307
  %v309 = vpop.f32.mrb[0].mxu0
  %310 = vmatprep.mubr.bf16.mxu0 %v127
  %311 = vmatmul.mubr.bf16.gmra.mrb[0].mxu0 %v126
  %v312 = vpop.f32.mrb[0].mxu0
  %v313 = vadd.f32 %v68, %v312
  %v314 = vpop.f32.mrb[0].mxu0
  %v315 = vpop.f32.mrb[0].mxu0
  %v316 = vadd.f32 %v68, %v315
  %v317 = vpop.f32.mrb[0].mxu0
  %318 = vmatprep.mubr.bf16.mxu0 %v129
  %319 = vmatmul.mubr.bf16.gmra.mrb[0].mxu0 %v128
  %v320 = vpop.f32.mrb[0].mxu0
  %v321 = vadd.f32 %v68, %v320
  %v322 = vpop.f32.mrb[0].mxu0
  %v323 = vpop.f32.mrb[0].mxu0
  %v324 = vadd.f32 %v68, %v323
  %v325 = vpop.f32.mrb[0].mxu0
  %326 = vmatprep.mubr.bf16.mxu0 %v131
  %327 = vmatmul.mubr.bf16.gmra.mrb[0].mxu0 %v130
  %v328 = vpop.f32.mrb[0].mxu0
  %v329 = vadd.f32 %v68, %v328
  %v330 = vpop.f32.mrb[0].mxu0
  %v331 = vpop.f32.mrb[0].mxu0
  %v332 = vadd.f32 %v68, %v331
  %v333 = vpop.f32.mrb[0].mxu0
  %334 = vmatprep.mubr.bf16.mxu0 %v133
  %335 = vmatmul.mubr.bf16.gmra.mrb[0].mxu0 %v132
  %v336 = vpop.f32.mrb[0].mxu0
  %v337 = vadd.f32 %v68, %v336
  %v338 = vpop.f32.mrb[0].mxu0
  %v339 = vpop.f32.mrb[0].mxu0
  %v340 = vadd.f32 %v68, %v339
  %v341 = vpop.f32.mrb[0].mxu0
  %342 = vdwg.mxu0
  %v343 = vmax.f32 %v281, 0.0
  %v344 = vmax.f32 %v284, 0.0
  %v345 = vmax.f32 %v289, 0.0
  %v346 = vmax.f32 %v292, 0.0
  %v347 = vmax.f32 %v297, 0.0
  %v348 = vmax.f32 %v300, 0.0
  %v349 = vmax.f32 %v305, 0.0
  %v350 = vmax.f32 %v308, 0.0
  %v351 = vmax.f32 %v313, 0.0
  %v352 = vmax.f32 %v316, 0.0
  %v353 = vmax.f32 %v321, 0.0
  %v354 = vmax.f32 %v324, 0.0
  %v355 = vmax.f32 %v329, 0.0
  %v356 = vmax.f32 %v332, 0.0
  %v357 = vmax.f32 %v337, 0.0
  %v358 = vmax.f32 %v340, 0.0
  %v359 = vpack.c.bf16 %v344, %v343
  %v360 = vpack.c.bf16 %v346, %v345
  %v361 = vpack.c.bf16 %v348, %v347
  %v362 = vpack.c.bf16 %v350, %v349
  %v363 = vpack.c.bf16 %v352, %v351
  %v364 = vpack.c.bf16 %v354, %v353
  %v365 = vpack.c.bf16 %v356, %v355
  %v366 = vpack.c.bf16 %v358, %v357
  %v375 = vunpack.c.l.b16 %v359
  %v376 = vunpack.c.h.b16 %v359
  %v377 = vunpack.c.l.b16 %v360
  %v378 = vunpack.c.h.b16 %v360
  %v379 = vunpack.c.l.b16 %v361
  %v380 = vunpack.c.h.b16 %v361
  %v381 = vunpack.c.l.b16 %v362
  %v382 = vunpack.c.h.b16 %v362
  %v383 = vunpack.c.l.b16 %v363
  %v384 = vunpack.c.h.b16 %v363
  %v385 = vunpack.c.l.b16 %v364
  %v386 = vunpack.c.h.b16 %v364
  %v387 = vunpack.c.l.b16 %v365
  %v388 = vunpack.c.h.b16 %v365
  %v389 = vunpack.c.l.b16 %v366
  %v390 = vunpack.c.h.b16 %v366
  %v391 = vpack.c.b16 %v375, %v375
  %v392 = vpack.c.b16 %v376, %v376
  %v393 = vpack.c.b16 %v377, %v377
  %v394 = vpack.c.b16 %v378, %v378
  %v395 = vpack.c.b16 %v379, %v379
  %v396 = vpack.c.b16 %v380, %v380
  %v397 = vpack.c.b16 %v381, %v381
  %v398 = vpack.c.b16 %v382, %v382
  %v399 = vpack.c.b16 %v383, %v383
  %v400 = vpack.c.b16 %v384, %v384
  %v401 = vpack.c.b16 %v385, %v385
  %v402 = vpack.c.b16 %v386, %v386
  %v403 = vpack.c.b16 %v387, %v387
  %v404 = vpack.c.b16 %v388, %v388
  %v405 = vpack.c.b16 %v389, %v389
  %v406 = vpack.c.b16 %v390, %v390
  %423 = vst [vmem:[%s3] sm:$0xf] %v391
  %424 = vst [vmem:[%s3 + $0x4] sm:$0xf] %v392
  %425 = vst [vmem:[%s3 + $0x8] sm:$0xf] %v393
  %426 = vst [vmem:[%s3 + $0xc] sm:$0xf] %v394
  %427 = vst [vmem:[%s3 + $0x10] sm:$0xf] %v395
  %428 = vst [vmem:[%s3 + $0x14] sm:$0xf] %v396
  %429 = vst [vmem:[%s3 + $0x18] sm:$0xf] %v397
  %430 = vst [vmem:[%s3 + $0x1c] sm:$0xf] %v398
  %431 = vst [vmem:[%s3 + $0x20] sm:$0xf] %v399
  %432 = vst [vmem:[%s3 + $0x24] sm:$0xf] %v400
  %433 = vst [vmem:[%s3 + $0x28] sm:$0xf] %v401
  %434 = vst [vmem:[%s3 + $0x2c] sm:$0xf] %v402
  %435 = vst [vmem:[%s3 + $0x30] sm:$0xf] %v403
  %436 = vst [vmem:[%s3 + $0x34] sm:$0xf] %v404
  %437 = vst [vmem:[%s3 + $0x38] sm:$0xf] %v405
  %438 = vst [vmem:[%s3 + $0x3c] sm:$0xf] %v406
  // Predicated region
  $region14: #{resnet_common_branch.18} parent=0 // pred_check
    _
  $region15: #{resnet_common_branch.18} parent=0 // pred_check_branch
    %440 = sbr.rel (0) target = $region17
  $region16: #{resnet_common_branch.18} parent=0 // pred_region
    _
  $region17: #{resnet_common_branch.18} parent=0 // pred_fallthru
    _
  // Predicated region
  $region18: #{resnet_common_branch.18} parent=0 // pred_check
    _
  $region19: #{resnet_common_branch.18} parent=0 // pred_check_branch
    %442 = sbr.rel (0) target = $region21
  $region20: #{resnet_common_branch.18} parent=0 // pred_region
    _
  $region21: #{resnet_common_branch.18} parent=0 // pred_fallthru
    _

// kernel: resnet_common_branch.17
$region0: #{resnet_common_branch.17}
  #allocation0 [shape = 'u32[]', space=smem, size = 0x4, offset = 0x4, fixed_abs, tag = 'smem constant byte address 0x4 - core index']
  #allocation1 [shape = 'u32[144,128]{1,0:T(1,128)}', space=vmem, size = 0x12000, scoped, tag = 'internal scratch']
  #allocation2 [shape = 'f32[1,1]{1,0:T(1,128)S(6)}', space=smem, size = 0x200, scoped, tag = 'scoped memory for resnet_common_branch.17']
  %s0 = inlined_call_operand.vmem [shape: bf16[2,64,256], index: 0, kind: input, shape index: {}]
  %s1 = inlined_call_operand.<no memory space> [shape: f32[1,1], index: 1, kind: input, shape index: {}]
  %s2 = inlined_call_operand.hbm [shape: f32[2,64,256], index: 2, kind: output, shape index: {0}]
  %s3 = inlined_call_operand.vmem [shape: bf16[2,64,256], index: 3, kind: output, shape index: {1}]
  %4 = xla_tuple %s2, %s3
  %s5 = sld [smem:[#allocation0]]
  $region49: #{resnet_common_branch.17} parent=0
    _
  %s7 = ssub.s32 1, %s5
  %s8 = scalar_select 0, %s7, %s5
  %9 = sst [smem:[#allocation2]] %s1
  $region1: #{resnet_common_branch.17} parent=0
    #allocation3 [shape = 'u8[131072]{0}', space=vmem, size = 0x20000, scoped, tag = 'output window, operand 0']
    #allocation4 [shape = 's32[2]{0}', space=sflag, size = 0x8, scoped, tag = 'scoped memory for resnet_common_branch.17']
    %10 = vsyncpa [#allocation4], 0
    %s11 = scalar_lea.sflag [#allocation4], 1
    %12 = vsyncpa %s11, 0
    loop: start=0, step=1, limit=4
    $region2: #{resnet_common_branch.17} parent=1 // loop_pre_header
      _
    $region3: #{resnet_common_branch.17} parent=1 // loop_header
      %s14 = sphi 0, %s18
      %p15 = scmp.ge.s32.totalorder %s14, 4
      %s24 = sphi 0, %s26
      %s27 = sphi 0, %s24
      %s28 = sphi 0, %s27
      %s44 = sphi 0, %s28
      %s48 = sphi 0, %s48
      %s50 = sphi 0, %s48
      %s51 = sphi 0, %s50
      %s65 = sphi 0, %s51
      %s71 = sphi 0, %s73
      %s74 = sphi 0, %s71
      %s75 = sphi 0, %s74
      %s91 = sphi 0, %s75
      %s97 = sphi 0, %s99
      %s100 = sphi 0, %s97
      %s101 = sphi 0, %s100
      %s117 = sphi 0, %s101
    $region4: #{resnet_common_branch.17} parent=1 // loop_header_branch
      %17 = sbr.rel (%p15) target = $region8
    $region5: #{resnet_common_branch.17} parent=1 // loop_body
      %s19 = ssub.s32 %s14, 1
      %s20 = ssub.s32 %s14, 2
      %s21 = sadd.s32 %s14, 1
      %s22 = ssub.s32 %s14, %s21
      %p23 = scmp.eq.s32.totalorder %s22, 0
      %s25 = sadd.s32 %s24, 1
      %s26 = scalar_select %p23, %s24, %s25
      %p29 = pneg %p23
      %p30 = scmp.eq.s32.totalorder %s14, 1
      %p31 = por %p29, %p30
      %p32 = scmp.ne.s32.totalorder %s24, %s27
      %p33 = scmp.eq.s32.totalorder %s14, 0
      %p34 = por %p32, %p33
      %p35 = scmp.ne.s32.totalorder %s24, %s27
      %p36 = scmp.eq.s32.totalorder %s19, 1
      %p37 = por %p35, %p36
      %p38 = scmp.ne.s32.totalorder %s27, %s28
      %p39 = scmp.eq.s32.totalorder %s19, 0
      %p40 = por %p38, %p39
      %p41 = scmp.ne.s32.totalorder %s27, %s28
      %p42 = scmp.eq.s32.totalorder %s20, 1
      %p43 = por %p41, %p42
      %p45 = scmp.ne.s32.totalorder %s28, %s44
      %p46 = scmp.eq.s32.totalorder %s20, 0
      %p47 = por %p45, %p46
      %s49 = sadd.s32 %s48, 1
      %p52 = scmp.eq.s32.totalorder %s14, 1
      %p53 = scmp.ne.s32.totalorder %s48, %s50
      %p54 = scmp.eq.s32.totalorder %s14, 0
      %p55 = por %p53, %p54
      %p56 = scmp.ne.s32.totalorder %s48, %s50
      %p57 = scmp.eq.s32.totalorder %s19, 1
      %p58 = por %p56, %p57
      %p59 = scmp.ne.s32.totalorder %s50, %s51
      %p60 = scmp.eq.s32.totalorder %s19, 0
      %p61 = por %p59, %p60
      %p62 = scmp.ne.s32.totalorder %s50, %s51
      %p63 = scmp.eq.s32.totalorder %s20, 1
      %p64 = por %p62, %p63
      %p66 = scmp.ne.s32.totalorder %s51, %s65
      %p67 = scmp.eq.s32.totalorder %s20, 0
      %p68 = por %p66, %p67
      %s69 = ssub.s32 %s14, %s21
      %p70 = scmp.eq.s32.totalorder %s69, 0
      %s72 = sadd.s32 %s71, 1
      %s73 = scalar_select %p70, %s71, %s72
      %p76 = pneg %p70
      %p77 = scmp.eq.s32.totalorder %s14, 1
      %p78 = por %p76, %p77
      %p79 = scmp.ne.s32.totalorder %s71, %s74
      %p80 = scmp.eq.s32.totalorder %s14, 0
      %p81 = por %p79, %p80
      %p82 = scmp.ne.s32.totalorder %s71, %s74
      %p83 = scmp.eq.s32.totalorder %s19, 1
      %p84 = por %p82, %p83
      %p85 = scmp.ne.s32.totalorder %s74, %s75
      %p86 = scmp.eq.s32.totalorder %s19, 0
      %p87 = por %p85, %p86
      %p88 = scmp.ne.s32.totalorder %s74, %s75
      %p89 = scmp.eq.s32.totalorder %s20, 1
      %p90 = por %p88, %p89
      %p92 = scmp.ne.s32.totalorder %s75, %s91
      %p93 = scmp.eq.s32.totalorder %s20, 0
      %p94 = por %p92, %p93
      %s95 = ssub.s32 %s14, %s21
      %p96 = scmp.eq.s32.totalorder %s95, 0
      %s98 = sadd.s32 %s97, 1
      %s99 = scalar_select %p96, %s97, %s98
      %p102 = pneg %p96
      %p103 = scmp.eq.s32.totalorder %s14, 1
      %p104 = por %p102, %p103
      %p105 = scmp.ne.s32.totalorder %s97, %s100
      %p106 = scmp.eq.s32.totalorder %s14, 0
      %p107 = por %p105, %p106
      %p108 = scmp.ne.s32.totalorder %s97, %s100
      %p109 = scmp.eq.s32.totalorder %s19, 1
      %p110 = por %p108, %p109
      %p111 = scmp.ne.s32.totalorder %s100, %s101
      %p112 = scmp.eq.s32.totalorder %s19, 0
      %p113 = por %p111, %p112
      %p114 = scmp.ne.s32.totalorder %s100, %s101
      %p115 = scmp.eq.s32.totalorder %s20, 1
      %p116 = por %p114, %p115
      %p118 = scmp.ne.s32.totalorder %s101, %s117
      %p119 = scmp.eq.s32.totalorder %s20, 0
      %p120 = por %p118, %p119
      %p121 = scmp.le.s32.totalorder 1, %s14
      %p122 = scmp.lt.s32.totalorder %s14, 3
      %p123 = pnand %p121, %p122
      %p124 = pneg %p123
      // Predicated region
      $region9: #{resnet_common_branch.17} parent=5 // pred_check
        _
      $region10: #{resnet_common_branch.17} parent=5 // pred_check_branch
        %126 = sbr.rel (%p123) target = $region12
      $region11: #{resnet_common_branch.17} parent=5 // pred_region
        %s127 = ssub.s32 %s14, 1
        // Predicated region
        $region13: #{resnet_common_branch.17} parent=11 // pred_check
          %p128 = pneg %p61
        $region14: #{resnet_common_branch.17} parent=11 // pred_check_branch
          %130 = sbr.rel (%p128) target = $region16
        $region15: #{resnet_common_branch.17} parent=11 // pred_region
          _
        $region16: #{resnet_common_branch.17} parent=11 // pred_fallthru
          _
      $region12: #{resnet_common_branch.17} parent=5 // pred_fallthru
        _
      %p131 = scmp.lt.s32.totalorder %s14, 2
      // Predicated region
      $region17: #{resnet_common_branch.17} parent=5 // pred_check
        %p132 = pneg %p131
      $region18: #{resnet_common_branch.17} parent=5 // pred_check_branch
        %134 = sbr.rel (%p132) target = $region20
      $region19: #{resnet_common_branch.17} parent=5 // pred_region
        // Predicated region
        $region21: #{resnet_common_branch.17} parent=19 // pred_check
          %p135 = pneg %p34
        $region22: #{resnet_common_branch.17} parent=19 // pred_check_branch
          %137 = sbr.rel (%p135) target = $region24
        $region23: #{resnet_common_branch.17} parent=19 // pred_region
          %p138 = scmp.lt.s32.totalorder %s14, 1
          %s139 = scalar_select %p138, %s14, 1
          %s140 = smul.addr %s139, 16
          %s141 = smul.addr %s140, 4
          %s142 = scalar_lea.vmem %s0, %s141
        $region24: #{resnet_common_branch.17} parent=19 // pred_fallthru
          _
      $region20: #{resnet_common_branch.17} parent=5 // pred_fallthru
        _
      %p143 = scmp.le.s32.totalorder 1, %s14
      %p144 = scmp.lt.s32.totalorder %s14, 3
      %p145 = pnand %p143, %p144
      %p146 = pneg %p145
      // Predicated region
      $region25: #{resnet_common_branch.17} parent=5 // pred_check
        _
      $region26: #{resnet_common_branch.17} parent=5 // pred_check_branch
        %148 = sbr.rel (%p145) target = $region28
      $region27: #{resnet_common_branch.17} parent=5 // pred_region
        %s149 = ssub.s32 %s14, 1
        %p150 = scmp.lt.s32.totalorder %s19, 1
        %s151 = scalar_select %p150, %s19, 1
        %s152 = smul.addr %s151, 16
        %s153 = smul.addr %s152, 4
        %s154 = scalar_lea.vmem %s0, %s153
        %p155 = pneg %p40
        %p156 = pneg %p37
        %p157 = pneg %p61
        %p158 = pneg %p58
        %p159 = pneg %p87
        %p160 = pneg %p84
        %s161 = sand.u32 %s74, 1
        %s162 = scalar_lea.sflag [#allocation4], %s161
        %s163 = sand.u32 %s74, 1
        %s164 = smul.addr %s163, 128
        %s165 = scalar_lea.vmem [#allocation3], %s164
        %p166 = pneg %p113
        %p167 = pneg %p110
        %p168 = scmp.lt.s32.totalorder %s19, 1
        %s169 = scalar_select %p168, %s19, 1
        %s170 = smul.addr %s169, 16
        %s171 = smul.addr %s170, 4
        %s172 = scalar_lea.vmem %s3, %s171
        %p173 = scmp.lt.s32.totalorder %s19, 1
        %s174 = scalar_select %p173, %s19, 1
        %s175 = smul.addr %s174, 16
        %s176 = smul.addr %s175, 4
        %s177 = scalar_lea.vmem %s0, %s176
        %p178 = scmp.lt.s32.totalorder %s19, 1
        %s179 = scalar_select %p178, %s19, 1
        %s180 = smul.addr %s179, 16
        %s181 = smul.addr %s180, 4
        %s182 = scalar_lea.vmem %s3, %s181
        %v184 = vld [vmem:[%s177] sm:$0xff]
        %v185 = vld [vmem:[%s177 + $0x8] sm:$0xff]
        %v186 = vld [vmem:[%s177 + $0x10] sm:$0xff]
        %v187 = vld [vmem:[%s177 + $0x18] sm:$0xff]
        %v188 = vld [vmem:[%s177 + $0x20] sm:$0xff]
        %v189 = vld [vmem:[%s177 + $0x28] sm:$0xff]
        %v190 = vld [vmem:[%s177 + $0x30] sm:$0xff]
        %v191 = vld [vmem:[%s177 + $0x38] sm:$0xff]
        %v200 = vunpack.c.l.b16 %v184
        %v201 = vunpack.c.h.b16 %v184
        %v202 = vunpack.c.l.b16 %v185
        %v203 = vunpack.c.h.b16 %v185
        %v204 = vunpack.c.l.b16 %v186
        %v205 = vunpack.c.h.b16 %v186
        %v206 = vunpack.c.l.b16 %v187
        %v207 = vunpack.c.h.b16 %v187
        %v208 = vunpack.c.l.b16 %v188
        %v209 = vunpack.c.h.b16 %v188
        %v210 = vunpack.c.l.b16 %v189
        %v211 = vunpack.c.h.b16 %v189
        %v212 = vunpack.c.l.b16 %v190
        %v213 = vunpack.c.h.b16 %v190
        %v214 = vunpack.c.l.b16 %v191
        %v215 = vunpack.c.h.b16 %v191
        %v216 = vpack.c.b16 %v202, %v200
        %v217 = vpack.c.b16 %v203, %v201
        %v218 = vpack.c.b16 %v206, %v204
        %v219 = vpack.c.b16 %v207, %v205
        %v220 = vpack.c.b16 %v210, %v208
        %v221 = vpack.c.b16 %v211, %v209
        %v222 = vpack.c.b16 %v214, %v212
        %v223 = vpack.c.b16 %v215, %v213
        %232 = vxpose.xlu0.c.b16.start [1/8] %v216, 128
        %233 = vxpose.xlu0.c.b16.cont [2/8] %v218, 128
        %234 = vxpose.xlu0.c.b16.cont [3/8] %v220, 128
        %235 = vxpose.xlu0.c.b16.cont [4/8] %v222, 128
        %236 = vxpose.xlu0.c.b16.cont [5/8] 0, 128
        %237 = vxpose.xlu0.c.b16.cont [6/8] 0, 128
        %238 = vxpose.xlu0.c.b16.cont [7/8] 0, 128
        %239 = vxpose.xlu0.c.b16.end [8/8] 0, 128
        %v240 = vpop.trf.xlu0
        %v241 = vpop.trf.xlu0
        %v242 = vpop.trf.xlu0
        %v243 = vpop.trf.xlu0
        %v244 = vpop.trf.xlu0
        %v245 = vpop.trf.xlu0
        %v246 = vpop.trf.xlu0
        %v247 = vpop.trf.xlu0
        %248 = vxpose.xlu0.c.b16.start [1/8] %v217, 128
        %249 = vxpose.xlu0.c.b16.cont [2/8] %v219, 128
        %250 = vxpose.xlu0.c.b16.cont [3/8] %v221, 128
        %251 = vxpose.xlu0.c.b16.cont [4/8] %v223, 128
        %252 = vxpose.xlu0.c.b16.cont [5/8] 0, 128
        %253 = vxpose.xlu0.c.b16.cont [6/8] 0, 128
        %254 = vxpose.xlu0.c.b16.cont [7/8] 0, 128
        %255 = vxpose.xlu0.c.b16.end [8/8] 0, 128
        %v256 = vpop.trf.xlu0
        %v257 = vpop.trf.xlu0
        %v258 = vpop.trf.xlu0
        %v259 = vpop.trf.xlu0
        %v260 = vpop.trf.xlu0
        %v261 = vpop.trf.xlu0
        %v262 = vpop.trf.xlu0
        %v263 = vpop.trf.xlu0
        %vm264 = vcmask 523264
        %v266 = vsel %vm264, %v240, 0
        %v269 = vsel %vm264, %v241, 0
        %v272 = vsel %vm264, %v242, 0
        %v275 = vsel %vm264, %v243, 0
        %v278 = vsel %vm264, %v244, 0
        %v281 = vsel %vm264, %v245, 0
        %v284 = vsel %vm264, %v246, 0
        %v287 = vsel %vm264, %v247, 0
        %v290 = vsel %vm264, %v256, 0
        %v293 = vsel %vm264, %v257, 0
        %v296 = vsel %vm264, %v258, 0
        %v299 = vsel %vm264, %v259, 0
        %v302 = vsel %vm264, %v260, 0
        %v305 = vsel %vm264, %v261, 0
        %v308 = vsel %vm264, %v262, 0
        %v311 = vsel %vm264, %v263, 0
        %313 = vmatprep.subr.bf16.mxu0 %v217
        %314 = vmatpush1.bf16.msra.mxu0 %v216
        %315 = vmatprep.subr.bf16.mxu0 %v219
        %316 = vmatpush1.bf16.msra.mxu0 %v218
        %317 = vmatprep.subr.bf16.mxu0 %v221
        %318 = vmatpush1.bf16.msra.mxu0 %v220
        %319 = vmatprep.subr.bf16.mxu0 %v223
        %320 = vmatpush1.bf16.msra.mxu0 %v222
        %321 = vmatprep.subr.bf16.mxu0 0
        %322 = vmatpush1.bf16.msra.mxu0 0
        %323 = vmatprep.subr.bf16.mxu0 0
        %324 = vmatpush1.bf16.msra.mxu0 0
        %325 = vmatprep.subr.bf16.mxu0 0
        %326 = vmatpush1.bf16.msra.mxu0 0
        %327 = vmatprep.subr.bf16.mxu0 0
        %328 = vmatpush1.bf16.msra.mxu0 0
        %329 = vmatprep.subr.bf16.mxu0 0
        %330 = vmatpush1.bf16.msra.mxu0 0
        %331 = vmatprep.subr.bf16.mxu0 0
        %332 = vmatpush1.bf16.msra.mxu0 0
        %333 = vmatprep.subr.bf16.mxu0 0
        %334 = vmatpush1.bf16.msra.mxu0 0
        %335 = vmatprep.subr.bf16.mxu0 0
        %336 = vmatpush1.bf16.msra.mxu0 0
        %337 = vmatprep.subr.bf16.mxu0 0
        %338 = vmatpush1.bf16.msra.mxu0 0
        %339 = vmatprep.subr.bf16.mxu0 0
        %340 = vmatpush1.bf16.msra.mxu0 0
        %341 = vmatprep.subr.bf16.mxu0 0
        %342 = vmatpush1.bf16.msra.mxu0 0
        %343 = vmatprep.subr.bf16.mxu0 0
        %344 = vmatpush1.bf16.msra.mxu0 0
        %345 = vmatprep.mubr.bf16.mxu0 0
        %346 = vmatmul.mubr.bf16.gmra.mrb[0].mxu0 %v266
        %v347 = vpop.f32.mrb[0].mxu0
        %v348 = vadd.f32 0.0, %v347
        %v349 = vpop.f32.mrb[0].mxu0
        %v350 = vadd.f32 0.0, %v349
        %v351 = vpop.f32.mrb[0].mxu0
        %v352 = vadd.f32 0.0, %v351
        %v353 = vpop.f32.mrb[0].mxu0
        %v354 = vadd.f32 0.0, %v353
        %355 = vmatprep.mubr.bf16.mxu0 0
        %356 = vmatmul.mubr.bf16.gmra.mrb[0].mxu0 %v269
        %v357 = vpop.f32.mrb[0].mxu0
        %v358 = vadd.f32 0.0, %v357
        %v359 = vpop.f32.mrb[0].mxu0
        %v360 = vadd.f32 0.0, %v359
        %v361 = vpop.f32.mrb[0].mxu0
        %v362 = vadd.f32 0.0, %v361
        %v363 = vpop.f32.mrb[0].mxu0
        %v364 = vadd.f32 0.0, %v363
        %365 = vmatprep.mubr.bf16.mxu0 0
        %366 = vmatmul.mubr.bf16.gmra.mrb[0].mxu0 %v272
        %v367 = vpop.f32.mrb[0].mxu0
        %v368 = vadd.f32 0.0, %v367
        %v369 = vpop.f32.mrb[0].mxu0
        %v370 = vadd.f32 0.0, %v369
        %v371 = vpop.f32.mrb[0].mxu0
        %v372 = vadd.f32 0.0, %v371
        %v373 = vpop.f32.mrb[0].mxu0
        %v374 = vadd.f32 0.0, %v373
        %375 = vmatprep.mubr.bf16.mxu0 0
        %376 = vmatmul.mubr.bf16.gmra.mrb[0].mxu0 %v275
        %v377 = vpop.f32.mrb[0].mxu0
        %v378 = vadd.f32 0.0, %v377
        %v379 = vpop.f32.mrb[0].mxu0
        %v380 = vadd.f32 0.0, %v379
        %v381 = vpop.f32.mrb[0].mxu0
        %v382 = vadd.f32 0.0, %v381
        %v383 = vpop.f32.mrb[0].mxu0
        %v384 = vadd.f32 0.0, %v383
        %385 = vmatprep.mubr.bf16.mxu0 0
        %386 = vmatmul.mubr.bf16.gmra.mrb[0].mxu0 %v278
        %v387 = vpop.f32.mrb[0].mxu0
        %v388 = vadd.f32 0.0, %v387
        %v389 = vpop.f32.mrb[0].mxu0
        %v390 = vadd.f32 0.0, %v389
        %v391 = vpop.f32.mrb[0].mxu0
        %v392 = vadd.f32 0.0, %v391
        %v393 = vpop.f32.mrb[0].mxu0
        %v394 = vadd.f32 0.0, %v393
        %395 = vmatprep.mubr.bf16.mxu0 0
        %396 = vmatmul.mubr.bf16.gmra.mrb[0].mxu0 %v281
        %v397 = vpop.f32.mrb[0].mxu0
        %v398 = vadd.f32 0.0, %v397
        %v399 = vpop.f32.mrb[0].mxu0
        %v400 = vadd.f32 0.0, %v399
        %v401 = vpop.f32.mrb[0].mxu0
        %v402 = vadd.f32 0.0, %v401
        %v403 = vpop.f32.mrb[0].mxu0
        %v404 = vadd.f32 0.0, %v403
        %405 = vmatprep.mubr.bf16.mxu0 0
        %406 = vmatmul.mubr.bf16.gmra.mrb[0].mxu0 %v284
        %v407 = vpop.f32.mrb[0].mxu0
        %v408 = vadd.f32 0.0, %v407
        %v409 = vpop.f32.mrb[0].mxu0
        %v410 = vadd.f32 0.0, %v409
        %v411 = vpop.f32.mrb[0].mxu0
        %v412 = vadd.f32 0.0, %v411
        %v413 = vpop.f32.mrb[0].mxu0
        %v414 = vadd.f32 0.0, %v413
        %415 = vmatprep.mubr.bf16.mxu0 0
        %416 = vmatmul.mubr.bf16.gmra.mrb[0].mxu0 %v287
        %v417 = vpop.f32.mrb[0].mxu0
        %v418 = vadd.f32 0.0, %v417
        %v419 = vpop.f32.mrb[0].mxu0
        %v420 = vadd.f32 0.0, %v419
        %v421 = vpop.f32.mrb[0].mxu0
        %v422 = vadd.f32 0.0, %v421
        %v423 = vpop.f32.mrb[0].mxu0
        %v424 = vadd.f32 0.0, %v423
        %425 = vmatprep.mubr.bf16.mxu0 0
        %426 = vmatmul.mubr.bf16.gmra.mrb[0].mxu0 %v290
        %v427 = vpop.f32.mrb[0].mxu0
        %v428 = vadd.f32 0.0, %v427
        %v429 = vpop.f32.mrb[0].mxu0
        %v430 = vadd.f32 0.0, %v429
        %v431 = vpop.f32.mrb[0].mxu0
        %v432 = vadd.f32 0.0, %v431
        %v433 = vpop.f32.mrb[0].mxu0
        %v434 = vadd.f32 0.0, %v433
        %435 = vmatprep.mubr.bf16.mxu0 0
        %436 = vmatmul.mubr.bf16.gmra.mrb[0].mxu0 %v293
        %v437 = vpop.f32.mrb[0].mxu0
        %v438 = vadd.f32 0.0, %v437
        %v439 = vpop.f32.mrb[0].mxu0
        %v440 = vadd.f32 0.0, %v439
        %v441 = vpop.f32.mrb[0].mxu0
        %v442 = vadd.f32 0.0, %v441
        %v443 = vpop.f32.mrb[0].mxu0
        %v444 = vadd.f32 0.0, %v443
        %445 = vmatprep.mubr.bf16.mxu0 0
        %446 = vmatmul.mubr.bf16.gmra.mrb[0].mxu0 %v296
        %v447 = vpop.f32.mrb[0].mxu0
        %v448 = vadd.f32 0.0, %v447
        %v449 = vpop.f32.mrb[0].mxu0
        %v450 = vadd.f32 0.0, %v449
        %v451 = vpop.f32.mrb[0].mxu0
        %v452 = vadd.f32 0.0, %v451
        %v453 = vpop.f32.mrb[0].mxu0
        %v454 = vadd.f32 0.0, %v453
        %455 = vmatprep.mubr.bf16.mxu0 0
        %456 = vmatmul.mubr.bf16.gmra.mrb[0].mxu0 %v299
        %v457 = vpop.f32.mrb[0].mxu0
        %v458 = vadd.f32 0.0, %v457
        %v459 = vpop.f32.mrb[0].mxu0
        %v460 = vadd.f32 0.0, %v459
        %v461 = vpop.f32.mrb[0].mxu0
        %v462 = vadd.f32 0.0, %v461
        %v463 = vpop.f32.mrb[0].mxu0
        %v464 = vadd.f32 0.0, %v463
        %465 = vmatprep.mubr.bf16.mxu0 0
        %466 = vmatmul.mubr.bf16.gmra.mrb[0].mxu0 %v302
        %v467 = vpop.f32.mrb[0].mxu0
        %v468 = vadd.f32 0.0, %v467
        %v469 = vpop.f32.mrb[0].mxu0
        %v470 = vadd.f32 0.0, %v469
        %v471 = vpop.f32.mrb[0].mxu0
        %v472 = vadd.f32 0.0, %v471
        %v473 = vpop.f32.mrb[0].mxu0
        %v474 = vadd.f32 0.0, %v473
        %475 = vmatprep.mubr.bf16.mxu0 0
        %476 = vmatmul.mubr.bf16.gmra.mrb[0].mxu0 %v305
        %v477 = vpop.f32.mrb[0].mxu0
        %v478 = vadd.f32 0.0, %v477
        %v479 = vpop.f32.mrb[0].mxu0
        %v480 = vadd.f32 0.0, %v479
        %v481 = vpop.f32.mrb[0].mxu0
        %v482 = vadd.f32 0.0, %v481
        %v483 = vpop.f32.mrb[0].mxu0
        %v484 = vadd.f32 0.0, %v483
        %485 = vmatprep.mubr.bf16.mxu0 0
        %486 = vmatmul.mubr.bf16.gmra.mrb[0].mxu0 %v308
        %v487 = vpop.f32.mrb[0].mxu0
        %v488 = vadd.f32 0.0, %v487
        %v489 = vpop.f32.mrb[0].mxu0
        %v490 = vadd.f32 0.0, %v489
        %v491 = vpop.f32.mrb[0].mxu0
        %v492 = vadd.f32 0.0, %v491
        %v493 = vpop.f32.mrb[0].mxu0
        %v494 = vadd.f32 0.0, %v493
        %495 = vmatprep.mubr.bf16.mxu0 0
        %496 = vmatmul.mubr.bf16.gmra.mrb[0].mxu0 %v311
        %v497 = vpop.f32.mrb[0].mxu0
        %v498 = vadd.f32 0.0, %v497
        %v499 = vpop.f32.mrb[0].mxu0
        %v500 = vadd.f32 0.0, %v499
        %v501 = vpop.f32.mrb[0].mxu0
        %v502 = vadd.f32 0.0, %v501
        %v503 = vpop.f32.mrb[0].mxu0
        %v504 = vadd.f32 0.0, %v503
        %505 = vdwg.mxu0
        %v506 = vmax.f32 %v348, %v350
        %507 = vmax.xlane.f32.xlu0 %v506
        %v508 = vpop.xlane.xlu0 %507
        %v509 = vmax.f32 %v352, %v354
        %510 = vmax.xlane.f32.xlu0 %v509
        %v511 = vpop.xlane.xlu0 %510
        %v512 = vmax.f32 %v358, %v360
        %513 = vmax.xlane.f32.xlu0 %v512
        %v514 = vpop.xlane.xlu0 %513
        %v515 = vmax.f32 %v362, %v364
        %516 = vmax.xlane.f32.xlu0 %v515
        %v517 = vpop.xlane.xlu0 %516
        %v518 = vmax.f32 %v368, %v370
        %519 = vmax.xlane.f32.xlu0 %v518
        %v520 = vpop.xlane.xlu0 %519
        %v521 = vmax.f32 %v372, %v374
        %522 = vmax.xlane.f32.xlu0 %v521
        %v523 = vpop.xlane.xlu0 %522
        %v524 = vmax.f32 %v378, %v380
        %525 = vmax.xlane.f32.xlu0 %v524
        %v526 = vpop.xlane.xlu0 %525
        %v527 = vmax.f32 %v382, %v384
        %528 = vmax.xlane.f32.xlu0 %v527
        %v529 = vpop.xlane.xlu0 %528
        %v530 = vmax.f32 %v388, %v390
        %531 = vmax.xlane.f32.xlu0 %v530
        %v532 = vpop.xlane.xlu0 %531
        %v533 = vmax.f32 %v392, %v394
        %534 = vmax.xlane.f32.xlu0 %v533
        %v535 = vpop.xlane.xlu0 %534
        %v536 = vmax.f32 %v398, %v400
        %537 = vmax.xlane.f32.xlu0 %v536
        %v538 = vpop.xlane.xlu0 %537
        %v539 = vmax.f32 %v402, %v404
        %540 = vmax.xlane.f32.xlu0 %v539
        %v541 = vpop.xlane.xlu0 %540
        %v542 = vmax.f32 %v408, %v410
        %543 = vmax.xlane.f32.xlu0 %v542
        %v544 = vpop.xlane.xlu0 %543
        %v545 = vmax.f32 %v412, %v414
        %546 = vmax.xlane.f32.xlu0 %v545
        %v547 = vpop.xlane.xlu0 %546
        %v548 = vmax.f32 %v418, %v420
        %549 = vmax.xlane.f32.xlu0 %v548
        %v550 = vpop.xlane.xlu0 %549
        %v551 = vmax.f32 %v422, %v424
        %552 = vmax.xlane.f32.xlu0 %v551
        %v553 = vpop.xlane.xlu0 %552
        %v554 = vmax.f32 %v428, %v430
        %555 = vmax.xlane.f32.xlu0 %v554
        %v556 = vpop.xlane.xlu0 %555
        %v557 = vmax.f32 %v432, %v434
        %558 = vmax.xlane.f32.xlu0 %v557
        %v559 = vpop.xlane.xlu0 %558
        %v560 = vmax.f32 %v438, %v440
        %561 = vmax.xlane.f32.xlu0 %v560
        %v562 = vpop.xlane.xlu0 %561
        %v563 = vmax.f32 %v442, %v444
        %564 = vmax.xlane.f32.xlu0 %v563
        %v565 = vpop.xlane.xlu0 %564
        %v566 = vmax.f32 %v448, %v450
        %567 = vmax.xlane.f32.xlu0 %v566
        %v568 = vpop.xlane.xlu0 %567
        %v569 = vmax.f32 %v452, %v454
        %570 = vmax.xlane.f32.xlu0 %v569
        %v571 = vpop.xlane.xlu0 %570
        %v572 = vmax.f32 %v458, %v460
        %573 = vmax.xlane.f32.xlu0 %v572
        %v574 = vpop.xlane.xlu0 %573
        %v575 = vmax.f32 %v462, %v464
        %576 = vmax.xlane.f32.xlu0 %v575
        %v577 = vpop.xlane.xlu0 %576
        %v578 = vmax.f32 %v468, %v470
        %579 = vmax.xlane.f32.xlu0 %v578
        %v580 = vpop.xlane.xlu0 %579
        %v581 = vmax.f32 %v472, %v474
        %582 = vmax.xlane.f32.xlu0 %v581
        %v583 = vpop.xlane.xlu0 %582
        %v584 = vmax.f32 %v478, %v480
        %585 = vmax.xlane.f32.xlu0 %v584
        %v586 = vpop.xlane.xlu0 %585
        %v587 = vmax.f32 %v482, %v484
        %588 = vmax.xlane.f32.xlu0 %v587
        %v589 = vpop.xlane.xlu0 %588
        %v590 = vmax.f32 %v488, %v490
        %591 = vmax.xlane.f32.xlu0 %v590
        %v592 = vpop.xlane.xlu0 %591
        %v593 = vmax.f32 %v492, %v494
        %594 = vmax.xlane.f32.xlu0 %v593
        %v595 = vpop.xlane.xlu0 %594
        %v596 = vmax.f32 %v498, %v500
        %597 = vmax.xlane.f32.xlu0 %v596
        %v598 = vpop.xlane.xlu0 %597
        %v599 = vmax.f32 %v502, %v504
        %600 = vmax.xlane.f32.xlu0 %v599
        %v601 = vpop.xlane.xlu0 %600
        %v602 = vsub.f32 %v508, %v348
        %v603 = vsub.f32 %v508, %v350
        %v604 = vsub.f32 %v511, %v352
        %v605 = vsub.f32 %v511, %v354
        %v606 = vsub.f32 %v514, %v358
        %v607 = vsub.f32 %v514, %v360
        %v608 = vsub.f32 %v517, %v362
        %v609 = vsub.f32 %v517, %v364
        %v610 = vsub.f32 %v520, %v368
        %v611 = vsub.f32 %v520, %v370
        %v612 = vsub.f32 %v523, %v372
        %v613 = vsub.f32 %v523, %v374
        %v614 = vsub.f32 %v526, %v378
        %v615 = vsub.f32 %v526, %v380
        %v616 = vsub.f32 %v529, %v382
        %v617 = vsub.f32 %v529, %v384
        %v618 = vsub.f32 %v532, %v388
        %v619 = vsub.f32 %v532, %v390
        %v620 = vsub.f32 %v535, %v392
        %v621 = vsub.f32 %v535, %v394
        %v622 = vsub.f32 %v538, %v398
        %v623 = vsub.f32 %v538, %v400
        %v624 = vsub.f32 %v541, %v402
        %v625 = vsub.f32 %v541, %v404
        %v626 = vsub.f32 %v544, %v408
        %v627 = vsub.f32 %v544, %v410
        %v628 = vsub.f32 %v547, %v412
        %v629 = vsub.f32 %v547, %v414
        %v630 = vsub.f32 %v550, %v418
        %v631 = vsub.f32 %v550, %v420
        %v632 = vsub.f32 %v553, %v422
        %v633 = vsub.f32 %v553, %v424
        %v634 = vsub.f32 %v556, %v428
        %v635 = vsub.f32 %v556, %v430
        %v636 = vsub.f32 %v559, %v432
        %v637 = vsub.f32 %v559, %v434
        %v638 = vsub.f32 %v562, %v438
        %v639 = vsub.f32 %v562, %v440
        %v640 = vsub.f32 %v565, %v442
        %v641 = vsub.f32 %v565, %v444
        %v642 = vsub.f32 %v568, %v448
        %v643 = vsub.f32 %v568, %v450
        %v644 = vsub.f32 %v571, %v452
        %v645 = vsub.f32 %v571, %v454
        %v646 = vsub.f32 %v574, %v458
        %v647 = vsub.f32 %v574, %v460
        %v648 = vsub.f32 %v577, %v462
        %v649 = vsub.f32 %v577, %v464
        %v650 = vsub.f32 %v580, %v468
        %v651 = vsub.f32 %v580, %v470
        %v652 = vsub.f32 %v583, %v472
        %v653 = vsub.f32 %v583, %v474
        %v654 = vsub.f32 %v586, %v478
        %v655 = vsub.f32 %v586, %v480
        %v656 = vsub.f32 %v589, %v482
        %v657 = vsub.f32 %v589, %v484
        %v658 = vsub.f32 %v592, %v488
        %v659 = vsub.f32 %v592, %v490
        %v660 = vsub.f32 %v595, %v492
        %v661 = vsub.f32 %v595, %v494
        %v662 = vsub.f32 %v598, %v498
        %v663 = vsub.f32 %v598, %v500
        %v664 = vsub.f32 %v601, %v502
        %v665 = vsub.f32 %v601, %v504
        %v666 = vmax.f32 %v602, %v603
        %667 = vmax.xlane.f32.xlu0 %v666
        %v668 = vpop.xlane.xlu0 %667
        %v669 = vmax.f32 %v604, %v605
        %670 = vmax.xlane.f32.xlu0 %v669
        %v671 = vpop.xlane.xlu0 %670
        %v672 = vmax.f32 %v606, %v607
        %673 = vmax.xlane.f32.xlu0 %v672
        %v674 = vpop.xlane.xlu0 %673
        %v675 = vmax.f32 %v608, %v609
        %676 = vmax.xlane.f32.xlu0 %v675
        %v677 = vpop.xlane.xlu0 %676
        %v678 = vmax.f32 %v610, %v611
        %679 = vmax.xlane.f32.xlu0 %v678
        %v680 = vpop.xlane.xlu0 %679
        %v681 = vmax.f32 %v612, %v613
        %682 = vmax.xlane.f32.xlu0 %v681
        %v683 = vpop.xlane.xlu0 %682
        %v684 = vmax.f32 %v614, %v615
        %685 = vmax.xlane.f32.xlu0 %v684
        %v686 = vpop.xlane.xlu0 %685
        %v687 = vmax.f32 %v616, %v617
        %688 = vmax.xlane.f32.xlu0 %v687
        %v689 = vpop.xlane.xlu0 %688
        %v690 = vmax.f32 %v618, %v619
        %691 = vmax.xlane.f32.xlu0 %v690
        %v692 = vpop.xlane.xlu0 %691
        %v693 = vmax.f32 %v620, %v621
        %694 = vmax.xlane.f32.xlu0 %v693
        %v695 = vpop.xlane.xlu0 %694
        %v696 = vmax.f32 %v622, %v623
        %697 = vmax.xlane.f32.xlu0 %v696
        %v698 = vpop.xlane.xlu0 %697
        %v699 = vmax.f32 %v624, %v625
        %700 = vmax.xlane.f32.xlu0 %v699
        %v701 = vpop.xlane.xlu0 %700
        %v702 = vmax.f32 %v626, %v627
        %703 = vmax.xlane.f32.xlu0 %v702
        %v704 = vpop.xlane.xlu0 %703
        %v705 = vmax.f32 %v628, %v629
        %706 = vmax.xlane.f32.xlu0 %v705
        %v707 = vpop.xlane.xlu0 %706
        %v708 = vmax.f32 %v630, %v631
        %709 = vmax.xlane.f32.xlu0 %v708
        %v710 = vpop.xlane.xlu0 %709
        %v711 = vmax.f32 %v632, %v633
        %712 = vmax.xlane.f32.xlu0 %v711
        %v713 = vpop.xlane.xlu0 %712
        %v714 = vmax.f32 %v634, %v635
        %715 = vmax.xlane.f32.xlu0 %v714
        %v716 = vpop.xlane.xlu0 %715
        %v717 = vmax.f32 %v636, %v637
        %718 = vmax.xlane.f32.xlu0 %v717
        %v719 = vpop.xlane.xlu0 %718
        %v720 = vmax.f32 %v638, %v639
        %721 = vmax.xlane.f32.xlu0 %v720
        %v722 = vpop.xlane.xlu0 %721
        %v723 = vmax.f32 %v640, %v641
        %724 = vmax.xlane.f32.xlu0 %v723
        %v725 = vpop.xlane.xlu0 %724
        %v726 = vmax.f32 %v642, %v643
        %727 = vmax.xlane.f32.xlu0 %v726
        %v728 = vpop.xlane.xlu0 %727
        %v729 = vmax.f32 %v644, %v645
        %730 = vmax.xlane.f32.xlu0 %v729
        %v731 = vpop.xlane.xlu0 %730
        %v732 = vmax.f32 %v646, %v647
        %733 = vmax.xlane.f32.xlu0 %v732
        %v734 = vpop.xlane.xlu0 %733
        %v735 = vmax.f32 %v648, %v649
        %736 = vmax.xlane.f32.xlu0 %v735
        %v737 = vpop.xlane.xlu0 %736
        %v738 = vmax.f32 %v650, %v651
        %739 = vmax.xlane.f32.xlu0 %v738
        %v740 = vpop.xlane.xlu0 %739
        %v741 = vmax.f32 %v652, %v653
        %742 = vmax.xlane.f32.xlu0 %v741
        %v743 = vpop.xlane.xlu0 %742
        %v744 = vmax.f32 %v654, %v655
        %745 = vmax.xlane.f32.xlu0 %v744
        %v746 = vpop.xlane.xlu0 %745
        %v747 = vmax.f32 %v656, %v657
        %748 = vmax.xlane.f32.xlu0 %v747
        %v749 = vpop.xlane.xlu0 %748
        %v750 = vmax.f32 %v658, %v659
        %751 = vmax.xlane.f32.xlu0 %v750
        %v752 = vpop.xlane.xlu0 %751
        %v753 = vmax.f32 %v660, %v661
        %754 = vmax.xlane.f32.xlu0 %v753
        %v755 = vpop.xlane.xlu0 %754
        %v756 = vmax.f32 %v662, %v663
        %757 = vmax.xlane.f32.xlu0 %v756
        %v758 = vpop.xlane.xlu0 %757
        %v759 = vmax.f32 %v664, %v665
        %760 = vmax.xlane.f32.xlu0 %v759
        %v761 = vpop.xlane.xlu0 %760
        %v762 = vsub.f32 %v602, %v668
        %v763 = vsub.f32 %v603, %v668
        %v764 = vsub.f32 %v604, %v671
        %v765 = vsub.f32 %v605, %v671
        %v766 = vsub.f32 %v606, %v674
        %v767 = vsub.f32 %v607, %v674
        %v768 = vsub.f32 %v608, %v677
        %v769 = vsub.f32 %v609, %v677
        %v770 = vsub.f32 %v610, %v680
        %v771 = vsub.f32 %v611, %v680
        %v772 = vsub.f32 %v612, %v683
        %v773 = vsub.f32 %v613, %v683
        %v774 = vsub.f32 %v614, %v686
        %v775 = vsub.f32 %v615, %v686
        %v776 = vsub.f32 %v616, %v689
        %v777 = vsub.f32 %v617, %v689
        %v778 = vsub.f32 %v618, %v692
        %v779 = vsub.f32 %v619, %v692
        %v780 = vsub.f32 %v620, %v695
        %v781 = vsub.f32 %v621, %v695
        %v782 = vsub.f32 %v622, %v698
        %v783 = vsub.f32 %v623, %v698
        %v784 = vsub.f32 %v624, %v701
        %v785 = vsub.f32 %v625, %v701
        %v786 = vsub.f32 %v626, %v704
        %v787 = vsub.f32 %v627, %v704
        %v788 = vsub.f32 %v628, %v707
        %v789 = vsub.f32 %v629, %v707
        %v790 = vsub.f32 %v630, %v710
        %v791 = vsub.f32 %v631, %v710
        %v792 = vsub.f32 %v632, %v713
        %v793 = vsub.f32 %v633, %v713
        %v794 = vsub.f32 %v634, %v716
        %v795 = vsub.f32 %v635, %v716
        %v796 = vsub.f32 %v636, %v719
        %v797 = vsub.f32 %v637, %v719
        %v798 = vsub.f32 %v638, %v722
        %v799 = vsub.f32 %v639, %v722
        %v800 = vsub.f32 %v640, %v725
        %v801 = vsub.f32 %v641, %v725
        %v802 = vsub.f32 %v642, %v728
        %v803 = vsub.f32 %v643, %v728
        %v804 = vsub.f32 %v644, %v731
        %v805 = vsub.f32 %v645, %v731
        %v806 = vsub.f32 %v646, %v734
        %v807 = vsub.f32 %v647, %v734
        %v808 = vsub.f32 %v648, %v737
        %v809 = vsub.f32 %v649, %v737
        %v810 = vsub.f32 %v650, %v740
        %v811 = vsub.f32 %v651, %v740
        %v812 = vsub.f32 %v652, %v743
        %v813 = vsub.f32 %v653, %v743
        %v814 = vsub.f32 %v654, %v746
        %v815 = vsub.f32 %v655, %v746
        %v816 = vsub.f32 %v656, %v749
        %v817 = vsub.f32 %v657, %v749
        %v818 = vsub.f32 %v658, %v752
        %v819 = vsub.f32 %v659, %v752
        %v820 = vsub.f32 %v660, %v755
        %v821 = vsub.f32 %v661, %v755
        %v822 = vsub.f32 %v662, %v758
        %v823 = vsub.f32 %v663, %v758
        %v824 = vsub.f32 %v664, %v761
        %v825 = vsub.f32 %v665, %v761
        %v826 = vmul.f32 %v762, 1.442695
        %v827 = vpow.pop %v826
        %v828 = vmul.f32 %v763, 1.442695
        %v829 = vpow.pop %v828
        %v830 = vmul.f32 %v764, 1.442695
        %v831 = vpow.pop %v830
        %v832 = vmul.f32 %v765, 1.442695
        %v833 = vpow.pop %v832
        %v834 = vmul.f32 %v766, 1.442695
        %v835 = vpow.pop %v834
        %v836 = vmul.f32 %v767, 1.442695
        %v837 = vpow.pop %v836
        %v838 = vmul.f32 %v768, 1.442695
        %v839 = vpow.pop %v838
        %v840 = vmul.f32 %v769, 1.442695
        %v841 = vpow.pop %v840
        %v842 = vmul.f32 %v770, 1.442695
        %v843 = vpow.pop %v842
        %v844 = vmul.f32 %v771, 1.442695
        %v845 = vpow.pop %v844
        %v846 = vmul.f32 %v772, 1.442695
        %v847 = vpow.pop %v846
        %v848 = vmul.f32 %v773, 1.442695
        %v849 = vpow.pop %v848
        %v850 = vmul.f32 %v774, 1.442695
        %v851 = vpow.pop %v850
        %v852 = vmul.f32 %v775, 1.442695
        %v853 = vpow.pop %v852
        %v854 = vmul.f32 %v776, 1.442695
        %v855 = vpow.pop %v854
        %v856 = vmul.f32 %v777, 1.442695
        %v857 = vpow.pop %v856
        %v858 = vmul.f32 %v778, 1.442695
        %v859 = vpow.pop %v858
        %v860 = vmul.f32 %v779, 1.442695
        %v861 = vpow.pop %v860
        %v862 = vmul.f32 %v780, 1.442695
        %v863 = vpow.pop %v862
        %v864 = vmul.f32 %v781, 1.442695
        %v865 = vpow.pop %v864
        %v866 = vmul.f32 %v782, 1.442695
        %v867 = vpow.pop %v866
        %v868 = vmul.f32 %v783, 1.442695
        %v869 = vpow.pop %v868
        %v870 = vmul.f32 %v784, 1.442695
        %v871 = vpow.pop %v870
        %v872 = vmul.f32 %v785, 1.442695
        %v873 = vpow.pop %v872
        %v874 = vmul.f32 %v786, 1.442695
        %v875 = vpow.pop %v874
        %v876 = vmul.f32 %v787, 1.442695
        %v877 = vpow.pop %v876
        %v878 = vmul.f32 %v788, 1.442695
        %v879 = vpow.pop %v878
        %v880 = vmul.f32 %v789, 1.442695
        %v881 = vpow.pop %v880
        %v882 = vmul.f32 %v790, 1.442695
        %v883 = vpow.pop %v882
        %v884 = vmul.f32 %v791, 1.442695
        %v885 = vpow.pop %v884
        %v886 = vmul.f32 %v792, 1.442695
        %v887 = vpow.pop %v886
        %v888 = vmul.f32 %v793, 1.442695
        %v889 = vpow.pop %v888
        %v890 = vmul.f32 %v794, 1.442695
        %v891 = vpow.pop %v890
        %v892 = vmul.f32 %v795, 1.442695
        %v893 = vpow.pop %v892
        %v894 = vmul.f32 %v796, 1.442695
        %v895 = vpow.pop %v894
        %v896 = vmul.f32 %v797, 1.442695
        %v897 = vpow.pop %v896
        %v898 = vmul.f32 %v798, 1.442695
        %v899 = vpow.pop %v898
        %v900 = vmul.f32 %v799, 1.442695
        %v901 = vpow.pop %v900
        %v902 = vmul.f32 %v800, 1.442695
        %v903 = vpow.pop %v902
        %v904 = vmul.f32 %v801, 1.442695
        %v905 = vpow.pop %v904
        %v906 = vmul.f32 %v802, 1.442695
        %v907 = vpow.pop %v906
        %v908 = vmul.f32 %v803, 1.442695
        %v909 = vpow.pop %v908
        %v910 = vmul.f32 %v804, 1.442695
        %v911 = vpow.pop %v910
        %v912 = vmul.f32 %v805, 1.442695
        %v913 = vpow.pop %v912
        %v914 = vmul.f32 %v806, 1.442695
        %v915 = vpow.pop %v914
        %v916 = vmul.f32 %v807, 1.442695
        %v917 = vpow.pop %v916
        %v918 = vmul.f32 %v808, 1.442695
        %v919 = vpow.pop %v918
        %v920 = vmul.f32 %v809, 1.442695
        %v921 = vpow.pop %v920
        %v922 = vmul.f32 %v810, 1.442695
        %v923 = vpow.pop %v922
        %v924 = vmul.f32 %v811, 1.442695
        %v925 = vpow.pop %v924
        %v926 = vmul.f32 %v812, 1.442695
        %v927 = vpow.pop %v926
        %v928 = vmul.f32 %v813, 1.442695
        %v929 = vpow.pop %v928
        %v930 = vmul.f32 %v814, 1.442695
        %v931 = vpow.pop %v930
        %v932 = vmul.f32 %v815, 1.442695
        %v933 = vpow.pop %v932
        %v934 = vmul.f32 %v816, 1.442695
        %v935 = vpow.pop %v934
        %v936 = vmul.f32 %v817, 1.442695
        %v937 = vpow.pop %v936
        %v938 = vmul.f32 %v818, 1.442695
        %v939 = vpow.pop %v938
        %v940 = vmul.f32 %v819, 1.442695
        %v941 = vpow.pop %v940
        %v942 = vmul.f32 %v820, 1.442695
        %v943 = vpow.pop %v942
        %v944 = vmul.f32 %v821, 1.442695
        %v945 = vpow.pop %v944
        %v946 = vmul.f32 %v822, 1.442695
        %v947 = vpow.pop %v946
        %v948 = vmul.f32 %v823, 1.442695
        %v949 = vpow.pop %v948
        %v950 = vmul.f32 %v824, 1.442695
        %v951 = vpow.pop %v950
        %v952 = vmul.f32 %v825, 1.442695
        %v953 = vpow.pop %v952
        %v954 = vadd.f32 %v827, %v829
        %955 = vadd.xlane.f32.xlu0 %v954
        %v956 = vpop.xlane.xlu0 %955
        %v957 = vadd.f32 %v831, %v833
        %958 = vadd.xlane.f32.xlu0 %v957
        %v959 = vpop.xlane.xlu0 %958
        %v960 = vadd.f32 %v835, %v837
        %961 = vadd.xlane.f32.xlu0 %v960
        %v962 = vpop.xlane.xlu0 %961
        %v963 = vadd.f32 %v839, %v841
        %964 = vadd.xlane.f32.xlu0 %v963
        %v965 = vpop.xlane.xlu0 %964
        %v966 = vadd.f32 %v843, %v845
        %967 = vadd.xlane.f32.xlu0 %v966
        %v968 = vpop.xlane.xlu0 %967
        %v969 = vadd.f32 %v847, %v849
        %970 = vadd.xlane.f32.xlu0 %v969
        %v971 = vpop.xlane.xlu0 %970
        %v972 = vadd.f32 %v851, %v853
        %973 = vadd.xlane.f32.xlu0 %v972
        %v974 = vpop.xlane.xlu0 %973
        %v975 = vadd.f32 %v855, %v857
        %976 = vadd.xlane.f32.xlu0 %v975
        %v977 = vpop.xlane.xlu0 %976
        %v978 = vadd.f32 %v859, %v861
        %979 = vadd.xlane.f32.xlu0 %v978
        %v980 = vpop.xlane.xlu0 %979
        %v981 = vadd.f32 %v863, %v865
        %982 = vadd.xlane.f32.xlu0 %v981
        %v983 = vpop.xlane.xlu0 %982
        %v984 = vadd.f32 %v867, %v869
        %985 = vadd.xlane.f32.xlu0 %v984
        %v986 = vpop.xlane.xlu0 %985
        %v987 = vadd.f32 %v871, %v873
        %988 = vadd.xlane.f32.xlu0 %v987
        %v989 = vpop.xlane.xlu0 %988
        %v990 = vadd.f32 %v875, %v877
        %991 = vadd.xlane.f32.xlu0 %v990
        %v992 = vpop.xlane.xlu0 %991
        %v993 = vadd.f32 %v879, %v881
        %994 = vadd.xlane.f32.xlu0 %v993
        %v995 = vpop.xlane.xlu0 %994
        %v996 = vadd.f32 %v883, %v885
        %997 = vadd.xlane.f32.xlu0 %v996
        %v998 = vpop.xlane.xlu0 %997
        %v999 = vadd.f32 %v887, %v889
        %1000 = vadd.xlane.f32.xlu0 %v999
        %v1001 = vpop.xlane.xlu0 %1000
        %v1002 = vadd.f32 %v891, %v893
        %1003 = vadd.xlane.f32.xlu0 %v1002
        %v1004 = vpop.xlane.xlu0 %1003
        %v1005 = vadd.f32 %v895, %v897
        %1006 = vadd.xlane.f32.xlu0 %v1005
        %v1007 = vpop.xlane.xlu0 %1006
        %v1008 = vadd.f32 %v899, %v901
        %1009 = vadd.xlane.f32.xlu0 %v1008
        %v1010 = vpop.xlane.xlu0 %1009
        %v1011 = vadd.f32 %v903, %v905
        %1012 = vadd.xlane.f32.xlu0 %v1011
        %v1013 = vpop.xlane.xlu0 %1012
        %v1014 = vadd.f32 %v907, %v909
        %1015 = vadd.xlane.f32.xlu0 %v1014
        %v1016 = vpop.xlane.xlu0 %1015
        %v1017 = vadd.f32 %v911, %v913
        %1018 = vadd.xlane.f32.xlu0 %v1017
        %v1019 = vpop.xlane.xlu0 %1018
        %v1020 = vadd.f32 %v915, %v917
        %1021 = vadd.xlane.f32.xlu0 %v1020
        %v1022 = vpop.xlane.xlu0 %1021
        %v1023 = vadd.f32 %v919, %v921
        %1024 = vadd.xlane.f32.xlu0 %v1023
        %v1025 = vpop.xlane.xlu0 %1024
        %v1026 = vadd.f32 %v923, %v925
        %1027 = vadd.xlane.f32.xlu0 %v1026
        %v1028 = vpop.xlane.xlu0 %1027
        %v1029 = vadd.f32 %v927, %v929
        %1030 = vadd.xlane.f32.xlu0 %v1029
        %v1031 = vpop.xlane.xlu0 %1030
        %v1032 = vadd.f32 %v931, %v933
        %1033 = vadd.xlane.f32.xlu0 %v1032
        %v1034 = vpop.xlane.xlu0 %1033
        %v1035 = vadd.f32 %v935, %v937
        %1036 = vadd.xlane.f32.xlu0 %v1035
        %v1037 = vpop.xlane.xlu0 %1036
        %v1038 = vadd.f32 %v939, %v941
        %1039 = vadd.xlane.f32.xlu0 %v1038
        %v1040 = vpop.xlane.xlu0 %1039
        %v1041 = vadd.f32 %v943, %v945
        %1042 = vadd.xlane.f32.xlu0 %v1041
        %v1043 = vpop.xlane.xlu0 %1042
        %v1044 = vadd.f32 %v947, %v949
        %1045 = vadd.xlane.f32.xlu0 %v1044
        %v1046 = vpop.xlane.xlu0 %1045
        %v1047 = vadd.f32 %v951, %v953
        %1048 = vadd.xlane.f32.xlu0 %v1047
        %v1049 = vpop.xlane.xlu0 %1048
        %v1050 = vrcp.pop %v956
        %v1051 = vrcp.pop %v959
        %v1052 = vrcp.pop %v962
        %v1053 = vrcp.pop %v965
        %v1054 = vrcp.pop %v968
        %v1055 = vrcp.pop %v971
        %v1056 = vrcp.pop %v974
        %v1057 = vrcp.pop %v977
        %v1058 = vrcp.pop %v980
        %v1059 = vrcp.pop %v983
        %v1060 = vrcp.pop %v986
        %v1061 = vrcp.pop %v989
        %v1062 = vrcp.pop %v992
        %v1063 = vrcp.pop %v995
        %v1064 = vrcp.pop %v998
        %v1065 = vrcp.pop %v1001
        %v1066 = vrcp.pop %v1004
        %v1067 = vrcp.pop %v1007
        %v1068 = vrcp.pop %v1010
        %v1069 = vrcp.pop %v1013
        %v1070 = vrcp.pop %v1016
        %v1071 = vrcp.pop %v1019
        %v1072 = vrcp.pop %v1022
        %v1073 = vrcp.pop %v1025
        %v1074 = vrcp.pop %v1028
        %v1075 = vrcp.pop %v1031
        %v1076 = vrcp.pop %v1034
        %v1077 = vrcp.pop %v1037
        %v1078 = vrcp.pop %v1040
        %v1079 = vrcp.pop %v1043
        %v1080 = vrcp.pop %v1046
        %v1081 = vrcp.pop %v1049
        %v1082 = vmul.f32 %v827, %v1050
        %v1083 = vmul.f32 %v829, %v1050
        %v1084 = vmul.f32 %v831, %v1051
        %v1085 = vmul.f32 %v833, %v1051
        %v1086 = vmul.f32 %v835, %v1052
        %v1087 = vmul.f32 %v837, %v1052
        %v1088 = vmul.f32 %v839, %v1053
        %v1089 = vmul.f32 %v841, %v1053
        %v1090 = vmul.f32 %v843, %v1054
        %v1091 = vmul.f32 %v845, %v1054
        %v1092 = vmul.f32 %v847, %v1055
        %v1093 = vmul.f32 %v849, %v1055
        %v1094 = vmul.f32 %v851, %v1056
        %v1095 = vmul.f32 %v853, %v1056
        %v1096 = vmul.f32 %v855, %v1057
        %v1097 = vmul.f32 %v857, %v1057
        %v1098 = vmul.f32 %v859, %v1058
        %v1099 = vmul.f32 %v861, %v1058
        %v1100 = vmul.f32 %v863, %v1059
        %v1101 = vmul.f32 %v865, %v1059
        %v1102 = vmul.f32 %v867, %v1060
        %v1103 = vmul.f32 %v869, %v1060
        %v1104 = vmul.f32 %v871, %v1061
        %v1105 = vmul.f32 %v873, %v1061
        %v1106 = vmul.f32 %v875, %v1062
        %v1107 = vmul.f32 %v877, %v1062
        %v1108 = vmul.f32 %v879, %v1063
        %v1109 = vmul.f32 %v881, %v1063
        %v1110 = vmul.f32 %v883, %v1064
        %v1111 = vmul.f32 %v885, %v1064
        %v1112 = vmul.f32 %v887, %v1065
        %v1113 = vmul.f32 %v889, %v1065
        %v1114 = vmul.f32 %v891, %v1066
        %v1115 = vmul.f32 %v893, %v1066
        %v1116 = vmul.f32 %v895, %v1067
        %v1117 = vmul.f32 %v897, %v1067
        %v1118 = vmul.f32 %v899, %v1068
        %v1119 = vmul.f32 %v901, %v1068
        %v1120 = vmul.f32 %v903, %v1069
        %v1121 = vmul.f32 %v905, %v1069
        %v1122 = vmul.f32 %v907, %v1070
        %v1123 = vmul.f32 %v909, %v1070
        %v1124 = vmul.f32 %v911, %v1071
        %v1125 = vmul.f32 %v913, %v1071
        %v1126 = vmul.f32 %v915, %v1072
        %v1127 = vmul.f32 %v917, %v1072
        %v1128 = vmul.f32 %v919, %v1073
        %v1129 = vmul.f32 %v921, %v1073
        %v1130 = vmul.f32 %v923, %v1074
        %v1131 = vmul.f32 %v925, %v1074
        %v1132 = vmul.f32 %v927, %v1075
        %v1133 = vmul.f32 %v929, %v1075
        %v1134 = vmul.f32 %v931, %v1076
        %v1135 = vmul.f32 %v933, %v1076
        %v1136 = vmul.f32 %v935, %v1077
        %v1137 = vmul.f32 %v937, %v1077
        %v1138 = vmul.f32 %v939, %v1078
        %v1139 = vmul.f32 %v941, %v1078
        %v1140 = vmul.f32 %v943, %v1079
        %v1141 = vmul.f32 %v945, %v1079
        %v1142 = vmul.f32 %v947, %v1080
        %v1143 = vmul.f32 %v949, %v1080
        %v1144 = vmul.f32 %v951, %v1081
        %v1145 = vmul.f32 %v953, %v1081
        %v1146 = vpack.c.bf16 %v1084, %v1082
        %v1147 = vpack.c.bf16 %v1085, %v1083
        %v1148 = vpack.c.bf16 %v1088, %v1086
        %v1149 = vpack.c.bf16 %v1089, %v1087
        %v1150 = vpack.c.bf16 %v1092, %v1090
        %v1151 = vpack.c.bf16 %v1093, %v1091
        %v1152 = vpack.c.bf16 %v1096, %v1094
        %v1153 = vpack.c.bf16 %v1097, %v1095
        %v1154 = vpack.c.bf16 %v1100, %v1098
        %v1155 = vpack.c.bf16 %v1101, %v1099
        %v1156 = vpack.c.bf16 %v1104, %v1102
        %v1157 = vpack.c.bf16 %v1105, %v1103
        %v1158 = vpack.c.bf16 %v1108, %v1106
        %v1159 = vpack.c.bf16 %v1109, %v1107
        %v1160 = vpack.c.bf16 %v1112, %v1110
        %v1161 = vpack.c.bf16 %v1113, %v1111
        %v1162 = vpack.c.bf16 %v1116, %v1114
        %v1163 = vpack.c.bf16 %v1117, %v1115
        %v1164 = vpack.c.bf16 %v1120, %v1118
        %v1165 = vpack.c.bf16 %v1121, %v1119
        %v1166 = vpack.c.bf16 %v1124, %v1122
        %v1167 = vpack.c.bf16 %v1125, %v1123
        %v1168 = vpack.c.bf16 %v1128, %v1126
        %v1169 = vpack.c.bf16 %v1129, %v1127
        %v1170 = vpack.c.bf16 %v1132, %v1130
        %v1171 = vpack.c.bf16 %v1133, %v1131
        %v1172 = vpack.c.bf16 %v1136, %v1134
        %v1173 = vpack.c.bf16 %v1137, %v1135
        %v1174 = vpack.c.bf16 %v1140, %v1138
        %v1175 = vpack.c.bf16 %v1141, %v1139
        %v1176 = vpack.c.bf16 %v1144, %v1142
        %v1177 = vpack.c.bf16 %v1145, %v1143
        %1178 = vmatprep.subr.bf16.mxu0 %v1147
        %1179 = vmatpush1.bf16.xpose.msra.mxu0 %v1146
        %1180 = vmatprep.subr.bf16.mxu0 %v1149
        %1181 = vmatpush1.bf16.xpose.msra.mxu0 %v1148
        %1182 = vmatprep.subr.bf16.mxu0 %v1151
        %1183 = vmatpush1.bf16.xpose.msra.mxu0 %v1150
        %1184 = vmatprep.subr.bf16.mxu0 %v1153
        %1185 = vmatpush1.bf16.xpose.msra.mxu0 %v1152
        %1186 = vmatprep.subr.bf16.mxu0 %v1155
        %1187 = vmatpush1.bf16.xpose.msra.mxu0 %v1154
        %1188 = vmatprep.subr.bf16.mxu0 %v1157
        %1189 = vmatpush1.bf16.xpose.msra.mxu0 %v1156
        %1190 = vmatprep.subr.bf16.mxu0 %v1159
        %1191 = vmatpush1.bf16.xpose.msra.mxu0 %v1158
        %1192 = vmatprep.subr.bf16.mxu0 %v1161
        %1193 = vmatpush1.bf16.xpose.msra.mxu0 %v1160
        %1194 = vmatprep.subr.bf16.mxu0 %v1163
        %1195 = vmatpush1.bf16.xpose.msra.mxu0 %v1162
        %1196 = vmatprep.subr.bf16.mxu0 %v1165
        %1197 = vmatpush1.bf16.xpose.msra.mxu0 %v1164
        %1198 = vmatprep.subr.bf16.mxu0 %v1167
        %1199 = vmatpush1.bf16.xpose.msra.mxu0 %v1166
        %1200 = vmatprep.subr.bf16.mxu0 %v1169
        %1201 = vmatpush1.bf16.xpose.msra.mxu0 %v1168
        %1202 = vmatprep.subr.bf16.mxu0 %v1171
        %1203 = vmatpush1.bf16.xpose.msra.mxu0 %v1170
        %1204 = vmatprep.subr.bf16.mxu0 %v1173
        %1205 = vmatpush1.bf16.xpose.msra.mxu0 %v1172
        %1206 = vmatprep.subr.bf16.mxu0 %v1175
        %1207 = vmatpush1.bf16.xpose.msra.mxu0 %v1174
        %1208 = vmatprep.subr.bf16.mxu0 %v1177
        %1209 = vmatpush1.bf16.xpose.msra.mxu0 %v1176
        %1210 = vmatprep.mubr.bf16.mxu0 %v217
        %1211 = vmatmul.mubr.bf16.gmra.mrb[0].mxu0 %v216
        %v1212 = vpop.f32.mrb[0].mxu0
        %v1213 = vadd.f32 0.0, %v1212
        %v1214 = vpop.f32.mrb[0].mxu0
        %v1215 = vadd.f32 0.0, %v1214
        %v1216 = vpop.f32.mrb[0].mxu0
        %v1217 = vadd.f32 0.0, %v1216
        %v1218 = vpop.f32.mrb[0].mxu0
        %v1219 = vadd.f32 0.0, %v1218
        %1220 = vmatprep.mubr.bf16.mxu0 %v219
        %1221 = vmatmul.mubr.bf16.gmra.mrb[0].mxu0 %v218
        %v1222 = vpop.f32.mrb[0].mxu0
        %v1223 = vadd.f32 0.0, %v1222
        %v1224 = vpop.f32.mrb[0].mxu0
        %v1225 = vadd.f32 0.0, %v1224
        %v1226 = vpop.f32.mrb[0].mxu0
        %v1227 = vadd.f32 0.0, %v1226
        %v1228 = vpop.f32.mrb[0].mxu0
        %v1229 = vadd.f32 0.0, %v1228
        %1230 = vmatprep.mubr.bf16.mxu0 %v221
        %1231 = vmatmul.mubr.bf16.gmra.mrb[0].mxu0 %v220
        %v1232 = vpop.f32.mrb[0].mxu0
        %v1233 = vadd.f32 0.0, %v1232
        %v1234 = vpop.f32.mrb[0].mxu0
        %v1235 = vadd.f32 0.0, %v1234
        %v1236 = vpop.f32.mrb[0].mxu0
        %v1237 = vadd.f32 0.0, %v1236
        %v1238 = vpop.f32.mrb[0].mxu0
        %v1239 = vadd.f32 0.0, %v1238
        %1240 = vmatprep.mubr.bf16.mxu0 %v223
        %1241 = vmatmul.mubr.bf16.gmra.mrb[0].mxu0 %v222
        %v1242 = vpop.f32.mrb[0].mxu0
        %v1243 = vadd.f32 0.0, %v1242
        %v1244 = vpop.f32.mrb[0].mxu0
        %v1245 = vadd.f32 0.0, %v1244
        %v1246 = vpop.f32.mrb[0].mxu0
        %v1247 = vadd.f32 0.0, %v1246
        %v1248 = vpop.f32.mrb[0].mxu0
        %v1249 = vadd.f32 0.0, %v1248
        %1250 = vdwg.mxu0
        %s1251 = sld [smem:[#allocation2]]
        %v1252 = vstv %s1251
        %v1253 = vmul.f32 %v1252, %v1213
        %v1254 = vmul.f32 %v1252, %v1215
        %v1255 = vmul.f32 %v1252, %v1217
        %v1256 = vmul.f32 %v1252, %v1219
        %v1257 = vmul.f32 %v1252, %v1223
        %v1258 = vmul.f32 %v1252, %v1225
        %v1259 = vmul.f32 %v1252, %v1227
        %v1260 = vmul.f32 %v1252, %v1229
        %v1261 = vmul.f32 %v1252, %v1233
        %v1262 = vmul.f32 %v1252, %v1235
        %v1263 = vmul.f32 %v1252, %v1237
        %v1264 = vmul.f32 %v1252, %v1239
        %v1265 = vmul.f32 %v1252, %v1243
        %v1266 = vmul.f32 %v1252, %v1245
        %v1267 = vmul.f32 %v1252, %v1247
        %v1268 = vmul.f32 %v1252, %v1249
        %v1269 = vunpack.c.l.bf16 %v184
        %v1270 = vunpack.c.h.bf16 %v184
        %v1271 = vunpack.c.l.bf16 %v185
        %v1272 = vunpack.c.h.bf16 %v185
        %v1273 = vunpack.c.l.bf16 %v186
        %v1274 = vunpack.c.h.bf16 %v186
        %v1275 = vunpack.c.l.bf16 %v187
        %v1276 = vunpack.c.h.bf16 %v187
        %v1277 = vunpack.c.l.bf16 %v188
        %v1278 = vunpack.c.h.bf16 %v188
        %v1279 = vunpack.c.l.bf16 %v189
        %v1280 = vunpack.c.h.bf16 %v189
        %v1281 = vunpack.c.l.bf16 %v190
        %v1282 = vunpack.c.h.bf16 %v190
        %v1283 = vunpack.c.l.bf16 %v191
        %v1284 = vunpack.c.h.bf16 %v191
        %v1285 = vadd.f32 %v1253, %v1269
        %v1286 = vadd.f32 %v1254, %v1270
        %v1287 = vadd.f32 %v1255, %v1271
        %v1288 = vadd.f32 %v1256, %v1272
        %v1289 = vadd.f32 %v1257, %v1273
        %v1290 = vadd.f32 %v1258, %v1274
        %v1291 = vadd.f32 %v1259, %v1275
        %v1292 = vadd.f32 %v1260, %v1276
        %v1293 = vadd.f32 %v1261, %v1277
        %v1294 = vadd.f32 %v1262, %v1278
        %v1295 = vadd.f32 %v1263, %v1279
        %v1296 = vadd.f32 %v1264, %v1280
        %v1297 = vadd.f32 %v1265, %v1281
        %v1298 = vadd.f32 %v1266, %v1282
        %v1299 = vadd.f32 %v1267, %v1283
        %v1300 = vadd.f32 %v1268, %v1284
        %1301 = vst [vmem:[%s165] sm:$0xff] %v1285
        %1302 = vst [vmem:[%s165 + $0x8] sm:$0xff] %v1286
        %1303 = vst [vmem:[%s165 + $0x10] sm:$0xff] %v1287
        %1304 = vst [vmem:[%s165 + $0x18] sm:$0xff] %v1288
        %1305 = vst [vmem:[%s165 + $0x20] sm:$0xff] %v1289
        %1306 = vst [vmem:[%s165 + $0x28] sm:$0xff] %v1290
        %1307 = vst [vmem:[%s165 + $0x30] sm:$0xff] %v1291
        %1308 = vst [vmem:[%s165 + $0x38] sm:$0xff] %v1292
        %1309 = vst [vmem:[%s165 + $0x40] sm:$0xff] %v1293
        %1310 = vst [vmem:[%s165 + $0x48] sm:$0xff] %v1294
        %1311 = vst [vmem:[%s165 + $0x50] sm:$0xff] %v1295
        %1312 = vst [vmem:[%s165 + $0x58] sm:$0xff] %v1296
        %1313 = vst [vmem:[%s165 + $0x60] sm:$0xff] %v1297
        %1314 = vst [vmem:[%s165 + $0x68] sm:$0xff] %v1298
        %1315 = vst [vmem:[%s165 + $0x70] sm:$0xff] %v1299
        %1316 = vst [vmem:[%s165 + $0x78] sm:$0xff] %v1300
        %v1317 = vpack.c.bf16 %v1287, %v1285
        %v1318 = vpack.c.bf16 %v1288, %v1286
        %v1319 = vpack.c.bf16 %v1291, %v1289
        %v1320 = vpack.c.bf16 %v1292, %v1290
        %v1321 = vpack.c.bf16 %v1295, %v1293
        %v1322 = vpack.c.bf16 %v1296, %v1294
        %v1323 = vpack.c.bf16 %v1299, %v1297
        %v1324 = vpack.c.bf16 %v1300, %v1298
        %v1333 = vunpack.c.l.b16 %v1317
        %v1334 = vunpack.c.l.b16 %v1318
        %v1335 = vunpack.c.h.b16 %v1317
        %v1336 = vunpack.c.h.b16 %v1318
        %v1337 = vunpack.c.l.b16 %v1319
        %v1338 = vunpack.c.l.b16 %v1320
        %v1339 = vunpack.c.h.b16 %v1319
        %v1340 = vunpack.c.h.b16 %v1320
        %v1341 = vunpack.c.l.b16 %v1321
        %v1342 = vunpack.c.l.b16 %v1322
        %v1343 = vunpack.c.h.b16 %v1321
        %v1344 = vunpack.c.h.b16 %v1322
        %v1345 = vunpack.c.l.b16 %v1323
        %v1346 = vunpack.c.l.b16 %v1324
        %v1347 = vunpack.c.h.b16 %v1323
        %v1348 = vunpack.c.h.b16 %v1324
        %v1349 = vpack.c.b16 %v1334, %v1333
        %v1350 = vpack.c.b16 %v1336, %v1335
        %v1351 = vpack.c.b16 %v1338, %v1337
        %v1352 = vpack.c.b16 %v1340, %v1339
        %v1353 = vpack.c.b16 %v1342, %v1341
        %v1354 = vpack.c.b16 %v1344, %v1343
        %v1355 = vpack.c.b16 %v1346, %v1345
        %v1356 = vpack.c.b16 %v1348, %v1347
        %1365 = vst [vmem:[%s182] sm:$0xff] %v1349
        %1366 = vst [vmem:[%s182 + $0x8] sm:$0xff] %v1350
        %1367 = vst [vmem:[%s182 + $0x10] sm:$0xff] %v1351
        %1368 = vst [vmem:[%s182 + $0x18] sm:$0xff] %v1352
        %1369 = vst [vmem:[%s182 + $0x20] sm:$0xff] %v1353
        %1370 = vst [vmem:[%s182 + $0x28] sm:$0xff] %v1354
        %1371 = vst [vmem:[%s182 + $0x30] sm:$0xff] %v1355
        %1372 = vst [vmem:[%s182 + $0x38] sm:$0xff] %v1356
        %s1373 = sand.u32 %s74, 1
        %s1374 = scalar_lea.sflag [#allocation4], %s1373
        %s1375 = sand.u32 %s74, 1
        %s1376 = smul.addr %s1375, 128
        %s1377 = scalar_lea.vmem [#allocation3], %s1376
        %p1378 = scmp.lt.s32.totalorder %s19, 1
        %s1379 = scalar_select %p1378, %s19, 1
        %s1380 = smul.addr %s1379, 16
        %s1381 = smul.addr %s1380, 4
        %s1382 = scalar_lea.vmem %s3, %s1381
        // Predicated region
        $region29: #{resnet_common_branch.17} parent=27 // pred_check
          %p1383 = pneg %p84
        $region30: #{resnet_common_branch.17} parent=27 // pred_check_branch
          %1385 = sbr.rel (%p1383) target = $region32
        $region31: #{resnet_common_branch.17} parent=27 // pred_region
          %s1387 = ssub.s32 2048, 2048
          %1388 = vsyncadd %s1374, %s1387
          %s1389 = smul.addr %s19, 16
          %s1390 = smul.addr %s1389, 128
          %s1391 = scalar_lea.hbm %s2, %s1390
          %s1392 = sshll.u32 %s1377, 4
          %s1393 = int_to_ptr.vmem [resolvable:$true] %s1392
          %1398 = dma.vmem_to_hbm [thread:$0]  %s1393, 2048, %s1391, %s1374, 256, 256, 16
        $region32: #{resnet_common_branch.17} parent=27 // pred_fallthru
          _
        // Predicated region
        $region33: #{resnet_common_branch.17} parent=27 // pred_check
          %p1399 = pneg %p110
        $region34: #{resnet_common_branch.17} parent=27 // pred_check_branch
          %1401 = sbr.rel (%p1399) target = $region36
        $region35: #{resnet_common_branch.17} parent=27 // pred_region
          _
        $region36: #{resnet_common_branch.17} parent=27 // pred_fallthru
          _
      $region28: #{resnet_common_branch.17} parent=5 // pred_fallthru
        _
      %p1402 = scmp.le.s32.totalorder 2, %s14
      // Predicated region
      $region37: #{resnet_common_branch.17} parent=5 // pred_check
        %p1403 = pneg %p1402
      $region38: #{resnet_common_branch.17} parent=5 // pred_check_branch
        %1405 = sbr.rel (%p1403) target = $region40
      $region39: #{resnet_common_branch.17} parent=5 // pred_region
        %s1406 = ssub.s32 %s14, 2
        // Predicated region
        $region41: #{resnet_common_branch.17} parent=39 // pred_check
          %p1407 = pneg %p90
        $region42: #{resnet_common_branch.17} parent=39 // pred_check_branch
          %1409 = sbr.rel (%p1407) target = $region44
        $region43: #{resnet_common_branch.17} parent=39 // pred_region
          %s1410 = sand.u32 %s75, 1
          %s1411 = scalar_lea.sflag [#allocation4], %s1410
          %s1412 = sand.u32 %s75, 1
          %s1413 = smul.addr %s1412, 128
          %s1414 = scalar_lea.vmem [#allocation3], %s1413
          %1415 = dma.done %s1411, 2048
        $region44: #{resnet_common_branch.17} parent=39 // pred_fallthru
          _
        // Predicated region
        $region45: #{resnet_common_branch.17} parent=39 // pred_check
          %p1416 = pneg %p116
        $region46: #{resnet_common_branch.17} parent=39 // pred_check_branch
          %1418 = sbr.rel (%p1416) target = $region48
        $region47: #{resnet_common_branch.17} parent=39 // pred_region
          %p1419 = scmp.lt.s32.totalorder %s20, 1
          %s1420 = scalar_select %p1419, %s20, 1
          %s1421 = smul.addr %s1420, 16
          %s1422 = smul.addr %s1421, 4
          %s1423 = scalar_lea.vmem %s3, %s1422
        $region48: #{resnet_common_branch.17} parent=39 // pred_fallthru
          _
      $region40: #{resnet_common_branch.17} parent=5 // pred_fallthru
        _
    $region6: #{resnet_common_branch.17} parent=1 // loop_footer
      %s18 = sadd.s32 1, %s14
    $region7: #{resnet_common_branch.17} parent=1 // loop_footer_branch
      %13 = sbr.rel target = $region3
    $region8: #{resnet_common_branch.17} parent=1 // loop_exit
      _
    %1424 = vsyncpa [#allocation4], 1
    %s1425 = scalar_lea.sflag [#allocation4], 1
    %1426 = vsyncpa %s1425, 1

// kernel: resnet_common_branch.16
$region0: #{resnet_common_branch.16}
  #allocation0 [shape = 'u32[]', space=smem, size = 0x4, offset = 0x4, fixed_abs, tag = 'smem constant byte address 0x4 - core index']
  #allocation1 [shape = 'u32[144,128]{1,0:T(1,128)}', space=vmem, size = 0x12000, scoped, tag = 'internal scratch']
  %s0 = inlined_call_operand.vmem [shape: bf16[128,128], index: 0, kind: input, shape index: {}]
  %s1 = inlined_call_operand.vmem [shape: bf16[128,256], index: 1, kind: input, shape index: {}]
  %s2 = inlined_call_operand.vmem [shape: bf16[128,128], index: 2, kind: input, shape index: {}]
  %s3 = inlined_call_operand.vmem [shape: bf16[128,256], index: 3, kind: input, shape index: {}]
  %s4 = inlined_call_operand.vmem [shape: f32[1,256], index: 4, kind: input, shape index: {}]
  %s5 = inlined_call_operand.vmem [shape: bf16[128,256], index: 5, kind: output, shape index: {}]
  %s6 = sld [smem:[#allocation0]]
  $region30: #{resnet_common_branch.16} parent=0
    _
  %s8 = ssub.s32 1, %s6
  %s9 = scalar_select 0, %s8, %s6
  // Predicated region
  $region2: #{resnet_common_branch.16} parent=0 // pred_check
    _
  $region3: #{resnet_common_branch.16} parent=0 // pred_check_branch
    %11 = sbr.rel (0) target = $region5
  $region4: #{resnet_common_branch.16} parent=0 // pred_region
    _
  $region5: #{resnet_common_branch.16} parent=0 // pred_fallthru
    _
  // Predicated region
  $region6: #{resnet_common_branch.16} parent=0 // pred_check
    _
  $region7: #{resnet_common_branch.16} parent=0 // pred_check_branch
    %13 = sbr.rel (0) target = $region9
  $region8: #{resnet_common_branch.16} parent=0 // pred_region
    _
  $region9: #{resnet_common_branch.16} parent=0 // pred_fallthru
    _
  // Predicated region
  $region10: #{resnet_common_branch.16} parent=0 // pred_check
    _
  $region11: #{resnet_common_branch.16} parent=0 // pred_check_branch
    %15 = sbr.rel (0) target = $region13
  $region12: #{resnet_common_branch.16} parent=0 // pred_region
    _
  $region13: #{resnet_common_branch.16} parent=0 // pred_fallthru
    _
  // Predicated region
  $region14: #{resnet_common_branch.16} parent=0 // pred_check
    _
  $region15: #{resnet_common_branch.16} parent=0 // pred_check_branch
    %17 = sbr.rel (0) target = $region17
  $region16: #{resnet_common_branch.16} parent=0 // pred_region
    _
  $region17: #{resnet_common_branch.16} parent=0 // pred_fallthru
    _
  // Predicated region
  $region18: #{resnet_common_branch.16} parent=0 // pred_check
    _
  $region19: #{resnet_common_branch.16} parent=0 // pred_check_branch
    %19 = sbr.rel (0) target = $region21
  $region20: #{resnet_common_branch.16} parent=0 // pred_region
    _
  $region21: #{resnet_common_branch.16} parent=0 // pred_fallthru
    _
  %v21 = vld [vmem:[%s0] sm:$0xf]
  %v22 = vld [vmem:[%s0 + $0x4] sm:$0xf]
  %v23 = vld [vmem:[%s0 + $0x8] sm:$0xf]
  %v24 = vld [vmem:[%s0 + $0xc] sm:$0xf]
  %v25 = vld [vmem:[%s0 + $0x10] sm:$0xf]
  %v26 = vld [vmem:[%s0 + $0x14] sm:$0xf]
  %v27 = vld [vmem:[%s0 + $0x18] sm:$0xf]
  %v28 = vld [vmem:[%s0 + $0x1c] sm:$0xf]
  %v29 = vld [vmem:[%s0 + $0x20] sm:$0xf]
  %v30 = vld [vmem:[%s0 + $0x24] sm:$0xf]
  %v31 = vld [vmem:[%s0 + $0x28] sm:$0xf]
  %v32 = vld [vmem:[%s0 + $0x2c] sm:$0xf]
  %v33 = vld [vmem:[%s0 + $0x30] sm:$0xf]
  %v34 = vld [vmem:[%s0 + $0x34] sm:$0xf]
  %v35 = vld [vmem:[%s0 + $0x38] sm:$0xf]
  %v36 = vld [vmem:[%s0 + $0x3c] sm:$0xf]
  %v37 = vld [vmem:[%s1] sm:$0xff]
  %v38 = vld [vmem:[%s1 + $0x8] sm:$0xff]
  %v39 = vld [vmem:[%s1 + $0x10] sm:$0xff]
  %v40 = vld [vmem:[%s1 + $0x18] sm:$0xff]
  %v41 = vld [vmem:[%s1 + $0x20] sm:$0xff]
  %v42 = vld [vmem:[%s1 + $0x28] sm:$0xff]
  %v43 = vld [vmem:[%s1 + $0x30] sm:$0xff]
  %v44 = vld [vmem:[%s1 + $0x38] sm:$0xff]
  %v45 = vld [vmem:[%s1 + $0x40] sm:$0xff]
  %v46 = vld [vmem:[%s1 + $0x48] sm:$0xff]
  %v47 = vld [vmem:[%s1 + $0x50] sm:$0xff]
  %v48 = vld [vmem:[%s1 + $0x58] sm:$0xff]
  %v49 = vld [vmem:[%s1 + $0x60] sm:$0xff]
  %v50 = vld [vmem:[%s1 + $0x68] sm:$0xff]
  %v51 = vld [vmem:[%s1 + $0x70] sm:$0xff]
  %v52 = vld [vmem:[%s1 + $0x78] sm:$0xff]
  %v53 = vld [vmem:[%s2] sm:$0xf]
  %v54 = vld [vmem:[%s2 + $0x4] sm:$0xf]
  %v55 = vld [vmem:[%s2 + $0x8] sm:$0xf]
  %v56 = vld [vmem:[%s2 + $0xc] sm:$0xf]
  %v57 = vld [vmem:[%s2 + $0x10] sm:$0xf]
  %v58 = vld [vmem:[%s2 + $0x14] sm:$0xf]
  %v59 = vld [vmem:[%s2 + $0x18] sm:$0xf]
  %v60 = vld [vmem:[%s2 + $0x1c] sm:$0xf]
  %v61 = vld [vmem:[%s2 + $0x20] sm:$0xf]
  %v62 = vld [vmem:[%s2 + $0x24] sm:$0xf]
  %v63 = vld [vmem:[%s2 + $0x28] sm:$0xf]
  %v64 = vld [vmem:[%s2 + $0x2c] sm:$0xf]
  %v65 = vld [vmem:[%s2 + $0x30] sm:$0xf]
  %v66 = vld [vmem:[%s2 + $0x34] sm:$0xf]
  %v67 = vld [vmem:[%s2 + $0x38] sm:$0xf]
  %v68 = vld [vmem:[%s2 + $0x3c] sm:$0xf]
  %v69 = vld [vmem:[%s3] sm:$0xff]
  %v70 = vld [vmem:[%s3 + $0x8] sm:$0xff]
  %v71 = vld [vmem:[%s3 + $0x10] sm:$0xff]
  %v72 = vld [vmem:[%s3 + $0x18] sm:$0xff]
  %v73 = vld [vmem:[%s3 + $0x20] sm:$0xff]
  %v74 = vld [vmem:[%s3 + $0x28] sm:$0xff]
  %v75 = vld [vmem:[%s3 + $0x30] sm:$0xff]
  %v76 = vld [vmem:[%s3 + $0x38] sm:$0xff]
  %v77 = vld [vmem:[%s3 + $0x40] sm:$0xff]
  %v78 = vld [vmem:[%s3 + $0x48] sm:$0xff]
  %v79 = vld [vmem:[%s3 + $0x50] sm:$0xff]
  %v80 = vld [vmem:[%s3 + $0x58] sm:$0xff]
  %v81 = vld [vmem:[%s3 + $0x60] sm:$0xff]
  %v82 = vld [vmem:[%s3 + $0x68] sm:$0xff]
  %v83 = vld [vmem:[%s3 + $0x70] sm:$0xff]
  %v84 = vld [vmem:[%s3 + $0x78] sm:$0xff]
  %v101 = vunpack.c.l.b16 %v53
  %v102 = vunpack.c.l.b16 %v54
  %v103 = vunpack.c.l.b16 %v55
  %v104 = vunpack.c.l.b16 %v56
  %v105 = vunpack.c.l.b16 %v57
  %v106 = vunpack.c.l.b16 %v58
  %v107 = vunpack.c.l.b16 %v59
  %v108 = vunpack.c.l.b16 %v60
  %v109 = vunpack.c.l.b16 %v61
  %v110 = vunpack.c.l.b16 %v62
  %v111 = vunpack.c.l.b16 %v63
  %v112 = vunpack.c.l.b16 %v64
  %v113 = vunpack.c.l.b16 %v65
  %v114 = vunpack.c.l.b16 %v66
  %v115 = vunpack.c.l.b16 %v67
  %v116 = vunpack.c.l.b16 %v68
  %v117 = vpack.c.b16 %v102, %v101
  %v118 = vpack.c.b16 %v104, %v103
  %v119 = vpack.c.b16 %v106, %v105
  %v120 = vpack.c.b16 %v108, %v107
  %v121 = vpack.c.b16 %v110, %v109
  %v122 = vpack.c.b16 %v112, %v111
  %v123 = vpack.c.b16 %v114, %v113
  %v124 = vpack.c.b16 %v116, %v115
  %v149 = vunpack.c.l.b16 %v69
  %v150 = vunpack.c.h.b16 %v69
  %v151 = vunpack.c.l.b16 %v70
  %v152 = vunpack.c.h.b16 %v70
  %v153 = vunpack.c.l.b16 %v71
  %v154 = vunpack.c.h.b16 %v71
  %v155 = vunpack.c.l.b16 %v72
  %v156 = vunpack.c.h.b16 %v72
  %v157 = vunpack.c.l.b16 %v73
  %v158 = vunpack.c.h.b16 %v73
  %v159 = vunpack.c.l.b16 %v74
  %v160 = vunpack.c.h.b16 %v74
  %v161 = vunpack.c.l.b16 %v75
  %v162 = vunpack.c.h.b16 %v75
  %v163 = vunpack.c.l.b16 %v76
  %v164 = vunpack.c.h.b16 %v76
  %v165 = vunpack.c.l.b16 %v77
  %v166 = vunpack.c.h.b16 %v77
  %v167 = vunpack.c.l.b16 %v78
  %v168 = vunpack.c.h.b16 %v78
  %v169 = vunpack.c.l.b16 %v79
  %v170 = vunpack.c.h.b16 %v79
  %v171 = vunpack.c.l.b16 %v80
  %v172 = vunpack.c.h.b16 %v80
  %v173 = vunpack.c.l.b16 %v81
  %v174 = vunpack.c.h.b16 %v81
  %v175 = vunpack.c.l.b16 %v82
  %v176 = vunpack.c.h.b16 %v82
  %v177 = vunpack.c.l.b16 %v83
  %v178 = vunpack.c.h.b16 %v83
  %v179 = vunpack.c.l.b16 %v84
  %v180 = vunpack.c.h.b16 %v84
  %v181 = vpack.c.b16 %v151, %v149
  %v182 = vpack.c.b16 %v152, %v150
  %v183 = vpack.c.b16 %v155, %v153
  %v184 = vpack.c.b16 %v156, %v154
  %v185 = vpack.c.b16 %v159, %v157
  %v186 = vpack.c.b16 %v160, %v158
  %v187 = vpack.c.b16 %v163, %v161
  %v188 = vpack.c.b16 %v164, %v162
  %v189 = vpack.c.b16 %v167, %v165
  %v190 = vpack.c.b16 %v168, %v166
  %v191 = vpack.c.b16 %v171, %v169
  %v192 = vpack.c.b16 %v172, %v170
  %v193 = vpack.c.b16 %v175, %v173
  %v194 = vpack.c.b16 %v176, %v174
  %v195 = vpack.c.b16 %v179, %v177
  %v196 = vpack.c.b16 %v180, %v178
  %213 = vmatprep.subr.bf16.mxu0 %v182
  %214 = vmatpush1.bf16.msra.mxu0 %v181
  %215 = vmatprep.subr.bf16.mxu0 %v184
  %216 = vmatpush1.bf16.msra.mxu0 %v183
  %217 = vmatprep.subr.bf16.mxu0 %v186
  %218 = vmatpush1.bf16.msra.mxu0 %v185
  %219 = vmatprep.subr.bf16.mxu0 %v188
  %220 = vmatpush1.bf16.msra.mxu0 %v187
  %221 = vmatprep.subr.bf16.mxu0 %v190
  %222 = vmatpush1.bf16.msra.mxu0 %v189
  %223 = vmatprep.subr.bf16.mxu0 %v192
  %224 = vmatpush1.bf16.msra.mxu0 %v191
  %225 = vmatprep.subr.bf16.mxu0 %v194
  %226 = vmatpush1.bf16.msra.mxu0 %v193
  %227 = vmatprep.subr.bf16.mxu0 %v196
  %228 = vmatpush1.bf16.msra.mxu0 %v195
  %229 = vmatprep.subr.bf16.mxu0 0
  %230 = vmatpush1.bf16.msra.mxu0 0
  %231 = vmatprep.subr.bf16.mxu0 0
  %232 = vmatpush1.bf16.msra.mxu0 0
  %233 = vmatprep.subr.bf16.mxu0 0
  %234 = vmatpush1.bf16.msra.mxu0 0
  %235 = vmatprep.subr.bf16.mxu0 0
  %236 = vmatpush1.bf16.msra.mxu0 0
  %237 = vmatprep.subr.bf16.mxu0 0
  %238 = vmatpush1.bf16.msra.mxu0 0
  %239 = vmatprep.subr.bf16.mxu0 0
  %240 = vmatpush1.bf16.msra.mxu0 0
  %241 = vmatprep.subr.bf16.mxu0 0
  %242 = vmatpush1.bf16.msra.mxu0 0
  %243 = vmatprep.subr.bf16.mxu0 0
  %244 = vmatpush1.bf16.msra.mxu0 0
  %245 = vmatprep.mubr.bf16.mxu0 0
  %246 = vmatmul.mubr.bf16.gmra.mrb[0].mxu0 %v117
  %v247 = vpop.f32.mrb[0].mxu0
  %v248 = vadd.f32 0.0, %v247
  %v249 = vpop.f32.mrb[0].mxu0
  %v250 = vadd.f32 0.0, %v249
  %v251 = vpop.f32.mrb[0].mxu0
  %v252 = vadd.f32 0.0, %v251
  %v253 = vpop.f32.mrb[0].mxu0
  %v254 = vadd.f32 0.0, %v253
  %255 = vmatprep.mubr.bf16.mxu0 0
  %256 = vmatmul.mubr.bf16.gmra.mrb[0].mxu0 %v118
  %v257 = vpop.f32.mrb[0].mxu0
  %v258 = vadd.f32 0.0, %v257
  %v259 = vpop.f32.mrb[0].mxu0
  %v260 = vadd.f32 0.0, %v259
  %v261 = vpop.f32.mrb[0].mxu0
  %v262 = vadd.f32 0.0, %v261
  %v263 = vpop.f32.mrb[0].mxu0
  %v264 = vadd.f32 0.0, %v263
  %265 = vmatprep.mubr.bf16.mxu0 0
  %266 = vmatmul.mubr.bf16.gmra.mrb[0].mxu0 %v119
  %v267 = vpop.f32.mrb[0].mxu0
  %v268 = vadd.f32 0.0, %v267
  %v269 = vpop.f32.mrb[0].mxu0
  %v270 = vadd.f32 0.0, %v269
  %v271 = vpop.f32.mrb[0].mxu0
  %v272 = vadd.f32 0.0, %v271
  %v273 = vpop.f32.mrb[0].mxu0
  %v274 = vadd.f32 0.0, %v273
  %275 = vmatprep.mubr.bf16.mxu0 0
  %276 = vmatmul.mubr.bf16.gmra.mrb[0].mxu0 %v120
  %v277 = vpop.f32.mrb[0].mxu0
  %v278 = vadd.f32 0.0, %v277
  %v279 = vpop.f32.mrb[0].mxu0
  %v280 = vadd.f32 0.0, %v279
  %v281 = vpop.f32.mrb[0].mxu0
  %v282 = vadd.f32 0.0, %v281
  %v283 = vpop.f32.mrb[0].mxu0
  %v284 = vadd.f32 0.0, %v283
  %285 = vmatprep.mubr.bf16.mxu0 0
  %286 = vmatmul.mubr.bf16.gmra.mrb[0].mxu0 %v121
  %v287 = vpop.f32.mrb[0].mxu0
  %v288 = vadd.f32 0.0, %v287
  %v289 = vpop.f32.mrb[0].mxu0
  %v290 = vadd.f32 0.0, %v289
  %v291 = vpop.f32.mrb[0].mxu0
  %v292 = vadd.f32 0.0, %v291
  %v293 = vpop.f32.mrb[0].mxu0
  %v294 = vadd.f32 0.0, %v293
  %295 = vmatprep.mubr.bf16.mxu0 0
  %296 = vmatmul.mubr.bf16.gmra.mrb[0].mxu0 %v122
  %v297 = vpop.f32.mrb[0].mxu0
  %v298 = vadd.f32 0.0, %v297
  %v299 = vpop.f32.mrb[0].mxu0
  %v300 = vadd.f32 0.0, %v299
  %v301 = vpop.f32.mrb[0].mxu0
  %v302 = vadd.f32 0.0, %v301
  %v303 = vpop.f32.mrb[0].mxu0
  %v304 = vadd.f32 0.0, %v303
  %305 = vmatprep.mubr.bf16.mxu0 0
  %306 = vmatmul.mubr.bf16.gmra.mrb[0].mxu0 %v123
  %v307 = vpop.f32.mrb[0].mxu0
  %v308 = vadd.f32 0.0, %v307
  %v309 = vpop.f32.mrb[0].mxu0
  %v310 = vadd.f32 0.0, %v309
  %v311 = vpop.f32.mrb[0].mxu0
  %v312 = vadd.f32 0.0, %v311
  %v313 = vpop.f32.mrb[0].mxu0
  %v314 = vadd.f32 0.0, %v313
  %315 = vmatprep.mubr.bf16.mxu0 0
  %316 = vmatmul.mubr.bf16.gmra.mrb[0].mxu0 %v124
  %v317 = vpop.f32.mrb[0].mxu0
  %v318 = vadd.f32 0.0, %v317
  %v319 = vpop.f32.mrb[0].mxu0
  %v320 = vadd.f32 0.0, %v319
  %v321 = vpop.f32.mrb[0].mxu0
  %v322 = vadd.f32 0.0, %v321
  %v323 = vpop.f32.mrb[0].mxu0
  %v324 = vadd.f32 0.0, %v323
  %325 = vdwg.mxu0
  %v342 = vunpack.c.l.b16 %v21
  %v343 = vunpack.c.l.b16 %v22
  %v344 = vunpack.c.l.b16 %v23
  %v345 = vunpack.c.l.b16 %v24
  %v346 = vunpack.c.l.b16 %v25
  %v347 = vunpack.c.l.b16 %v26
  %v348 = vunpack.c.l.b16 %v27
  %v349 = vunpack.c.l.b16 %v28
  %v350 = vunpack.c.l.b16 %v29
  %v351 = vunpack.c.l.b16 %v30
  %v352 = vunpack.c.l.b16 %v31
  %v353 = vunpack.c.l.b16 %v32
  %v354 = vunpack.c.l.b16 %v33
  %v355 = vunpack.c.l.b16 %v34
  %v356 = vunpack.c.l.b16 %v35
  %v357 = vunpack.c.l.b16 %v36
  %v358 = vpack.c.b16 %v343, %v342
  %v359 = vpack.c.b16 %v345, %v344
  %v360 = vpack.c.b16 %v347, %v346
  %v361 = vpack.c.b16 %v349, %v348
  %v362 = vpack.c.b16 %v351, %v350
  %v363 = vpack.c.b16 %v353, %v352
  %v364 = vpack.c.b16 %v355, %v354
  %v365 = vpack.c.b16 %v357, %v356
  %v390 = vunpack.c.l.b16 %v37
  %v391 = vunpack.c.h.b16 %v37
  %v392 = vunpack.c.l.b16 %v38
  %v393 = vunpack.c.h.b16 %v38
  %v394 = vunpack.c.l.b16 %v39
  %v395 = vunpack.c.h.b16 %v39
  %v396 = vunpack.c.l.b16 %v40
  %v397 = vunpack.c.h.b16 %v40
  %v398 = vunpack.c.l.b16 %v41
  %v399 = vunpack.c.h.b16 %v41
  %v400 = vunpack.c.l.b16 %v42
  %v401 = vunpack.c.h.b16 %v42
  %v402 = vunpack.c.l.b16 %v43
  %v403 = vunpack.c.h.b16 %v43
  %v404 = vunpack.c.l.b16 %v44
  %v405 = vunpack.c.h.b16 %v44
  %v406 = vunpack.c.l.b16 %v45
  %v407 = vunpack.c.h.b16 %v45
  %v408 = vunpack.c.l.b16 %v46
  %v409 = vunpack.c.h.b16 %v46
  %v410 = vunpack.c.l.b16 %v47
  %v411 = vunpack.c.h.b16 %v47
  %v412 = vunpack.c.l.b16 %v48
  %v413 = vunpack.c.h.b16 %v48
  %v414 = vunpack.c.l.b16 %v49
  %v415 = vunpack.c.h.b16 %v49
  %v416 = vunpack.c.l.b16 %v50
  %v417 = vunpack.c.h.b16 %v50
  %v418 = vunpack.c.l.b16 %v51
  %v419 = vunpack.c.h.b16 %v51
  %v420 = vunpack.c.l.b16 %v52
  %v421 = vunpack.c.h.b16 %v52
  %v422 = vpack.c.b16 %v392, %v390
  %v423 = vpack.c.b16 %v393, %v391
  %v424 = vpack.c.b16 %v396, %v394
  %v425 = vpack.c.b16 %v397, %v395
  %v426 = vpack.c.b16 %v400, %v398
  %v427 = vpack.c.b16 %v401, %v399
  %v428 = vpack.c.b16 %v404, %v402
  %v429 = vpack.c.b16 %v405, %v403
  %v430 = vpack.c.b16 %v408, %v406
  %v431 = vpack.c.b16 %v409, %v407
  %v432 = vpack.c.b16 %v412, %v410
  %v433 = vpack.c.b16 %v413, %v411
  %v434 = vpack.c.b16 %v416, %v414
  %v435 = vpack.c.b16 %v417, %v415
  %v436 = vpack.c.b16 %v420, %v418
  %v437 = vpack.c.b16 %v421, %v419
  %454 = vmatprep.subr.bf16.mxu0 %v423
  %455 = vmatpush1.bf16.msra.mxu0 %v422
  %456 = vmatprep.subr.bf16.mxu0 %v425
  %457 = vmatpush1.bf16.msra.mxu0 %v424
  %458 = vmatprep.subr.bf16.mxu0 %v427
  %459 = vmatpush1.bf16.msra.mxu0 %v426
  %460 = vmatprep.subr.bf16.mxu0 %v429
  %461 = vmatpush1.bf16.msra.mxu0 %v428
  %462 = vmatprep.subr.bf16.mxu0 %v431
  %463 = vmatpush1.bf16.msra.mxu0 %v430
  %464 = vmatprep.subr.bf16.mxu0 %v433
  %465 = vmatpush1.bf16.msra.mxu0 %v432
  %466 = vmatprep.subr.bf16.mxu0 %v435
  %467 = vmatpush1.bf16.msra.mxu0 %v434
  %468 = vmatprep.subr.bf16.mxu0 %v437
  %469 = vmatpush1.bf16.msra.mxu0 %v436
  %470 = vmatprep.subr.bf16.mxu0 0
  %471 = vmatpush1.bf16.msra.mxu0 0
  %472 = vmatprep.subr.bf16.mxu0 0
  %473 = vmatpush1.bf16.msra.mxu0 0
  %474 = vmatprep.subr.bf16.mxu0 0
  %475 = vmatpush1.bf16.msra.mxu0 0
  %476 = vmatprep.subr.bf16.mxu0 0
  %477 = vmatpush1.bf16.msra.mxu0 0
  %478 = vmatprep.subr.bf16.mxu0 0
  %479 = vmatpush1.bf16.msra.mxu0 0
  %480 = vmatprep.subr.bf16.mxu0 0
  %481 = vmatpush1.bf16.msra.mxu0 0
  %482 = vmatprep.subr.bf16.mxu0 0
  %483 = vmatpush1.bf16.msra.mxu0 0
  %484 = vmatprep.subr.bf16.mxu0 0
  %485 = vmatpush1.bf16.msra.mxu0 0
  %486 = vmatprep.mubr.bf16.mxu0 0
  %487 = vmatmul.mubr.bf16.gmra.mrb[0].mxu0 %v358
  %v488 = vpop.f32.mrb[0].mxu0
  %v489 = vadd.f32 %v248, %v488
  %v490 = vpop.f32.mrb[0].mxu0
  %v491 = vadd.f32 %v250, %v490
  %v492 = vpop.f32.mrb[0].mxu0
  %v493 = vadd.f32 %v252, %v492
  %v494 = vpop.f32.mrb[0].mxu0
  %v495 = vadd.f32 %v254, %v494
  %496 = vmatprep.mubr.bf16.mxu0 0
  %497 = vmatmul.mubr.bf16.gmra.mrb[0].mxu0 %v359
  %v498 = vpop.f32.mrb[0].mxu0
  %v499 = vadd.f32 %v258, %v498
  %v500 = vpop.f32.mrb[0].mxu0
  %v501 = vadd.f32 %v260, %v500
  %v502 = vpop.f32.mrb[0].mxu0
  %v503 = vadd.f32 %v262, %v502
  %v504 = vpop.f32.mrb[0].mxu0
  %v505 = vadd.f32 %v264, %v504
  %506 = vmatprep.mubr.bf16.mxu0 0
  %507 = vmatmul.mubr.bf16.gmra.mrb[0].mxu0 %v360
  %v508 = vpop.f32.mrb[0].mxu0
  %v509 = vadd.f32 %v268, %v508
  %v510 = vpop.f32.mrb[0].mxu0
  %v511 = vadd.f32 %v270, %v510
  %v512 = vpop.f32.mrb[0].mxu0
  %v513 = vadd.f32 %v272, %v512
  %v514 = vpop.f32.mrb[0].mxu0
  %v515 = vadd.f32 %v274, %v514
  %516 = vmatprep.mubr.bf16.mxu0 0
  %517 = vmatmul.mubr.bf16.gmra.mrb[0].mxu0 %v361
  %v518 = vpop.f32.mrb[0].mxu0
  %v519 = vadd.f32 %v278, %v518
  %v520 = vpop.f32.mrb[0].mxu0
  %v521 = vadd.f32 %v280, %v520
  %v522 = vpop.f32.mrb[0].mxu0
  %v523 = vadd.f32 %v282, %v522
  %v524 = vpop.f32.mrb[0].mxu0
  %v525 = vadd.f32 %v284, %v524
  %526 = vmatprep.mubr.bf16.mxu0 0
  %527 = vmatmul.mubr.bf16.gmra.mrb[0].mxu0 %v362
  %v528 = vpop.f32.mrb[0].mxu0
  %v529 = vadd.f32 %v288, %v528
  %v530 = vpop.f32.mrb[0].mxu0
  %v531 = vadd.f32 %v290, %v530
  %v532 = vpop.f32.mrb[0].mxu0
  %v533 = vadd.f32 %v292, %v532
  %v534 = vpop.f32.mrb[0].mxu0
  %v535 = vadd.f32 %v294, %v534
  %536 = vmatprep.mubr.bf16.mxu0 0
  %537 = vmatmul.mubr.bf16.gmra.mrb[0].mxu0 %v363
  %v538 = vpop.f32.mrb[0].mxu0
  %v539 = vadd.f32 %v298, %v538
  %v540 = vpop.f32.mrb[0].mxu0
  %v541 = vadd.f32 %v300, %v540
  %v542 = vpop.f32.mrb[0].mxu0
  %v543 = vadd.f32 %v302, %v542
  %v544 = vpop.f32.mrb[0].mxu0
  %v545 = vadd.f32 %v304, %v544
  %546 = vmatprep.mubr.bf16.mxu0 0
  %547 = vmatmul.mubr.bf16.gmra.mrb[0].mxu0 %v364
  %v548 = vpop.f32.mrb[0].mxu0
  %v549 = vadd.f32 %v308, %v548
  %v550 = vpop.f32.mrb[0].mxu0
  %v551 = vadd.f32 %v310, %v550
  %v552 = vpop.f32.mrb[0].mxu0
  %v553 = vadd.f32 %v312, %v552
  %v554 = vpop.f32.mrb[0].mxu0
  %v555 = vadd.f32 %v314, %v554
  %556 = vmatprep.mubr.bf16.mxu0 0
  %557 = vmatmul.mubr.bf16.gmra.mrb[0].mxu0 %v365
  %v558 = vpop.f32.mrb[0].mxu0
  %v559 = vadd.f32 %v318, %v558
  %v560 = vpop.f32.mrb[0].mxu0
  %v561 = vadd.f32 %v320, %v560
  %v562 = vpop.f32.mrb[0].mxu0
  %v563 = vadd.f32 %v322, %v562
  %v564 = vpop.f32.mrb[0].mxu0
  %v565 = vadd.f32 %v324, %v564
  %566 = vdwg.mxu0
  %v567 = vld [vmem:[%s4] sm:$0x3]
  %v569 = vlaneseq
  %v570 = vshrl.u32 %v569, 7
  %v571 = vsub.s32 0, %v570
  %v572 = vrot.slane %v567, %v571
  %v573 = vlaneseq
  %v574 = vshrl.u32 %v573, 7
  %v575 = vsub.s32 1, %v574
  %v576 = vrot.slane %v567, %v575
  %v579 = vadd.f32 %v489, %v572
  %v580 = vadd.f32 %v491, %v576
  %v581 = vadd.f32 %v493, %v572
  %v582 = vadd.f32 %v495, %v576
  %v583 = vadd.f32 %v499, %v572
  %v584 = vadd.f32 %v501, %v576
  %v585 = vadd.f32 %v503, %v572
  %v586 = vadd.f32 %v505, %v576
  %v587 = vadd.f32 %v509, %v572
  %v588 = vadd.f32 %v511, %v576
  %v589 = vadd.f32 %v513, %v572
  %v590 = vadd.f32 %v515, %v576
  %v591 = vadd.f32 %v519, %v572
  %v592 = vadd.f32 %v521, %v576
  %v593 = vadd.f32 %v523, %v572
  %v594 = vadd.f32 %v525, %v576
  %v595 = vadd.f32 %v529, %v572
  %v596 = vadd.f32 %v531, %v576
  %v597 = vadd.f32 %v533, %v572
  %v598 = vadd.f32 %v535, %v576
  %v599 = vadd.f32 %v539, %v572
  %v600 = vadd.f32 %v541, %v576
  %v601 = vadd.f32 %v543, %v572
  %v602 = vadd.f32 %v545, %v576
  %v603 = vadd.f32 %v549, %v572
  %v604 = vadd.f32 %v551, %v576
  %v605 = vadd.f32 %v553, %v572
  %v606 = vadd.f32 %v555, %v576
  %v607 = vadd.f32 %v559, %v572
  %v608 = vadd.f32 %v561, %v576
  %v609 = vadd.f32 %v563, %v572
  %v610 = vadd.f32 %v565, %v576
  %v611 = vmax.f32 %v579, 0.0
  %v612 = vmax.f32 %v580, 0.0
  %v613 = vmax.f32 %v581, 0.0
  %v614 = vmax.f32 %v582, 0.0
  %v615 = vmax.f32 %v583, 0.0
  %v616 = vmax.f32 %v584, 0.0
  %v617 = vmax.f32 %v585, 0.0
  %v618 = vmax.f32 %v586, 0.0
  %v619 = vmax.f32 %v587, 0.0
  %v620 = vmax.f32 %v588, 0.0
  %v621 = vmax.f32 %v589, 0.0
  %v622 = vmax.f32 %v590, 0.0
  %v623 = vmax.f32 %v591, 0.0
  %v624 = vmax.f32 %v592, 0.0
  %v625 = vmax.f32 %v593, 0.0
  %v626 = vmax.f32 %v594, 0.0
  %v627 = vmax.f32 %v595, 0.0
  %v628 = vmax.f32 %v596, 0.0
  %v629 = vmax.f32 %v597, 0.0
  %v630 = vmax.f32 %v598, 0.0
  %v631 = vmax.f32 %v599, 0.0
  %v632 = vmax.f32 %v600, 0.0
  %v633 = vmax.f32 %v601, 0.0
  %v634 = vmax.f32 %v602, 0.0
  %v635 = vmax.f32 %v603, 0.0
  %v636 = vmax.f32 %v604, 0.0
  %v637 = vmax.f32 %v605, 0.0
  %v638 = vmax.f32 %v606, 0.0
  %v639 = vmax.f32 %v607, 0.0
  %v640 = vmax.f32 %v608, 0.0
  %v641 = vmax.f32 %v609, 0.0
  %v642 = vmax.f32 %v610, 0.0
  %v643 = vpack.c.bf16 %v613, %v611
  %v644 = vpack.c.bf16 %v614, %v612
  %v645 = vpack.c.bf16 %v617, %v615
  %v646 = vpack.c.bf16 %v618, %v616
  %v647 = vpack.c.bf16 %v621, %v619
  %v648 = vpack.c.bf16 %v622, %v620
  %v649 = vpack.c.bf16 %v625, %v623
  %v650 = vpack.c.bf16 %v626, %v624
  %v651 = vpack.c.bf16 %v629, %v627
  %v652 = vpack.c.bf16 %v630, %v628
  %v653 = vpack.c.bf16 %v633, %v631
  %v654 = vpack.c.bf16 %v634, %v632
  %v655 = vpack.c.bf16 %v637, %v635
  %v656 = vpack.c.bf16 %v638, %v636
  %v657 = vpack.c.bf16 %v641, %v639
  %v658 = vpack.c.bf16 %v642, %v640
  %v675 = vunpack.c.l.b16 %v643
  %v676 = vunpack.c.l.b16 %v644
  %v677 = vunpack.c.h.b16 %v643
  %v678 = vunpack.c.h.b16 %v644
  %v679 = vunpack.c.l.b16 %v645
  %v680 = vunpack.c.l.b16 %v646
  %v681 = vunpack.c.h.b16 %v645
  %v682 = vunpack.c.h.b16 %v646
  %v683 = vunpack.c.l.b16 %v647
  %v684 = vunpack.c.l.b16 %v648
  %v685 = vunpack.c.h.b16 %v647
  %v686 = vunpack.c.h.b16 %v648
  %v687 = vunpack.c.l.b16 %v649
  %v688 = vunpack.c.l.b16 %v650
  %v689 = vunpack.c.h.b16 %v649
  %v690 = vunpack.c.h.b16 %v650
  %v691 = vunpack.c.l.b16 %v651
  %v692 = vunpack.c.l.b16 %v652
  %v693 = vunpack.c.h.b16 %v651
  %v694 = vunpack.c.h.b16 %v652
  %v695 = vunpack.c.l.b16 %v653
  %v696 = vunpack.c.l.b16 %v654
  %v697 = vunpack.c.h.b16 %v653
  %v698 = vunpack.c.h.b16 %v654
  %v699 = vunpack.c.l.b16 %v655
  %v700 = vunpack.c.l.b16 %v656
  %v701 = vunpack.c.h.b16 %v655
  %v702 = vunpack.c.h.b16 %v656
  %v703 = vunpack.c.l.b16 %v657
  %v704 = vunpack.c.l.b16 %v658
  %v705 = vunpack.c.h.b16 %v657
  %v706 = vunpack.c.h.b16 %v658
  %v707 = vpack.c.b16 %v676, %v675
  %v708 = vpack.c.b16 %v678, %v677
  %v709 = vpack.c.b16 %v680, %v679
  %v710 = vpack.c.b16 %v682, %v681
  %v711 = vpack.c.b16 %v684, %v683
  %v712 = vpack.c.b16 %v686, %v685
  %v713 = vpack.c.b16 %v688, %v687
  %v714 = vpack.c.b16 %v690, %v689
  %v715 = vpack.c.b16 %v692, %v691
  %v716 = vpack.c.b16 %v694, %v693
  %v717 = vpack.c.b16 %v696, %v695
  %v718 = vpack.c.b16 %v698, %v697
  %v719 = vpack.c.b16 %v700, %v699
  %v720 = vpack.c.b16 %v702, %v701
  %v721 = vpack.c.b16 %v704, %v703
  %v722 = vpack.c.b16 %v706, %v705
  %739 = vst [vmem:[%s5] sm:$0xff] %v707
  %740 = vst [vmem:[%s5 + $0x8] sm:$0xff] %v708
  %741 = vst [vmem:[%s5 + $0x10] sm:$0xff] %v709
  %742 = vst [vmem:[%s5 + $0x18] sm:$0xff] %v710
  %743 = vst [vmem:[%s5 + $0x20] sm:$0xff] %v711
  %744 = vst [vmem:[%s5 + $0x28] sm:$0xff] %v712
  %745 = vst [vmem:[%s5 + $0x30] sm:$0xff] %v713
  %746 = vst [vmem:[%s5 + $0x38] sm:$0xff] %v714
  %747 = vst [vmem:[%s5 + $0x40] sm:$0xff] %v715
  %748 = vst [vmem:[%s5 + $0x48] sm:$0xff] %v716
  %749 = vst [vmem:[%s5 + $0x50] sm:$0xff] %v717
  %750 = vst [vmem:[%s5 + $0x58] sm:$0xff] %v718
  %751 = vst [vmem:[%s5 + $0x60] sm:$0xff] %v719
  %752 = vst [vmem:[%s5 + $0x68] sm:$0xff] %v720
  %753 = vst [vmem:[%s5 + $0x70] sm:$0xff] %v721
  %754 = vst [vmem:[%s5 + $0x78] sm:$0xff] %v722
  // Predicated region
  $region22: #{resnet_common_branch.16} parent=0 // pred_check
    _
  $region23: #{resnet_common_branch.16} parent=0 // pred_check_branch
    %756 = sbr.rel (0) target = $region25
  $region24: #{resnet_common_branch.16} parent=0 // pred_region
    _
  $region25: #{resnet_common_branch.16} parent=0 // pred_fallthru
    _
  // Predicated region
  $region26: #{resnet_common_branch.16} parent=0 // pred_check
    _
  $region27: #{resnet_common_branch.16} parent=0 // pred_check_branch
    %758 = sbr.rel (0) target = $region29
  $region28: #{resnet_common_branch.16} parent=0 // pred_region
    _
  $region29: #{resnet_common_branch.16} parent=0 // pred_fallthru
    _

// kernel: resnet_common_branch.15
$region0: #{resnet_common_branch.15}
  #allocation0 [shape = 'u32[]', space=smem, size = 0x4, offset = 0x4, fixed_abs, tag = 'smem constant byte address 0x4 - core index']
  #allocation1 [shape = 'u32[144,128]{1,0:T(1,128)}', space=vmem, size = 0x12000, scoped, tag = 'internal scratch']
  %s0 = inlined_call_operand.vmem [shape: bf16[128,1152], index: 0, kind: input, shape index: {}]
  %s1 = inlined_call_operand.vmem [shape: bf16[1152,128], index: 1, kind: input, shape index: {}]
  %s2 = inlined_call_operand.vmem [shape: f32[1,128], index: 2, kind: input, shape index: {}]
  %s3 = inlined_call_operand.vmem [shape: bf16[128,128], index: 3, kind: output, shape index: {}]
  %s4 = sld [smem:[#allocation0]]
  $region22: #{resnet_common_branch.15} parent=0
    _
  %s6 = ssub.s32 1, %s4
  %s7 = scalar_select 0, %s6, %s4
  // Predicated region
  $region2: #{resnet_common_branch.15} parent=0 // pred_check
    _
  $region3: #{resnet_common_branch.15} parent=0 // pred_check_branch
    %9 = sbr.rel (0) target = $region5
  $region4: #{resnet_common_branch.15} parent=0 // pred_region
    _
  $region5: #{resnet_common_branch.15} parent=0 // pred_fallthru
    _
  // Predicated region
  $region6: #{resnet_common_branch.15} parent=0 // pred_check
    _
  $region7: #{resnet_common_branch.15} parent=0 // pred_check_branch
    %11 = sbr.rel (0) target = $region9
  $region8: #{resnet_common_branch.15} parent=0 // pred_region
    _
  $region9: #{resnet_common_branch.15} parent=0 // pred_fallthru
    _
  // Predicated region
  $region10: #{resnet_common_branch.15} parent=0 // pred_check
    _
  $region11: #{resnet_common_branch.15} parent=0 // pred_check_branch
    %13 = sbr.rel (0) target = $region13
  $region12: #{resnet_common_branch.15} parent=0 // pred_region
    _
  $region13: #{resnet_common_branch.15} parent=0 // pred_fallthru
    _
  %v15 = vld [vmem:[%s0] sm:$0xff]
  %v16 = vld [vmem:[%s0 + $0x8] sm:$0xff]
  %v17 = vld [vmem:[%s0 + $0x10] sm:$0xff]
  %v18 = vld [vmem:[%s0 + $0x18] sm:$0xff]
  %v19 = vld [vmem:[%s0 + $0x20] sm:$0xf]
  %v20 = vld [vmem:[%s0 + $0x24] sm:$0xff]
  %v21 = vld [vmem:[%s0 + $0x2c] sm:$0xff]
  %v22 = vld [vmem:[%s0 + $0x34] sm:$0xff]
  %v23 = vld [vmem:[%s0 + $0x3c] sm:$0xff]
  %v24 = vld [vmem:[%s0 + $0x44] sm:$0xf]
  %v25 = vld [vmem:[%s0 + $0x48] sm:$0xff]
  %v26 = vld [vmem:[%s0 + $0x50] sm:$0xff]
  %v27 = vld [vmem:[%s0 + $0x58] sm:$0xff]
  %v28 = vld [vmem:[%s0 + $0x60] sm:$0xff]
  %v29 = vld [vmem:[%s0 + $0x68] sm:$0xf]
  %v30 = vld [vmem:[%s0 + $0x6c] sm:$0xff]
  %v31 = vld [vmem:[%s0 + $0x74] sm:$0xff]
  %v32 = vld [vmem:[%s0 + $0x7c] sm:$0xff]
  %v33 = vld [vmem:[%s0 + $0x84] sm:$0xff]
  %v34 = vld [vmem:[%s0 + $0x8c] sm:$0xf]
  %v35 = vld [vmem:[%s0 + $0x90] sm:$0xff]
  %v36 = vld [vmem:[%s0 + $0x98] sm:$0xff]
  %v37 = vld [vmem:[%s0 + $0xa0] sm:$0xff]
  %v38 = vld [vmem:[%s0 + $0xa8] sm:$0xff]
  %v39 = vld [vmem:[%s0 + $0xb0] sm:$0xf]
  %v40 = vld [vmem:[%s0 + $0xb4] sm:$0xff]
  %v41 = vld [vmem:[%s0 + $0xbc] sm:$0xff]
  %v42 = vld [vmem:[%s0 + $0xc4] sm:$0xff]
  %v43 = vld [vmem:[%s0 + $0xcc] sm:$0xff]
  %v44 = vld [vmem:[%s0 + $0xd4] sm:$0xf]
  %v45 = vld [vmem:[%s0 + $0xd8] sm:$0xff]
  %v46 = vld [vmem:[%s0 + $0xe0] sm:$0xff]
  %v47 = vld [vmem:[%s0 + $0xe8] sm:$0xff]
  %v48 = vld [vmem:[%s0 + $0xf0] sm:$0xff]
  %v49 = vld [vmem:[%s0 + $0xf8] sm:$0xf]
  %v50 = vld [vmem:[%s0 + $0xfc] sm:$0xff]
  %v51 = vld [vmem:[%s0 + $0x104] sm:$0xff]
  %v52 = vld [vmem:[%s0 + $0x10c] sm:$0xff]
  %v53 = vld [vmem:[%s0 + $0x114] sm:$0xff]
  %v54 = vld [vmem:[%s0 + $0x11c] sm:$0xf]
  %v55 = vld [vmem:[%s0 + $0x120] sm:$0xff]
  %v56 = vld [vmem:[%s0 + $0x128] sm:$0xff]
  %v57 = vld [vmem:[%s0 + $0x130] sm:$0xff]
  %v58 = vld [vmem:[%s0 + $0x138] sm:$0xff]
  %v59 = vld [vmem:[%s0 + $0x140] sm:$0xf]
  %v60 = vld [vmem:[%s0 + $0x144] sm:$0xff]
  %v61 = vld [vmem:[%s0 + $0x14c] sm:$0xff]
  %v62 = vld [vmem:[%s0 + $0x154] sm:$0xff]
  %v63 = vld [vmem:[%s0 + $0x15c] sm:$0xff]
  %v64 = vld [vmem:[%s0 + $0x164] sm:$0xf]
  %v65 = vld [vmem:[%s0 + $0x168] sm:$0xff]
  %v66 = vld [vmem:[%s0 + $0x170] sm:$0xff]
  %v67 = vld [vmem:[%s0 + $0x178] sm:$0xff]
  %v68 = vld [vmem:[%s0 + $0x180] sm:$0xff]
  %v69 = vld [vmem:[%s0 + $0x188] sm:$0xf]
  %v70 = vld [vmem:[%s0 + $0x18c] sm:$0xff]
  %v71 = vld [vmem:[%s0 + $0x194] sm:$0xff]
  %v72 = vld [vmem:[%s0 + $0x19c] sm:$0xff]
  %v73 = vld [vmem:[%s0 + $0x1a4] sm:$0xff]
  %v74 = vld [vmem:[%s0 + $0x1ac] sm:$0xf]
  %v75 = vld [vmem:[%s0 + $0x1b0] sm:$0xff]
  %v76 = vld [vmem:[%s0 + $0x1b8] sm:$0xff]
  %v77 = vld [vmem:[%s0 + $0x1c0] sm:$0xff]
  %v78 = vld [vmem:[%s0 + $0x1c8] sm:$0xff]
  %v79 = vld [vmem:[%s0 + $0x1d0] sm:$0xf]
  %v80 = vld [vmem:[%s0 + $0x1d4] sm:$0xff]
  %v81 = vld [vmem:[%s0 + $0x1dc] sm:$0xff]
  %v82 = vld [vmem:[%s0 + $0x1e4] sm:$0xff]
  %v83 = vld [vmem:[%s0 + $0x1ec] sm:$0xff]
  %v84 = vld [vmem:[%s0 + $0x1f4] sm:$0xf]
  %v85 = vld [vmem:[%s0 + $0x1f8] sm:$0xff]
  %v86 = vld [vmem:[%s0 + $0x200] sm:$0xff]
  %v87 = vld [vmem:[%s0 + $0x208] sm:$0xff]
  %v88 = vld [vmem:[%s0 + $0x210] sm:$0xff]
  %v89 = vld [vmem:[%s0 + $0x218] sm:$0xf]
  %v90 = vld [vmem:[%s0 + $0x21c] sm:$0xff]
  %v91 = vld [vmem:[%s0 + $0x224] sm:$0xff]
  %v92 = vld [vmem:[%s0 + $0x22c] sm:$0xff]
  %v93 = vld [vmem:[%s0 + $0x234] sm:$0xff]
  %v94 = vld [vmem:[%s0 + $0x23c] sm:$0xf]
  %v95 = vld [vmem:[%s1] sm:$0xf]
  %v96 = vld [vmem:[%s1 + $0x4] sm:$0xf]
  %v97 = vld [vmem:[%s1 + $0x8] sm:$0xf]
  %v98 = vld [vmem:[%s1 + $0xc] sm:$0xf]
  %v99 = vld [vmem:[%s1 + $0x10] sm:$0xf]
  %v100 = vld [vmem:[%s1 + $0x14] sm:$0xf]
  %v101 = vld [vmem:[%s1 + $0x18] sm:$0xf]
  %v102 = vld [vmem:[%s1 + $0x1c] sm:$0xf]
  %v103 = vld [vmem:[%s1 + $0x20] sm:$0xf]
  %v104 = vld [vmem:[%s1 + $0x24] sm:$0xf]
  %v105 = vld [vmem:[%s1 + $0x28] sm:$0xf]
  %v106 = vld [vmem:[%s1 + $0x2c] sm:$0xf]
  %v107 = vld [vmem:[%s1 + $0x30] sm:$0xf]
  %v108 = vld [vmem:[%s1 + $0x34] sm:$0xf]
  %v109 = vld [vmem:[%s1 + $0x38] sm:$0xf]
  %v110 = vld [vmem:[%s1 + $0x3c] sm:$0xf]
  %v111 = vld [vmem:[%s1 + $0x40] sm:$0xf]
  %v112 = vld [vmem:[%s1 + $0x44] sm:$0xf]
  %v113 = vld [vmem:[%s1 + $0x48] sm:$0xf]
  %v114 = vld [vmem:[%s1 + $0x4c] sm:$0xf]
  %v115 = vld [vmem:[%s1 + $0x50] sm:$0xf]
  %v116 = vld [vmem:[%s1 + $0x54] sm:$0xf]
  %v117 = vld [vmem:[%s1 + $0x58] sm:$0xf]
  %v118 = vld [vmem:[%s1 + $0x5c] sm:$0xf]
  %v119 = vld [vmem:[%s1 + $0x60] sm:$0xf]
  %v120 = vld [vmem:[%s1 + $0x64] sm:$0xf]
  %v121 = vld [vmem:[%s1 + $0x68] sm:$0xf]
  %v122 = vld [vmem:[%s1 + $0x6c] sm:$0xf]
  %v123 = vld [vmem:[%s1 + $0x70] sm:$0xf]
  %v124 = vld [vmem:[%s1 + $0x74] sm:$0xf]
  %v125 = vld [vmem:[%s1 + $0x78] sm:$0xf]
  %v126 = vld [vmem:[%s1 + $0x7c] sm:$0xf]
  %v127 = vld [vmem:[%s1 + $0x80] sm:$0xf]
  %v128 = vld [vmem:[%s1 + $0x84] sm:$0xf]
  %v129 = vld [vmem:[%s1 + $0x88] sm:$0xf]
  %v130 = vld [vmem:[%s1 + $0x8c] sm:$0xf]
  %v131 = vld [vmem:[%s1 + $0x90] sm:$0xf]
  %v132 = vld [vmem:[%s1 + $0x94] sm:$0xf]
  %v133 = vld [vmem:[%s1 + $0x98] sm:$0xf]
  %v134 = vld [vmem:[%s1 + $0x9c] sm:$0xf]
  %v135 = vld [vmem:[%s1 + $0xa0] sm:$0xf]
  %v136 = vld [vmem:[%s1 + $0xa4] sm:$0xf]
  %v137 = vld [vmem:[%s1 + $0xa8] sm:$0xf]
  %v138 = vld [vmem:[%s1 + $0xac] sm:$0xf]
  %v139 = vld [vmem:[%s1 + $0xb0] sm:$0xf]
  %v140 = vld [vmem:[%s1 + $0xb4] sm:$0xf]
  %v141 = vld [vmem:[%s1 + $0xb8] sm:$0xf]
  %v142 = vld [vmem:[%s1 + $0xbc] sm:$0xf]
  %v143 = vld [vmem:[%s1 + $0xc0] sm:$0xf]
  %v144 = vld [vmem:[%s1 + $0xc4] sm:$0xf]
  %v145 = vld [vmem:[%s1 + $0xc8] sm:$0xf]
  %v146 = vld [vmem:[%s1 + $0xcc] sm:$0xf]
  %v147 = vld [vmem:[%s1 + $0xd0] sm:$0xf]
  %v148 = vld [vmem:[%s1 + $0xd4] sm:$0xf]
  %v149 = vld [vmem:[%s1 + $0xd8] sm:$0xf]
  %v150 = vld [vmem:[%s1 + $0xdc] sm:$0xf]
  %v151 = vld [vmem:[%s1 + $0xe0] sm:$0xf]
  %v152 = vld [vmem:[%s1 + $0xe4] sm:$0xf]
  %v153 = vld [vmem:[%s1 + $0xe8] sm:$0xf]
  %v154 = vld [vmem:[%s1 + $0xec] sm:$0xf]
  %v155 = vld [vmem:[%s1 + $0xf0] sm:$0xf]
  %v156 = vld [vmem:[%s1 + $0xf4] sm:$0xf]
  %v157 = vld [vmem:[%s1 + $0xf8] sm:$0xf]
  %v158 = vld [vmem:[%s1 + $0xfc] sm:$0xf]
  %v159 = vld [vmem:[%s1 + $0x100] sm:$0xf]
  %v160 = vld [vmem:[%s1 + $0x104] sm:$0xf]
  %v161 = vld [vmem:[%s1 + $0x108] sm:$0xf]
  %v162 = vld [vmem:[%s1 + $0x10c] sm:$0xf]
  %v163 = vld [vmem:[%s1 + $0x110] sm:$0xf]
  %v164 = vld [vmem:[%s1 + $0x114] sm:$0xf]
  %v165 = vld [vmem:[%s1 + $0x118] sm:$0xf]
  %v166 = vld [vmem:[%s1 + $0x11c] sm:$0xf]
  %v167 = vld [vmem:[%s1 + $0x120] sm:$0xf]
  %v168 = vld [vmem:[%s1 + $0x124] sm:$0xf]
  %v169 = vld [vmem:[%s1 + $0x128] sm:$0xf]
  %v170 = vld [vmem:[%s1 + $0x12c] sm:$0xf]
  %v171 = vld [vmem:[%s1 + $0x130] sm:$0xf]
  %v172 = vld [vmem:[%s1 + $0x134] sm:$0xf]
  %v173 = vld [vmem:[%s1 + $0x138] sm:$0xf]
  %v174 = vld [vmem:[%s1 + $0x13c] sm:$0xf]
  %v175 = vld [vmem:[%s1 + $0x140] sm:$0xf]
  %v176 = vld [vmem:[%s1 + $0x144] sm:$0xf]
  %v177 = vld [vmem:[%s1 + $0x148] sm:$0xf]
  %v178 = vld [vmem:[%s1 + $0x14c] sm:$0xf]
  %v179 = vld [vmem:[%s1 + $0x150] sm:$0xf]
  %v180 = vld [vmem:[%s1 + $0x154] sm:$0xf]
  %v181 = vld [vmem:[%s1 + $0x158] sm:$0xf]
  %v182 = vld [vmem:[%s1 + $0x15c] sm:$0xf]
  %v183 = vld [vmem:[%s1 + $0x160] sm:$0xf]
  %v184 = vld [vmem:[%s1 + $0x164] sm:$0xf]
  %v185 = vld [vmem:[%s1 + $0x168] sm:$0xf]
  %v186 = vld [vmem:[%s1 + $0x16c] sm:$0xf]
  %v187 = vld [vmem:[%s1 + $0x170] sm:$0xf]
  %v188 = vld [vmem:[%s1 + $0x174] sm:$0xf]
  %v189 = vld [vmem:[%s1 + $0x178] sm:$0xf]
  %v190 = vld [vmem:[%s1 + $0x17c] sm:$0xf]
  %v191 = vld [vmem:[%s1 + $0x180] sm:$0xf]
  %v192 = vld [vmem:[%s1 + $0x184] sm:$0xf]
  %v193 = vld [vmem:[%s1 + $0x188] sm:$0xf]
  %v194 = vld [vmem:[%s1 + $0x18c] sm:$0xf]
  %v195 = vld [vmem:[%s1 + $0x190] sm:$0xf]
  %v196 = vld [vmem:[%s1 + $0x194] sm:$0xf]
  %v197 = vld [vmem:[%s1 + $0x198] sm:$0xf]
  %v198 = vld [vmem:[%s1 + $0x19c] sm:$0xf]
  %v199 = vld [vmem:[%s1 + $0x1a0] sm:$0xf]
  %v200 = vld [vmem:[%s1 + $0x1a4] sm:$0xf]
  %v201 = vld [vmem:[%s1 + $0x1a8] sm:$0xf]
  %v202 = vld [vmem:[%s1 + $0x1ac] sm:$0xf]
  %v203 = vld [vmem:[%s1 + $0x1b0] sm:$0xf]
  %v204 = vld [vmem:[%s1 + $0x1b4] sm:$0xf]
  %v205 = vld [vmem:[%s1 + $0x1b8] sm:$0xf]
  %v206 = vld [vmem:[%s1 + $0x1bc] sm:$0xf]
  %v207 = vld [vmem:[%s1 + $0x1c0] sm:$0xf]
  %v208 = vld [vmem:[%s1 + $0x1c4] sm:$0xf]
  %v209 = vld [vmem:[%s1 + $0x1c8] sm:$0xf]
  %v210 = vld [vmem:[%s1 + $0x1cc] sm:$0xf]
  %v211 = vld [vmem:[%s1 + $0x1d0] sm:$0xf]
  %v212 = vld [vmem:[%s1 + $0x1d4] sm:$0xf]
  %v213 = vld [vmem:[%s1 + $0x1d8] sm:$0xf]
  %v214 = vld [vmem:[%s1 + $0x1dc] sm:$0xf]
  %v215 = vld [vmem:[%s1 + $0x1e0] sm:$0xf]
  %v216 = vld [vmem:[%s1 + $0x1e4] sm:$0xf]
  %v217 = vld [vmem:[%s1 + $0x1e8] sm:$0xf]
  %v218 = vld [vmem:[%s1 + $0x1ec] sm:$0xf]
  %v219 = vld [vmem:[%s1 + $0x1f0] sm:$0xf]
  %v220 = vld [vmem:[%s1 + $0x1f4] sm:$0xf]
  %v221 = vld [vmem:[%s1 + $0x1f8] sm:$0xf]
  %v222 = vld [vmem:[%s1 + $0x1fc] sm:$0xf]
  %v223 = vld [vmem:[%s1 + $0x200] sm:$0xf]
  %v224 = vld [vmem:[%s1 + $0x204] sm:$0xf]
  %v225 = vld [vmem:[%s1 + $0x208] sm:$0xf]
  %v226 = vld [vmem:[%s1 + $0x20c] sm:$0xf]
  %v227 = vld [vmem:[%s1 + $0x210] sm:$0xf]
  %v228 = vld [vmem:[%s1 + $0x214] sm:$0xf]
  %v229 = vld [vmem:[%s1 + $0x218] sm:$0xf]
  %v230 = vld [vmem:[%s1 + $0x21c] sm:$0xf]
  %v231 = vld [vmem:[%s1 + $0x220] sm:$0xf]
  %v232 = vld [vmem:[%s1 + $0x224] sm:$0xf]
  %v233 = vld [vmem:[%s1 + $0x228] sm:$0xf]
  %v234 = vld [vmem:[%s1 + $0x22c] sm:$0xf]
  %v235 = vld [vmem:[%s1 + $0x230] sm:$0xf]
  %v236 = vld [vmem:[%s1 + $0x234] sm:$0xf]
  %v237 = vld [vmem:[%s1 + $0x238] sm:$0xf]
  %v238 = vld [vmem:[%s1 + $0x23c] sm:$0xf]
  %v239 = vld [vmem:[%s2] sm:$0x1]
  %v241 = vlaneseq
  %v242 = vshrl.u32 %v241, 7
  %v243 = vsub.s32 0, %v242
  %v244 = vrot.slane %v239, %v243
  %v326 = vunpack.c.l.b16 %v15
  %v327 = vunpack.c.h.b16 %v15
  %v328 = vunpack.c.l.b16 %v16
  %v329 = vunpack.c.h.b16 %v16
  %v330 = vunpack.c.l.b16 %v17
  %v331 = vunpack.c.h.b16 %v17
  %v332 = vunpack.c.l.b16 %v18
  %v333 = vunpack.c.h.b16 %v18
  %v334 = vunpack.c.l.b16 %v19
  %v335 = vunpack.c.l.b16 %v20
  %v336 = vunpack.c.h.b16 %v20
  %v337 = vunpack.c.l.b16 %v21
  %v338 = vunpack.c.h.b16 %v21
  %v339 = vunpack.c.l.b16 %v22
  %v340 = vunpack.c.h.b16 %v22
  %v341 = vunpack.c.l.b16 %v23
  %v342 = vunpack.c.h.b16 %v23
  %v343 = vunpack.c.l.b16 %v24
  %v344 = vunpack.c.l.b16 %v25
  %v345 = vunpack.c.h.b16 %v25
  %v346 = vunpack.c.l.b16 %v26
  %v347 = vunpack.c.h.b16 %v26
  %v348 = vunpack.c.l.b16 %v27
  %v349 = vunpack.c.h.b16 %v27
  %v350 = vunpack.c.l.b16 %v28
  %v351 = vunpack.c.h.b16 %v28
  %v352 = vunpack.c.l.b16 %v29
  %v353 = vunpack.c.l.b16 %v30
  %v354 = vunpack.c.h.b16 %v30
  %v355 = vunpack.c.l.b16 %v31
  %v356 = vunpack.c.h.b16 %v31
  %v357 = vunpack.c.l.b16 %v32
  %v358 = vunpack.c.h.b16 %v32
  %v359 = vunpack.c.l.b16 %v33
  %v360 = vunpack.c.h.b16 %v33
  %v361 = vunpack.c.l.b16 %v34
  %v362 = vunpack.c.l.b16 %v35
  %v363 = vunpack.c.h.b16 %v35
  %v364 = vunpack.c.l.b16 %v36
  %v365 = vunpack.c.h.b16 %v36
  %v366 = vunpack.c.l.b16 %v37
  %v367 = vunpack.c.h.b16 %v37
  %v368 = vunpack.c.l.b16 %v38
  %v369 = vunpack.c.h.b16 %v38
  %v370 = vunpack.c.l.b16 %v39
  %v371 = vunpack.c.l.b16 %v40
  %v372 = vunpack.c.h.b16 %v40
  %v373 = vunpack.c.l.b16 %v41
  %v374 = vunpack.c.h.b16 %v41
  %v375 = vunpack.c.l.b16 %v42
  %v376 = vunpack.c.h.b16 %v42
  %v377 = vunpack.c.l.b16 %v43
  %v378 = vunpack.c.h.b16 %v43
  %v379 = vunpack.c.l.b16 %v44
  %v380 = vunpack.c.l.b16 %v45
  %v381 = vunpack.c.h.b16 %v45
  %v382 = vunpack.c.l.b16 %v46
  %v383 = vunpack.c.h.b16 %v46
  %v384 = vunpack.c.l.b16 %v47
  %v385 = vunpack.c.h.b16 %v47
  %v386 = vunpack.c.l.b16 %v48
  %v387 = vunpack.c.h.b16 %v48
  %v388 = vunpack.c.l.b16 %v49
  %v389 = vunpack.c.l.b16 %v50
  %v390 = vunpack.c.h.b16 %v50
  %v391 = vunpack.c.l.b16 %v51
  %v392 = vunpack.c.h.b16 %v51
  %v393 = vunpack.c.l.b16 %v52
  %v394 = vunpack.c.h.b16 %v52
  %v395 = vunpack.c.l.b16 %v53
  %v396 = vunpack.c.h.b16 %v53
  %v397 = vunpack.c.l.b16 %v54
  %v398 = vunpack.c.l.b16 %v55
  %v399 = vunpack.c.h.b16 %v55
  %v400 = vunpack.c.l.b16 %v56
  %v401 = vunpack.c.h.b16 %v56
  %v402 = vunpack.c.l.b16 %v57
  %v403 = vunpack.c.h.b16 %v57
  %v404 = vunpack.c.l.b16 %v58
  %v405 = vunpack.c.h.b16 %v58
  %v406 = vunpack.c.l.b16 %v59
  %v407 = vunpack.c.l.b16 %v60
  %v408 = vunpack.c.h.b16 %v60
  %v409 = vunpack.c.l.b16 %v61
  %v410 = vunpack.c.h.b16 %v61
  %v411 = vunpack.c.l.b16 %v62
  %v412 = vunpack.c.h.b16 %v62
  %v413 = vunpack.c.l.b16 %v63
  %v414 = vunpack.c.h.b16 %v63
  %v415 = vunpack.c.l.b16 %v64
  %v416 = vunpack.c.l.b16 %v65
  %v417 = vunpack.c.h.b16 %v65
  %v418 = vunpack.c.l.b16 %v66
  %v419 = vunpack.c.h.b16 %v66
  %v420 = vunpack.c.l.b16 %v67
  %v421 = vunpack.c.h.b16 %v67
  %v422 = vunpack.c.l.b16 %v68
  %v423 = vunpack.c.h.b16 %v68
  %v424 = vunpack.c.l.b16 %v69
  %v425 = vunpack.c.l.b16 %v70
  %v426 = vunpack.c.h.b16 %v70
  %v427 = vunpack.c.l.b16 %v71
  %v428 = vunpack.c.h.b16 %v71
  %v429 = vunpack.c.l.b16 %v72
  %v430 = vunpack.c.h.b16 %v72
  %v431 = vunpack.c.l.b16 %v73
  %v432 = vunpack.c.h.b16 %v73
  %v433 = vunpack.c.l.b16 %v74
  %v434 = vunpack.c.l.b16 %v75
  %v435 = vunpack.c.h.b16 %v75
  %v436 = vunpack.c.l.b16 %v76
  %v437 = vunpack.c.h.b16 %v76
  %v438 = vunpack.c.l.b16 %v77
  %v439 = vunpack.c.h.b16 %v77
  %v440 = vunpack.c.l.b16 %v78
  %v441 = vunpack.c.h.b16 %v78
  %v442 = vunpack.c.l.b16 %v79
  %v443 = vunpack.c.l.b16 %v80
  %v444 = vunpack.c.h.b16 %v80
  %v445 = vunpack.c.l.b16 %v81
  %v446 = vunpack.c.h.b16 %v81
  %v447 = vunpack.c.l.b16 %v82
  %v448 = vunpack.c.h.b16 %v82
  %v449 = vunpack.c.l.b16 %v83
  %v450 = vunpack.c.h.b16 %v83
  %v451 = vunpack.c.l.b16 %v84
  %v452 = vunpack.c.l.b16 %v85
  %v453 = vunpack.c.h.b16 %v85
  %v454 = vunpack.c.l.b16 %v86
  %v455 = vunpack.c.h.b16 %v86
  %v456 = vunpack.c.l.b16 %v87
  %v457 = vunpack.c.h.b16 %v87
  %v458 = vunpack.c.l.b16 %v88
  %v459 = vunpack.c.h.b16 %v88
  %v460 = vunpack.c.l.b16 %v89
  %v461 = vunpack.c.l.b16 %v90
  %v462 = vunpack.c.h.b16 %v90
  %v463 = vunpack.c.l.b16 %v91
  %v464 = vunpack.c.h.b16 %v91
  %v465 = vunpack.c.l.b16 %v92
  %v466 = vunpack.c.h.b16 %v92
  %v467 = vunpack.c.l.b16 %v93
  %v468 = vunpack.c.h.b16 %v93
  %v469 = vunpack.c.l.b16 %v94
  %v470 = vpack.c.b16 %v335, %v326
  %v471 = vpack.c.b16 %v336, %v327
  %v472 = vpack.c.b16 %v337, %v328
  %v473 = vpack.c.b16 %v338, %v329
  %v474 = vpack.c.b16 %v339, %v330
  %v475 = vpack.c.b16 %v340, %v331
  %v476 = vpack.c.b16 %v341, %v332
  %v477 = vpack.c.b16 %v342, %v333
  %v478 = vpack.c.b16 %v343, %v334
  %v479 = vpack.c.b16 %v353, %v344
  %v480 = vpack.c.b16 %v354, %v345
  %v481 = vpack.c.b16 %v355, %v346
  %v482 = vpack.c.b16 %v356, %v347
  %v483 = vpack.c.b16 %v357, %v348
  %v484 = vpack.c.b16 %v358, %v349
  %v485 = vpack.c.b16 %v359, %v350
  %v486 = vpack.c.b16 %v360, %v351
  %v487 = vpack.c.b16 %v361, %v352
  %v488 = vpack.c.b16 %v371, %v362
  %v489 = vpack.c.b16 %v372, %v363
  %v490 = vpack.c.b16 %v373, %v364
  %v491 = vpack.c.b16 %v374, %v365
  %v492 = vpack.c.b16 %v375, %v366
  %v493 = vpack.c.b16 %v376, %v367
  %v494 = vpack.c.b16 %v377, %v368
  %v495 = vpack.c.b16 %v378, %v369
  %v496 = vpack.c.b16 %v379, %v370
  %v497 = vpack.c.b16 %v389, %v380
  %v498 = vpack.c.b16 %v390, %v381
  %v499 = vpack.c.b16 %v391, %v382
  %v500 = vpack.c.b16 %v392, %v383
  %v501 = vpack.c.b16 %v393, %v384
  %v502 = vpack.c.b16 %v394, %v385
  %v503 = vpack.c.b16 %v395, %v386
  %v504 = vpack.c.b16 %v396, %v387
  %v505 = vpack.c.b16 %v397, %v388
  %v506 = vpack.c.b16 %v407, %v398
  %v507 = vpack.c.b16 %v408, %v399
  %v508 = vpack.c.b16 %v409, %v400
  %v509 = vpack.c.b16 %v410, %v401
  %v510 = vpack.c.b16 %v411, %v402
  %v511 = vpack.c.b16 %v412, %v403
  %v512 = vpack.c.b16 %v413, %v404
  %v513 = vpack.c.b16 %v414, %v405
  %v514 = vpack.c.b16 %v415, %v406
  %v515 = vpack.c.b16 %v425, %v416
  %v516 = vpack.c.b16 %v426, %v417
  %v517 = vpack.c.b16 %v427, %v418
  %v518 = vpack.c.b16 %v428, %v419
  %v519 = vpack.c.b16 %v429, %v420
  %v520 = vpack.c.b16 %v430, %v421
  %v521 = vpack.c.b16 %v431, %v422
  %v522 = vpack.c.b16 %v432, %v423
  %v523 = vpack.c.b16 %v433, %v424
  %v524 = vpack.c.b16 %v443, %v434
  %v525 = vpack.c.b16 %v444, %v435
  %v526 = vpack.c.b16 %v445, %v436
  %v527 = vpack.c.b16 %v446, %v437
  %v528 = vpack.c.b16 %v447, %v438
  %v529 = vpack.c.b16 %v448, %v439
  %v530 = vpack.c.b16 %v449, %v440
  %v531 = vpack.c.b16 %v450, %v441
  %v532 = vpack.c.b16 %v451, %v442
  %v533 = vpack.c.b16 %v461, %v452
  %v534 = vpack.c.b16 %v462, %v453
  %v535 = vpack.c.b16 %v463, %v454
  %v536 = vpack.c.b16 %v464, %v455
  %v537 = vpack.c.b16 %v465, %v456
  %v538 = vpack.c.b16 %v466, %v457
  %v539 = vpack.c.b16 %v467, %v458
  %v540 = vpack.c.b16 %v468, %v459
  %v541 = vpack.c.b16 %v469, %v460
  %v758 = vunpack.c.l.b16 %v95
  %v759 = vunpack.c.l.b16 %v96
  %v760 = vunpack.c.l.b16 %v97
  %v761 = vunpack.c.l.b16 %v98
  %v762 = vunpack.c.l.b16 %v99
  %v763 = vunpack.c.l.b16 %v100
  %v764 = vunpack.c.l.b16 %v101
  %v765 = vunpack.c.l.b16 %v102
  %v766 = vunpack.c.l.b16 %v103
  %v767 = vunpack.c.l.b16 %v104
  %v768 = vunpack.c.l.b16 %v105
  %v769 = vunpack.c.l.b16 %v106
  %v770 = vunpack.c.l.b16 %v107
  %v771 = vunpack.c.l.b16 %v108
  %v772 = vunpack.c.l.b16 %v109
  %v773 = vunpack.c.l.b16 %v110
  %v774 = vunpack.c.l.b16 %v111
  %v775 = vunpack.c.l.b16 %v112
  %v776 = vunpack.c.l.b16 %v113
  %v777 = vunpack.c.l.b16 %v114
  %v778 = vunpack.c.l.b16 %v115
  %v779 = vunpack.c.l.b16 %v116
  %v780 = vunpack.c.l.b16 %v117
  %v781 = vunpack.c.l.b16 %v118
  %v782 = vunpack.c.l.b16 %v119
  %v783 = vunpack.c.l.b16 %v120
  %v784 = vunpack.c.l.b16 %v121
  %v785 = vunpack.c.l.b16 %v122
  %v786 = vunpack.c.l.b16 %v123
  %v787 = vunpack.c.l.b16 %v124
  %v788 = vunpack.c.l.b16 %v125
  %v789 = vunpack.c.l.b16 %v126
  %v790 = vunpack.c.l.b16 %v127
  %v791 = vunpack.c.l.b16 %v128
  %v792 = vunpack.c.l.b16 %v129
  %v793 = vunpack.c.l.b16 %v130
  %v794 = vunpack.c.l.b16 %v131
  %v795 = vunpack.c.l.b16 %v132
  %v796 = vunpack.c.l.b16 %v133
  %v797 = vunpack.c.l.b16 %v134
  %v798 = vunpack.c.l.b16 %v135
  %v799 = vunpack.c.l.b16 %v136
  %v800 = vunpack.c.l.b16 %v137
  %v801 = vunpack.c.l.b16 %v138
  %v802 = vunpack.c.l.b16 %v139
  %v803 = vunpack.c.l.b16 %v140
  %v804 = vunpack.c.l.b16 %v141
  %v805 = vunpack.c.l.b16 %v142
  %v806 = vunpack.c.l.b16 %v143
  %v807 = vunpack.c.l.b16 %v144
  %v808 = vunpack.c.l.b16 %v145
  %v809 = vunpack.c.l.b16 %v146
  %v810 = vunpack.c.l.b16 %v147
  %v811 = vunpack.c.l.b16 %v148
  %v812 = vunpack.c.l.b16 %v149
  %v813 = vunpack.c.l.b16 %v150
  %v814 = vunpack.c.l.b16 %v151
  %v815 = vunpack.c.l.b16 %v152
  %v816 = vunpack.c.l.b16 %v153
  %v817 = vunpack.c.l.b16 %v154
  %v818 = vunpack.c.l.b16 %v155
  %v819 = vunpack.c.l.b16 %v156
  %v820 = vunpack.c.l.b16 %v157
  %v821 = vunpack.c.l.b16 %v158
  %v822 = vunpack.c.l.b16 %v159
  %v823 = vunpack.c.l.b16 %v160
  %v824 = vunpack.c.l.b16 %v161
  %v825 = vunpack.c.l.b16 %v162
  %v826 = vunpack.c.l.b16 %v163
  %v827 = vunpack.c.l.b16 %v164
  %v828 = vunpack.c.l.b16 %v165
  %v829 = vunpack.c.l.b16 %v166
  %v830 = vunpack.c.l.b16 %v167
  %v831 = vunpack.c.l.b16 %v168
  %v832 = vunpack.c.l.b16 %v169
  %v833 = vunpack.c.l.b16 %v170
  %v834 = vunpack.c.l.b16 %v171
  %v835 = vunpack.c.l.b16 %v172
  %v836 = vunpack.c.l.b16 %v173
  %v837 = vunpack.c.l.b16 %v174
  %v838 = vunpack.c.l.b16 %v175
  %v839 = vunpack.c.l.b16 %v176
  %v840 = vunpack.c.l.b16 %v177
  %v841 = vunpack.c.l.b16 %v178
  %v842 = vunpack.c.l.b16 %v179
  %v843 = vunpack.c.l.b16 %v180
  %v844 = vunpack.c.l.b16 %v181
  %v845 = vunpack.c.l.b16 %v182
  %v846 = vunpack.c.l.b16 %v183
  %v847 = vunpack.c.l.b16 %v184
  %v848 = vunpack.c.l.b16 %v185
  %v849 = vunpack.c.l.b16 %v186
  %v850 = vunpack.c.l.b16 %v187
  %v851 = vunpack.c.l.b16 %v188
  %v852 = vunpack.c.l.b16 %v189
  %v853 = vunpack.c.l.b16 %v190
  %v854 = vunpack.c.l.b16 %v191
  %v855 = vunpack.c.l.b16 %v192
  %v856 = vunpack.c.l.b16 %v193
  %v857 = vunpack.c.l.b16 %v194
  %v858 = vunpack.c.l.b16 %v195
  %v859 = vunpack.c.l.b16 %v196
  %v860 = vunpack.c.l.b16 %v197
  %v861 = vunpack.c.l.b16 %v198
  %v862 = vunpack.c.l.b16 %v199
  %v863 = vunpack.c.l.b16 %v200
  %v864 = vunpack.c.l.b16 %v201
  %v865 = vunpack.c.l.b16 %v202
  %v866 = vunpack.c.l.b16 %v203
  %v867 = vunpack.c.l.b16 %v204
  %v868 = vunpack.c.l.b16 %v205
  %v869 = vunpack.c.l.b16 %v206
  %v870 = vunpack.c.l.b16 %v207
  %v871 = vunpack.c.l.b16 %v208
  %v872 = vunpack.c.l.b16 %v209
  %v873 = vunpack.c.l.b16 %v210
  %v874 = vunpack.c.l.b16 %v211
  %v875 = vunpack.c.l.b16 %v212
  %v876 = vunpack.c.l.b16 %v213
  %v877 = vunpack.c.l.b16 %v214
  %v878 = vunpack.c.l.b16 %v215
  %v879 = vunpack.c.l.b16 %v216
  %v880 = vunpack.c.l.b16 %v217
  %v881 = vunpack.c.l.b16 %v218
  %v882 = vunpack.c.l.b16 %v219
  %v883 = vunpack.c.l.b16 %v220
  %v884 = vunpack.c.l.b16 %v221
  %v885 = vunpack.c.l.b16 %v222
  %v886 = vunpack.c.l.b16 %v223
  %v887 = vunpack.c.l.b16 %v224
  %v888 = vunpack.c.l.b16 %v225
  %v889 = vunpack.c.l.b16 %v226
  %v890 = vunpack.c.l.b16 %v227
  %v891 = vunpack.c.l.b16 %v228
  %v892 = vunpack.c.l.b16 %v229
  %v893 = vunpack.c.l.b16 %v230
  %v894 = vunpack.c.l.b16 %v231
  %v895 = vunpack.c.l.b16 %v232
  %v896 = vunpack.c.l.b16 %v233
  %v897 = vunpack.c.l.b16 %v234
  %v898 = vunpack.c.l.b16 %v235
  %v899 = vunpack.c.l.b16 %v236
  %v900 = vunpack.c.l.b16 %v237
  %v901 = vunpack.c.l.b16 %v238
  %v902 = vpack.c.b16 %v759, %v758
  %v903 = vpack.c.b16 %v761, %v760
  %v904 = vpack.c.b16 %v763, %v762
  %v905 = vpack.c.b16 %v765, %v764
  %v906 = vpack.c.b16 %v767, %v766
  %v907 = vpack.c.b16 %v769, %v768
  %v908 = vpack.c.b16 %v771, %v770
  %v909 = vpack.c.b16 %v773, %v772
  %v910 = vpack.c.b16 %v775, %v774
  %v911 = vpack.c.b16 %v777, %v776
  %v912 = vpack.c.b16 %v779, %v778
  %v913 = vpack.c.b16 %v781, %v780
  %v914 = vpack.c.b16 %v783, %v782
  %v915 = vpack.c.b16 %v785, %v784
  %v916 = vpack.c.b16 %v787, %v786
  %v917 = vpack.c.b16 %v789, %v788
  %v918 = vpack.c.b16 %v791, %v790
  %v919 = vpack.c.b16 %v793, %v792
  %v920 = vpack.c.b16 %v795, %v794
  %v921 = vpack.c.b16 %v797, %v796
  %v922 = vpack.c.b16 %v799, %v798
  %v923 = vpack.c.b16 %v801, %v800
  %v924 = vpack.c.b16 %v803, %v802
  %v925 = vpack.c.b16 %v805, %v804
  %v926 = vpack.c.b16 %v807, %v806
  %v927 = vpack.c.b16 %v809, %v808
  %v928 = vpack.c.b16 %v811, %v810
  %v929 = vpack.c.b16 %v813, %v812
  %v930 = vpack.c.b16 %v815, %v814
  %v931 = vpack.c.b16 %v817, %v816
  %v932 = vpack.c.b16 %v819, %v818
  %v933 = vpack.c.b16 %v821, %v820
  %v934 = vpack.c.b16 %v823, %v822
  %v935 = vpack.c.b16 %v825, %v824
  %v936 = vpack.c.b16 %v827, %v826
  %v937 = vpack.c.b16 %v829, %v828
  %v938 = vpack.c.b16 %v831, %v830
  %v939 = vpack.c.b16 %v833, %v832
  %v940 = vpack.c.b16 %v835, %v834
  %v941 = vpack.c.b16 %v837, %v836
  %v942 = vpack.c.b16 %v839, %v838
  %v943 = vpack.c.b16 %v841, %v840
  %v944 = vpack.c.b16 %v843, %v842
  %v945 = vpack.c.b16 %v845, %v844
  %v946 = vpack.c.b16 %v847, %v846
  %v947 = vpack.c.b16 %v849, %v848
  %v948 = vpack.c.b16 %v851, %v850
  %v949 = vpack.c.b16 %v853, %v852
  %v950 = vpack.c.b16 %v855, %v854
  %v951 = vpack.c.b16 %v857, %v856
  %v952 = vpack.c.b16 %v859, %v858
  %v953 = vpack.c.b16 %v861, %v860
  %v954 = vpack.c.b16 %v863, %v862
  %v955 = vpack.c.b16 %v865, %v864
  %v956 = vpack.c.b16 %v867, %v866
  %v957 = vpack.c.b16 %v869, %v868
  %v958 = vpack.c.b16 %v871, %v870
  %v959 = vpack.c.b16 %v873, %v872
  %v960 = vpack.c.b16 %v875, %v874
  %v961 = vpack.c.b16 %v877, %v876
  %v962 = vpack.c.b16 %v879, %v878
  %v963 = vpack.c.b16 %v881, %v880
  %v964 = vpack.c.b16 %v883, %v882
  %v965 = vpack.c.b16 %v885, %v884
  %v966 = vpack.c.b16 %v887, %v886
  %v967 = vpack.c.b16 %v889, %v888
  %v968 = vpack.c.b16 %v891, %v890
  %v969 = vpack.c.b16 %v893, %v892
  %v970 = vpack.c.b16 %v895, %v894
  %v971 = vpack.c.b16 %v897, %v896
  %v972 = vpack.c.b16 %v899, %v898
  %v973 = vpack.c.b16 %v901, %v900
  %1046 = vmatprep.subr.bf16.mxu0 0
  %1047 = vmatpush1.bf16.msra.mxu0 %v902
  %1048 = vmatprep.subr.bf16.mxu0 0
  %1049 = vmatpush1.bf16.msra.mxu0 %v903
  %1050 = vmatprep.subr.bf16.mxu0 0
  %1051 = vmatpush1.bf16.msra.mxu0 %v904
  %1052 = vmatprep.subr.bf16.mxu0 0
  %1053 = vmatpush1.bf16.msra.mxu0 %v905
  %1054 = vmatprep.subr.bf16.mxu0 0
  %1055 = vmatpush1.bf16.msra.mxu0 %v906
  %1056 = vmatprep.subr.bf16.mxu0 0
  %1057 = vmatpush1.bf16.msra.mxu0 %v907
  %1058 = vmatprep.subr.bf16.mxu0 0
  %1059 = vmatpush1.bf16.msra.mxu0 %v908
  %1060 = vmatprep.subr.bf16.mxu0 0
  %1061 = vmatpush1.bf16.msra.mxu0 %v909
  %1062 = vmatprep.subr.bf16.mxu0 0
  %1063 = vmatpush1.bf16.msra.mxu0 %v910
  %1064 = vmatprep.subr.bf16.mxu0 0
  %1065 = vmatpush1.bf16.msra.mxu0 %v911
  %1066 = vmatprep.subr.bf16.mxu0 0
  %1067 = vmatpush1.bf16.msra.mxu0 %v912
  %1068 = vmatprep.subr.bf16.mxu0 0
  %1069 = vmatpush1.bf16.msra.mxu0 %v913
  %1070 = vmatprep.subr.bf16.mxu0 0
  %1071 = vmatpush1.bf16.msra.mxu0 %v914
  %1072 = vmatprep.subr.bf16.mxu0 0
  %1073 = vmatpush1.bf16.msra.mxu0 %v915
  %1074 = vmatprep.subr.bf16.mxu0 0
  %1075 = vmatpush1.bf16.msra.mxu0 %v916
  %1076 = vmatprep.subr.bf16.mxu0 0
  %1077 = vmatpush1.bf16.msra.mxu0 %v917
  %1078 = vmatprep.mubr.bf16.mxu0 %v471
  %1079 = vmatmul.mubr.bf16.gmra.mrb[0].mxu0 %v470
  %v1080 = vpop.f32.mrb[0].mxu0
  %v1081 = vadd.f32 %v244, %v1080
  %v1082 = vpop.f32.mrb[0].mxu0
  %v1083 = vpop.f32.mrb[0].mxu0
  %v1084 = vadd.f32 %v244, %v1083
  %v1085 = vpop.f32.mrb[0].mxu0
  %1086 = vmatprep.mubr.bf16.mxu0 %v480
  %1087 = vmatmul.mubr.bf16.gmra.mrb[0].mxu0 %v479
  %v1088 = vpop.f32.mrb[0].mxu0
  %v1089 = vadd.f32 %v244, %v1088
  %v1090 = vpop.f32.mrb[0].mxu0
  %v1091 = vpop.f32.mrb[0].mxu0
  %v1092 = vadd.f32 %v244, %v1091
  %v1093 = vpop.f32.mrb[0].mxu0
  %1094 = vmatprep.mubr.bf16.mxu0 %v489
  %1095 = vmatmul.mubr.bf16.gmra.mrb[0].mxu0 %v488
  %v1096 = vpop.f32.mrb[0].mxu0
  %v1097 = vadd.f32 %v244, %v1096
  %v1098 = vpop.f32.mrb[0].mxu0
  %v1099 = vpop.f32.mrb[0].mxu0
  %v1100 = vadd.f32 %v244, %v1099
  %v1101 = vpop.f32.mrb[0].mxu0
  %1102 = vmatprep.mubr.bf16.mxu0 %v498
  %1103 = vmatmul.mubr.bf16.gmra.mrb[0].mxu0 %v497
  %v1104 = vpop.f32.mrb[0].mxu0
  %v1105 = vadd.f32 %v244, %v1104
  %v1106 = vpop.f32.mrb[0].mxu0
  %v1107 = vpop.f32.mrb[0].mxu0
  %v1108 = vadd.f32 %v244, %v1107
  %v1109 = vpop.f32.mrb[0].mxu0
  %1110 = vmatprep.mubr.bf16.mxu0 %v507
  %1111 = vmatmul.mubr.bf16.gmra.mrb[0].mxu0 %v506
  %v1112 = vpop.f32.mrb[0].mxu0
  %v1113 = vadd.f32 %v244, %v1112
  %v1114 = vpop.f32.mrb[0].mxu0
  %v1115 = vpop.f32.mrb[0].mxu0
  %v1116 = vadd.f32 %v244, %v1115
  %v1117 = vpop.f32.mrb[0].mxu0
  %1118 = vmatprep.mubr.bf16.mxu0 %v516
  %1119 = vmatmul.mubr.bf16.gmra.mrb[0].mxu0 %v515
  %v1120 = vpop.f32.mrb[0].mxu0
  %v1121 = vadd.f32 %v244, %v1120
  %v1122 = vpop.f32.mrb[0].mxu0
  %v1123 = vpop.f32.mrb[0].mxu0
  %v1124 = vadd.f32 %v244, %v1123
  %v1125 = vpop.f32.mrb[0].mxu0
  %1126 = vmatprep.mubr.bf16.mxu0 %v525
  %1127 = vmatmul.mubr.bf16.gmra.mrb[0].mxu0 %v524
  %v1128 = vpop.f32.mrb[0].mxu0
  %v1129 = vadd.f32 %v244, %v1128
  %v1130 = vpop.f32.mrb[0].mxu0
  %v1131 = vpop.f32.mrb[0].mxu0
  %v1132 = vadd.f32 %v244, %v1131
  %v1133 = vpop.f32.mrb[0].mxu0
  %1134 = vmatprep.mubr.bf16.mxu0 %v534
  %1135 = vmatmul.mubr.bf16.gmra.mrb[0].mxu0 %v533
  %v1136 = vpop.f32.mrb[0].mxu0
  %v1137 = vadd.f32 %v244, %v1136
  %v1138 = vpop.f32.mrb[0].mxu0
  %v1139 = vpop.f32.mrb[0].mxu0
  %v1140 = vadd.f32 %v244, %v1139
  %v1141 = vpop.f32.mrb[0].mxu0
  %1142 = vdwg.mxu0
  %1143 = vmatprep.subr.bf16.mxu0 0
  %1144 = vmatpush1.bf16.msra.mxu0 %v918
  %1145 = vmatprep.subr.bf16.mxu0 0
  %1146 = vmatpush1.bf16.msra.mxu0 %v919
  %1147 = vmatprep.subr.bf16.mxu0 0
  %1148 = vmatpush1.bf16.msra.mxu0 %v920
  %1149 = vmatprep.subr.bf16.mxu0 0
  %1150 = vmatpush1.bf16.msra.mxu0 %v921
  %1151 = vmatprep.subr.bf16.mxu0 0
  %1152 = vmatpush1.bf16.msra.mxu0 %v922
  %1153 = vmatprep.subr.bf16.mxu0 0
  %1154 = vmatpush1.bf16.msra.mxu0 %v923
  %1155 = vmatprep.subr.bf16.mxu0 0
  %1156 = vmatpush1.bf16.msra.mxu0 %v924
  %1157 = vmatprep.subr.bf16.mxu0 0
  %1158 = vmatpush1.bf16.msra.mxu0 %v925
  %1159 = vmatprep.subr.bf16.mxu0 0
  %1160 = vmatpush1.bf16.msra.mxu0 %v926
  %1161 = vmatprep.subr.bf16.mxu0 0
  %1162 = vmatpush1.bf16.msra.mxu0 %v927
  %1163 = vmatprep.subr.bf16.mxu0 0
  %1164 = vmatpush1.bf16.msra.mxu0 %v928
  %1165 = vmatprep.subr.bf16.mxu0 0
  %1166 = vmatpush1.bf16.msra.mxu0 %v929
  %1167 = vmatprep.subr.bf16.mxu0 0
  %1168 = vmatpush1.bf16.msra.mxu0 %v930
  %1169 = vmatprep.subr.bf16.mxu0 0
  %1170 = vmatpush1.bf16.msra.mxu0 %v931
  %1171 = vmatprep.subr.bf16.mxu0 0
  %1172 = vmatpush1.bf16.msra.mxu0 %v932
  %1173 = vmatprep.subr.bf16.mxu0 0
  %1174 = vmatpush1.bf16.msra.mxu0 %v933
  %1175 = vmatprep.mubr.bf16.mxu0 %v473
  %1176 = vmatmul.mubr.bf16.gmra.mrb[0].mxu0 %v472
  %v1177 = vpop.f32.mrb[0].mxu0
  %v1178 = vadd.f32 %v1081, %v1177
  %v1179 = vpop.f32.mrb[0].mxu0
  %v1180 = vpop.f32.mrb[0].mxu0
  %v1181 = vadd.f32 %v1084, %v1180
  %v1182 = vpop.f32.mrb[0].mxu0
  %1183 = vmatprep.mubr.bf16.mxu0 %v482
  %1184 = vmatmul.mubr.bf16.gmra.mrb[0].mxu0 %v481
  %v1185 = vpop.f32.mrb[0].mxu0
  %v1186 = vadd.f32 %v1089, %v1185
  %v1187 = vpop.f32.mrb[0].mxu0
  %v1188 = vpop.f32.mrb[0].mxu0
  %v1189 = vadd.f32 %v1092, %v1188
  %v1190 = vpop.f32.mrb[0].mxu0
  %1191 = vmatprep.mubr.bf16.mxu0 %v491
  %1192 = vmatmul.mubr.bf16.gmra.mrb[0].mxu0 %v490
  %v1193 = vpop.f32.mrb[0].mxu0
  %v1194 = vadd.f32 %v1097, %v1193
  %v1195 = vpop.f32.mrb[0].mxu0
  %v1196 = vpop.f32.mrb[0].mxu0
  %v1197 = vadd.f32 %v1100, %v1196
  %v1198 = vpop.f32.mrb[0].mxu0
  %1199 = vmatprep.mubr.bf16.mxu0 %v500
  %1200 = vmatmul.mubr.bf16.gmra.mrb[0].mxu0 %v499
  %v1201 = vpop.f32.mrb[0].mxu0
  %v1202 = vadd.f32 %v1105, %v1201
  %v1203 = vpop.f32.mrb[0].mxu0
  %v1204 = vpop.f32.mrb[0].mxu0
  %v1205 = vadd.f32 %v1108, %v1204
  %v1206 = vpop.f32.mrb[0].mxu0
  %1207 = vmatprep.mubr.bf16.mxu0 %v509
  %1208 = vmatmul.mubr.bf16.gmra.mrb[0].mxu0 %v508
  %v1209 = vpop.f32.mrb[0].mxu0
  %v1210 = vadd.f32 %v1113, %v1209
  %v1211 = vpop.f32.mrb[0].mxu0
  %v1212 = vpop.f32.mrb[0].mxu0
  %v1213 = vadd.f32 %v1116, %v1212
  %v1214 = vpop.f32.mrb[0].mxu0
  %1215 = vmatprep.mubr.bf16.mxu0 %v518
  %1216 = vmatmul.mubr.bf16.gmra.mrb[0].mxu0 %v517
  %v1217 = vpop.f32.mrb[0].mxu0
  %v1218 = vadd.f32 %v1121, %v1217
  %v1219 = vpop.f32.mrb[0].mxu0
  %v1220 = vpop.f32.mrb[0].mxu0
  %v1221 = vadd.f32 %v1124, %v1220
  %v1222 = vpop.f32.mrb[0].mxu0
  %1223 = vmatprep.mubr.bf16.mxu0 %v527
  %1224 = vmatmul.mubr.bf16.gmra.mrb[0].mxu0 %v526
  %v1225 = vpop.f32.mrb[0].mxu0
  %v1226 = vadd.f32 %v1129, %v1225
  %v1227 = vpop.f32.mrb[0].mxu0
  %v1228 = vpop.f32.mrb[0].mxu0
  %v1229 = vadd.f32 %v1132, %v1228
  %v1230 = vpop.f32.mrb[0].mxu0
  %1231 = vmatprep.mubr.bf16.mxu0 %v536
  %1232 = vmatmul.mubr.bf16.gmra.mrb[0].mxu0 %v535
  %v1233 = vpop.f32.mrb[0].mxu0
  %v1234 = vadd.f32 %v1137, %v1233
  %v1235 = vpop.f32.mrb[0].mxu0
  %v1236 = vpop.f32.mrb[0].mxu0
  %v1237 = vadd.f32 %v1140, %v1236
  %v1238 = vpop.f32.mrb[0].mxu0
  %1239 = vdwg.mxu0
  %1240 = vmatprep.subr.bf16.mxu0 0
  %1241 = vmatpush1.bf16.msra.mxu0 %v934
  %1242 = vmatprep.subr.bf16.mxu0 0
  %1243 = vmatpush1.bf16.msra.mxu0 %v935
  %1244 = vmatprep.subr.bf16.mxu0 0
  %1245 = vmatpush1.bf16.msra.mxu0 %v936
  %1246 = vmatprep.subr.bf16.mxu0 0
  %1247 = vmatpush1.bf16.msra.mxu0 %v937
  %1248 = vmatprep.subr.bf16.mxu0 0
  %1249 = vmatpush1.bf16.msra.mxu0 %v938
  %1250 = vmatprep.subr.bf16.mxu0 0
  %1251 = vmatpush1.bf16.msra.mxu0 %v939
  %1252 = vmatprep.subr.bf16.mxu0 0
  %1253 = vmatpush1.bf16.msra.mxu0 %v940
  %1254 = vmatprep.subr.bf16.mxu0 0
  %1255 = vmatpush1.bf16.msra.mxu0 %v941
  %1256 = vmatprep.subr.bf16.mxu0 0
  %1257 = vmatpush1.bf16.msra.mxu0 %v942
  %1258 = vmatprep.subr.bf16.mxu0 0
  %1259 = vmatpush1.bf16.msra.mxu0 %v943
  %1260 = vmatprep.subr.bf16.mxu0 0
  %1261 = vmatpush1.bf16.msra.mxu0 %v944
  %1262 = vmatprep.subr.bf16.mxu0 0
  %1263 = vmatpush1.bf16.msra.mxu0 %v945
  %1264 = vmatprep.subr.bf16.mxu0 0
  %1265 = vmatpush1.bf16.msra.mxu0 %v946
  %1266 = vmatprep.subr.bf16.mxu0 0
  %1267 = vmatpush1.bf16.msra.mxu0 %v947
  %1268 = vmatprep.subr.bf16.mxu0 0
  %1269 = vmatpush1.bf16.msra.mxu0 %v948
  %1270 = vmatprep.subr.bf16.mxu0 0
  %1271 = vmatpush1.bf16.msra.mxu0 %v949
  %1272 = vmatprep.mubr.bf16.mxu0 %v475
  %1273 = vmatmul.mubr.bf16.gmra.mrb[0].mxu0 %v474
  %v1274 = vpop.f32.mrb[0].mxu0
  %v1275 = vadd.f32 %v1178, %v1274
  %v1276 = vpop.f32.mrb[0].mxu0
  %v1277 = vpop.f32.mrb[0].mxu0
  %v1278 = vadd.f32 %v1181, %v1277
  %v1279 = vpop.f32.mrb[0].mxu0
  %1280 = vmatprep.mubr.bf16.mxu0 %v484
  %1281 = vmatmul.mubr.bf16.gmra.mrb[0].mxu0 %v483
  %v1282 = vpop.f32.mrb[0].mxu0
  %v1283 = vadd.f32 %v1186, %v1282
  %v1284 = vpop.f32.mrb[0].mxu0
  %v1285 = vpop.f32.mrb[0].mxu0
  %v1286 = vadd.f32 %v1189, %v1285
  %v1287 = vpop.f32.mrb[0].mxu0
  %1288 = vmatprep.mubr.bf16.mxu0 %v493
  %1289 = vmatmul.mubr.bf16.gmra.mrb[0].mxu0 %v492
  %v1290 = vpop.f32.mrb[0].mxu0
  %v1291 = vadd.f32 %v1194, %v1290
  %v1292 = vpop.f32.mrb[0].mxu0
  %v1293 = vpop.f32.mrb[0].mxu0
  %v1294 = vadd.f32 %v1197, %v1293
  %v1295 = vpop.f32.mrb[0].mxu0
  %1296 = vmatprep.mubr.bf16.mxu0 %v502
  %1297 = vmatmul.mubr.bf16.gmra.mrb[0].mxu0 %v501
  %v1298 = vpop.f32.mrb[0].mxu0
  %v1299 = vadd.f32 %v1202, %v1298
  %v1300 = vpop.f32.mrb[0].mxu0
  %v1301 = vpop.f32.mrb[0].mxu0
  %v1302 = vadd.f32 %v1205, %v1301
  %v1303 = vpop.f32.mrb[0].mxu0
  %1304 = vmatprep.mubr.bf16.mxu0 %v511
  %1305 = vmatmul.mubr.bf16.gmra.mrb[0].mxu0 %v510
  %v1306 = vpop.f32.mrb[0].mxu0
  %v1307 = vadd.f32 %v1210, %v1306
  %v1308 = vpop.f32.mrb[0].mxu0
  %v1309 = vpop.f32.mrb[0].mxu0
  %v1310 = vadd.f32 %v1213, %v1309
  %v1311 = vpop.f32.mrb[0].mxu0
  %1312 = vmatprep.mubr.bf16.mxu0 %v520
  %1313 = vmatmul.mubr.bf16.gmra.mrb[0].mxu0 %v519
  %v1314 = vpop.f32.mrb[0].mxu0
  %v1315 = vadd.f32 %v1218, %v1314
  %v1316 = vpop.f32.mrb[0].mxu0
  %v1317 = vpop.f32.mrb[0].mxu0
  %v1318 = vadd.f32 %v1221, %v1317
  %v1319 = vpop.f32.mrb[0].mxu0
  %1320 = vmatprep.mubr.bf16.mxu0 %v529
  %1321 = vmatmul.mubr.bf16.gmra.mrb[0].mxu0 %v528
  %v1322 = vpop.f32.mrb[0].mxu0
  %v1323 = vadd.f32 %v1226, %v1322
  %v1324 = vpop.f32.mrb[0].mxu0
  %v1325 = vpop.f32.mrb[0].mxu0
  %v1326 = vadd.f32 %v1229, %v1325
  %v1327 = vpop.f32.mrb[0].mxu0
  %1328 = vmatprep.mubr.bf16.mxu0 %v538
  %1329 = vmatmul.mubr.bf16.gmra.mrb[0].mxu0 %v537
  %v1330 = vpop.f32.mrb[0].mxu0
  %v1331 = vadd.f32 %v1234, %v1330
  %v1332 = vpop.f32.mrb[0].mxu0
  %v1333 = vpop.f32.mrb[0].mxu0
  %v1334 = vadd.f32 %v1237, %v1333
  %v1335 = vpop.f32.mrb[0].mxu0
  %1336 = vdwg.mxu0
  %1337 = vmatprep.subr.bf16.mxu0 0
  %1338 = vmatpush1.bf16.msra.mxu0 %v950
  %1339 = vmatprep.subr.bf16.mxu0 0
  %1340 = vmatpush1.bf16.msra.mxu0 %v951
  %1341 = vmatprep.subr.bf16.mxu0 0
  %1342 = vmatpush1.bf16.msra.mxu0 %v952
  %1343 = vmatprep.subr.bf16.mxu0 0
  %1344 = vmatpush1.bf16.msra.mxu0 %v953
  %1345 = vmatprep.subr.bf16.mxu0 0
  %1346 = vmatpush1.bf16.msra.mxu0 %v954
  %1347 = vmatprep.subr.bf16.mxu0 0
  %1348 = vmatpush1.bf16.msra.mxu0 %v955
  %1349 = vmatprep.subr.bf16.mxu0 0
  %1350 = vmatpush1.bf16.msra.mxu0 %v956
  %1351 = vmatprep.subr.bf16.mxu0 0
  %1352 = vmatpush1.bf16.msra.mxu0 %v957
  %1353 = vmatprep.subr.bf16.mxu0 0
  %1354 = vmatpush1.bf16.msra.mxu0 %v958
  %1355 = vmatprep.subr.bf16.mxu0 0
  %1356 = vmatpush1.bf16.msra.mxu0 %v959
  %1357 = vmatprep.subr.bf16.mxu0 0
  %1358 = vmatpush1.bf16.msra.mxu0 %v960
  %1359 = vmatprep.subr.bf16.mxu0 0
  %1360 = vmatpush1.bf16.msra.mxu0 %v961
  %1361 = vmatprep.subr.bf16.mxu0 0
  %1362 = vmatpush1.bf16.msra.mxu0 %v962
  %1363 = vmatprep.subr.bf16.mxu0 0
  %1364 = vmatpush1.bf16.msra.mxu0 %v963
  %1365 = vmatprep.subr.bf16.mxu0 0
  %1366 = vmatpush1.bf16.msra.mxu0 %v964
  %1367 = vmatprep.subr.bf16.mxu0 0
  %1368 = vmatpush1.bf16.msra.mxu0 %v965
  %1369 = vmatprep.mubr.bf16.mxu0 %v477
  %1370 = vmatmul.mubr.bf16.gmra.mrb[0].mxu0 %v476
  %v1371 = vpop.f32.mrb[0].mxu0
  %v1372 = vadd.f32 %v1275, %v1371
  %v1373 = vpop.f32.mrb[0].mxu0
  %v1374 = vpop.f32.mrb[0].mxu0
  %v1375 = vadd.f32 %v1278, %v1374
  %v1376 = vpop.f32.mrb[0].mxu0
  %1377 = vmatprep.mubr.bf16.mxu0 %v486
  %1378 = vmatmul.mubr.bf16.gmra.mrb[0].mxu0 %v485
  %v1379 = vpop.f32.mrb[0].mxu0
  %v1380 = vadd.f32 %v1283, %v1379
  %v1381 = vpop.f32.mrb[0].mxu0
  %v1382 = vpop.f32.mrb[0].mxu0
  %v1383 = vadd.f32 %v1286, %v1382
  %v1384 = vpop.f32.mrb[0].mxu0
  %1385 = vmatprep.mubr.bf16.mxu0 %v495
  %1386 = vmatmul.mubr.bf16.gmra.mrb[0].mxu0 %v494
  %v1387 = vpop.f32.mrb[0].mxu0
  %v1388 = vadd.f32 %v1291, %v1387
  %v1389 = vpop.f32.mrb[0].mxu0
  %v1390 = vpop.f32.mrb[0].mxu0
  %v1391 = vadd.f32 %v1294, %v1390
  %v1392 = vpop.f32.mrb[0].mxu0
  %1393 = vmatprep.mubr.bf16.mxu0 %v504
  %1394 = vmatmul.mubr.bf16.gmra.mrb[0].mxu0 %v503
  %v1395 = vpop.f32.mrb[0].mxu0
  %v1396 = vadd.f32 %v1299, %v1395
  %v1397 = vpop.f32.mrb[0].mxu0
  %v1398 = vpop.f32.mrb[0].mxu0
  %v1399 = vadd.f32 %v1302, %v1398
  %v1400 = vpop.f32.mrb[0].mxu0
  %1401 = vmatprep.mubr.bf16.mxu0 %v513
  %1402 = vmatmul.mubr.bf16.gmra.mrb[0].mxu0 %v512
  %v1403 = vpop.f32.mrb[0].mxu0
  %v1404 = vadd.f32 %v1307, %v1403
  %v1405 = vpop.f32.mrb[0].mxu0
  %v1406 = vpop.f32.mrb[0].mxu0
  %v1407 = vadd.f32 %v1310, %v1406
  %v1408 = vpop.f32.mrb[0].mxu0
  %1409 = vmatprep.mubr.bf16.mxu0 %v522
  %1410 = vmatmul.mubr.bf16.gmra.mrb[0].mxu0 %v521
  %v1411 = vpop.f32.mrb[0].mxu0
  %v1412 = vadd.f32 %v1315, %v1411
  %v1413 = vpop.f32.mrb[0].mxu0
  %v1414 = vpop.f32.mrb[0].mxu0
  %v1415 = vadd.f32 %v1318, %v1414
  %v1416 = vpop.f32.mrb[0].mxu0
  %1417 = vmatprep.mubr.bf16.mxu0 %v531
  %1418 = vmatmul.mubr.bf16.gmra.mrb[0].mxu0 %v530
  %v1419 = vpop.f32.mrb[0].mxu0
  %v1420 = vadd.f32 %v1323, %v1419
  %v1421 = vpop.f32.mrb[0].mxu0
  %v1422 = vpop.f32.mrb[0].mxu0
  %v1423 = vadd.f32 %v1326, %v1422
  %v1424 = vpop.f32.mrb[0].mxu0
  %1425 = vmatprep.mubr.bf16.mxu0 %v540
  %1426 = vmatmul.mubr.bf16.gmra.mrb[0].mxu0 %v539
  %v1427 = vpop.f32.mrb[0].mxu0
  %v1428 = vadd.f32 %v1331, %v1427
  %v1429 = vpop.f32.mrb[0].mxu0
  %v1430 = vpop.f32.mrb[0].mxu0
  %v1431 = vadd.f32 %v1334, %v1430
  %v1432 = vpop.f32.mrb[0].mxu0
  %1433 = vdwg.mxu0
  %1434 = vmatprep.subr.bf16.mxu0 0
  %1435 = vmatpush1.bf16.msra.mxu0 %v966
  %1436 = vmatprep.subr.bf16.mxu0 0
  %1437 = vmatpush1.bf16.msra.mxu0 %v967
  %1438 = vmatprep.subr.bf16.mxu0 0
  %1439 = vmatpush1.bf16.msra.mxu0 %v968
  %1440 = vmatprep.subr.bf16.mxu0 0
  %1441 = vmatpush1.bf16.msra.mxu0 %v969
  %1442 = vmatprep.subr.bf16.mxu0 0
  %1443 = vmatpush1.bf16.msra.mxu0 %v970
  %1444 = vmatprep.subr.bf16.mxu0 0
  %1445 = vmatpush1.bf16.msra.mxu0 %v971
  %1446 = vmatprep.subr.bf16.mxu0 0
  %1447 = vmatpush1.bf16.msra.mxu0 %v972
  %1448 = vmatprep.subr.bf16.mxu0 0
  %1449 = vmatpush1.bf16.msra.mxu0 %v973
  %1450 = vmatprep.subr.bf16.mxu0 0
  %1451 = vmatpush1.bf16.msra.mxu0 0
  %1452 = vmatprep.subr.bf16.mxu0 0
  %1453 = vmatpush1.bf16.msra.mxu0 0
  %1454 = vmatprep.subr.bf16.mxu0 0
  %1455 = vmatpush1.bf16.msra.mxu0 0
  %1456 = vmatprep.subr.bf16.mxu0 0
  %1457 = vmatpush1.bf16.msra.mxu0 0
  %1458 = vmatprep.subr.bf16.mxu0 0
  %1459 = vmatpush1.bf16.msra.mxu0 0
  %1460 = vmatprep.subr.bf16.mxu0 0
  %1461 = vmatpush1.bf16.msra.mxu0 0
  %1462 = vmatprep.subr.bf16.mxu0 0
  %1463 = vmatpush1.bf16.msra.mxu0 0
  %1464 = vmatprep.subr.bf16.mxu0 0
  %1465 = vmatpush1.bf16.msra.mxu0 0
  %1466 = vmatprep.mubr.bf16.mxu0 0
  %1467 = vmatmul.mubr.bf16.gmra.mrb[0].mxu0 %v478
  %v1468 = vpop.f32.mrb[0].mxu0
  %v1469 = vadd.f32 %v1372, %v1468
  %v1470 = vpop.f32.mrb[0].mxu0
  %v1471 = vpop.f32.mrb[0].mxu0
  %v1472 = vadd.f32 %v1375, %v1471
  %v1473 = vpop.f32.mrb[0].mxu0
  %1474 = vmatprep.mubr.bf16.mxu0 0
  %1475 = vmatmul.mubr.bf16.gmra.mrb[0].mxu0 %v487
  %v1476 = vpop.f32.mrb[0].mxu0
  %v1477 = vadd.f32 %v1380, %v1476
  %v1478 = vpop.f32.mrb[0].mxu0
  %v1479 = vpop.f32.mrb[0].mxu0
  %v1480 = vadd.f32 %v1383, %v1479
  %v1481 = vpop.f32.mrb[0].mxu0
  %1482 = vmatprep.mubr.bf16.mxu0 0
  %1483 = vmatmul.mubr.bf16.gmra.mrb[0].mxu0 %v496
  %v1484 = vpop.f32.mrb[0].mxu0
  %v1485 = vadd.f32 %v1388, %v1484
  %v1486 = vpop.f32.mrb[0].mxu0
  %v1487 = vpop.f32.mrb[0].mxu0
  %v1488 = vadd.f32 %v1391, %v1487
  %v1489 = vpop.f32.mrb[0].mxu0
  %1490 = vmatprep.mubr.bf16.mxu0 0
  %1491 = vmatmul.mubr.bf16.gmra.mrb[0].mxu0 %v505
  %v1492 = vpop.f32.mrb[0].mxu0
  %v1493 = vadd.f32 %v1396, %v1492
  %v1494 = vpop.f32.mrb[0].mxu0
  %v1495 = vpop.f32.mrb[0].mxu0
  %v1496 = vadd.f32 %v1399, %v1495
  %v1497 = vpop.f32.mrb[0].mxu0
  %1498 = vmatprep.mubr.bf16.mxu0 0
  %1499 = vmatmul.mubr.bf16.gmra.mrb[0].mxu0 %v514
  %v1500 = vpop.f32.mrb[0].mxu0
  %v1501 = vadd.f32 %v1404, %v1500
  %v1502 = vpop.f32.mrb[0].mxu0
  %v1503 = vpop.f32.mrb[0].mxu0
  %v1504 = vadd.f32 %v1407, %v1503
  %v1505 = vpop.f32.mrb[0].mxu0
  %1506 = vmatprep.mubr.bf16.mxu0 0
  %1507 = vmatmul.mubr.bf16.gmra.mrb[0].mxu0 %v523
  %v1508 = vpop.f32.mrb[0].mxu0
  %v1509 = vadd.f32 %v1412, %v1508
  %v1510 = vpop.f32.mrb[0].mxu0
  %v1511 = vpop.f32.mrb[0].mxu0
  %v1512 = vadd.f32 %v1415, %v1511
  %v1513 = vpop.f32.mrb[0].mxu0
  %1514 = vmatprep.mubr.bf16.mxu0 0
  %1515 = vmatmul.mubr.bf16.gmra.mrb[0].mxu0 %v532
  %v1516 = vpop.f32.mrb[0].mxu0
  %v1517 = vadd.f32 %v1420, %v1516
  %v1518 = vpop.f32.mrb[0].mxu0
  %v1519 = vpop.f32.mrb[0].mxu0
  %v1520 = vadd.f32 %v1423, %v1519
  %v1521 = vpop.f32.mrb[0].mxu0
  %1522 = vmatprep.mubr.bf16.mxu0 0
  %1523 = vmatmul.mubr.bf16.gmra.mrb[0].mxu0 %v541
  %v1524 = vpop.f32.mrb[0].mxu0
  %v1525 = vadd.f32 %v1428, %v1524
  %v1526 = vpop.f32.mrb[0].mxu0
  %v1527 = vpop.f32.mrb[0].mxu0
  %v1528 = vadd.f32 %v1431, %v1527
  %v1529 = vpop.f32.mrb[0].mxu0
  %1530 = vdwg.mxu0
  %v1531 = vmax.f32 %v1469, 0.0
  %v1532 = vmax.f32 %v1472, 0.0
  %v1533 = vmax.f32 %v1477, 0.0
  %v1534 = vmax.f32 %v1480, 0.0
  %v1535 = vmax.f32 %v1485, 0.0
  %v1536 = vmax.f32 %v1488, 0.0
  %v1537 = vmax.f32 %v1493, 0.0
  %v1538 = vmax.f32 %v1496, 0.0
  %v1539 = vmax.f32 %v1501, 0.0
  %v1540 = vmax.f32 %v1504, 0.0
  %v1541 = vmax.f32 %v1509, 0.0
  %v1542 = vmax.f32 %v1512, 0.0
  %v1543 = vmax.f32 %v1517, 0.0
  %v1544 = vmax.f32 %v1520, 0.0
  %v1545 = vmax.f32 %v1525, 0.0
  %v1546 = vmax.f32 %v1528, 0.0
  %v1547 = vpack.c.bf16 %v1532, %v1531
  %v1548 = vpack.c.bf16 %v1534, %v1533
  %v1549 = vpack.c.bf16 %v1536, %v1535
  %v1550 = vpack.c.bf16 %v1538, %v1537
  %v1551 = vpack.c.bf16 %v1540, %v1539
  %v1552 = vpack.c.bf16 %v1542, %v1541
  %v1553 = vpack.c.bf16 %v1544, %v1543
  %v1554 = vpack.c.bf16 %v1546, %v1545
  %v1563 = vunpack.c.l.b16 %v1547
  %v1564 = vunpack.c.h.b16 %v1547
  %v1565 = vunpack.c.l.b16 %v1548
  %v1566 = vunpack.c.h.b16 %v1548
  %v1567 = vunpack.c.l.b16 %v1549
  %v1568 = vunpack.c.h.b16 %v1549
  %v1569 = vunpack.c.l.b16 %v1550
  %v1570 = vunpack.c.h.b16 %v1550
  %v1571 = vunpack.c.l.b16 %v1551
  %v1572 = vunpack.c.h.b16 %v1551
  %v1573 = vunpack.c.l.b16 %v1552
  %v1574 = vunpack.c.h.b16 %v1552
  %v1575 = vunpack.c.l.b16 %v1553
  %v1576 = vunpack.c.h.b16 %v1553
  %v1577 = vunpack.c.l.b16 %v1554
  %v1578 = vunpack.c.h.b16 %v1554
  %v1579 = vpack.c.b16 %v1563, %v1563
  %v1580 = vpack.c.b16 %v1564, %v1564
  %v1581 = vpack.c.b16 %v1565, %v1565
  %v1582 = vpack.c.b16 %v1566, %v1566
  %v1583 = vpack.c.b16 %v1567, %v1567
  %v1584 = vpack.c.b16 %v1568, %v1568
  %v1585 = vpack.c.b16 %v1569, %v1569
  %v1586 = vpack.c.b16 %v1570, %v1570
  %v1587 = vpack.c.b16 %v1571, %v1571
  %v1588 = vpack.c.b16 %v1572, %v1572
  %v1589 = vpack.c.b16 %v1573, %v1573
  %v1590 = vpack.c.b16 %v1574, %v1574
  %v1591 = vpack.c.b16 %v1575, %v1575
  %v1592 = vpack.c.b16 %v1576, %v1576
  %v1593 = vpack.c.b16 %v1577, %v1577
  %v1594 = vpack.c.b16 %v1578, %v1578
  %1611 = vst [vmem:[%s3] sm:$0xf] %v1579
  %1612 = vst [vmem:[%s3 + $0x4] sm:$0xf] %v1580
  %1613 = vst [vmem:[%s3 + $0x8] sm:$0xf] %v1581
  %1614 = vst [vmem:[%s3 + $0xc] sm:$0xf] %v1582
  %1615 = vst [vmem:[%s3 + $0x10] sm:$0xf] %v1583
  %1616 = vst [vmem:[%s3 + $0x14] sm:$0xf] %v1584
  %1617 = vst [vmem:[%s3 + $0x18] sm:$0xf] %v1585
  %1618 = vst [vmem:[%s3 + $0x1c] sm:$0xf] %v1586
  %1619 = vst [vmem:[%s3 + $0x20] sm:$0xf] %v1587
  %1620 = vst [vmem:[%s3 + $0x24] sm:$0xf] %v1588
  %1621 = vst [vmem:[%s3 + $0x28] sm:$0xf] %v1589
  %1622 = vst [vmem:[%s3 + $0x2c] sm:$0xf] %v1590
  %1623 = vst [vmem:[%s3 + $0x30] sm:$0xf] %v1591
  %1624 = vst [vmem:[%s3 + $0x34] sm:$0xf] %v1592
  %1625 = vst [vmem:[%s3 + $0x38] sm:$0xf] %v1593
  %1626 = vst [vmem:[%s3 + $0x3c] sm:$0xf] %v1594
  // Predicated region
  $region14: #{resnet_common_branch.15} parent=0 // pred_check
    _
  $region15: #{resnet_common_branch.15} parent=0 // pred_check_branch
    %1628 = sbr.rel (0) target = $region17
  $region16: #{resnet_common_branch.15} parent=0 // pred_region
    _
  $region17: #{resnet_common_branch.15} parent=0 // pred_fallthru
    _
  // Predicated region
  $region18: #{resnet_common_branch.15} parent=0 // pred_check
    _
  $region19: #{resnet_common_branch.15} parent=0 // pred_check_branch
    %1630 = sbr.rel (0) target = $region21
  $region20: #{resnet_common_branch.15} parent=0 // pred_region
    _
  $region21: #{resnet_common_branch.15} parent=0 // pred_fallthru
    _

// kernel: resnet_common_branch.20
$region0: #{resnet_common_branch.20}
  #allocation0 [shape = 'u32[]', space=smem, size = 0x4, offset = 0x4, fixed_abs, tag = 'smem constant byte address 0x4 - core index']
  #allocation1 [shape = 'u32[144,128]{1,0:T(1,128)}', space=vmem, size = 0x12000, scoped, tag = 'internal scratch']
  %s0 = inlined_call_operand.vmem [shape: bf16[32,128], index: 0, kind: input, shape index: {}]
  %s1 = inlined_call_operand.vmem [shape: bf16[128,512], index: 1, kind: input, shape index: {}]
  %s2 = inlined_call_operand.vmem [shape: bf16[32,256], index: 2, kind: input, shape index: {}]
  %s3 = inlined_call_operand.vmem [shape: bf16[256,512], index: 3, kind: input, shape index: {}]
  %s4 = inlined_call_operand.vmem [shape: f32[1,512], index: 4, kind: input, shape index: {}]
  %s5 = inlined_call_operand.vmem [shape: bf16[32,512], index: 5, kind: output, shape index: {}]
  %s6 = sld [smem:[#allocation0]]
  $region30: #{resnet_common_branch.20} parent=0
    _
  %s8 = ssub.s32 1, %s6
  %s9 = scalar_select 0, %s8, %s6
  // Predicated region
  $region2: #{resnet_common_branch.20} parent=0 // pred_check
    _
  $region3: #{resnet_common_branch.20} parent=0 // pred_check_branch
    %11 = sbr.rel (0) target = $region5
  $region4: #{resnet_common_branch.20} parent=0 // pred_region
    _
  $region5: #{resnet_common_branch.20} parent=0 // pred_fallthru
    _
  // Predicated region
  $region6: #{resnet_common_branch.20} parent=0 // pred_check
    _
  $region7: #{resnet_common_branch.20} parent=0 // pred_check_branch
    %13 = sbr.rel (0) target = $region9
  $region8: #{resnet_common_branch.20} parent=0 // pred_region
    _
  $region9: #{resnet_common_branch.20} parent=0 // pred_fallthru
    _
  // Predicated region
  $region10: #{resnet_common_branch.20} parent=0 // pred_check
    _
  $region11: #{resnet_common_branch.20} parent=0 // pred_check_branch
    %15 = sbr.rel (0) target = $region13
  $region12: #{resnet_common_branch.20} parent=0 // pred_region
    _
  $region13: #{resnet_common_branch.20} parent=0 // pred_fallthru
    _
  // Predicated region
  $region14: #{resnet_common_branch.20} parent=0 // pred_check
    _
  $region15: #{resnet_common_branch.20} parent=0 // pred_check_branch
    %17 = sbr.rel (0) target = $region17
  $region16: #{resnet_common_branch.20} parent=0 // pred_region
    _
  $region17: #{resnet_common_branch.20} parent=0 // pred_fallthru
    _
  // Predicated region
  $region18: #{resnet_common_branch.20} parent=0 // pred_check
    _
  $region19: #{resnet_common_branch.20} parent=0 // pred_check_branch
    %19 = sbr.rel (0) target = $region21
  $region20: #{resnet_common_branch.20} parent=0 // pred_region
    _
  $region21: #{resnet_common_branch.20} parent=0 // pred_fallthru
    _
  %v21 = vld [vmem:[%s0] sm:$0xf]
  %v22 = vld [vmem:[%s0 + $0x4] sm:$0xf]
  %v23 = vld [vmem:[%s0 + $0x8] sm:$0xf]
  %v24 = vld [vmem:[%s0 + $0xc] sm:$0xf]
  %v25 = vld [vmem:[%s1] sm:$0xff]
  %v26 = vld [vmem:[%s1 + $0x8] sm:$0xff]
  %v27 = vld [vmem:[%s1 + $0x10] sm:$0xff]
  %v28 = vld [vmem:[%s1 + $0x18] sm:$0xff]
  %v29 = vld [vmem:[%s1 + $0x20] sm:$0xff]
  %v30 = vld [vmem:[%s1 + $0x28] sm:$0xff]
  %v31 = vld [vmem:[%s1 + $0x30] sm:$0xff]
  %v32 = vld [vmem:[%s1 + $0x38] sm:$0xff]
  %v33 = vld [vmem:[%s1 + $0x40] sm:$0xff]
  %v34 = vld [vmem:[%s1 + $0x48] sm:$0xff]
  %v35 = vld [vmem:[%s1 + $0x50] sm:$0xff]
  %v36 = vld [vmem:[%s1 + $0x58] sm:$0xff]
  %v37 = vld [vmem:[%s1 + $0x60] sm:$0xff]
  %v38 = vld [vmem:[%s1 + $0x68] sm:$0xff]
  %v39 = vld [vmem:[%s1 + $0x70] sm:$0xff]
  %v40 = vld [vmem:[%s1 + $0x78] sm:$0xff]
  %v41 = vld [vmem:[%s1 + $0x80] sm:$0xff]
  %v42 = vld [vmem:[%s1 + $0x88] sm:$0xff]
  %v43 = vld [vmem:[%s1 + $0x90] sm:$0xff]
  %v44 = vld [vmem:[%s1 + $0x98] sm:$0xff]
  %v45 = vld [vmem:[%s1 + $0xa0] sm:$0xff]
  %v46 = vld [vmem:[%s1 + $0xa8] sm:$0xff]
  %v47 = vld [vmem:[%s1 + $0xb0] sm:$0xff]
  %v48 = vld [vmem:[%s1 + $0xb8] sm:$0xff]
  %v49 = vld [vmem:[%s1 + $0xc0] sm:$0xff]
  %v50 = vld [vmem:[%s1 + $0xc8] sm:$0xff]
  %v51 = vld [vmem:[%s1 + $0xd0] sm:$0xff]
  %v52 = vld [vmem:[%s1 + $0xd8] sm:$0xff]
  %v53 = vld [vmem:[%s1 + $0xe0] sm:$0xff]
  %v54 = vld [vmem:[%s1 + $0xe8] sm:$0xff]
  %v55 = vld [vmem:[%s1 + $0xf0] sm:$0xff]
  %v56 = vld [vmem:[%s1 + $0xf8] sm:$0xff]
  %v57 = vld [vmem:[%s2] sm:$0xff]
  %v58 = vld [vmem:[%s2 + $0x8] sm:$0xff]
  %v59 = vld [vmem:[%s2 + $0x10] sm:$0xff]
  %v60 = vld [vmem:[%s2 + $0x18] sm:$0xff]
  %v61 = vld [vmem:[%s3] sm:$0xff]
  %v62 = vld [vmem:[%s3 + $0x8] sm:$0xff]
  %v63 = vld [vmem:[%s3 + $0x10] sm:$0xff]
  %v64 = vld [vmem:[%s3 + $0x18] sm:$0xff]
  %v65 = vld [vmem:[%s3 + $0x20] sm:$0xff]
  %v66 = vld [vmem:[%s3 + $0x28] sm:$0xff]
  %v67 = vld [vmem:[%s3 + $0x30] sm:$0xff]
  %v68 = vld [vmem:[%s3 + $0x38] sm:$0xff]
  %v69 = vld [vmem:[%s3 + $0x40] sm:$0xff]
  %v70 = vld [vmem:[%s3 + $0x48] sm:$0xff]
  %v71 = vld [vmem:[%s3 + $0x50] sm:$0xff]
  %v72 = vld [vmem:[%s3 + $0x58] sm:$0xff]
  %v73 = vld [vmem:[%s3 + $0x60] sm:$0xff]
  %v74 = vld [vmem:[%s3 + $0x68] sm:$0xff]
  %v75 = vld [vmem:[%s3 + $0x70] sm:$0xff]
  %v76 = vld [vmem:[%s3 + $0x78] sm:$0xff]
  %v77 = vld [vmem:[%s3 + $0x80] sm:$0xff]
  %v78 = vld [vmem:[%s3 + $0x88] sm:$0xff]
  %v79 = vld [vmem:[%s3 + $0x90] sm:$0xff]
  %v80 = vld [vmem:[%s3 + $0x98] sm:$0xff]
  %v81 = vld [vmem:[%s3 + $0xa0] sm:$0xff]
  %v82 = vld [vmem:[%s3 + $0xa8] sm:$0xff]
  %v83 = vld [vmem:[%s3 + $0xb0] sm:$0xff]
  %v84 = vld [vmem:[%s3 + $0xb8] sm:$0xff]
  %v85 = vld [vmem:[%s3 + $0xc0] sm:$0xff]
  %v86 = vld [vmem:[%s3 + $0xc8] sm:$0xff]
  %v87 = vld [vmem:[%s3 + $0xd0] sm:$0xff]
  %v88 = vld [vmem:[%s3 + $0xd8] sm:$0xff]
  %v89 = vld [vmem:[%s3 + $0xe0] sm:$0xff]
  %v90 = vld [vmem:[%s3 + $0xe8] sm:$0xff]
  %v91 = vld [vmem:[%s3 + $0xf0] sm:$0xff]
  %v92 = vld [vmem:[%s3 + $0xf8] sm:$0xff]
  %v93 = vld [vmem:[%s3 + $0x100] sm:$0xff]
  %v94 = vld [vmem:[%s3 + $0x108] sm:$0xff]
  %v95 = vld [vmem:[%s3 + $0x110] sm:$0xff]
  %v96 = vld [vmem:[%s3 + $0x118] sm:$0xff]
  %v97 = vld [vmem:[%s3 + $0x120] sm:$0xff]
  %v98 = vld [vmem:[%s3 + $0x128] sm:$0xff]
  %v99 = vld [vmem:[%s3 + $0x130] sm:$0xff]
  %v100 = vld [vmem:[%s3 + $0x138] sm:$0xff]
  %v101 = vld [vmem:[%s3 + $0x140] sm:$0xff]
  %v102 = vld [vmem:[%s3 + $0x148] sm:$0xff]
  %v103 = vld [vmem:[%s3 + $0x150] sm:$0xff]
  %v104 = vld [vmem:[%s3 + $0x158] sm:$0xff]
  %v105 = vld [vmem:[%s3 + $0x160] sm:$0xff]
  %v106 = vld [vmem:[%s3 + $0x168] sm:$0xff]
  %v107 = vld [vmem:[%s3 + $0x170] sm:$0xff]
  %v108 = vld [vmem:[%s3 + $0x178] sm:$0xff]
  %v109 = vld [vmem:[%s3 + $0x180] sm:$0xff]
  %v110 = vld [vmem:[%s3 + $0x188] sm:$0xff]
  %v111 = vld [vmem:[%s3 + $0x190] sm:$0xff]
  %v112 = vld [vmem:[%s3 + $0x198] sm:$0xff]
  %v113 = vld [vmem:[%s3 + $0x1a0] sm:$0xff]
  %v114 = vld [vmem:[%s3 + $0x1a8] sm:$0xff]
  %v115 = vld [vmem:[%s3 + $0x1b0] sm:$0xff]
  %v116 = vld [vmem:[%s3 + $0x1b8] sm:$0xff]
  %v117 = vld [vmem:[%s3 + $0x1c0] sm:$0xff]
  %v118 = vld [vmem:[%s3 + $0x1c8] sm:$0xff]
  %v119 = vld [vmem:[%s3 + $0x1d0] sm:$0xff]
  %v120 = vld [vmem:[%s3 + $0x1d8] sm:$0xff]
  %v121 = vld [vmem:[%s3 + $0x1e0] sm:$0xff]
  %v122 = vld [vmem:[%s3 + $0x1e8] sm:$0xff]
  %v123 = vld [vmem:[%s3 + $0x1f0] sm:$0xff]
  %v124 = vld [vmem:[%s3 + $0x1f8] sm:$0xff]
  %v129 = vunpack.c.l.b16 %v57
  %v130 = vunpack.c.h.b16 %v57
  %v131 = vunpack.c.l.b16 %v58
  %v132 = vunpack.c.h.b16 %v58
  %v133 = vunpack.c.l.b16 %v59
  %v134 = vunpack.c.h.b16 %v59
  %v135 = vunpack.c.l.b16 %v60
  %v136 = vunpack.c.h.b16 %v60
  %v137 = vpack.c.b16 %v131, %v129
  %v138 = vpack.c.b16 %v132, %v130
  %v139 = vpack.c.b16 %v135, %v133
  %v140 = vpack.c.b16 %v136, %v134
  %v209 = vunpack.c.l.b16 %v61
  %v210 = vunpack.c.h.b16 %v61
  %v211 = vunpack.c.l.b16 %v62
  %v212 = vunpack.c.h.b16 %v62
  %v213 = vunpack.c.l.b16 %v63
  %v214 = vunpack.c.h.b16 %v63
  %v215 = vunpack.c.l.b16 %v64
  %v216 = vunpack.c.h.b16 %v64
  %v217 = vunpack.c.l.b16 %v65
  %v218 = vunpack.c.h.b16 %v65
  %v219 = vunpack.c.l.b16 %v66
  %v220 = vunpack.c.h.b16 %v66
  %v221 = vunpack.c.l.b16 %v67
  %v222 = vunpack.c.h.b16 %v67
  %v223 = vunpack.c.l.b16 %v68
  %v224 = vunpack.c.h.b16 %v68
  %v225 = vunpack.c.l.b16 %v69
  %v226 = vunpack.c.h.b16 %v69
  %v227 = vunpack.c.l.b16 %v70
  %v228 = vunpack.c.h.b16 %v70
  %v229 = vunpack.c.l.b16 %v71
  %v230 = vunpack.c.h.b16 %v71
  %v231 = vunpack.c.l.b16 %v72
  %v232 = vunpack.c.h.b16 %v72
  %v233 = vunpack.c.l.b16 %v73
  %v234 = vunpack.c.h.b16 %v73
  %v235 = vunpack.c.l.b16 %v74
  %v236 = vunpack.c.h.b16 %v74
  %v237 = vunpack.c.l.b16 %v75
  %v238 = vunpack.c.h.b16 %v75
  %v239 = vunpack.c.l.b16 %v76
  %v240 = vunpack.c.h.b16 %v76
  %v241 = vunpack.c.l.b16 %v77
  %v242 = vunpack.c.h.b16 %v77
  %v243 = vunpack.c.l.b16 %v78
  %v244 = vunpack.c.h.b16 %v78
  %v245 = vunpack.c.l.b16 %v79
  %v246 = vunpack.c.h.b16 %v79
  %v247 = vunpack.c.l.b16 %v80
  %v248 = vunpack.c.h.b16 %v80
  %v249 = vunpack.c.l.b16 %v81
  %v250 = vunpack.c.h.b16 %v81
  %v251 = vunpack.c.l.b16 %v82
  %v252 = vunpack.c.h.b16 %v82
  %v253 = vunpack.c.l.b16 %v83
  %v254 = vunpack.c.h.b16 %v83
  %v255 = vunpack.c.l.b16 %v84
  %v256 = vunpack.c.h.b16 %v84
  %v257 = vunpack.c.l.b16 %v85
  %v258 = vunpack.c.h.b16 %v85
  %v259 = vunpack.c.l.b16 %v86
  %v260 = vunpack.c.h.b16 %v86
  %v261 = vunpack.c.l.b16 %v87
  %v262 = vunpack.c.h.b16 %v87
  %v263 = vunpack.c.l.b16 %v88
  %v264 = vunpack.c.h.b16 %v88
  %v265 = vunpack.c.l.b16 %v89
  %v266 = vunpack.c.h.b16 %v89
  %v267 = vunpack.c.l.b16 %v90
  %v268 = vunpack.c.h.b16 %v90
  %v269 = vunpack.c.l.b16 %v91
  %v270 = vunpack.c.h.b16 %v91
  %v271 = vunpack.c.l.b16 %v92
  %v272 = vunpack.c.h.b16 %v92
  %v273 = vunpack.c.l.b16 %v93
  %v274 = vunpack.c.h.b16 %v93
  %v275 = vunpack.c.l.b16 %v94
  %v276 = vunpack.c.h.b16 %v94
  %v277 = vunpack.c.l.b16 %v95
  %v278 = vunpack.c.h.b16 %v95
  %v279 = vunpack.c.l.b16 %v96
  %v280 = vunpack.c.h.b16 %v96
  %v281 = vunpack.c.l.b16 %v97
  %v282 = vunpack.c.h.b16 %v97
  %v283 = vunpack.c.l.b16 %v98
  %v284 = vunpack.c.h.b16 %v98
  %v285 = vunpack.c.l.b16 %v99
  %v286 = vunpack.c.h.b16 %v99
  %v287 = vunpack.c.l.b16 %v100
  %v288 = vunpack.c.h.b16 %v100
  %v289 = vunpack.c.l.b16 %v101
  %v290 = vunpack.c.h.b16 %v101
  %v291 = vunpack.c.l.b16 %v102
  %v292 = vunpack.c.h.b16 %v102
  %v293 = vunpack.c.l.b16 %v103
  %v294 = vunpack.c.h.b16 %v103
  %v295 = vunpack.c.l.b16 %v104
  %v296 = vunpack.c.h.b16 %v104
  %v297 = vunpack.c.l.b16 %v105
  %v298 = vunpack.c.h.b16 %v105
  %v299 = vunpack.c.l.b16 %v106
  %v300 = vunpack.c.h.b16 %v106
  %v301 = vunpack.c.l.b16 %v107
  %v302 = vunpack.c.h.b16 %v107
  %v303 = vunpack.c.l.b16 %v108
  %v304 = vunpack.c.h.b16 %v108
  %v305 = vunpack.c.l.b16 %v109
  %v306 = vunpack.c.h.b16 %v109
  %v307 = vunpack.c.l.b16 %v110
  %v308 = vunpack.c.h.b16 %v110
  %v309 = vunpack.c.l.b16 %v111
  %v310 = vunpack.c.h.b16 %v111
  %v311 = vunpack.c.l.b16 %v112
  %v312 = vunpack.c.h.b16 %v112
  %v313 = vunpack.c.l.b16 %v113
  %v314 = vunpack.c.h.b16 %v113
  %v315 = vunpack.c.l.b16 %v114
  %v316 = vunpack.c.h.b16 %v114
  %v317 = vunpack.c.l.b16 %v115
  %v318 = vunpack.c.h.b16 %v115
  %v319 = vunpack.c.l.b16 %v116
  %v320 = vunpack.c.h.b16 %v116
  %v321 = vunpack.c.l.b16 %v117
  %v322 = vunpack.c.h.b16 %v117
  %v323 = vunpack.c.l.b16 %v118
  %v324 = vunpack.c.h.b16 %v118
  %v325 = vunpack.c.l.b16 %v119
  %v326 = vunpack.c.h.b16 %v119
  %v327 = vunpack.c.l.b16 %v120
  %v328 = vunpack.c.h.b16 %v120
  %v329 = vunpack.c.l.b16 %v121
  %v330 = vunpack.c.h.b16 %v121
  %v331 = vunpack.c.l.b16 %v122
  %v332 = vunpack.c.h.b16 %v122
  %v333 = vunpack.c.l.b16 %v123
  %v334 = vunpack.c.h.b16 %v123
  %v335 = vunpack.c.l.b16 %v124
  %v336 = vunpack.c.h.b16 %v124
  %v337 = vpack.c.b16 %v213, %v209
  %v338 = vpack.c.b16 %v214, %v210
  %v339 = vpack.c.b16 %v215, %v211
  %v340 = vpack.c.b16 %v216, %v212
  %v341 = vpack.c.b16 %v221, %v217
  %v342 = vpack.c.b16 %v222, %v218
  %v343 = vpack.c.b16 %v223, %v219
  %v344 = vpack.c.b16 %v224, %v220
  %v345 = vpack.c.b16 %v229, %v225
  %v346 = vpack.c.b16 %v230, %v226
  %v347 = vpack.c.b16 %v231, %v227
  %v348 = vpack.c.b16 %v232, %v228
  %v349 = vpack.c.b16 %v237, %v233
  %v350 = vpack.c.b16 %v238, %v234
  %v351 = vpack.c.b16 %v239, %v235
  %v352 = vpack.c.b16 %v240, %v236
  %v353 = vpack.c.b16 %v245, %v241
  %v354 = vpack.c.b16 %v246, %v242
  %v355 = vpack.c.b16 %v247, %v243
  %v356 = vpack.c.b16 %v248, %v244
  %v357 = vpack.c.b16 %v253, %v249
  %v358 = vpack.c.b16 %v254, %v250
  %v359 = vpack.c.b16 %v255, %v251
  %v360 = vpack.c.b16 %v256, %v252
  %v361 = vpack.c.b16 %v261, %v257
  %v362 = vpack.c.b16 %v262, %v258
  %v363 = vpack.c.b16 %v263, %v259
  %v364 = vpack.c.b16 %v264, %v260
  %v365 = vpack.c.b16 %v269, %v265
  %v366 = vpack.c.b16 %v270, %v266
  %v367 = vpack.c.b16 %v271, %v267
  %v368 = vpack.c.b16 %v272, %v268
  %v369 = vpack.c.b16 %v277, %v273
  %v370 = vpack.c.b16 %v278, %v274
  %v371 = vpack.c.b16 %v279, %v275
  %v372 = vpack.c.b16 %v280, %v276
  %v373 = vpack.c.b16 %v285, %v281
  %v374 = vpack.c.b16 %v286, %v282
  %v375 = vpack.c.b16 %v287, %v283
  %v376 = vpack.c.b16 %v288, %v284
  %v377 = vpack.c.b16 %v293, %v289
  %v378 = vpack.c.b16 %v294, %v290
  %v379 = vpack.c.b16 %v295, %v291
  %v380 = vpack.c.b16 %v296, %v292
  %v381 = vpack.c.b16 %v301, %v297
  %v382 = vpack.c.b16 %v302, %v298
  %v383 = vpack.c.b16 %v303, %v299
  %v384 = vpack.c.b16 %v304, %v300
  %v385 = vpack.c.b16 %v309, %v305
  %v386 = vpack.c.b16 %v310, %v306
  %v387 = vpack.c.b16 %v311, %v307
  %v388 = vpack.c.b16 %v312, %v308
  %v389 = vpack.c.b16 %v317, %v313
  %v390 = vpack.c.b16 %v318, %v314
  %v391 = vpack.c.b16 %v319, %v315
  %v392 = vpack.c.b16 %v320, %v316
  %v393 = vpack.c.b16 %v325, %v321
  %v394 = vpack.c.b16 %v326, %v322
  %v395 = vpack.c.b16 %v327, %v323
  %v396 = vpack.c.b16 %v328, %v324
  %v397 = vpack.c.b16 %v333, %v329
  %v398 = vpack.c.b16 %v334, %v330
  %v399 = vpack.c.b16 %v335, %v331
  %v400 = vpack.c.b16 %v336, %v332
  %465 = vmatprep.subr.bf16.mxu0 %v338
  %466 = vmatpush1.bf16.msra.mxu0 %v337
  %467 = vmatprep.subr.bf16.mxu0 %v342
  %468 = vmatpush1.bf16.msra.mxu0 %v341
  %469 = vmatprep.subr.bf16.mxu0 %v346
  %470 = vmatpush1.bf16.msra.mxu0 %v345
  %471 = vmatprep.subr.bf16.mxu0 %v350
  %472 = vmatpush1.bf16.msra.mxu0 %v349
  %473 = vmatprep.subr.bf16.mxu0 %v354
  %474 = vmatpush1.bf16.msra.mxu0 %v353
  %475 = vmatprep.subr.bf16.mxu0 %v358
  %476 = vmatpush1.bf16.msra.mxu0 %v357
  %477 = vmatprep.subr.bf16.mxu0 %v362
  %478 = vmatpush1.bf16.msra.mxu0 %v361
  %479 = vmatprep.subr.bf16.mxu0 %v366
  %480 = vmatpush1.bf16.msra.mxu0 %v365
  %481 = vmatprep.subr.bf16.mxu0 %v370
  %482 = vmatpush1.bf16.msra.mxu0 %v369
  %483 = vmatprep.subr.bf16.mxu0 %v374
  %484 = vmatpush1.bf16.msra.mxu0 %v373
  %485 = vmatprep.subr.bf16.mxu0 %v378
  %486 = vmatpush1.bf16.msra.mxu0 %v377
  %487 = vmatprep.subr.bf16.mxu0 %v382
  %488 = vmatpush1.bf16.msra.mxu0 %v381
  %489 = vmatprep.subr.bf16.mxu0 %v386
  %490 = vmatpush1.bf16.msra.mxu0 %v385
  %491 = vmatprep.subr.bf16.mxu0 %v390
  %492 = vmatpush1.bf16.msra.mxu0 %v389
  %493 = vmatprep.subr.bf16.mxu0 %v394
  %494 = vmatpush1.bf16.msra.mxu0 %v393
  %495 = vmatprep.subr.bf16.mxu0 %v398
  %496 = vmatpush1.bf16.msra.mxu0 %v397
  %497 = vmatprep.mubr.bf16.mxu0 %v138
  %498 = vmatmul.mubr.bf16.gmra.mrb[0].mxu0 %v137
  %v499 = vpop.f32.mrb[0].mxu0
  %v500 = vadd.f32 0.0, %v499
  %v501 = vpop.f32.mrb[0].mxu0
  %v502 = vadd.f32 0.0, %v501
  %v503 = vpop.f32.mrb[0].mxu0
  %v504 = vadd.f32 0.0, %v503
  %v505 = vpop.f32.mrb[0].mxu0
  %v506 = vadd.f32 0.0, %v505
  %507 = vmatprep.mubr.bf16.mxu0 %v140
  %508 = vmatmul.mubr.bf16.gmra.mrb[0].mxu0 %v139
  %v509 = vpop.f32.mrb[0].mxu0
  %v510 = vadd.f32 0.0, %v509
  %v511 = vpop.f32.mrb[0].mxu0
  %v512 = vadd.f32 0.0, %v511
  %v513 = vpop.f32.mrb[0].mxu0
  %v514 = vadd.f32 0.0, %v513
  %v515 = vpop.f32.mrb[0].mxu0
  %v516 = vadd.f32 0.0, %v515
  %517 = vdwg.mxu0
  %518 = vmatprep.subr.bf16.mxu0 %v340
  %519 = vmatpush1.bf16.msra.mxu0 %v339
  %520 = vmatprep.subr.bf16.mxu0 %v344
  %521 = vmatpush1.bf16.msra.mxu0 %v343
  %522 = vmatprep.subr.bf16.mxu0 %v348
  %523 = vmatpush1.bf16.msra.mxu0 %v347
  %524 = vmatprep.subr.bf16.mxu0 %v352
  %525 = vmatpush1.bf16.msra.mxu0 %v351
  %526 = vmatprep.subr.bf16.mxu0 %v356
  %527 = vmatpush1.bf16.msra.mxu0 %v355
  %528 = vmatprep.subr.bf16.mxu0 %v360
  %529 = vmatpush1.bf16.msra.mxu0 %v359
  %530 = vmatprep.subr.bf16.mxu0 %v364
  %531 = vmatpush1.bf16.msra.mxu0 %v363
  %532 = vmatprep.subr.bf16.mxu0 %v368
  %533 = vmatpush1.bf16.msra.mxu0 %v367
  %534 = vmatprep.subr.bf16.mxu0 %v372
  %535 = vmatpush1.bf16.msra.mxu0 %v371
  %536 = vmatprep.subr.bf16.mxu0 %v376
  %537 = vmatpush1.bf16.msra.mxu0 %v375
  %538 = vmatprep.subr.bf16.mxu0 %v380
  %539 = vmatpush1.bf16.msra.mxu0 %v379
  %540 = vmatprep.subr.bf16.mxu0 %v384
  %541 = vmatpush1.bf16.msra.mxu0 %v383
  %542 = vmatprep.subr.bf16.mxu0 %v388
  %543 = vmatpush1.bf16.msra.mxu0 %v387
  %544 = vmatprep.subr.bf16.mxu0 %v392
  %545 = vmatpush1.bf16.msra.mxu0 %v391
  %546 = vmatprep.subr.bf16.mxu0 %v396
  %547 = vmatpush1.bf16.msra.mxu0 %v395
  %548 = vmatprep.subr.bf16.mxu0 %v400
  %549 = vmatpush1.bf16.msra.mxu0 %v399
  %550 = vmatprep.mubr.bf16.mxu0 %v138
  %551 = vmatmul.mubr.bf16.gmra.mrb[0].mxu0 %v137
  %v552 = vpop.f32.mrb[0].mxu0
  %v553 = vadd.f32 0.0, %v552
  %v554 = vpop.f32.mrb[0].mxu0
  %v555 = vadd.f32 0.0, %v554
  %v556 = vpop.f32.mrb[0].mxu0
  %v557 = vadd.f32 0.0, %v556
  %v558 = vpop.f32.mrb[0].mxu0
  %v559 = vadd.f32 0.0, %v558
  %560 = vmatprep.mubr.bf16.mxu0 %v140
  %561 = vmatmul.mubr.bf16.gmra.mrb[0].mxu0 %v139
  %v562 = vpop.f32.mrb[0].mxu0
  %v563 = vadd.f32 0.0, %v562
  %v564 = vpop.f32.mrb[0].mxu0
  %v565 = vadd.f32 0.0, %v564
  %v566 = vpop.f32.mrb[0].mxu0
  %v567 = vadd.f32 0.0, %v566
  %v568 = vpop.f32.mrb[0].mxu0
  %v569 = vadd.f32 0.0, %v568
  %570 = vdwg.mxu0
  %v575 = vunpack.c.l.b16 %v21
  %v576 = vunpack.c.l.b16 %v22
  %v577 = vunpack.c.l.b16 %v23
  %v578 = vunpack.c.l.b16 %v24
  %v579 = vpack.c.b16 %v576, %v575
  %v580 = vpack.c.b16 %v578, %v577
  %v615 = vunpack.c.l.b16 %v25
  %v616 = vunpack.c.h.b16 %v25
  %v617 = vunpack.c.l.b16 %v26
  %v618 = vunpack.c.h.b16 %v26
  %v619 = vunpack.c.l.b16 %v27
  %v620 = vunpack.c.h.b16 %v27
  %v621 = vunpack.c.l.b16 %v28
  %v622 = vunpack.c.h.b16 %v28
  %v623 = vunpack.c.l.b16 %v29
  %v624 = vunpack.c.h.b16 %v29
  %v625 = vunpack.c.l.b16 %v30
  %v626 = vunpack.c.h.b16 %v30
  %v627 = vunpack.c.l.b16 %v31
  %v628 = vunpack.c.h.b16 %v31
  %v629 = vunpack.c.l.b16 %v32
  %v630 = vunpack.c.h.b16 %v32
  %v631 = vunpack.c.l.b16 %v33
  %v632 = vunpack.c.h.b16 %v33
  %v633 = vunpack.c.l.b16 %v34
  %v634 = vunpack.c.h.b16 %v34
  %v635 = vunpack.c.l.b16 %v35
  %v636 = vunpack.c.h.b16 %v35
  %v637 = vunpack.c.l.b16 %v36
  %v638 = vunpack.c.h.b16 %v36
  %v639 = vunpack.c.l.b16 %v37
  %v640 = vunpack.c.h.b16 %v37
  %v641 = vunpack.c.l.b16 %v38
  %v642 = vunpack.c.h.b16 %v38
  %v643 = vunpack.c.l.b16 %v39
  %v644 = vunpack.c.h.b16 %v39
  %v645 = vunpack.c.l.b16 %v40
  %v646 = vunpack.c.h.b16 %v40
  %v647 = vunpack.c.l.b16 %v41
  %v648 = vunpack.c.h.b16 %v41
  %v649 = vunpack.c.l.b16 %v42
  %v650 = vunpack.c.h.b16 %v42
  %v651 = vunpack.c.l.b16 %v43
  %v652 = vunpack.c.h.b16 %v43
  %v653 = vunpack.c.l.b16 %v44
  %v654 = vunpack.c.h.b16 %v44
  %v655 = vunpack.c.l.b16 %v45
  %v656 = vunpack.c.h.b16 %v45
  %v657 = vunpack.c.l.b16 %v46
  %v658 = vunpack.c.h.b16 %v46
  %v659 = vunpack.c.l.b16 %v47
  %v660 = vunpack.c.h.b16 %v47
  %v661 = vunpack.c.l.b16 %v48
  %v662 = vunpack.c.h.b16 %v48
  %v663 = vunpack.c.l.b16 %v49
  %v664 = vunpack.c.h.b16 %v49
  %v665 = vunpack.c.l.b16 %v50
  %v666 = vunpack.c.h.b16 %v50
  %v667 = vunpack.c.l.b16 %v51
  %v668 = vunpack.c.h.b16 %v51
  %v669 = vunpack.c.l.b16 %v52
  %v670 = vunpack.c.h.b16 %v52
  %v671 = vunpack.c.l.b16 %v53
  %v672 = vunpack.c.h.b16 %v53
  %v673 = vunpack.c.l.b16 %v54
  %v674 = vunpack.c.h.b16 %v54
  %v675 = vunpack.c.l.b16 %v55
  %v676 = vunpack.c.h.b16 %v55
  %v677 = vunpack.c.l.b16 %v56
  %v678 = vunpack.c.h.b16 %v56
  %v679 = vpack.c.b16 %v619, %v615
  %v680 = vpack.c.b16 %v620, %v616
  %v681 = vpack.c.b16 %v621, %v617
  %v682 = vpack.c.b16 %v622, %v618
  %v683 = vpack.c.b16 %v627, %v623
  %v684 = vpack.c.b16 %v628, %v624
  %v685 = vpack.c.b16 %v629, %v625
  %v686 = vpack.c.b16 %v630, %v626
  %v687 = vpack.c.b16 %v635, %v631
  %v688 = vpack.c.b16 %v636, %v632
  %v689 = vpack.c.b16 %v637, %v633
  %v690 = vpack.c.b16 %v638, %v634
  %v691 = vpack.c.b16 %v643, %v639
  %v692 = vpack.c.b16 %v644, %v640
  %v693 = vpack.c.b16 %v645, %v641
  %v694 = vpack.c.b16 %v646, %v642
  %v695 = vpack.c.b16 %v651, %v647
  %v696 = vpack.c.b16 %v652, %v648
  %v697 = vpack.c.b16 %v653, %v649
  %v698 = vpack.c.b16 %v654, %v650
  %v699 = vpack.c.b16 %v659, %v655
  %v700 = vpack.c.b16 %v660, %v656
  %v701 = vpack.c.b16 %v661, %v657
  %v702 = vpack.c.b16 %v662, %v658
  %v703 = vpack.c.b16 %v667, %v663
  %v704 = vpack.c.b16 %v668, %v664
  %v705 = vpack.c.b16 %v669, %v665
  %v706 = vpack.c.b16 %v670, %v666
  %v707 = vpack.c.b16 %v675, %v671
  %v708 = vpack.c.b16 %v676, %v672
  %v709 = vpack.c.b16 %v677, %v673
  %v710 = vpack.c.b16 %v678, %v674
  %743 = vmatprep.subr.bf16.mxu0 %v680
  %744 = vmatpush1.bf16.msra.mxu0 %v679
  %745 = vmatprep.subr.bf16.mxu0 %v684
  %746 = vmatpush1.bf16.msra.mxu0 %v683
  %747 = vmatprep.subr.bf16.mxu0 %v688
  %748 = vmatpush1.bf16.msra.mxu0 %v687
  %749 = vmatprep.subr.bf16.mxu0 %v692
  %750 = vmatpush1.bf16.msra.mxu0 %v691
  %751 = vmatprep.subr.bf16.mxu0 %v696
  %752 = vmatpush1.bf16.msra.mxu0 %v695
  %753 = vmatprep.subr.bf16.mxu0 %v700
  %754 = vmatpush1.bf16.msra.mxu0 %v699
  %755 = vmatprep.subr.bf16.mxu0 %v704
  %756 = vmatpush1.bf16.msra.mxu0 %v703
  %757 = vmatprep.subr.bf16.mxu0 %v708
  %758 = vmatpush1.bf16.msra.mxu0 %v707
  %759 = vmatprep.subr.bf16.mxu0 0
  %760 = vmatpush1.bf16.msra.mxu0 0
  %761 = vmatprep.subr.bf16.mxu0 0
  %762 = vmatpush1.bf16.msra.mxu0 0
  %763 = vmatprep.subr.bf16.mxu0 0
  %764 = vmatpush1.bf16.msra.mxu0 0
  %765 = vmatprep.subr.bf16.mxu0 0
  %766 = vmatpush1.bf16.msra.mxu0 0
  %767 = vmatprep.subr.bf16.mxu0 0
  %768 = vmatpush1.bf16.msra.mxu0 0
  %769 = vmatprep.subr.bf16.mxu0 0
  %770 = vmatpush1.bf16.msra.mxu0 0
  %771 = vmatprep.subr.bf16.mxu0 0
  %772 = vmatpush1.bf16.msra.mxu0 0
  %773 = vmatprep.subr.bf16.mxu0 0
  %774 = vmatpush1.bf16.msra.mxu0 0
  %775 = vmatprep.mubr.bf16.mxu0 0
  %776 = vmatmul.mubr.bf16.gmra.mrb[0].mxu0 %v579
  %v777 = vpop.f32.mrb[0].mxu0
  %v778 = vadd.f32 %v500, %v777
  %v779 = vpop.f32.mrb[0].mxu0
  %v780 = vadd.f32 %v502, %v779
  %v781 = vpop.f32.mrb[0].mxu0
  %v782 = vadd.f32 %v504, %v781
  %v783 = vpop.f32.mrb[0].mxu0
  %v784 = vadd.f32 %v506, %v783
  %785 = vmatprep.mubr.bf16.mxu0 0
  %786 = vmatmul.mubr.bf16.gmra.mrb[0].mxu0 %v580
  %v787 = vpop.f32.mrb[0].mxu0
  %v788 = vadd.f32 %v510, %v787
  %v789 = vpop.f32.mrb[0].mxu0
  %v790 = vadd.f32 %v512, %v789
  %v791 = vpop.f32.mrb[0].mxu0
  %v792 = vadd.f32 %v514, %v791
  %v793 = vpop.f32.mrb[0].mxu0
  %v794 = vadd.f32 %v516, %v793
  %795 = vdwg.mxu0
  %796 = vmatprep.subr.bf16.mxu0 %v682
  %797 = vmatpush1.bf16.msra.mxu0 %v681
  %798 = vmatprep.subr.bf16.mxu0 %v686
  %799 = vmatpush1.bf16.msra.mxu0 %v685
  %800 = vmatprep.subr.bf16.mxu0 %v690
  %801 = vmatpush1.bf16.msra.mxu0 %v689
  %802 = vmatprep.subr.bf16.mxu0 %v694
  %803 = vmatpush1.bf16.msra.mxu0 %v693
  %804 = vmatprep.subr.bf16.mxu0 %v698
  %805 = vmatpush1.bf16.msra.mxu0 %v697
  %806 = vmatprep.subr.bf16.mxu0 %v702
  %807 = vmatpush1.bf16.msra.mxu0 %v701
  %808 = vmatprep.subr.bf16.mxu0 %v706
  %809 = vmatpush1.bf16.msra.mxu0 %v705
  %810 = vmatprep.subr.bf16.mxu0 %v710
  %811 = vmatpush1.bf16.msra.mxu0 %v709
  %812 = vmatprep.subr.bf16.mxu0 0
  %813 = vmatpush1.bf16.msra.mxu0 0
  %814 = vmatprep.subr.bf16.mxu0 0
  %815 = vmatpush1.bf16.msra.mxu0 0
  %816 = vmatprep.subr.bf16.mxu0 0
  %817 = vmatpush1.bf16.msra.mxu0 0
  %818 = vmatprep.subr.bf16.mxu0 0
  %819 = vmatpush1.bf16.msra.mxu0 0
  %820 = vmatprep.subr.bf16.mxu0 0
  %821 = vmatpush1.bf16.msra.mxu0 0
  %822 = vmatprep.subr.bf16.mxu0 0
  %823 = vmatpush1.bf16.msra.mxu0 0
  %824 = vmatprep.subr.bf16.mxu0 0
  %825 = vmatpush1.bf16.msra.mxu0 0
  %826 = vmatprep.subr.bf16.mxu0 0
  %827 = vmatpush1.bf16.msra.mxu0 0
  %828 = vmatprep.mubr.bf16.mxu0 0
  %829 = vmatmul.mubr.bf16.gmra.mrb[0].mxu0 %v579
  %v830 = vpop.f32.mrb[0].mxu0
  %v831 = vadd.f32 %v553, %v830
  %v832 = vpop.f32.mrb[0].mxu0
  %v833 = vadd.f32 %v555, %v832
  %v834 = vpop.f32.mrb[0].mxu0
  %v835 = vadd.f32 %v557, %v834
  %v836 = vpop.f32.mrb[0].mxu0
  %v837 = vadd.f32 %v559, %v836
  %838 = vmatprep.mubr.bf16.mxu0 0
  %839 = vmatmul.mubr.bf16.gmra.mrb[0].mxu0 %v580
  %v840 = vpop.f32.mrb[0].mxu0
  %v841 = vadd.f32 %v563, %v840
  %v842 = vpop.f32.mrb[0].mxu0
  %v843 = vadd.f32 %v565, %v842
  %v844 = vpop.f32.mrb[0].mxu0
  %v845 = vadd.f32 %v567, %v844
  %v846 = vpop.f32.mrb[0].mxu0
  %v847 = vadd.f32 %v569, %v846
  %848 = vdwg.mxu0
  %v849 = vld [vmem:[%s4] sm:$0xf]
  %v851 = vlaneseq
  %v852 = vshrl.u32 %v851, 7
  %v853 = vsub.s32 0, %v852
  %v854 = vrot.slane %v849, %v853
  %v855 = vlaneseq
  %v856 = vshrl.u32 %v855, 7
  %v857 = vsub.s32 1, %v856
  %v858 = vrot.slane %v849, %v857
  %v859 = vlaneseq
  %v860 = vshrl.u32 %v859, 7
  %v861 = vsub.s32 2, %v860
  %v862 = vrot.slane %v849, %v861
  %v863 = vlaneseq
  %v864 = vshrl.u32 %v863, 7
  %v865 = vsub.s32 3, %v864
  %v866 = vrot.slane %v849, %v865
  %v871 = vadd.f32 %v778, %v854
  %v872 = vadd.f32 %v780, %v858
  %v873 = vadd.f32 %v831, %v862
  %v874 = vadd.f32 %v833, %v866
  %v875 = vadd.f32 %v782, %v854
  %v876 = vadd.f32 %v784, %v858
  %v877 = vadd.f32 %v835, %v862
  %v878 = vadd.f32 %v837, %v866
  %v879 = vadd.f32 %v788, %v854
  %v880 = vadd.f32 %v790, %v858
  %v881 = vadd.f32 %v841, %v862
  %v882 = vadd.f32 %v843, %v866
  %v883 = vadd.f32 %v792, %v854
  %v884 = vadd.f32 %v794, %v858
  %v885 = vadd.f32 %v845, %v862
  %v886 = vadd.f32 %v847, %v866
  %v887 = vmax.f32 %v871, 0.0
  %v888 = vmax.f32 %v872, 0.0
  %v889 = vmax.f32 %v873, 0.0
  %v890 = vmax.f32 %v874, 0.0
  %v891 = vmax.f32 %v875, 0.0
  %v892 = vmax.f32 %v876, 0.0
  %v893 = vmax.f32 %v877, 0.0
  %v894 = vmax.f32 %v878, 0.0
  %v895 = vmax.f32 %v879, 0.0
  %v896 = vmax.f32 %v880, 0.0
  %v897 = vmax.f32 %v881, 0.0
  %v898 = vmax.f32 %v882, 0.0
  %v899 = vmax.f32 %v883, 0.0
  %v900 = vmax.f32 %v884, 0.0
  %v901 = vmax.f32 %v885, 0.0
  %v902 = vmax.f32 %v886, 0.0
  %v903 = vpack.c.bf16 %v891, %v887
  %v904 = vpack.c.bf16 %v892, %v888
  %v905 = vpack.c.bf16 %v893, %v889
  %v906 = vpack.c.bf16 %v894, %v890
  %v907 = vpack.c.bf16 %v899, %v895
  %v908 = vpack.c.bf16 %v900, %v896
  %v909 = vpack.c.bf16 %v901, %v897
  %v910 = vpack.c.bf16 %v902, %v898
  %v919 = vunpack.c.l.b16 %v903
  %v920 = vunpack.c.l.b16 %v904
  %v921 = vunpack.c.l.b16 %v905
  %v922 = vunpack.c.l.b16 %v906
  %v923 = vunpack.c.h.b16 %v903
  %v924 = vunpack.c.h.b16 %v904
  %v925 = vunpack.c.h.b16 %v905
  %v926 = vunpack.c.h.b16 %v906
  %v927 = vunpack.c.l.b16 %v907
  %v928 = vunpack.c.l.b16 %v908
  %v929 = vunpack.c.l.b16 %v909
  %v930 = vunpack.c.l.b16 %v910
  %v931 = vunpack.c.h.b16 %v907
  %v932 = vunpack.c.h.b16 %v908
  %v933 = vunpack.c.h.b16 %v909
  %v934 = vunpack.c.h.b16 %v910
  %v935 = vpack.c.b16 %v920, %v919
  %v936 = vpack.c.b16 %v922, %v921
  %v937 = vpack.c.b16 %v924, %v923
  %v938 = vpack.c.b16 %v926, %v925
  %v939 = vpack.c.b16 %v928, %v927
  %v940 = vpack.c.b16 %v930, %v929
  %v941 = vpack.c.b16 %v932, %v931
  %v942 = vpack.c.b16 %v934, %v933
  %951 = vst [vmem:[%s5] sm:$0xff] %v935
  %952 = vst [vmem:[%s5 + $0x8] sm:$0xff] %v936
  %953 = vst [vmem:[%s5 + $0x10] sm:$0xff] %v937
  %954 = vst [vmem:[%s5 + $0x18] sm:$0xff] %v938
  %955 = vst [vmem:[%s5 + $0x20] sm:$0xff] %v939
  %956 = vst [vmem:[%s5 + $0x28] sm:$0xff] %v940
  %957 = vst [vmem:[%s5 + $0x30] sm:$0xff] %v941
  %958 = vst [vmem:[%s5 + $0x38] sm:$0xff] %v942
  // Predicated region
  $region22: #{resnet_common_branch.20} parent=0 // pred_check
    _
  $region23: #{resnet_common_branch.20} parent=0 // pred_check_branch
    %960 = sbr.rel (0) target = $region25
  $region24: #{resnet_common_branch.20} parent=0 // pred_region
    _
  $region25: #{resnet_common_branch.20} parent=0 // pred_fallthru
    _
  // Predicated region
  $region26: #{resnet_common_branch.20} parent=0 // pred_check
    _
  $region27: #{resnet_common_branch.20} parent=0 // pred_check_branch
    %962 = sbr.rel (0) target = $region29
  $region28: #{resnet_common_branch.20} parent=0 // pred_region
    _
  $region29: #{resnet_common_branch.20} parent=0 // pred_fallthru
    _

// kernel: resnet_common_branch.19
$region0: #{resnet_common_branch.19}
  #allocation0 [shape = 'u32[]', space=smem, size = 0x4, offset = 0x4, fixed_abs, tag = 'smem constant byte address 0x4 - core index']
  #allocation1 [shape = 'u32[144,128]{1,0:T(1,128)}', space=vmem, size = 0x12000, scoped, tag = 'internal scratch']
  %s0 = inlined_call_operand.vmem [shape: bf16[32,1152], index: 0, kind: input, shape index: {}]
  %s1 = inlined_call_operand.vmem [shape: bf16[1152,128], index: 1, kind: input, shape index: {}]
  %s2 = inlined_call_operand.vmem [shape: f32[1,128], index: 2, kind: input, shape index: {}]
  %s3 = inlined_call_operand.vmem [shape: bf16[32,128], index: 3, kind: output, shape index: {}]
  %s4 = sld [smem:[#allocation0]]
  $region22: #{resnet_common_branch.19} parent=0
    _
  %s6 = ssub.s32 1, %s4
  %s7 = scalar_select 0, %s6, %s4
  // Predicated region
  $region2: #{resnet_common_branch.19} parent=0 // pred_check
    _
  $region3: #{resnet_common_branch.19} parent=0 // pred_check_branch
    %9 = sbr.rel (0) target = $region5
  $region4: #{resnet_common_branch.19} parent=0 // pred_region
    _
  $region5: #{resnet_common_branch.19} parent=0 // pred_fallthru
    _
  // Predicated region
  $region6: #{resnet_common_branch.19} parent=0 // pred_check
    _
  $region7: #{resnet_common_branch.19} parent=0 // pred_check_branch
    %11 = sbr.rel (0) target = $region9
  $region8: #{resnet_common_branch.19} parent=0 // pred_region
    _
  $region9: #{resnet_common_branch.19} parent=0 // pred_fallthru
    _
  // Predicated region
  $region10: #{resnet_common_branch.19} parent=0 // pred_check
    _
  $region11: #{resnet_common_branch.19} parent=0 // pred_check_branch
    %13 = sbr.rel (0) target = $region13
  $region12: #{resnet_common_branch.19} parent=0 // pred_region
    _
  $region13: #{resnet_common_branch.19} parent=0 // pred_fallthru
    _
  %v15 = vld [vmem:[%s0] sm:$0xff]
  %v16 = vld [vmem:[%s0 + $0x8] sm:$0xff]
  %v17 = vld [vmem:[%s0 + $0x10] sm:$0xff]
  %v18 = vld [vmem:[%s0 + $0x18] sm:$0xff]
  %v19 = vld [vmem:[%s0 + $0x20] sm:$0xf]
  %v20 = vld [vmem:[%s0 + $0x24] sm:$0xff]
  %v21 = vld [vmem:[%s0 + $0x2c] sm:$0xff]
  %v22 = vld [vmem:[%s0 + $0x34] sm:$0xff]
  %v23 = vld [vmem:[%s0 + $0x3c] sm:$0xff]
  %v24 = vld [vmem:[%s0 + $0x44] sm:$0xf]
  %v25 = vld [vmem:[%s0 + $0x48] sm:$0xff]
  %v26 = vld [vmem:[%s0 + $0x50] sm:$0xff]
  %v27 = vld [vmem:[%s0 + $0x58] sm:$0xff]
  %v28 = vld [vmem:[%s0 + $0x60] sm:$0xff]
  %v29 = vld [vmem:[%s0 + $0x68] sm:$0xf]
  %v30 = vld [vmem:[%s0 + $0x6c] sm:$0xff]
  %v31 = vld [vmem:[%s0 + $0x74] sm:$0xff]
  %v32 = vld [vmem:[%s0 + $0x7c] sm:$0xff]
  %v33 = vld [vmem:[%s0 + $0x84] sm:$0xff]
  %v34 = vld [vmem:[%s0 + $0x8c] sm:$0xf]
  %v35 = vld [vmem:[%s1] sm:$0xf]
  %v36 = vld [vmem:[%s1 + $0x4] sm:$0xf]
  %v37 = vld [vmem:[%s1 + $0x8] sm:$0xf]
  %v38 = vld [vmem:[%s1 + $0xc] sm:$0xf]
  %v39 = vld [vmem:[%s1 + $0x10] sm:$0xf]
  %v40 = vld [vmem:[%s1 + $0x14] sm:$0xf]
  %v41 = vld [vmem:[%s1 + $0x18] sm:$0xf]
  %v42 = vld [vmem:[%s1 + $0x1c] sm:$0xf]
  %v43 = vld [vmem:[%s1 + $0x20] sm:$0xf]
  %v44 = vld [vmem:[%s1 + $0x24] sm:$0xf]
  %v45 = vld [vmem:[%s1 + $0x28] sm:$0xf]
  %v46 = vld [vmem:[%s1 + $0x2c] sm:$0xf]
  %v47 = vld [vmem:[%s1 + $0x30] sm:$0xf]
  %v48 = vld [vmem:[%s1 + $0x34] sm:$0xf]
  %v49 = vld [vmem:[%s1 + $0x38] sm:$0xf]
  %v50 = vld [vmem:[%s1 + $0x3c] sm:$0xf]
  %v51 = vld [vmem:[%s1 + $0x40] sm:$0xf]
  %v52 = vld [vmem:[%s1 + $0x44] sm:$0xf]
  %v53 = vld [vmem:[%s1 + $0x48] sm:$0xf]
  %v54 = vld [vmem:[%s1 + $0x4c] sm:$0xf]
  %v55 = vld [vmem:[%s1 + $0x50] sm:$0xf]
  %v56 = vld [vmem:[%s1 + $0x54] sm:$0xf]
  %v57 = vld [vmem:[%s1 + $0x58] sm:$0xf]
  %v58 = vld [vmem:[%s1 + $0x5c] sm:$0xf]
  %v59 = vld [vmem:[%s1 + $0x60] sm:$0xf]
  %v60 = vld [vmem:[%s1 + $0x64] sm:$0xf]
  %v61 = vld [vmem:[%s1 + $0x68] sm:$0xf]
  %v62 = vld [vmem:[%s1 + $0x6c] sm:$0xf]
  %v63 = vld [vmem:[%s1 + $0x70] sm:$0xf]
  %v64 = vld [vmem:[%s1 + $0x74] sm:$0xf]
  %v65 = vld [vmem:[%s1 + $0x78] sm:$0xf]
  %v66 = vld [vmem:[%s1 + $0x7c] sm:$0xf]
  %v67 = vld [vmem:[%s1 + $0x80] sm:$0xf]
  %v68 = vld [vmem:[%s1 + $0x84] sm:$0xf]
  %v69 = vld [vmem:[%s1 + $0x88] sm:$0xf]
  %v70 = vld [vmem:[%s1 + $0x8c] sm:$0xf]
  %v71 = vld [vmem:[%s1 + $0x90] sm:$0xf]
  %v72 = vld [vmem:[%s1 + $0x94] sm:$0xf]
  %v73 = vld [vmem:[%s1 + $0x98] sm:$0xf]
  %v74 = vld [vmem:[%s1 + $0x9c] sm:$0xf]
  %v75 = vld [vmem:[%s1 + $0xa0] sm:$0xf]
  %v76 = vld [vmem:[%s1 + $0xa4] sm:$0xf]
  %v77 = vld [vmem:[%s1 + $0xa8] sm:$0xf]
  %v78 = vld [vmem:[%s1 + $0xac] sm:$0xf]
  %v79 = vld [vmem:[%s1 + $0xb0] sm:$0xf]
  %v80 = vld [vmem:[%s1 + $0xb4] sm:$0xf]
  %v81 = vld [vmem:[%s1 + $0xb8] sm:$0xf]
  %v82 = vld [vmem:[%s1 + $0xbc] sm:$0xf]
  %v83 = vld [vmem:[%s1 + $0xc0] sm:$0xf]
  %v84 = vld [vmem:[%s1 + $0xc4] sm:$0xf]
  %v85 = vld [vmem:[%s1 + $0xc8] sm:$0xf]
  %v86 = vld [vmem:[%s1 + $0xcc] sm:$0xf]
  %v87 = vld [vmem:[%s1 + $0xd0] sm:$0xf]
  %v88 = vld [vmem:[%s1 + $0xd4] sm:$0xf]
  %v89 = vld [vmem:[%s1 + $0xd8] sm:$0xf]
  %v90 = vld [vmem:[%s1 + $0xdc] sm:$0xf]
  %v91 = vld [vmem:[%s1 + $0xe0] sm:$0xf]
  %v92 = vld [vmem:[%s1 + $0xe4] sm:$0xf]
  %v93 = vld [vmem:[%s1 + $0xe8] sm:$0xf]
  %v94 = vld [vmem:[%s1 + $0xec] sm:$0xf]
  %v95 = vld [vmem:[%s1 + $0xf0] sm:$0xf]
  %v96 = vld [vmem:[%s1 + $0xf4] sm:$0xf]
  %v97 = vld [vmem:[%s1 + $0xf8] sm:$0xf]
  %v98 = vld [vmem:[%s1 + $0xfc] sm:$0xf]
  %v99 = vld [vmem:[%s1 + $0x100] sm:$0xf]
  %v100 = vld [vmem:[%s1 + $0x104] sm:$0xf]
  %v101 = vld [vmem:[%s1 + $0x108] sm:$0xf]
  %v102 = vld [vmem:[%s1 + $0x10c] sm:$0xf]
  %v103 = vld [vmem:[%s1 + $0x110] sm:$0xf]
  %v104 = vld [vmem:[%s1 + $0x114] sm:$0xf]
  %v105 = vld [vmem:[%s1 + $0x118] sm:$0xf]
  %v106 = vld [vmem:[%s1 + $0x11c] sm:$0xf]
  %v107 = vld [vmem:[%s1 + $0x120] sm:$0xf]
  %v108 = vld [vmem:[%s1 + $0x124] sm:$0xf]
  %v109 = vld [vmem:[%s1 + $0x128] sm:$0xf]
  %v110 = vld [vmem:[%s1 + $0x12c] sm:$0xf]
  %v111 = vld [vmem:[%s1 + $0x130] sm:$0xf]
  %v112 = vld [vmem:[%s1 + $0x134] sm:$0xf]
  %v113 = vld [vmem:[%s1 + $0x138] sm:$0xf]
  %v114 = vld [vmem:[%s1 + $0x13c] sm:$0xf]
  %v115 = vld [vmem:[%s1 + $0x140] sm:$0xf]
  %v116 = vld [vmem:[%s1 + $0x144] sm:$0xf]
  %v117 = vld [vmem:[%s1 + $0x148] sm:$0xf]
  %v118 = vld [vmem:[%s1 + $0x14c] sm:$0xf]
  %v119 = vld [vmem:[%s1 + $0x150] sm:$0xf]
  %v120 = vld [vmem:[%s1 + $0x154] sm:$0xf]
  %v121 = vld [vmem:[%s1 + $0x158] sm:$0xf]
  %v122 = vld [vmem:[%s1 + $0x15c] sm:$0xf]
  %v123 = vld [vmem:[%s1 + $0x160] sm:$0xf]
  %v124 = vld [vmem:[%s1 + $0x164] sm:$0xf]
  %v125 = vld [vmem:[%s1 + $0x168] sm:$0xf]
  %v126 = vld [vmem:[%s1 + $0x16c] sm:$0xf]
  %v127 = vld [vmem:[%s1 + $0x170] sm:$0xf]
  %v128 = vld [vmem:[%s1 + $0x174] sm:$0xf]
  %v129 = vld [vmem:[%s1 + $0x178] sm:$0xf]
  %v130 = vld [vmem:[%s1 + $0x17c] sm:$0xf]
  %v131 = vld [vmem:[%s1 + $0x180] sm:$0xf]
  %v132 = vld [vmem:[%s1 + $0x184] sm:$0xf]
  %v133 = vld [vmem:[%s1 + $0x188] sm:$0xf]
  %v134 = vld [vmem:[%s1 + $0x18c] sm:$0xf]
  %v135 = vld [vmem:[%s1 + $0x190] sm:$0xf]
  %v136 = vld [vmem:[%s1 + $0x194] sm:$0xf]
  %v137 = vld [vmem:[%s1 + $0x198] sm:$0xf]
  %v138 = vld [vmem:[%s1 + $0x19c] sm:$0xf]
  %v139 = vld [vmem:[%s1 + $0x1a0] sm:$0xf]
  %v140 = vld [vmem:[%s1 + $0x1a4] sm:$0xf]
  %v141 = vld [vmem:[%s1 + $0x1a8] sm:$0xf]
  %v142 = vld [vmem:[%s1 + $0x1ac] sm:$0xf]
  %v143 = vld [vmem:[%s1 + $0x1b0] sm:$0xf]
  %v144 = vld [vmem:[%s1 + $0x1b4] sm:$0xf]
  %v145 = vld [vmem:[%s1 + $0x1b8] sm:$0xf]
  %v146 = vld [vmem:[%s1 + $0x1bc] sm:$0xf]
  %v147 = vld [vmem:[%s1 + $0x1c0] sm:$0xf]
  %v148 = vld [vmem:[%s1 + $0x1c4] sm:$0xf]
  %v149 = vld [vmem:[%s1 + $0x1c8] sm:$0xf]
  %v150 = vld [vmem:[%s1 + $0x1cc] sm:$0xf]
  %v151 = vld [vmem:[%s1 + $0x1d0] sm:$0xf]
  %v152 = vld [vmem:[%s1 + $0x1d4] sm:$0xf]
  %v153 = vld [vmem:[%s1 + $0x1d8] sm:$0xf]
  %v154 = vld [vmem:[%s1 + $0x1dc] sm:$0xf]
  %v155 = vld [vmem:[%s1 + $0x1e0] sm:$0xf]
  %v156 = vld [vmem:[%s1 + $0x1e4] sm:$0xf]
  %v157 = vld [vmem:[%s1 + $0x1e8] sm:$0xf]
  %v158 = vld [vmem:[%s1 + $0x1ec] sm:$0xf]
  %v159 = vld [vmem:[%s1 + $0x1f0] sm:$0xf]
  %v160 = vld [vmem:[%s1 + $0x1f4] sm:$0xf]
  %v161 = vld [vmem:[%s1 + $0x1f8] sm:$0xf]
  %v162 = vld [vmem:[%s1 + $0x1fc] sm:$0xf]
  %v163 = vld [vmem:[%s1 + $0x200] sm:$0xf]
  %v164 = vld [vmem:[%s1 + $0x204] sm:$0xf]
  %v165 = vld [vmem:[%s1 + $0x208] sm:$0xf]
  %v166 = vld [vmem:[%s1 + $0x20c] sm:$0xf]
  %v167 = vld [vmem:[%s1 + $0x210] sm:$0xf]
  %v168 = vld [vmem:[%s1 + $0x214] sm:$0xf]
  %v169 = vld [vmem:[%s1 + $0x218] sm:$0xf]
  %v170 = vld [vmem:[%s1 + $0x21c] sm:$0xf]
  %v171 = vld [vmem:[%s1 + $0x220] sm:$0xf]
  %v172 = vld [vmem:[%s1 + $0x224] sm:$0xf]
  %v173 = vld [vmem:[%s1 + $0x228] sm:$0xf]
  %v174 = vld [vmem:[%s1 + $0x22c] sm:$0xf]
  %v175 = vld [vmem:[%s1 + $0x230] sm:$0xf]
  %v176 = vld [vmem:[%s1 + $0x234] sm:$0xf]
  %v177 = vld [vmem:[%s1 + $0x238] sm:$0xf]
  %v178 = vld [vmem:[%s1 + $0x23c] sm:$0xf]
  %v179 = vld [vmem:[%s2] sm:$0x1]
  %v181 = vlaneseq
  %v182 = vshrl.u32 %v181, 7
  %v183 = vsub.s32 0, %v182
  %v184 = vrot.slane %v179, %v183
  %v206 = vunpack.c.l.b16 %v15
  %v207 = vunpack.c.h.b16 %v15
  %v208 = vunpack.c.l.b16 %v16
  %v209 = vunpack.c.h.b16 %v16
  %v210 = vunpack.c.l.b16 %v17
  %v211 = vunpack.c.h.b16 %v17
  %v212 = vunpack.c.l.b16 %v18
  %v213 = vunpack.c.h.b16 %v18
  %v214 = vunpack.c.l.b16 %v19
  %v215 = vunpack.c.l.b16 %v20
  %v216 = vunpack.c.h.b16 %v20
  %v217 = vunpack.c.l.b16 %v21
  %v218 = vunpack.c.h.b16 %v21
  %v219 = vunpack.c.l.b16 %v22
  %v220 = vunpack.c.h.b16 %v22
  %v221 = vunpack.c.l.b16 %v23
  %v222 = vunpack.c.h.b16 %v23
  %v223 = vunpack.c.l.b16 %v24
  %v224 = vunpack.c.l.b16 %v25
  %v225 = vunpack.c.h.b16 %v25
  %v226 = vunpack.c.l.b16 %v26
  %v227 = vunpack.c.h.b16 %v26
  %v228 = vunpack.c.l.b16 %v27
  %v229 = vunpack.c.h.b16 %v27
  %v230 = vunpack.c.l.b16 %v28
  %v231 = vunpack.c.h.b16 %v28
  %v232 = vunpack.c.l.b16 %v29
  %v233 = vunpack.c.l.b16 %v30
  %v234 = vunpack.c.h.b16 %v30
  %v235 = vunpack.c.l.b16 %v31
  %v236 = vunpack.c.h.b16 %v31
  %v237 = vunpack.c.l.b16 %v32
  %v238 = vunpack.c.h.b16 %v32
  %v239 = vunpack.c.l.b16 %v33
  %v240 = vunpack.c.h.b16 %v33
  %v241 = vunpack.c.l.b16 %v34
  %v242 = vpack.c.b16 %v215, %v206
  %v243 = vpack.c.b16 %v216, %v207
  %v244 = vpack.c.b16 %v217, %v208
  %v245 = vpack.c.b16 %v218, %v209
  %v246 = vpack.c.b16 %v219, %v210
  %v247 = vpack.c.b16 %v220, %v211
  %v248 = vpack.c.b16 %v221, %v212
  %v249 = vpack.c.b16 %v222, %v213
  %v250 = vpack.c.b16 %v223, %v214
  %v251 = vpack.c.b16 %v233, %v224
  %v252 = vpack.c.b16 %v234, %v225
  %v253 = vpack.c.b16 %v235, %v226
  %v254 = vpack.c.b16 %v236, %v227
  %v255 = vpack.c.b16 %v237, %v228
  %v256 = vpack.c.b16 %v238, %v229
  %v257 = vpack.c.b16 %v239, %v230
  %v258 = vpack.c.b16 %v240, %v231
  %v259 = vpack.c.b16 %v241, %v232
  %v422 = vunpack.c.l.b16 %v35
  %v423 = vunpack.c.l.b16 %v36
  %v424 = vunpack.c.l.b16 %v37
  %v425 = vunpack.c.l.b16 %v38
  %v426 = vunpack.c.l.b16 %v39
  %v427 = vunpack.c.l.b16 %v40
  %v428 = vunpack.c.l.b16 %v41
  %v429 = vunpack.c.l.b16 %v42
  %v430 = vunpack.c.l.b16 %v43
  %v431 = vunpack.c.l.b16 %v44
  %v432 = vunpack.c.l.b16 %v45
  %v433 = vunpack.c.l.b16 %v46
  %v434 = vunpack.c.l.b16 %v47
  %v435 = vunpack.c.l.b16 %v48
  %v436 = vunpack.c.l.b16 %v49
  %v437 = vunpack.c.l.b16 %v50
  %v438 = vunpack.c.l.b16 %v51
  %v439 = vunpack.c.l.b16 %v52
  %v440 = vunpack.c.l.b16 %v53
  %v441 = vunpack.c.l.b16 %v54
  %v442 = vunpack.c.l.b16 %v55
  %v443 = vunpack.c.l.b16 %v56
  %v444 = vunpack.c.l.b16 %v57
  %v445 = vunpack.c.l.b16 %v58
  %v446 = vunpack.c.l.b16 %v59
  %v447 = vunpack.c.l.b16 %v60
  %v448 = vunpack.c.l.b16 %v61
  %v449 = vunpack.c.l.b16 %v62
  %v450 = vunpack.c.l.b16 %v63
  %v451 = vunpack.c.l.b16 %v64
  %v452 = vunpack.c.l.b16 %v65
  %v453 = vunpack.c.l.b16 %v66
  %v454 = vunpack.c.l.b16 %v67
  %v455 = vunpack.c.l.b16 %v68
  %v456 = vunpack.c.l.b16 %v69
  %v457 = vunpack.c.l.b16 %v70
  %v458 = vunpack.c.l.b16 %v71
  %v459 = vunpack.c.l.b16 %v72
  %v460 = vunpack.c.l.b16 %v73
  %v461 = vunpack.c.l.b16 %v74
  %v462 = vunpack.c.l.b16 %v75
  %v463 = vunpack.c.l.b16 %v76
  %v464 = vunpack.c.l.b16 %v77
  %v465 = vunpack.c.l.b16 %v78
  %v466 = vunpack.c.l.b16 %v79
  %v467 = vunpack.c.l.b16 %v80
  %v468 = vunpack.c.l.b16 %v81
  %v469 = vunpack.c.l.b16 %v82
  %v470 = vunpack.c.l.b16 %v83
  %v471 = vunpack.c.l.b16 %v84
  %v472 = vunpack.c.l.b16 %v85
  %v473 = vunpack.c.l.b16 %v86
  %v474 = vunpack.c.l.b16 %v87
  %v475 = vunpack.c.l.b16 %v88
  %v476 = vunpack.c.l.b16 %v89
  %v477 = vunpack.c.l.b16 %v90
  %v478 = vunpack.c.l.b16 %v91
  %v479 = vunpack.c.l.b16 %v92
  %v480 = vunpack.c.l.b16 %v93
  %v481 = vunpack.c.l.b16 %v94
  %v482 = vunpack.c.l.b16 %v95
  %v483 = vunpack.c.l.b16 %v96
  %v484 = vunpack.c.l.b16 %v97
  %v485 = vunpack.c.l.b16 %v98
  %v486 = vunpack.c.l.b16 %v99
  %v487 = vunpack.c.l.b16 %v100
  %v488 = vunpack.c.l.b16 %v101
  %v489 = vunpack.c.l.b16 %v102
  %v490 = vunpack.c.l.b16 %v103
  %v491 = vunpack.c.l.b16 %v104
  %v492 = vunpack.c.l.b16 %v105
  %v493 = vunpack.c.l.b16 %v106
  %v494 = vunpack.c.l.b16 %v107
  %v495 = vunpack.c.l.b16 %v108
  %v496 = vunpack.c.l.b16 %v109
  %v497 = vunpack.c.l.b16 %v110
  %v498 = vunpack.c.l.b16 %v111
  %v499 = vunpack.c.l.b16 %v112
  %v500 = vunpack.c.l.b16 %v113
  %v501 = vunpack.c.l.b16 %v114
  %v502 = vunpack.c.l.b16 %v115
  %v503 = vunpack.c.l.b16 %v116
  %v504 = vunpack.c.l.b16 %v117
  %v505 = vunpack.c.l.b16 %v118
  %v506 = vunpack.c.l.b16 %v119
  %v507 = vunpack.c.l.b16 %v120
  %v508 = vunpack.c.l.b16 %v121
  %v509 = vunpack.c.l.b16 %v122
  %v510 = vunpack.c.l.b16 %v123
  %v511 = vunpack.c.l.b16 %v124
  %v512 = vunpack.c.l.b16 %v125
  %v513 = vunpack.c.l.b16 %v126
  %v514 = vunpack.c.l.b16 %v127
  %v515 = vunpack.c.l.b16 %v128
  %v516 = vunpack.c.l.b16 %v129
  %v517 = vunpack.c.l.b16 %v130
  %v518 = vunpack.c.l.b16 %v131
  %v519 = vunpack.c.l.b16 %v132
  %v520 = vunpack.c.l.b16 %v133
  %v521 = vunpack.c.l.b16 %v134
  %v522 = vunpack.c.l.b16 %v135
  %v523 = vunpack.c.l.b16 %v136
  %v524 = vunpack.c.l.b16 %v137
  %v525 = vunpack.c.l.b16 %v138
  %v526 = vunpack.c.l.b16 %v139
  %v527 = vunpack.c.l.b16 %v140
  %v528 = vunpack.c.l.b16 %v141
  %v529 = vunpack.c.l.b16 %v142
  %v530 = vunpack.c.l.b16 %v143
  %v531 = vunpack.c.l.b16 %v144
  %v532 = vunpack.c.l.b16 %v145
  %v533 = vunpack.c.l.b16 %v146
  %v534 = vunpack.c.l.b16 %v147
  %v535 = vunpack.c.l.b16 %v148
  %v536 = vunpack.c.l.b16 %v149
  %v537 = vunpack.c.l.b16 %v150
  %v538 = vunpack.c.l.b16 %v151
  %v539 = vunpack.c.l.b16 %v152
  %v540 = vunpack.c.l.b16 %v153
  %v541 = vunpack.c.l.b16 %v154
  %v542 = vunpack.c.l.b16 %v155
  %v543 = vunpack.c.l.b16 %v156
  %v544 = vunpack.c.l.b16 %v157
  %v545 = vunpack.c.l.b16 %v158
  %v546 = vunpack.c.l.b16 %v159
  %v547 = vunpack.c.l.b16 %v160
  %v548 = vunpack.c.l.b16 %v161
  %v549 = vunpack.c.l.b16 %v162
  %v550 = vunpack.c.l.b16 %v163
  %v551 = vunpack.c.l.b16 %v164
  %v552 = vunpack.c.l.b16 %v165
  %v553 = vunpack.c.l.b16 %v166
  %v554 = vunpack.c.l.b16 %v167
  %v555 = vunpack.c.l.b16 %v168
  %v556 = vunpack.c.l.b16 %v169
  %v557 = vunpack.c.l.b16 %v170
  %v558 = vunpack.c.l.b16 %v171
  %v559 = vunpack.c.l.b16 %v172
  %v560 = vunpack.c.l.b16 %v173
  %v561 = vunpack.c.l.b16 %v174
  %v562 = vunpack.c.l.b16 %v175
  %v563 = vunpack.c.l.b16 %v176
  %v564 = vunpack.c.l.b16 %v177
  %v565 = vunpack.c.l.b16 %v178
  %v566 = vpack.c.b16 %v423, %v422
  %v567 = vpack.c.b16 %v425, %v424
  %v568 = vpack.c.b16 %v427, %v426
  %v569 = vpack.c.b16 %v429, %v428
  %v570 = vpack.c.b16 %v431, %v430
  %v571 = vpack.c.b16 %v433, %v432
  %v572 = vpack.c.b16 %v435, %v434
  %v573 = vpack.c.b16 %v437, %v436
  %v574 = vpack.c.b16 %v439, %v438
  %v575 = vpack.c.b16 %v441, %v440
  %v576 = vpack.c.b16 %v443, %v442
  %v577 = vpack.c.b16 %v445, %v444
  %v578 = vpack.c.b16 %v447, %v446
  %v579 = vpack.c.b16 %v449, %v448
  %v580 = vpack.c.b16 %v451, %v450
  %v581 = vpack.c.b16 %v453, %v452
  %v582 = vpack.c.b16 %v455, %v454
  %v583 = vpack.c.b16 %v457, %v456
  %v584 = vpack.c.b16 %v459, %v458
  %v585 = vpack.c.b16 %v461, %v460
  %v586 = vpack.c.b16 %v463, %v462
  %v587 = vpack.c.b16 %v465, %v464
  %v588 = vpack.c.b16 %v467, %v466
  %v589 = vpack.c.b16 %v469, %v468
  %v590 = vpack.c.b16 %v471, %v470
  %v591 = vpack.c.b16 %v473, %v472
  %v592 = vpack.c.b16 %v475, %v474
  %v593 = vpack.c.b16 %v477, %v476
  %v594 = vpack.c.b16 %v479, %v478
  %v595 = vpack.c.b16 %v481, %v480
  %v596 = vpack.c.b16 %v483, %v482
  %v597 = vpack.c.b16 %v485, %v484
  %v598 = vpack.c.b16 %v487, %v486
  %v599 = vpack.c.b16 %v489, %v488
  %v600 = vpack.c.b16 %v491, %v490
  %v601 = vpack.c.b16 %v493, %v492
  %v602 = vpack.c.b16 %v495, %v494
  %v603 = vpack.c.b16 %v497, %v496
  %v604 = vpack.c.b16 %v499, %v498
  %v605 = vpack.c.b16 %v501, %v500
  %v606 = vpack.c.b16 %v503, %v502
  %v607 = vpack.c.b16 %v505, %v504
  %v608 = vpack.c.b16 %v507, %v506
  %v609 = vpack.c.b16 %v509, %v508
  %v610 = vpack.c.b16 %v511, %v510
  %v611 = vpack.c.b16 %v513, %v512
  %v612 = vpack.c.b16 %v515, %v514
  %v613 = vpack.c.b16 %v517, %v516
  %v614 = vpack.c.b16 %v519, %v518
  %v615 = vpack.c.b16 %v521, %v520
  %v616 = vpack.c.b16 %v523, %v522
  %v617 = vpack.c.b16 %v525, %v524
  %v618 = vpack.c.b16 %v527, %v526
  %v619 = vpack.c.b16 %v529, %v528
  %v620 = vpack.c.b16 %v531, %v530
  %v621 = vpack.c.b16 %v533, %v532
  %v622 = vpack.c.b16 %v535, %v534
  %v623 = vpack.c.b16 %v537, %v536
  %v624 = vpack.c.b16 %v539, %v538
  %v625 = vpack.c.b16 %v541, %v540
  %v626 = vpack.c.b16 %v543, %v542
  %v627 = vpack.c.b16 %v545, %v544
  %v628 = vpack.c.b16 %v547, %v546
  %v629 = vpack.c.b16 %v549, %v548
  %v630 = vpack.c.b16 %v551, %v550
  %v631 = vpack.c.b16 %v553, %v552
  %v632 = vpack.c.b16 %v555, %v554
  %v633 = vpack.c.b16 %v557, %v556
  %v634 = vpack.c.b16 %v559, %v558
  %v635 = vpack.c.b16 %v561, %v560
  %v636 = vpack.c.b16 %v563, %v562
  %v637 = vpack.c.b16 %v565, %v564
  %710 = vmatprep.subr.bf16.mxu0 0
  %711 = vmatpush1.bf16.msra.mxu0 %v566
  %712 = vmatprep.subr.bf16.mxu0 0
  %713 = vmatpush1.bf16.msra.mxu0 %v567
  %714 = vmatprep.subr.bf16.mxu0 0
  %715 = vmatpush1.bf16.msra.mxu0 %v568
  %716 = vmatprep.subr.bf16.mxu0 0
  %717 = vmatpush1.bf16.msra.mxu0 %v569
  %718 = vmatprep.subr.bf16.mxu0 0
  %719 = vmatpush1.bf16.msra.mxu0 %v570
  %720 = vmatprep.subr.bf16.mxu0 0
  %721 = vmatpush1.bf16.msra.mxu0 %v571
  %722 = vmatprep.subr.bf16.mxu0 0
  %723 = vmatpush1.bf16.msra.mxu0 %v572
  %724 = vmatprep.subr.bf16.mxu0 0
  %725 = vmatpush1.bf16.msra.mxu0 %v573
  %726 = vmatprep.subr.bf16.mxu0 0
  %727 = vmatpush1.bf16.msra.mxu0 %v574
  %728 = vmatprep.subr.bf16.mxu0 0
  %729 = vmatpush1.bf16.msra.mxu0 %v575
  %730 = vmatprep.subr.bf16.mxu0 0
  %731 = vmatpush1.bf16.msra.mxu0 %v576
  %732 = vmatprep.subr.bf16.mxu0 0
  %733 = vmatpush1.bf16.msra.mxu0 %v577
  %734 = vmatprep.subr.bf16.mxu0 0
  %735 = vmatpush1.bf16.msra.mxu0 %v578
  %736 = vmatprep.subr.bf16.mxu0 0
  %737 = vmatpush1.bf16.msra.mxu0 %v579
  %738 = vmatprep.subr.bf16.mxu0 0
  %739 = vmatpush1.bf16.msra.mxu0 %v580
  %740 = vmatprep.subr.bf16.mxu0 0
  %741 = vmatpush1.bf16.msra.mxu0 %v581
  %742 = vmatprep.mubr.bf16.mxu0 %v243
  %743 = vmatmul.mubr.bf16.gmra.mrb[0].mxu0 %v242
  %v744 = vpop.f32.mrb[0].mxu0
  %v745 = vadd.f32 %v184, %v744
  %v746 = vpop.f32.mrb[0].mxu0
  %v747 = vpop.f32.mrb[0].mxu0
  %v748 = vadd.f32 %v184, %v747
  %v749 = vpop.f32.mrb[0].mxu0
  %750 = vmatprep.mubr.bf16.mxu0 %v252
  %751 = vmatmul.mubr.bf16.gmra.mrb[0].mxu0 %v251
  %v752 = vpop.f32.mrb[0].mxu0
  %v753 = vadd.f32 %v184, %v752
  %v754 = vpop.f32.mrb[0].mxu0
  %v755 = vpop.f32.mrb[0].mxu0
  %v756 = vadd.f32 %v184, %v755
  %v757 = vpop.f32.mrb[0].mxu0
  %758 = vdwg.mxu0
  %759 = vmatprep.subr.bf16.mxu0 0
  %760 = vmatpush1.bf16.msra.mxu0 %v582
  %761 = vmatprep.subr.bf16.mxu0 0
  %762 = vmatpush1.bf16.msra.mxu0 %v583
  %763 = vmatprep.subr.bf16.mxu0 0
  %764 = vmatpush1.bf16.msra.mxu0 %v584
  %765 = vmatprep.subr.bf16.mxu0 0
  %766 = vmatpush1.bf16.msra.mxu0 %v585
  %767 = vmatprep.subr.bf16.mxu0 0
  %768 = vmatpush1.bf16.msra.mxu0 %v586
  %769 = vmatprep.subr.bf16.mxu0 0
  %770 = vmatpush1.bf16.msra.mxu0 %v587
  %771 = vmatprep.subr.bf16.mxu0 0
  %772 = vmatpush1.bf16.msra.mxu0 %v588
  %773 = vmatprep.subr.bf16.mxu0 0
  %774 = vmatpush1.bf16.msra.mxu0 %v589
  %775 = vmatprep.subr.bf16.mxu0 0
  %776 = vmatpush1.bf16.msra.mxu0 %v590
  %777 = vmatprep.subr.bf16.mxu0 0
  %778 = vmatpush1.bf16.msra.mxu0 %v591
  %779 = vmatprep.subr.bf16.mxu0 0
  %780 = vmatpush1.bf16.msra.mxu0 %v592
  %781 = vmatprep.subr.bf16.mxu0 0
  %782 = vmatpush1.bf16.msra.mxu0 %v593
  %783 = vmatprep.subr.bf16.mxu0 0
  %784 = vmatpush1.bf16.msra.mxu0 %v594
  %785 = vmatprep.subr.bf16.mxu0 0
  %786 = vmatpush1.bf16.msra.mxu0 %v595
  %787 = vmatprep.subr.bf16.mxu0 0
  %788 = vmatpush1.bf16.msra.mxu0 %v596
  %789 = vmatprep.subr.bf16.mxu0 0
  %790 = vmatpush1.bf16.msra.mxu0 %v597
  %791 = vmatprep.mubr.bf16.mxu0 %v245
  %792 = vmatmul.mubr.bf16.gmra.mrb[0].mxu0 %v244
  %v793 = vpop.f32.mrb[0].mxu0
  %v794 = vadd.f32 %v745, %v793
  %v795 = vpop.f32.mrb[0].mxu0
  %v796 = vpop.f32.mrb[0].mxu0
  %v797 = vadd.f32 %v748, %v796
  %v798 = vpop.f32.mrb[0].mxu0
  %799 = vmatprep.mubr.bf16.mxu0 %v254
  %800 = vmatmul.mubr.bf16.gmra.mrb[0].mxu0 %v253
  %v801 = vpop.f32.mrb[0].mxu0
  %v802 = vadd.f32 %v753, %v801
  %v803 = vpop.f32.mrb[0].mxu0
  %v804 = vpop.f32.mrb[0].mxu0
  %v805 = vadd.f32 %v756, %v804
  %v806 = vpop.f32.mrb[0].mxu0
  %807 = vdwg.mxu0
  %808 = vmatprep.subr.bf16.mxu0 0
  %809 = vmatpush1.bf16.msra.mxu0 %v598
  %810 = vmatprep.subr.bf16.mxu0 0
  %811 = vmatpush1.bf16.msra.mxu0 %v599
  %812 = vmatprep.subr.bf16.mxu0 0
  %813 = vmatpush1.bf16.msra.mxu0 %v600
  %814 = vmatprep.subr.bf16.mxu0 0
  %815 = vmatpush1.bf16.msra.mxu0 %v601
  %816 = vmatprep.subr.bf16.mxu0 0
  %817 = vmatpush1.bf16.msra.mxu0 %v602
  %818 = vmatprep.subr.bf16.mxu0 0
  %819 = vmatpush1.bf16.msra.mxu0 %v603
  %820 = vmatprep.subr.bf16.mxu0 0
  %821 = vmatpush1.bf16.msra.mxu0 %v604
  %822 = vmatprep.subr.bf16.mxu0 0
  %823 = vmatpush1.bf16.msra.mxu0 %v605
  %824 = vmatprep.subr.bf16.mxu0 0
  %825 = vmatpush1.bf16.msra.mxu0 %v606
  %826 = vmatprep.subr.bf16.mxu0 0
  %827 = vmatpush1.bf16.msra.mxu0 %v607
  %828 = vmatprep.subr.bf16.mxu0 0
  %829 = vmatpush1.bf16.msra.mxu0 %v608
  %830 = vmatprep.subr.bf16.mxu0 0
  %831 = vmatpush1.bf16.msra.mxu0 %v609
  %832 = vmatprep.subr.bf16.mxu0 0
  %833 = vmatpush1.bf16.msra.mxu0 %v610
  %834 = vmatprep.subr.bf16.mxu0 0
  %835 = vmatpush1.bf16.msra.mxu0 %v611
  %836 = vmatprep.subr.bf16.mxu0 0
  %837 = vmatpush1.bf16.msra.mxu0 %v612
  %838 = vmatprep.subr.bf16.mxu0 0
  %839 = vmatpush1.bf16.msra.mxu0 %v613
  %840 = vmatprep.mubr.bf16.mxu0 %v247
  %841 = vmatmul.mubr.bf16.gmra.mrb[0].mxu0 %v246
  %v842 = vpop.f32.mrb[0].mxu0
  %v843 = vadd.f32 %v794, %v842
  %v844 = vpop.f32.mrb[0].mxu0
  %v845 = vpop.f32.mrb[0].mxu0
  %v846 = vadd.f32 %v797, %v845
  %v847 = vpop.f32.mrb[0].mxu0
  %848 = vmatprep.mubr.bf16.mxu0 %v256
  %849 = vmatmul.mubr.bf16.gmra.mrb[0].mxu0 %v255
  %v850 = vpop.f32.mrb[0].mxu0
  %v851 = vadd.f32 %v802, %v850
  %v852 = vpop.f32.mrb[0].mxu0
  %v853 = vpop.f32.mrb[0].mxu0
  %v854 = vadd.f32 %v805, %v853
  %v855 = vpop.f32.mrb[0].mxu0
  %856 = vdwg.mxu0
  %857 = vmatprep.subr.bf16.mxu0 0
  %858 = vmatpush1.bf16.msra.mxu0 %v614
  %859 = vmatprep.subr.bf16.mxu0 0
  %860 = vmatpush1.bf16.msra.mxu0 %v615
  %861 = vmatprep.subr.bf16.mxu0 0
  %862 = vmatpush1.bf16.msra.mxu0 %v616
  %863 = vmatprep.subr.bf16.mxu0 0
  %864 = vmatpush1.bf16.msra.mxu0 %v617
  %865 = vmatprep.subr.bf16.mxu0 0
  %866 = vmatpush1.bf16.msra.mxu0 %v618
  %867 = vmatprep.subr.bf16.mxu0 0
  %868 = vmatpush1.bf16.msra.mxu0 %v619
  %869 = vmatprep.subr.bf16.mxu0 0
  %870 = vmatpush1.bf16.msra.mxu0 %v620
  %871 = vmatprep.subr.bf16.mxu0 0
  %872 = vmatpush1.bf16.msra.mxu0 %v621
  %873 = vmatprep.subr.bf16.mxu0 0
  %874 = vmatpush1.bf16.msra.mxu0 %v622
  %875 = vmatprep.subr.bf16.mxu0 0
  %876 = vmatpush1.bf16.msra.mxu0 %v623
  %877 = vmatprep.subr.bf16.mxu0 0
  %878 = vmatpush1.bf16.msra.mxu0 %v624
  %879 = vmatprep.subr.bf16.mxu0 0
  %880 = vmatpush1.bf16.msra.mxu0 %v625
  %881 = vmatprep.subr.bf16.mxu0 0
  %882 = vmatpush1.bf16.msra.mxu0 %v626
  %883 = vmatprep.subr.bf16.mxu0 0
  %884 = vmatpush1.bf16.msra.mxu0 %v627
  %885 = vmatprep.subr.bf16.mxu0 0
  %886 = vmatpush1.bf16.msra.mxu0 %v628
  %887 = vmatprep.subr.bf16.mxu0 0
  %888 = vmatpush1.bf16.msra.mxu0 %v629
  %889 = vmatprep.mubr.bf16.mxu0 %v249
  %890 = vmatmul.mubr.bf16.gmra.mrb[0].mxu0 %v248
  %v891 = vpop.f32.mrb[0].mxu0
  %v892 = vadd.f32 %v843, %v891
  %v893 = vpop.f32.mrb[0].mxu0
  %v894 = vpop.f32.mrb[0].mxu0
  %v895 = vadd.f32 %v846, %v894
  %v896 = vpop.f32.mrb[0].mxu0
  %897 = vmatprep.mubr.bf16.mxu0 %v258
  %898 = vmatmul.mubr.bf16.gmra.mrb[0].mxu0 %v257
  %v899 = vpop.f32.mrb[0].mxu0
  %v900 = vadd.f32 %v851, %v899
  %v901 = vpop.f32.mrb[0].mxu0
  %v902 = vpop.f32.mrb[0].mxu0
  %v903 = vadd.f32 %v854, %v902
  %v904 = vpop.f32.mrb[0].mxu0
  %905 = vdwg.mxu0
  %906 = vmatprep.subr.bf16.mxu0 0
  %907 = vmatpush1.bf16.msra.mxu0 %v630
  %908 = vmatprep.subr.bf16.mxu0 0
  %909 = vmatpush1.bf16.msra.mxu0 %v631
  %910 = vmatprep.subr.bf16.mxu0 0
  %911 = vmatpush1.bf16.msra.mxu0 %v632
  %912 = vmatprep.subr.bf16.mxu0 0
  %913 = vmatpush1.bf16.msra.mxu0 %v633
  %914 = vmatprep.subr.bf16.mxu0 0
  %915 = vmatpush1.bf16.msra.mxu0 %v634
  %916 = vmatprep.subr.bf16.mxu0 0
  %917 = vmatpush1.bf16.msra.mxu0 %v635
  %918 = vmatprep.subr.bf16.mxu0 0
  %919 = vmatpush1.bf16.msra.mxu0 %v636
  %920 = vmatprep.subr.bf16.mxu0 0
  %921 = vmatpush1.bf16.msra.mxu0 %v637
  %922 = vmatprep.subr.bf16.mxu0 0
  %923 = vmatpush1.bf16.msra.mxu0 0
  %924 = vmatprep.subr.bf16.mxu0 0
  %925 = vmatpush1.bf16.msra.mxu0 0
  %926 = vmatprep.subr.bf16.mxu0 0
  %927 = vmatpush1.bf16.msra.mxu0 0
  %928 = vmatprep.subr.bf16.mxu0 0
  %929 = vmatpush1.bf16.msra.mxu0 0
  %930 = vmatprep.subr.bf16.mxu0 0
  %931 = vmatpush1.bf16.msra.mxu0 0
  %932 = vmatprep.subr.bf16.mxu0 0
  %933 = vmatpush1.bf16.msra.mxu0 0
  %934 = vmatprep.subr.bf16.mxu0 0
  %935 = vmatpush1.bf16.msra.mxu0 0
  %936 = vmatprep.subr.bf16.mxu0 0
  %937 = vmatpush1.bf16.msra.mxu0 0
  %938 = vmatprep.mubr.bf16.mxu0 0
  %939 = vmatmul.mubr.bf16.gmra.mrb[0].mxu0 %v250
  %v940 = vpop.f32.mrb[0].mxu0
  %v941 = vadd.f32 %v892, %v940
  %v942 = vpop.f32.mrb[0].mxu0
  %v943 = vpop.f32.mrb[0].mxu0
  %v944 = vadd.f32 %v895, %v943
  %v945 = vpop.f32.mrb[0].mxu0
  %946 = vmatprep.mubr.bf16.mxu0 0
  %947 = vmatmul.mubr.bf16.gmra.mrb[0].mxu0 %v259
  %v948 = vpop.f32.mrb[0].mxu0
  %v949 = vadd.f32 %v900, %v948
  %v950 = vpop.f32.mrb[0].mxu0
  %v951 = vpop.f32.mrb[0].mxu0
  %v952 = vadd.f32 %v903, %v951
  %v953 = vpop.f32.mrb[0].mxu0
  %954 = vdwg.mxu0
  %v955 = vmax.f32 %v941, 0.0
  %v956 = vmax.f32 %v944, 0.0
  %v957 = vmax.f32 %v949, 0.0
  %v958 = vmax.f32 %v952, 0.0
  %v959 = vpack.c.bf16 %v956, %v955
  %v960 = vpack.c.bf16 %v958, %v957
  %v963 = vunpack.c.l.b16 %v959
  %v964 = vunpack.c.h.b16 %v959
  %v965 = vunpack.c.l.b16 %v960
  %v966 = vunpack.c.h.b16 %v960
  %v967 = vpack.c.b16 %v963, %v963
  %v968 = vpack.c.b16 %v964, %v964
  %v969 = vpack.c.b16 %v965, %v965
  %v970 = vpack.c.b16 %v966, %v966
  %975 = vst [vmem:[%s3] sm:$0xf] %v967
  %976 = vst [vmem:[%s3 + $0x4] sm:$0xf] %v968
  %977 = vst [vmem:[%s3 + $0x8] sm:$0xf] %v969
  %978 = vst [vmem:[%s3 + $0xc] sm:$0xf] %v970
  // Predicated region
  $region14: #{resnet_common_branch.19} parent=0 // pred_check
    _
  $region15: #{resnet_common_branch.19} parent=0 // pred_check_branch
    %980 = sbr.rel (0) target = $region17
  $region16: #{resnet_common_branch.19} parent=0 // pred_region
    _
  $region17: #{resnet_common_branch.19} parent=0 // pred_fallthru
    _
  // Predicated region
  $region18: #{resnet_common_branch.19} parent=0 // pred_check
    _
  $region19: #{resnet_common_branch.19} parent=0 // pred_check_branch
    %982 = sbr.rel (0) target = $region21
  $region20: #{resnet_common_branch.19} parent=0 // pred_region
    _
  $region21: #{resnet_common_branch.19} parent=0 // pred_fallthru
    _

// kernel: resnet_common_branch.21
$region0: #{resnet_common_branch.21}
  #allocation0 [shape = 'u32[]', space=smem, size = 0x4, offset = 0x4, fixed_abs, tag = 'smem constant byte address 0x4 - core index']
  #allocation1 [shape = 'u32[144,128]{1,0:T(1,128)}', space=vmem, size = 0x12000, scoped, tag = 'internal scratch']
  %s0 = inlined_call_operand.vmem [shape: bf16[32,512], index: 0, kind: input, shape index: {}]
  %s1 = inlined_call_operand.vmem [shape: bf16[512,256], index: 1, kind: input, shape index: {}]
  %s2 = inlined_call_operand.vmem [shape: f32[1,256], index: 2, kind: input, shape index: {}]
  %s3 = inlined_call_operand.vmem [shape: bf16[32,256], index: 3, kind: output, shape index: {}]
  %s4 = sld [smem:[#allocation0]]
  $region22: #{resnet_common_branch.21} parent=0
    _
  %s6 = ssub.s32 1, %s4
  %s7 = scalar_select 0, %s6, %s4
  // Predicated region
  $region2: #{resnet_common_branch.21} parent=0 // pred_check
    _
  $region3: #{resnet_common_branch.21} parent=0 // pred_check_branch
    %9 = sbr.rel (0) target = $region5
  $region4: #{resnet_common_branch.21} parent=0 // pred_region
    _
  $region5: #{resnet_common_branch.21} parent=0 // pred_fallthru
    _
  // Predicated region
  $region6: #{resnet_common_branch.21} parent=0 // pred_check
    _
  $region7: #{resnet_common_branch.21} parent=0 // pred_check_branch
    %11 = sbr.rel (0) target = $region9
  $region8: #{resnet_common_branch.21} parent=0 // pred_region
    _
  $region9: #{resnet_common_branch.21} parent=0 // pred_fallthru
    _
  // Predicated region
  $region10: #{resnet_common_branch.21} parent=0 // pred_check
    _
  $region11: #{resnet_common_branch.21} parent=0 // pred_check_branch
    %13 = sbr.rel (0) target = $region13
  $region12: #{resnet_common_branch.21} parent=0 // pred_region
    _
  $region13: #{resnet_common_branch.21} parent=0 // pred_fallthru
    _
  %v14 = vld [vmem:[%s0] sm:$0xff]
  %v15 = vld [vmem:[%s0 + $0x8] sm:$0xff]
  %v16 = vld [vmem:[%s0 + $0x10] sm:$0xff]
  %v17 = vld [vmem:[%s0 + $0x18] sm:$0xff]
  %v18 = vld [vmem:[%s0 + $0x20] sm:$0xff]
  %v19 = vld [vmem:[%s0 + $0x28] sm:$0xff]
  %v20 = vld [vmem:[%s0 + $0x30] sm:$0xff]
  %v21 = vld [vmem:[%s0 + $0x38] sm:$0xff]
  %v22 = vld [vmem:[%s1] sm:$0xff]
  %v23 = vld [vmem:[%s1 + $0x8] sm:$0xff]
  %v24 = vld [vmem:[%s1 + $0x10] sm:$0xff]
  %v25 = vld [vmem:[%s1 + $0x18] sm:$0xff]
  %v26 = vld [vmem:[%s1 + $0x20] sm:$0xff]
  %v27 = vld [vmem:[%s1 + $0x28] sm:$0xff]
  %v28 = vld [vmem:[%s1 + $0x30] sm:$0xff]
  %v29 = vld [vmem:[%s1 + $0x38] sm:$0xff]
  %v30 = vld [vmem:[%s1 + $0x40] sm:$0xff]
  %v31 = vld [vmem:[%s1 + $0x48] sm:$0xff]
  %v32 = vld [vmem:[%s1 + $0x50] sm:$0xff]
  %v33 = vld [vmem:[%s1 + $0x58] sm:$0xff]
  %v34 = vld [vmem:[%s1 + $0x60] sm:$0xff]
  %v35 = vld [vmem:[%s1 + $0x68] sm:$0xff]
  %v36 = vld [vmem:[%s1 + $0x70] sm:$0xff]
  %v37 = vld [vmem:[%s1 + $0x78] sm:$0xff]
  %v38 = vld [vmem:[%s1 + $0x80] sm:$0xff]
  %v39 = vld [vmem:[%s1 + $0x88] sm:$0xff]
  %v40 = vld [vmem:[%s1 + $0x90] sm:$0xff]
  %v41 = vld [vmem:[%s1 + $0x98] sm:$0xff]
  %v42 = vld [vmem:[%s1 + $0xa0] sm:$0xff]
  %v43 = vld [vmem:[%s1 + $0xa8] sm:$0xff]
  %v44 = vld [vmem:[%s1 + $0xb0] sm:$0xff]
  %v45 = vld [vmem:[%s1 + $0xb8] sm:$0xff]
  %v46 = vld [vmem:[%s1 + $0xc0] sm:$0xff]
  %v47 = vld [vmem:[%s1 + $0xc8] sm:$0xff]
  %v48 = vld [vmem:[%s1 + $0xd0] sm:$0xff]
  %v49 = vld [vmem:[%s1 + $0xd8] sm:$0xff]
  %v50 = vld [vmem:[%s1 + $0xe0] sm:$0xff]
  %v51 = vld [vmem:[%s1 + $0xe8] sm:$0xff]
  %v52 = vld [vmem:[%s1 + $0xf0] sm:$0xff]
  %v53 = vld [vmem:[%s1 + $0xf8] sm:$0xff]
  %v54 = vld [vmem:[%s1 + $0x100] sm:$0xff]
  %v55 = vld [vmem:[%s1 + $0x108] sm:$0xff]
  %v56 = vld [vmem:[%s1 + $0x110] sm:$0xff]
  %v57 = vld [vmem:[%s1 + $0x118] sm:$0xff]
  %v58 = vld [vmem:[%s1 + $0x120] sm:$0xff]
  %v59 = vld [vmem:[%s1 + $0x128] sm:$0xff]
  %v60 = vld [vmem:[%s1 + $0x130] sm:$0xff]
  %v61 = vld [vmem:[%s1 + $0x138] sm:$0xff]
  %v62 = vld [vmem:[%s1 + $0x140] sm:$0xff]
  %v63 = vld [vmem:[%s1 + $0x148] sm:$0xff]
  %v64 = vld [vmem:[%s1 + $0x150] sm:$0xff]
  %v65 = vld [vmem:[%s1 + $0x158] sm:$0xff]
  %v66 = vld [vmem:[%s1 + $0x160] sm:$0xff]
  %v67 = vld [vmem:[%s1 + $0x168] sm:$0xff]
  %v68 = vld [vmem:[%s1 + $0x170] sm:$0xff]
  %v69 = vld [vmem:[%s1 + $0x178] sm:$0xff]
  %v70 = vld [vmem:[%s1 + $0x180] sm:$0xff]
  %v71 = vld [vmem:[%s1 + $0x188] sm:$0xff]
  %v72 = vld [vmem:[%s1 + $0x190] sm:$0xff]
  %v73 = vld [vmem:[%s1 + $0x198] sm:$0xff]
  %v74 = vld [vmem:[%s1 + $0x1a0] sm:$0xff]
  %v75 = vld [vmem:[%s1 + $0x1a8] sm:$0xff]
  %v76 = vld [vmem:[%s1 + $0x1b0] sm:$0xff]
  %v77 = vld [vmem:[%s1 + $0x1b8] sm:$0xff]
  %v78 = vld [vmem:[%s1 + $0x1c0] sm:$0xff]
  %v79 = vld [vmem:[%s1 + $0x1c8] sm:$0xff]
  %v80 = vld [vmem:[%s1 + $0x1d0] sm:$0xff]
  %v81 = vld [vmem:[%s1 + $0x1d8] sm:$0xff]
  %v82 = vld [vmem:[%s1 + $0x1e0] sm:$0xff]
  %v83 = vld [vmem:[%s1 + $0x1e8] sm:$0xff]
  %v84 = vld [vmem:[%s1 + $0x1f0] sm:$0xff]
  %v85 = vld [vmem:[%s1 + $0x1f8] sm:$0xff]
  %v86 = vld [vmem:[%s2] sm:$0x3]
  %v88 = vlaneseq
  %v89 = vshrl.u32 %v88, 7
  %v90 = vsub.s32 0, %v89
  %v91 = vrot.slane %v86, %v90
  %v92 = vlaneseq
  %v93 = vshrl.u32 %v92, 7
  %v94 = vsub.s32 1, %v93
  %v95 = vrot.slane %v86, %v94
  %v106 = vunpack.c.l.b16 %v14
  %v107 = vunpack.c.h.b16 %v14
  %v108 = vunpack.c.l.b16 %v15
  %v109 = vunpack.c.h.b16 %v15
  %v110 = vunpack.c.l.b16 %v16
  %v111 = vunpack.c.h.b16 %v16
  %v112 = vunpack.c.l.b16 %v17
  %v113 = vunpack.c.h.b16 %v17
  %v114 = vunpack.c.l.b16 %v18
  %v115 = vunpack.c.h.b16 %v18
  %v116 = vunpack.c.l.b16 %v19
  %v117 = vunpack.c.h.b16 %v19
  %v118 = vunpack.c.l.b16 %v20
  %v119 = vunpack.c.h.b16 %v20
  %v120 = vunpack.c.l.b16 %v21
  %v121 = vunpack.c.h.b16 %v21
  %v122 = vpack.c.b16 %v110, %v106
  %v123 = vpack.c.b16 %v111, %v107
  %v124 = vpack.c.b16 %v112, %v108
  %v125 = vpack.c.b16 %v113, %v109
  %v126 = vpack.c.b16 %v118, %v114
  %v127 = vpack.c.b16 %v119, %v115
  %v128 = vpack.c.b16 %v120, %v116
  %v129 = vpack.c.b16 %v121, %v117
  %v202 = vunpack.c.l.b16 %v22
  %v203 = vunpack.c.h.b16 %v22
  %v204 = vunpack.c.l.b16 %v23
  %v205 = vunpack.c.h.b16 %v23
  %v206 = vunpack.c.l.b16 %v24
  %v207 = vunpack.c.h.b16 %v24
  %v208 = vunpack.c.l.b16 %v25
  %v209 = vunpack.c.h.b16 %v25
  %v210 = vunpack.c.l.b16 %v26
  %v211 = vunpack.c.h.b16 %v26
  %v212 = vunpack.c.l.b16 %v27
  %v213 = vunpack.c.h.b16 %v27
  %v214 = vunpack.c.l.b16 %v28
  %v215 = vunpack.c.h.b16 %v28
  %v216 = vunpack.c.l.b16 %v29
  %v217 = vunpack.c.h.b16 %v29
  %v218 = vunpack.c.l.b16 %v30
  %v219 = vunpack.c.h.b16 %v30
  %v220 = vunpack.c.l.b16 %v31
  %v221 = vunpack.c.h.b16 %v31
  %v222 = vunpack.c.l.b16 %v32
  %v223 = vunpack.c.h.b16 %v32
  %v224 = vunpack.c.l.b16 %v33
  %v225 = vunpack.c.h.b16 %v33
  %v226 = vunpack.c.l.b16 %v34
  %v227 = vunpack.c.h.b16 %v34
  %v228 = vunpack.c.l.b16 %v35
  %v229 = vunpack.c.h.b16 %v35
  %v230 = vunpack.c.l.b16 %v36
  %v231 = vunpack.c.h.b16 %v36
  %v232 = vunpack.c.l.b16 %v37
  %v233 = vunpack.c.h.b16 %v37
  %v234 = vunpack.c.l.b16 %v38
  %v235 = vunpack.c.h.b16 %v38
  %v236 = vunpack.c.l.b16 %v39
  %v237 = vunpack.c.h.b16 %v39
  %v238 = vunpack.c.l.b16 %v40
  %v239 = vunpack.c.h.b16 %v40
  %v240 = vunpack.c.l.b16 %v41
  %v241 = vunpack.c.h.b16 %v41
  %v242 = vunpack.c.l.b16 %v42
  %v243 = vunpack.c.h.b16 %v42
  %v244 = vunpack.c.l.b16 %v43
  %v245 = vunpack.c.h.b16 %v43
  %v246 = vunpack.c.l.b16 %v44
  %v247 = vunpack.c.h.b16 %v44
  %v248 = vunpack.c.l.b16 %v45
  %v249 = vunpack.c.h.b16 %v45
  %v250 = vunpack.c.l.b16 %v46
  %v251 = vunpack.c.h.b16 %v46
  %v252 = vunpack.c.l.b16 %v47
  %v253 = vunpack.c.h.b16 %v47
  %v254 = vunpack.c.l.b16 %v48
  %v255 = vunpack.c.h.b16 %v48
  %v256 = vunpack.c.l.b16 %v49
  %v257 = vunpack.c.h.b16 %v49
  %v258 = vunpack.c.l.b16 %v50
  %v259 = vunpack.c.h.b16 %v50
  %v260 = vunpack.c.l.b16 %v51
  %v261 = vunpack.c.h.b16 %v51
  %v262 = vunpack.c.l.b16 %v52
  %v263 = vunpack.c.h.b16 %v52
  %v264 = vunpack.c.l.b16 %v53
  %v265 = vunpack.c.h.b16 %v53
  %v266 = vunpack.c.l.b16 %v54
  %v267 = vunpack.c.h.b16 %v54
  %v268 = vunpack.c.l.b16 %v55
  %v269 = vunpack.c.h.b16 %v55
  %v270 = vunpack.c.l.b16 %v56
  %v271 = vunpack.c.h.b16 %v56
  %v272 = vunpack.c.l.b16 %v57
  %v273 = vunpack.c.h.b16 %v57
  %v274 = vunpack.c.l.b16 %v58
  %v275 = vunpack.c.h.b16 %v58
  %v276 = vunpack.c.l.b16 %v59
  %v277 = vunpack.c.h.b16 %v59
  %v278 = vunpack.c.l.b16 %v60
  %v279 = vunpack.c.h.b16 %v60
  %v280 = vunpack.c.l.b16 %v61
  %v281 = vunpack.c.h.b16 %v61
  %v282 = vunpack.c.l.b16 %v62
  %v283 = vunpack.c.h.b16 %v62
  %v284 = vunpack.c.l.b16 %v63
  %v285 = vunpack.c.h.b16 %v63
  %v286 = vunpack.c.l.b16 %v64
  %v287 = vunpack.c.h.b16 %v64
  %v288 = vunpack.c.l.b16 %v65
  %v289 = vunpack.c.h.b16 %v65
  %v290 = vunpack.c.l.b16 %v66
  %v291 = vunpack.c.h.b16 %v66
  %v292 = vunpack.c.l.b16 %v67
  %v293 = vunpack.c.h.b16 %v67
  %v294 = vunpack.c.l.b16 %v68
  %v295 = vunpack.c.h.b16 %v68
  %v296 = vunpack.c.l.b16 %v69
  %v297 = vunpack.c.h.b16 %v69
  %v298 = vunpack.c.l.b16 %v70
  %v299 = vunpack.c.h.b16 %v70
  %v300 = vunpack.c.l.b16 %v71
  %v301 = vunpack.c.h.b16 %v71
  %v302 = vunpack.c.l.b16 %v72
  %v303 = vunpack.c.h.b16 %v72
  %v304 = vunpack.c.l.b16 %v73
  %v305 = vunpack.c.h.b16 %v73
  %v306 = vunpack.c.l.b16 %v74
  %v307 = vunpack.c.h.b16 %v74
  %v308 = vunpack.c.l.b16 %v75
  %v309 = vunpack.c.h.b16 %v75
  %v310 = vunpack.c.l.b16 %v76
  %v311 = vunpack.c.h.b16 %v76
  %v312 = vunpack.c.l.b16 %v77
  %v313 = vunpack.c.h.b16 %v77
  %v314 = vunpack.c.l.b16 %v78
  %v315 = vunpack.c.h.b16 %v78
  %v316 = vunpack.c.l.b16 %v79
  %v317 = vunpack.c.h.b16 %v79
  %v318 = vunpack.c.l.b16 %v80
  %v319 = vunpack.c.h.b16 %v80
  %v320 = vunpack.c.l.b16 %v81
  %v321 = vunpack.c.h.b16 %v81
  %v322 = vunpack.c.l.b16 %v82
  %v323 = vunpack.c.h.b16 %v82
  %v324 = vunpack.c.l.b16 %v83
  %v325 = vunpack.c.h.b16 %v83
  %v326 = vunpack.c.l.b16 %v84
  %v327 = vunpack.c.h.b16 %v84
  %v328 = vunpack.c.l.b16 %v85
  %v329 = vunpack.c.h.b16 %v85
  %v330 = vpack.c.b16 %v204, %v202
  %v331 = vpack.c.b16 %v205, %v203
  %v332 = vpack.c.b16 %v208, %v206
  %v333 = vpack.c.b16 %v209, %v207
  %v334 = vpack.c.b16 %v212, %v210
  %v335 = vpack.c.b16 %v213, %v211
  %v336 = vpack.c.b16 %v216, %v214
  %v337 = vpack.c.b16 %v217, %v215
  %v338 = vpack.c.b16 %v220, %v218
  %v339 = vpack.c.b16 %v221, %v219
  %v340 = vpack.c.b16 %v224, %v222
  %v341 = vpack.c.b16 %v225, %v223
  %v342 = vpack.c.b16 %v228, %v226
  %v343 = vpack.c.b16 %v229, %v227
  %v344 = vpack.c.b16 %v232, %v230
  %v345 = vpack.c.b16 %v233, %v231
  %v346 = vpack.c.b16 %v236, %v234
  %v347 = vpack.c.b16 %v237, %v235
  %v348 = vpack.c.b16 %v240, %v238
  %v349 = vpack.c.b16 %v241, %v239
  %v350 = vpack.c.b16 %v244, %v242
  %v351 = vpack.c.b16 %v245, %v243
  %v352 = vpack.c.b16 %v248, %v246
  %v353 = vpack.c.b16 %v249, %v247
  %v354 = vpack.c.b16 %v252, %v250
  %v355 = vpack.c.b16 %v253, %v251
  %v356 = vpack.c.b16 %v256, %v254
  %v357 = vpack.c.b16 %v257, %v255
  %v358 = vpack.c.b16 %v260, %v258
  %v359 = vpack.c.b16 %v261, %v259
  %v360 = vpack.c.b16 %v264, %v262
  %v361 = vpack.c.b16 %v265, %v263
  %v362 = vpack.c.b16 %v268, %v266
  %v363 = vpack.c.b16 %v269, %v267
  %v364 = vpack.c.b16 %v272, %v270
  %v365 = vpack.c.b16 %v273, %v271
  %v366 = vpack.c.b16 %v276, %v274
  %v367 = vpack.c.b16 %v277, %v275
  %v368 = vpack.c.b16 %v280, %v278
  %v369 = vpack.c.b16 %v281, %v279
  %v370 = vpack.c.b16 %v284, %v282
  %v371 = vpack.c.b16 %v285, %v283
  %v372 = vpack.c.b16 %v288, %v286
  %v373 = vpack.c.b16 %v289, %v287
  %v374 = vpack.c.b16 %v292, %v290
  %v375 = vpack.c.b16 %v293, %v291
  %v376 = vpack.c.b16 %v296, %v294
  %v377 = vpack.c.b16 %v297, %v295
  %v378 = vpack.c.b16 %v300, %v298
  %v379 = vpack.c.b16 %v301, %v299
  %v380 = vpack.c.b16 %v304, %v302
  %v381 = vpack.c.b16 %v305, %v303
  %v382 = vpack.c.b16 %v308, %v306
  %v383 = vpack.c.b16 %v309, %v307
  %v384 = vpack.c.b16 %v312, %v310
  %v385 = vpack.c.b16 %v313, %v311
  %v386 = vpack.c.b16 %v316, %v314
  %v387 = vpack.c.b16 %v317, %v315
  %v388 = vpack.c.b16 %v320, %v318
  %v389 = vpack.c.b16 %v321, %v319
  %v390 = vpack.c.b16 %v324, %v322
  %v391 = vpack.c.b16 %v325, %v323
  %v392 = vpack.c.b16 %v328, %v326
  %v393 = vpack.c.b16 %v329, %v327
  %458 = vmatprep.subr.bf16.mxu0 %v331
  %459 = vmatpush1.bf16.msra.mxu0 %v330
  %460 = vmatprep.subr.bf16.mxu0 %v333
  %461 = vmatpush1.bf16.msra.mxu0 %v332
  %462 = vmatprep.subr.bf16.mxu0 %v335
  %463 = vmatpush1.bf16.msra.mxu0 %v334
  %464 = vmatprep.subr.bf16.mxu0 %v337
  %465 = vmatpush1.bf16.msra.mxu0 %v336
  %466 = vmatprep.subr.bf16.mxu0 %v339
  %467 = vmatpush1.bf16.msra.mxu0 %v338
  %468 = vmatprep.subr.bf16.mxu0 %v341
  %469 = vmatpush1.bf16.msra.mxu0 %v340
  %470 = vmatprep.subr.bf16.mxu0 %v343
  %471 = vmatpush1.bf16.msra.mxu0 %v342
  %472 = vmatprep.subr.bf16.mxu0 %v345
  %473 = vmatpush1.bf16.msra.mxu0 %v344
  %474 = vmatprep.subr.bf16.mxu0 %v347
  %475 = vmatpush1.bf16.msra.mxu0 %v346
  %476 = vmatprep.subr.bf16.mxu0 %v349
  %477 = vmatpush1.bf16.msra.mxu0 %v348
  %478 = vmatprep.subr.bf16.mxu0 %v351
  %479 = vmatpush1.bf16.msra.mxu0 %v350
  %480 = vmatprep.subr.bf16.mxu0 %v353
  %481 = vmatpush1.bf16.msra.mxu0 %v352
  %482 = vmatprep.subr.bf16.mxu0 %v355
  %483 = vmatpush1.bf16.msra.mxu0 %v354
  %484 = vmatprep.subr.bf16.mxu0 %v357
  %485 = vmatpush1.bf16.msra.mxu0 %v356
  %486 = vmatprep.subr.bf16.mxu0 %v359
  %487 = vmatpush1.bf16.msra.mxu0 %v358
  %488 = vmatprep.subr.bf16.mxu0 %v361
  %489 = vmatpush1.bf16.msra.mxu0 %v360
  %490 = vmatprep.mubr.bf16.mxu0 %v123
  %491 = vmatmul.mubr.bf16.gmra.mrb[0].mxu0 %v122
  %v492 = vpop.f32.mrb[0].mxu0
  %v493 = vadd.f32 %v91, %v492
  %v494 = vpop.f32.mrb[0].mxu0
  %v495 = vadd.f32 %v95, %v494
  %v496 = vpop.f32.mrb[0].mxu0
  %v497 = vadd.f32 %v91, %v496
  %v498 = vpop.f32.mrb[0].mxu0
  %v499 = vadd.f32 %v95, %v498
  %500 = vmatprep.mubr.bf16.mxu0 %v127
  %501 = vmatmul.mubr.bf16.gmra.mrb[0].mxu0 %v126
  %v502 = vpop.f32.mrb[0].mxu0
  %v503 = vadd.f32 %v91, %v502
  %v504 = vpop.f32.mrb[0].mxu0
  %v505 = vadd.f32 %v95, %v504
  %v506 = vpop.f32.mrb[0].mxu0
  %v507 = vadd.f32 %v91, %v506
  %v508 = vpop.f32.mrb[0].mxu0
  %v509 = vadd.f32 %v95, %v508
  %510 = vdwg.mxu0
  %511 = vmatprep.subr.bf16.mxu0 %v363
  %512 = vmatpush1.bf16.msra.mxu0 %v362
  %513 = vmatprep.subr.bf16.mxu0 %v365
  %514 = vmatpush1.bf16.msra.mxu0 %v364
  %515 = vmatprep.subr.bf16.mxu0 %v367
  %516 = vmatpush1.bf16.msra.mxu0 %v366
  %517 = vmatprep.subr.bf16.mxu0 %v369
  %518 = vmatpush1.bf16.msra.mxu0 %v368
  %519 = vmatprep.subr.bf16.mxu0 %v371
  %520 = vmatpush1.bf16.msra.mxu0 %v370
  %521 = vmatprep.subr.bf16.mxu0 %v373
  %522 = vmatpush1.bf16.msra.mxu0 %v372
  %523 = vmatprep.subr.bf16.mxu0 %v375
  %524 = vmatpush1.bf16.msra.mxu0 %v374
  %525 = vmatprep.subr.bf16.mxu0 %v377
  %526 = vmatpush1.bf16.msra.mxu0 %v376
  %527 = vmatprep.subr.bf16.mxu0 %v379
  %528 = vmatpush1.bf16.msra.mxu0 %v378
  %529 = vmatprep.subr.bf16.mxu0 %v381
  %530 = vmatpush1.bf16.msra.mxu0 %v380
  %531 = vmatprep.subr.bf16.mxu0 %v383
  %532 = vmatpush1.bf16.msra.mxu0 %v382
  %533 = vmatprep.subr.bf16.mxu0 %v385
  %534 = vmatpush1.bf16.msra.mxu0 %v384
  %535 = vmatprep.subr.bf16.mxu0 %v387
  %536 = vmatpush1.bf16.msra.mxu0 %v386
  %537 = vmatprep.subr.bf16.mxu0 %v389
  %538 = vmatpush1.bf16.msra.mxu0 %v388
  %539 = vmatprep.subr.bf16.mxu0 %v391
  %540 = vmatpush1.bf16.msra.mxu0 %v390
  %541 = vmatprep.subr.bf16.mxu0 %v393
  %542 = vmatpush1.bf16.msra.mxu0 %v392
  %543 = vmatprep.mubr.bf16.mxu0 %v125
  %544 = vmatmul.mubr.bf16.gmra.mrb[0].mxu0 %v124
  %v545 = vpop.f32.mrb[0].mxu0
  %v546 = vadd.f32 %v493, %v545
  %v547 = vpop.f32.mrb[0].mxu0
  %v548 = vadd.f32 %v495, %v547
  %v549 = vpop.f32.mrb[0].mxu0
  %v550 = vadd.f32 %v497, %v549
  %v551 = vpop.f32.mrb[0].mxu0
  %v552 = vadd.f32 %v499, %v551
  %553 = vmatprep.mubr.bf16.mxu0 %v129
  %554 = vmatmul.mubr.bf16.gmra.mrb[0].mxu0 %v128
  %v555 = vpop.f32.mrb[0].mxu0
  %v556 = vadd.f32 %v503, %v555
  %v557 = vpop.f32.mrb[0].mxu0
  %v558 = vadd.f32 %v505, %v557
  %v559 = vpop.f32.mrb[0].mxu0
  %v560 = vadd.f32 %v507, %v559
  %v561 = vpop.f32.mrb[0].mxu0
  %v562 = vadd.f32 %v509, %v561
  %563 = vdwg.mxu0
  %v564 = vmax.f32 %v546, 0.0
  %v565 = vmax.f32 %v548, 0.0
  %v566 = vmax.f32 %v550, 0.0
  %v567 = vmax.f32 %v552, 0.0
  %v568 = vmax.f32 %v556, 0.0
  %v569 = vmax.f32 %v558, 0.0
  %v570 = vmax.f32 %v560, 0.0
  %v571 = vmax.f32 %v562, 0.0
  %v572 = vpack.c.bf16 %v566, %v564
  %v573 = vpack.c.bf16 %v567, %v565
  %v574 = vpack.c.bf16 %v570, %v568
  %v575 = vpack.c.bf16 %v571, %v569
  %v580 = vunpack.c.l.b16 %v572
  %v581 = vunpack.c.l.b16 %v573
  %v582 = vunpack.c.h.b16 %v572
  %v583 = vunpack.c.h.b16 %v573
  %v584 = vunpack.c.l.b16 %v574
  %v585 = vunpack.c.l.b16 %v575
  %v586 = vunpack.c.h.b16 %v574
  %v587 = vunpack.c.h.b16 %v575
  %v588 = vpack.c.b16 %v581, %v580
  %v589 = vpack.c.b16 %v583, %v582
  %v590 = vpack.c.b16 %v585, %v584
  %v591 = vpack.c.b16 %v587, %v586
  %596 = vst [vmem:[%s3] sm:$0xff] %v588
  %597 = vst [vmem:[%s3 + $0x8] sm:$0xff] %v589
  %598 = vst [vmem:[%s3 + $0x10] sm:$0xff] %v590
  %599 = vst [vmem:[%s3 + $0x18] sm:$0xff] %v591
  // Predicated region
  $region14: #{resnet_common_branch.21} parent=0 // pred_check
    _
  $region15: #{resnet_common_branch.21} parent=0 // pred_check_branch
    %601 = sbr.rel (0) target = $region17
  $region16: #{resnet_common_branch.21} parent=0 // pred_region
    _
  $region17: #{resnet_common_branch.21} parent=0 // pred_fallthru
    _
  // Predicated region
  $region18: #{resnet_common_branch.21} parent=0 // pred_check
    _
  $region19: #{resnet_common_branch.21} parent=0 // pred_check_branch
    %603 = sbr.rel (0) target = $region21
  $region20: #{resnet_common_branch.21} parent=0 // pred_region
    _
  $region21: #{resnet_common_branch.21} parent=0 // pred_fallthru
    _

// kernel: resnet_common_branch.22
$region0: #{resnet_common_branch.22}
  #allocation0 [shape = 'u32[]', space=smem, size = 0x4, offset = 0x4, fixed_abs, tag = 'smem constant byte address 0x4 - core index']
  #allocation1 [shape = 'u32[144,128]{1,0:T(1,128)}', space=vmem, size = 0x12000, scoped, tag = 'internal scratch']
  %s0 = inlined_call_operand.vmem [shape: bf16[8,2304], index: 0, kind: input, shape index: {}]
  %s1 = inlined_call_operand.vmem [shape: bf16[2304,256], index: 1, kind: input, shape index: {}]
  %s2 = inlined_call_operand.vmem [shape: f32[1,256], index: 2, kind: input, shape index: {}]
  %s3 = inlined_call_operand.vmem [shape: bf16[8,256], index: 3, kind: output, shape index: {}]
  %s4 = sld [smem:[#allocation0]]
  $region22: #{resnet_common_branch.22} parent=0
    _
  %s6 = ssub.s32 1, %s4
  %s7 = scalar_select 0, %s6, %s4
  // Predicated region
  $region2: #{resnet_common_branch.22} parent=0 // pred_check
    _
  $region3: #{resnet_common_branch.22} parent=0 // pred_check_branch
    %9 = sbr.rel (0) target = $region5
  $region4: #{resnet_common_branch.22} parent=0 // pred_region
    _
  $region5: #{resnet_common_branch.22} parent=0 // pred_fallthru
    _
  // Predicated region
  $region6: #{resnet_common_branch.22} parent=0 // pred_check
    _
  $region7: #{resnet_common_branch.22} parent=0 // pred_check_branch
    %11 = sbr.rel (0) target = $region9
  $region8: #{resnet_common_branch.22} parent=0 // pred_region
    _
  $region9: #{resnet_common_branch.22} parent=0 // pred_fallthru
    _
  // Predicated region
  $region10: #{resnet_common_branch.22} parent=0 // pred_check
    _
  $region11: #{resnet_common_branch.22} parent=0 // pred_check_branch
    %13 = sbr.rel (0) target = $region13
  $region12: #{resnet_common_branch.22} parent=0 // pred_region
    _
  $region13: #{resnet_common_branch.22} parent=0 // pred_fallthru
    _
  %v14 = vld [vmem:[%s0] sm:$0xff]
  %v15 = vld [vmem:[%s0 + $0x8] sm:$0xff]
  %v16 = vld [vmem:[%s0 + $0x10] sm:$0xff]
  %v17 = vld [vmem:[%s0 + $0x18] sm:$0xff]
  %v18 = vld [vmem:[%s0 + $0x20] sm:$0xff]
  %v19 = vld [vmem:[%s0 + $0x28] sm:$0xff]
  %v20 = vld [vmem:[%s0 + $0x30] sm:$0xff]
  %v21 = vld [vmem:[%s0 + $0x38] sm:$0xff]
  %v22 = vld [vmem:[%s0 + $0x40] sm:$0xff]
  %v23 = vld [vmem:[%s1] sm:$0xff]
  %v24 = vld [vmem:[%s1 + $0x8] sm:$0xff]
  %v25 = vld [vmem:[%s1 + $0x10] sm:$0xff]
  %v26 = vld [vmem:[%s1 + $0x18] sm:$0xff]
  %v27 = vld [vmem:[%s1 + $0x20] sm:$0xff]
  %v28 = vld [vmem:[%s1 + $0x28] sm:$0xff]
  %v29 = vld [vmem:[%s1 + $0x30] sm:$0xff]
  %v30 = vld [vmem:[%s1 + $0x38] sm:$0xff]
  %v31 = vld [vmem:[%s1 + $0x40] sm:$0xff]
  %v32 = vld [vmem:[%s1 + $0x48] sm:$0xff]
  %v33 = vld [vmem:[%s1 + $0x50] sm:$0xff]
  %v34 = vld [vmem:[%s1 + $0x58] sm:$0xff]
  %v35 = vld [vmem:[%s1 + $0x60] sm:$0xff]
  %v36 = vld [vmem:[%s1 + $0x68] sm:$0xff]
  %v37 = vld [vmem:[%s1 + $0x70] sm:$0xff]
  %v38 = vld [vmem:[%s1 + $0x78] sm:$0xff]
  %v39 = vld [vmem:[%s1 + $0x80] sm:$0xff]
  %v40 = vld [vmem:[%s1 + $0x88] sm:$0xff]
  %v41 = vld [vmem:[%s1 + $0x90] sm:$0xff]
  %v42 = vld [vmem:[%s1 + $0x98] sm:$0xff]
  %v43 = vld [vmem:[%s1 + $0xa0] sm:$0xff]
  %v44 = vld [vmem:[%s1 + $0xa8] sm:$0xff]
  %v45 = vld [vmem:[%s1 + $0xb0] sm:$0xff]
  %v46 = vld [vmem:[%s1 + $0xb8] sm:$0xff]
  %v47 = vld [vmem:[%s1 + $0xc0] sm:$0xff]
  %v48 = vld [vmem:[%s1 + $0xc8] sm:$0xff]
  %v49 = vld [vmem:[%s1 + $0xd0] sm:$0xff]
  %v50 = vld [vmem:[%s1 + $0xd8] sm:$0xff]
  %v51 = vld [vmem:[%s1 + $0xe0] sm:$0xff]
  %v52 = vld [vmem:[%s1 + $0xe8] sm:$0xff]
  %v53 = vld [vmem:[%s1 + $0xf0] sm:$0xff]
  %v54 = vld [vmem:[%s1 + $0xf8] sm:$0xff]
  %v55 = vld [vmem:[%s1 + $0x100] sm:$0xff]
  %v56 = vld [vmem:[%s1 + $0x108] sm:$0xff]
  %v57 = vld [vmem:[%s1 + $0x110] sm:$0xff]
  %v58 = vld [vmem:[%s1 + $0x118] sm:$0xff]
  %v59 = vld [vmem:[%s1 + $0x120] sm:$0xff]
  %v60 = vld [vmem:[%s1 + $0x128] sm:$0xff]
  %v61 = vld [vmem:[%s1 + $0x130] sm:$0xff]
  %v62 = vld [vmem:[%s1 + $0x138] sm:$0xff]
  %v63 = vld [vmem:[%s1 + $0x140] sm:$0xff]
  %v64 = vld [vmem:[%s1 + $0x148] sm:$0xff]
  %v65 = vld [vmem:[%s1 + $0x150] sm:$0xff]
  %v66 = vld [vmem:[%s1 + $0x158] sm:$0xff]
  %v67 = vld [vmem:[%s1 + $0x160] sm:$0xff]
  %v68 = vld [vmem:[%s1 + $0x168] sm:$0xff]
  %v69 = vld [vmem:[%s1 + $0x170] sm:$0xff]
  %v70 = vld [vmem:[%s1 + $0x178] sm:$0xff]
  %v71 = vld [vmem:[%s1 + $0x180] sm:$0xff]
  %v72 = vld [vmem:[%s1 + $0x188] sm:$0xff]
  %v73 = vld [vmem:[%s1 + $0x190] sm:$0xff]
  %v74 = vld [vmem:[%s1 + $0x198] sm:$0xff]
  %v75 = vld [vmem:[%s1 + $0x1a0] sm:$0xff]
  %v76 = vld [vmem:[%s1 + $0x1a8] sm:$0xff]
  %v77 = vld [vmem:[%s1 + $0x1b0] sm:$0xff]
  %v78 = vld [vmem:[%s1 + $0x1b8] sm:$0xff]
  %v79 = vld [vmem:[%s1 + $0x1c0] sm:$0xff]
  %v80 = vld [vmem:[%s1 + $0x1c8] sm:$0xff]
  %v81 = vld [vmem:[%s1 + $0x1d0] sm:$0xff]
  %v82 = vld [vmem:[%s1 + $0x1d8] sm:$0xff]
  %v83 = vld [vmem:[%s1 + $0x1e0] sm:$0xff]
  %v84 = vld [vmem:[%s1 + $0x1e8] sm:$0xff]
  %v85 = vld [vmem:[%s1 + $0x1f0] sm:$0xff]
  %v86 = vld [vmem:[%s1 + $0x1f8] sm:$0xff]
  %v87 = vld [vmem:[%s1 + $0x200] sm:$0xff]
  %v88 = vld [vmem:[%s1 + $0x208] sm:$0xff]
  %v89 = vld [vmem:[%s1 + $0x210] sm:$0xff]
  %v90 = vld [vmem:[%s1 + $0x218] sm:$0xff]
  %v91 = vld [vmem:[%s1 + $0x220] sm:$0xff]
  %v92 = vld [vmem:[%s1 + $0x228] sm:$0xff]
  %v93 = vld [vmem:[%s1 + $0x230] sm:$0xff]
  %v94 = vld [vmem:[%s1 + $0x238] sm:$0xff]
  %v95 = vld [vmem:[%s1 + $0x240] sm:$0xff]
  %v96 = vld [vmem:[%s1 + $0x248] sm:$0xff]
  %v97 = vld [vmem:[%s1 + $0x250] sm:$0xff]
  %v98 = vld [vmem:[%s1 + $0x258] sm:$0xff]
  %v99 = vld [vmem:[%s1 + $0x260] sm:$0xff]
  %v100 = vld [vmem:[%s1 + $0x268] sm:$0xff]
  %v101 = vld [vmem:[%s1 + $0x270] sm:$0xff]
  %v102 = vld [vmem:[%s1 + $0x278] sm:$0xff]
  %v103 = vld [vmem:[%s1 + $0x280] sm:$0xff]
  %v104 = vld [vmem:[%s1 + $0x288] sm:$0xff]
  %v105 = vld [vmem:[%s1 + $0x290] sm:$0xff]
  %v106 = vld [vmem:[%s1 + $0x298] sm:$0xff]
  %v107 = vld [vmem:[%s1 + $0x2a0] sm:$0xff]
  %v108 = vld [vmem:[%s1 + $0x2a8] sm:$0xff]
  %v109 = vld [vmem:[%s1 + $0x2b0] sm:$0xff]
  %v110 = vld [vmem:[%s1 + $0x2b8] sm:$0xff]
  %v111 = vld [vmem:[%s1 + $0x2c0] sm:$0xff]
  %v112 = vld [vmem:[%s1 + $0x2c8] sm:$0xff]
  %v113 = vld [vmem:[%s1 + $0x2d0] sm:$0xff]
  %v114 = vld [vmem:[%s1 + $0x2d8] sm:$0xff]
  %v115 = vld [vmem:[%s1 + $0x2e0] sm:$0xff]
  %v116 = vld [vmem:[%s1 + $0x2e8] sm:$0xff]
  %v117 = vld [vmem:[%s1 + $0x2f0] sm:$0xff]
  %v118 = vld [vmem:[%s1 + $0x2f8] sm:$0xff]
  %v119 = vld [vmem:[%s1 + $0x300] sm:$0xff]
  %v120 = vld [vmem:[%s1 + $0x308] sm:$0xff]
  %v121 = vld [vmem:[%s1 + $0x310] sm:$0xff]
  %v122 = vld [vmem:[%s1 + $0x318] sm:$0xff]
  %v123 = vld [vmem:[%s1 + $0x320] sm:$0xff]
  %v124 = vld [vmem:[%s1 + $0x328] sm:$0xff]
  %v125 = vld [vmem:[%s1 + $0x330] sm:$0xff]
  %v126 = vld [vmem:[%s1 + $0x338] sm:$0xff]
  %v127 = vld [vmem:[%s1 + $0x340] sm:$0xff]
  %v128 = vld [vmem:[%s1 + $0x348] sm:$0xff]
  %v129 = vld [vmem:[%s1 + $0x350] sm:$0xff]
  %v130 = vld [vmem:[%s1 + $0x358] sm:$0xff]
  %v131 = vld [vmem:[%s1 + $0x360] sm:$0xff]
  %v132 = vld [vmem:[%s1 + $0x368] sm:$0xff]
  %v133 = vld [vmem:[%s1 + $0x370] sm:$0xff]
  %v134 = vld [vmem:[%s1 + $0x378] sm:$0xff]
  %v135 = vld [vmem:[%s1 + $0x380] sm:$0xff]
  %v136 = vld [vmem:[%s1 + $0x388] sm:$0xff]
  %v137 = vld [vmem:[%s1 + $0x390] sm:$0xff]
  %v138 = vld [vmem:[%s1 + $0x398] sm:$0xff]
  %v139 = vld [vmem:[%s1 + $0x3a0] sm:$0xff]
  %v140 = vld [vmem:[%s1 + $0x3a8] sm:$0xff]
  %v141 = vld [vmem:[%s1 + $0x3b0] sm:$0xff]
  %v142 = vld [vmem:[%s1 + $0x3b8] sm:$0xff]
  %v143 = vld [vmem:[%s1 + $0x3c0] sm:$0xff]
  %v144 = vld [vmem:[%s1 + $0x3c8] sm:$0xff]
  %v145 = vld [vmem:[%s1 + $0x3d0] sm:$0xff]
  %v146 = vld [vmem:[%s1 + $0x3d8] sm:$0xff]
  %v147 = vld [vmem:[%s1 + $0x3e0] sm:$0xff]
  %v148 = vld [vmem:[%s1 + $0x3e8] sm:$0xff]
  %v149 = vld [vmem:[%s1 + $0x3f0] sm:$0xff]
  %v150 = vld [vmem:[%s1 + $0x3f8] sm:$0xff]
  %v151 = vld [vmem:[%s1 + $0x400] sm:$0xff]
  %v152 = vld [vmem:[%s1 + $0x408] sm:$0xff]
  %v153 = vld [vmem:[%s1 + $0x410] sm:$0xff]
  %v154 = vld [vmem:[%s1 + $0x418] sm:$0xff]
  %v155 = vld [vmem:[%s1 + $0x420] sm:$0xff]
  %v156 = vld [vmem:[%s1 + $0x428] sm:$0xff]
  %v157 = vld [vmem:[%s1 + $0x430] sm:$0xff]
  %v158 = vld [vmem:[%s1 + $0x438] sm:$0xff]
  %v159 = vld [vmem:[%s1 + $0x440] sm:$0xff]
  %v160 = vld [vmem:[%s1 + $0x448] sm:$0xff]
  %v161 = vld [vmem:[%s1 + $0x450] sm:$0xff]
  %v162 = vld [vmem:[%s1 + $0x458] sm:$0xff]
  %v163 = vld [vmem:[%s1 + $0x460] sm:$0xff]
  %v164 = vld [vmem:[%s1 + $0x468] sm:$0xff]
  %v165 = vld [vmem:[%s1 + $0x470] sm:$0xff]
  %v166 = vld [vmem:[%s1 + $0x478] sm:$0xff]
  %v167 = vld [vmem:[%s1 + $0x480] sm:$0xff]
  %v168 = vld [vmem:[%s1 + $0x488] sm:$0xff]
  %v169 = vld [vmem:[%s1 + $0x490] sm:$0xff]
  %v170 = vld [vmem:[%s1 + $0x498] sm:$0xff]
  %v171 = vld [vmem:[%s1 + $0x4a0] sm:$0xff]
  %v172 = vld [vmem:[%s1 + $0x4a8] sm:$0xff]
  %v173 = vld [vmem:[%s1 + $0x4b0] sm:$0xff]
  %v174 = vld [vmem:[%s1 + $0x4b8] sm:$0xff]
  %v175 = vld [vmem:[%s1 + $0x4c0] sm:$0xff]
  %v176 = vld [vmem:[%s1 + $0x4c8] sm:$0xff]
  %v177 = vld [vmem:[%s1 + $0x4d0] sm:$0xff]
  %v178 = vld [vmem:[%s1 + $0x4d8] sm:$0xff]
  %v179 = vld [vmem:[%s1 + $0x4e0] sm:$0xff]
  %v180 = vld [vmem:[%s1 + $0x4e8] sm:$0xff]
  %v181 = vld [vmem:[%s1 + $0x4f0] sm:$0xff]
  %v182 = vld [vmem:[%s1 + $0x4f8] sm:$0xff]
  %v183 = vld [vmem:[%s1 + $0x500] sm:$0xff]
  %v184 = vld [vmem:[%s1 + $0x508] sm:$0xff]
  %v185 = vld [vmem:[%s1 + $0x510] sm:$0xff]
  %v186 = vld [vmem:[%s1 + $0x518] sm:$0xff]
  %v187 = vld [vmem:[%s1 + $0x520] sm:$0xff]
  %v188 = vld [vmem:[%s1 + $0x528] sm:$0xff]
  %v189 = vld [vmem:[%s1 + $0x530] sm:$0xff]
  %v190 = vld [vmem:[%s1 + $0x538] sm:$0xff]
  %v191 = vld [vmem:[%s1 + $0x540] sm:$0xff]
  %v192 = vld [vmem:[%s1 + $0x548] sm:$0xff]
  %v193 = vld [vmem:[%s1 + $0x550] sm:$0xff]
  %v194 = vld [vmem:[%s1 + $0x558] sm:$0xff]
  %v195 = vld [vmem:[%s1 + $0x560] sm:$0xff]
  %v196 = vld [vmem:[%s1 + $0x568] sm:$0xff]
  %v197 = vld [vmem:[%s1 + $0x570] sm:$0xff]
  %v198 = vld [vmem:[%s1 + $0x578] sm:$0xff]
  %v199 = vld [vmem:[%s1 + $0x580] sm:$0xff]
  %v200 = vld [vmem:[%s1 + $0x588] sm:$0xff]
  %v201 = vld [vmem:[%s1 + $0x590] sm:$0xff]
  %v202 = vld [vmem:[%s1 + $0x598] sm:$0xff]
  %v203 = vld [vmem:[%s1 + $0x5a0] sm:$0xff]
  %v204 = vld [vmem:[%s1 + $0x5a8] sm:$0xff]
  %v205 = vld [vmem:[%s1 + $0x5b0] sm:$0xff]
  %v206 = vld [vmem:[%s1 + $0x5b8] sm:$0xff]
  %v207 = vld [vmem:[%s1 + $0x5c0] sm:$0xff]
  %v208 = vld [vmem:[%s1 + $0x5c8] sm:$0xff]
  %v209 = vld [vmem:[%s1 + $0x5d0] sm:$0xff]
  %v210 = vld [vmem:[%s1 + $0x5d8] sm:$0xff]
  %v211 = vld [vmem:[%s1 + $0x5e0] sm:$0xff]
  %v212 = vld [vmem:[%s1 + $0x5e8] sm:$0xff]
  %v213 = vld [vmem:[%s1 + $0x5f0] sm:$0xff]
  %v214 = vld [vmem:[%s1 + $0x5f8] sm:$0xff]
  %v215 = vld [vmem:[%s1 + $0x600] sm:$0xff]
  %v216 = vld [vmem:[%s1 + $0x608] sm:$0xff]
  %v217 = vld [vmem:[%s1 + $0x610] sm:$0xff]
  %v218 = vld [vmem:[%s1 + $0x618] sm:$0xff]
  %v219 = vld [vmem:[%s1 + $0x620] sm:$0xff]
  %v220 = vld [vmem:[%s1 + $0x628] sm:$0xff]
  %v221 = vld [vmem:[%s1 + $0x630] sm:$0xff]
  %v222 = vld [vmem:[%s1 + $0x638] sm:$0xff]
  %v223 = vld [vmem:[%s1 + $0x640] sm:$0xff]
  %v224 = vld [vmem:[%s1 + $0x648] sm:$0xff]
  %v225 = vld [vmem:[%s1 + $0x650] sm:$0xff]
  %v226 = vld [vmem:[%s1 + $0x658] sm:$0xff]
  %v227 = vld [vmem:[%s1 + $0x660] sm:$0xff]
  %v228 = vld [vmem:[%s1 + $0x668] sm:$0xff]
  %v229 = vld [vmem:[%s1 + $0x670] sm:$0xff]
  %v230 = vld [vmem:[%s1 + $0x678] sm:$0xff]
  %v231 = vld [vmem:[%s1 + $0x680] sm:$0xff]
  %v232 = vld [vmem:[%s1 + $0x688] sm:$0xff]
  %v233 = vld [vmem:[%s1 + $0x690] sm:$0xff]
  %v234 = vld [vmem:[%s1 + $0x698] sm:$0xff]
  %v235 = vld [vmem:[%s1 + $0x6a0] sm:$0xff]
  %v236 = vld [vmem:[%s1 + $0x6a8] sm:$0xff]
  %v237 = vld [vmem:[%s1 + $0x6b0] sm:$0xff]
  %v238 = vld [vmem:[%s1 + $0x6b8] sm:$0xff]
  %v239 = vld [vmem:[%s1 + $0x6c0] sm:$0xff]
  %v240 = vld [vmem:[%s1 + $0x6c8] sm:$0xff]
  %v241 = vld [vmem:[%s1 + $0x6d0] sm:$0xff]
  %v242 = vld [vmem:[%s1 + $0x6d8] sm:$0xff]
  %v243 = vld [vmem:[%s1 + $0x6e0] sm:$0xff]
  %v244 = vld [vmem:[%s1 + $0x6e8] sm:$0xff]
  %v245 = vld [vmem:[%s1 + $0x6f0] sm:$0xff]
  %v246 = vld [vmem:[%s1 + $0x6f8] sm:$0xff]
  %v247 = vld [vmem:[%s1 + $0x700] sm:$0xff]
  %v248 = vld [vmem:[%s1 + $0x708] sm:$0xff]
  %v249 = vld [vmem:[%s1 + $0x710] sm:$0xff]
  %v250 = vld [vmem:[%s1 + $0x718] sm:$0xff]
  %v251 = vld [vmem:[%s1 + $0x720] sm:$0xff]
  %v252 = vld [vmem:[%s1 + $0x728] sm:$0xff]
  %v253 = vld [vmem:[%s1 + $0x730] sm:$0xff]
  %v254 = vld [vmem:[%s1 + $0x738] sm:$0xff]
  %v255 = vld [vmem:[%s1 + $0x740] sm:$0xff]
  %v256 = vld [vmem:[%s1 + $0x748] sm:$0xff]
  %v257 = vld [vmem:[%s1 + $0x750] sm:$0xff]
  %v258 = vld [vmem:[%s1 + $0x758] sm:$0xff]
  %v259 = vld [vmem:[%s1 + $0x760] sm:$0xff]
  %v260 = vld [vmem:[%s1 + $0x768] sm:$0xff]
  %v261 = vld [vmem:[%s1 + $0x770] sm:$0xff]
  %v262 = vld [vmem:[%s1 + $0x778] sm:$0xff]
  %v263 = vld [vmem:[%s1 + $0x780] sm:$0xff]
  %v264 = vld [vmem:[%s1 + $0x788] sm:$0xff]
  %v265 = vld [vmem:[%s1 + $0x790] sm:$0xff]
  %v266 = vld [vmem:[%s1 + $0x798] sm:$0xff]
  %v267 = vld [vmem:[%s1 + $0x7a0] sm:$0xff]
  %v268 = vld [vmem:[%s1 + $0x7a8] sm:$0xff]
  %v269 = vld [vmem:[%s1 + $0x7b0] sm:$0xff]
  %v270 = vld [vmem:[%s1 + $0x7b8] sm:$0xff]
  %v271 = vld [vmem:[%s1 + $0x7c0] sm:$0xff]
  %v272 = vld [vmem:[%s1 + $0x7c8] sm:$0xff]
  %v273 = vld [vmem:[%s1 + $0x7d0] sm:$0xff]
  %v274 = vld [vmem:[%s1 + $0x7d8] sm:$0xff]
  %v275 = vld [vmem:[%s1 + $0x7e0] sm:$0xff]
  %v276 = vld [vmem:[%s1 + $0x7e8] sm:$0xff]
  %v277 = vld [vmem:[%s1 + $0x7f0] sm:$0xff]
  %v278 = vld [vmem:[%s1 + $0x7f8] sm:$0xff]
  %v279 = vld [vmem:[%s1 + $0x800] sm:$0xff]
  %v280 = vld [vmem:[%s1 + $0x808] sm:$0xff]
  %v281 = vld [vmem:[%s1 + $0x810] sm:$0xff]
  %v282 = vld [vmem:[%s1 + $0x818] sm:$0xff]
  %v283 = vld [vmem:[%s1 + $0x820] sm:$0xff]
  %v284 = vld [vmem:[%s1 + $0x828] sm:$0xff]
  %v285 = vld [vmem:[%s1 + $0x830] sm:$0xff]
  %v286 = vld [vmem:[%s1 + $0x838] sm:$0xff]
  %v287 = vld [vmem:[%s1 + $0x840] sm:$0xff]
  %v288 = vld [vmem:[%s1 + $0x848] sm:$0xff]
  %v289 = vld [vmem:[%s1 + $0x850] sm:$0xff]
  %v290 = vld [vmem:[%s1 + $0x858] sm:$0xff]
  %v291 = vld [vmem:[%s1 + $0x860] sm:$0xff]
  %v292 = vld [vmem:[%s1 + $0x868] sm:$0xff]
  %v293 = vld [vmem:[%s1 + $0x870] sm:$0xff]
  %v294 = vld [vmem:[%s1 + $0x878] sm:$0xff]
  %v295 = vld [vmem:[%s1 + $0x880] sm:$0xff]
  %v296 = vld [vmem:[%s1 + $0x888] sm:$0xff]
  %v297 = vld [vmem:[%s1 + $0x890] sm:$0xff]
  %v298 = vld [vmem:[%s1 + $0x898] sm:$0xff]
  %v299 = vld [vmem:[%s1 + $0x8a0] sm:$0xff]
  %v300 = vld [vmem:[%s1 + $0x8a8] sm:$0xff]
  %v301 = vld [vmem:[%s1 + $0x8b0] sm:$0xff]
  %v302 = vld [vmem:[%s1 + $0x8b8] sm:$0xff]
  %v303 = vld [vmem:[%s1 + $0x8c0] sm:$0xff]
  %v304 = vld [vmem:[%s1 + $0x8c8] sm:$0xff]
  %v305 = vld [vmem:[%s1 + $0x8d0] sm:$0xff]
  %v306 = vld [vmem:[%s1 + $0x8d8] sm:$0xff]
  %v307 = vld [vmem:[%s1 + $0x8e0] sm:$0xff]
  %v308 = vld [vmem:[%s1 + $0x8e8] sm:$0xff]
  %v309 = vld [vmem:[%s1 + $0x8f0] sm:$0xff]
  %v310 = vld [vmem:[%s1 + $0x8f8] sm:$0xff]
  %v311 = vld [vmem:[%s2] sm:$0x3]
  %v313 = vlaneseq
  %v314 = vshrl.u32 %v313, 7
  %v315 = vsub.s32 0, %v314
  %v316 = vrot.slane %v311, %v315
  %v317 = vlaneseq
  %v318 = vshrl.u32 %v317, 7
  %v319 = vsub.s32 1, %v318
  %v320 = vrot.slane %v311, %v319
  %v332 = vunpack.c.l.b16 %v14
  %v333 = vunpack.c.h.b16 %v14
  %v334 = vunpack.c.l.b16 %v15
  %v335 = vunpack.c.h.b16 %v15
  %v336 = vunpack.c.l.b16 %v16
  %v337 = vunpack.c.h.b16 %v16
  %v338 = vunpack.c.l.b16 %v17
  %v339 = vunpack.c.h.b16 %v17
  %v340 = vunpack.c.l.b16 %v18
  %v341 = vunpack.c.h.b16 %v18
  %v342 = vunpack.c.l.b16 %v19
  %v343 = vunpack.c.h.b16 %v19
  %v344 = vunpack.c.l.b16 %v20
  %v345 = vunpack.c.h.b16 %v20
  %v346 = vunpack.c.l.b16 %v21
  %v347 = vunpack.c.h.b16 %v21
  %v348 = vunpack.c.l.b16 %v22
  %v349 = vunpack.c.h.b16 %v22
  %v350 = vpack.c.b16 %v332, %v332
  %v351 = vpack.c.b16 %v333, %v333
  %v352 = vpack.c.b16 %v334, %v334
  %v353 = vpack.c.b16 %v335, %v335
  %v354 = vpack.c.b16 %v336, %v336
  %v355 = vpack.c.b16 %v337, %v337
  %v356 = vpack.c.b16 %v338, %v338
  %v357 = vpack.c.b16 %v339, %v339
  %v358 = vpack.c.b16 %v340, %v340
  %v359 = vpack.c.b16 %v341, %v341
  %v360 = vpack.c.b16 %v342, %v342
  %v361 = vpack.c.b16 %v343, %v343
  %v362 = vpack.c.b16 %v344, %v344
  %v363 = vpack.c.b16 %v345, %v345
  %v364 = vpack.c.b16 %v346, %v346
  %v365 = vpack.c.b16 %v347, %v347
  %v366 = vpack.c.b16 %v348, %v348
  %v367 = vpack.c.b16 %v349, %v349
  %v674 = vunpack.c.l.b16 %v23
  %v675 = vunpack.c.h.b16 %v23
  %v676 = vunpack.c.l.b16 %v24
  %v677 = vunpack.c.h.b16 %v24
  %v678 = vunpack.c.l.b16 %v25
  %v679 = vunpack.c.h.b16 %v25
  %v680 = vunpack.c.l.b16 %v26
  %v681 = vunpack.c.h.b16 %v26
  %v682 = vunpack.c.l.b16 %v27
  %v683 = vunpack.c.h.b16 %v27
  %v684 = vunpack.c.l.b16 %v28
  %v685 = vunpack.c.h.b16 %v28
  %v686 = vunpack.c.l.b16 %v29
  %v687 = vunpack.c.h.b16 %v29
  %v688 = vunpack.c.l.b16 %v30
  %v689 = vunpack.c.h.b16 %v30
  %v690 = vunpack.c.l.b16 %v31
  %v691 = vunpack.c.h.b16 %v31
  %v692 = vunpack.c.l.b16 %v32
  %v693 = vunpack.c.h.b16 %v32
  %v694 = vunpack.c.l.b16 %v33
  %v695 = vunpack.c.h.b16 %v33
  %v696 = vunpack.c.l.b16 %v34
  %v697 = vunpack.c.h.b16 %v34
  %v698 = vunpack.c.l.b16 %v35
  %v699 = vunpack.c.h.b16 %v35
  %v700 = vunpack.c.l.b16 %v36
  %v701 = vunpack.c.h.b16 %v36
  %v702 = vunpack.c.l.b16 %v37
  %v703 = vunpack.c.h.b16 %v37
  %v704 = vunpack.c.l.b16 %v38
  %v705 = vunpack.c.h.b16 %v38
  %v706 = vunpack.c.l.b16 %v39
  %v707 = vunpack.c.h.b16 %v39
  %v708 = vunpack.c.l.b16 %v40
  %v709 = vunpack.c.h.b16 %v40
  %v710 = vunpack.c.l.b16 %v41
  %v711 = vunpack.c.h.b16 %v41
  %v712 = vunpack.c.l.b16 %v42
  %v713 = vunpack.c.h.b16 %v42
  %v714 = vunpack.c.l.b16 %v43
  %v715 = vunpack.c.h.b16 %v43
  %v716 = vunpack.c.l.b16 %v44
  %v717 = vunpack.c.h.b16 %v44
  %v718 = vunpack.c.l.b16 %v45
  %v719 = vunpack.c.h.b16 %v45
  %v720 = vunpack.c.l.b16 %v46
  %v721 = vunpack.c.h.b16 %v46
  %v722 = vunpack.c.l.b16 %v47
  %v723 = vunpack.c.h.b16 %v47
  %v724 = vunpack.c.l.b16 %v48
  %v725 = vunpack.c.h.b16 %v48
  %v726 = vunpack.c.l.b16 %v49
  %v727 = vunpack.c.h.b16 %v49
  %v728 = vunpack.c.l.b16 %v50
  %v729 = vunpack.c.h.b16 %v50
  %v730 = vunpack.c.l.b16 %v51
  %v731 = vunpack.c.h.b16 %v51
  %v732 = vunpack.c.l.b16 %v52
  %v733 = vunpack.c.h.b16 %v52
  %v734 = vunpack.c.l.b16 %v53
  %v735 = vunpack.c.h.b16 %v53
  %v736 = vunpack.c.l.b16 %v54
  %v737 = vunpack.c.h.b16 %v54
  %v738 = vunpack.c.l.b16 %v55
  %v739 = vunpack.c.h.b16 %v55
  %v740 = vunpack.c.l.b16 %v56
  %v741 = vunpack.c.h.b16 %v56
  %v742 = vunpack.c.l.b16 %v57
  %v743 = vunpack.c.h.b16 %v57
  %v744 = vunpack.c.l.b16 %v58
  %v745 = vunpack.c.h.b16 %v58
  %v746 = vunpack.c.l.b16 %v59
  %v747 = vunpack.c.h.b16 %v59
  %v748 = vunpack.c.l.b16 %v60
  %v749 = vunpack.c.h.b16 %v60
  %v750 = vunpack.c.l.b16 %v61
  %v751 = vunpack.c.h.b16 %v61
  %v752 = vunpack.c.l.b16 %v62
  %v753 = vunpack.c.h.b16 %v62
  %v754 = vunpack.c.l.b16 %v63
  %v755 = vunpack.c.h.b16 %v63
  %v756 = vunpack.c.l.b16 %v64
  %v757 = vunpack.c.h.b16 %v64
  %v758 = vunpack.c.l.b16 %v65
  %v759 = vunpack.c.h.b16 %v65
  %v760 = vunpack.c.l.b16 %v66
  %v761 = vunpack.c.h.b16 %v66
  %v762 = vunpack.c.l.b16 %v67
  %v763 = vunpack.c.h.b16 %v67
  %v764 = vunpack.c.l.b16 %v68
  %v765 = vunpack.c.h.b16 %v68
  %v766 = vunpack.c.l.b16 %v69
  %v767 = vunpack.c.h.b16 %v69
  %v768 = vunpack.c.l.b16 %v70
  %v769 = vunpack.c.h.b16 %v70
  %v770 = vunpack.c.l.b16 %v71
  %v771 = vunpack.c.h.b16 %v71
  %v772 = vunpack.c.l.b16 %v72
  %v773 = vunpack.c.h.b16 %v72
  %v774 = vunpack.c.l.b16 %v73
  %v775 = vunpack.c.h.b16 %v73
  %v776 = vunpack.c.l.b16 %v74
  %v777 = vunpack.c.h.b16 %v74
  %v778 = vunpack.c.l.b16 %v75
  %v779 = vunpack.c.h.b16 %v75
  %v780 = vunpack.c.l.b16 %v76
  %v781 = vunpack.c.h.b16 %v76
  %v782 = vunpack.c.l.b16 %v77
  %v783 = vunpack.c.h.b16 %v77
  %v784 = vunpack.c.l.b16 %v78
  %v785 = vunpack.c.h.b16 %v78
  %v786 = vunpack.c.l.b16 %v79
  %v787 = vunpack.c.h.b16 %v79
  %v788 = vunpack.c.l.b16 %v80
  %v789 = vunpack.c.h.b16 %v80
  %v790 = vunpack.c.l.b16 %v81
  %v791 = vunpack.c.h.b16 %v81
  %v792 = vunpack.c.l.b16 %v82
  %v793 = vunpack.c.h.b16 %v82
  %v794 = vunpack.c.l.b16 %v83
  %v795 = vunpack.c.h.b16 %v83
  %v796 = vunpack.c.l.b16 %v84
  %v797 = vunpack.c.h.b16 %v84
  %v798 = vunpack.c.l.b16 %v85
  %v799 = vunpack.c.h.b16 %v85
  %v800 = vunpack.c.l.b16 %v86
  %v801 = vunpack.c.h.b16 %v86
  %v802 = vunpack.c.l.b16 %v87
  %v803 = vunpack.c.h.b16 %v87
  %v804 = vunpack.c.l.b16 %v88
  %v805 = vunpack.c.h.b16 %v88
  %v806 = vunpack.c.l.b16 %v89
  %v807 = vunpack.c.h.b16 %v89
  %v808 = vunpack.c.l.b16 %v90
  %v809 = vunpack.c.h.b16 %v90
  %v810 = vunpack.c.l.b16 %v91
  %v811 = vunpack.c.h.b16 %v91
  %v812 = vunpack.c.l.b16 %v92
  %v813 = vunpack.c.h.b16 %v92
  %v814 = vunpack.c.l.b16 %v93
  %v815 = vunpack.c.h.b16 %v93
  %v816 = vunpack.c.l.b16 %v94
  %v817 = vunpack.c.h.b16 %v94
  %v818 = vunpack.c.l.b16 %v95
  %v819 = vunpack.c.h.b16 %v95
  %v820 = vunpack.c.l.b16 %v96
  %v821 = vunpack.c.h.b16 %v96
  %v822 = vunpack.c.l.b16 %v97
  %v823 = vunpack.c.h.b16 %v97
  %v824 = vunpack.c.l.b16 %v98
  %v825 = vunpack.c.h.b16 %v98
  %v826 = vunpack.c.l.b16 %v99
  %v827 = vunpack.c.h.b16 %v99
  %v828 = vunpack.c.l.b16 %v100
  %v829 = vunpack.c.h.b16 %v100
  %v830 = vunpack.c.l.b16 %v101
  %v831 = vunpack.c.h.b16 %v101
  %v832 = vunpack.c.l.b16 %v102
  %v833 = vunpack.c.h.b16 %v102
  %v834 = vunpack.c.l.b16 %v103
  %v835 = vunpack.c.h.b16 %v103
  %v836 = vunpack.c.l.b16 %v104
  %v837 = vunpack.c.h.b16 %v104
  %v838 = vunpack.c.l.b16 %v105
  %v839 = vunpack.c.h.b16 %v105
  %v840 = vunpack.c.l.b16 %v106
  %v841 = vunpack.c.h.b16 %v106
  %v842 = vunpack.c.l.b16 %v107
  %v843 = vunpack.c.h.b16 %v107
  %v844 = vunpack.c.l.b16 %v108
  %v845 = vunpack.c.h.b16 %v108
  %v846 = vunpack.c.l.b16 %v109
  %v847 = vunpack.c.h.b16 %v109
  %v848 = vunpack.c.l.b16 %v110
  %v849 = vunpack.c.h.b16 %v110
  %v850 = vunpack.c.l.b16 %v111
  %v851 = vunpack.c.h.b16 %v111
  %v852 = vunpack.c.l.b16 %v112
  %v853 = vunpack.c.h.b16 %v112
  %v854 = vunpack.c.l.b16 %v113
  %v855 = vunpack.c.h.b16 %v113
  %v856 = vunpack.c.l.b16 %v114
  %v857 = vunpack.c.h.b16 %v114
  %v858 = vunpack.c.l.b16 %v115
  %v859 = vunpack.c.h.b16 %v115
  %v860 = vunpack.c.l.b16 %v116
  %v861 = vunpack.c.h.b16 %v116
  %v862 = vunpack.c.l.b16 %v117
  %v863 = vunpack.c.h.b16 %v117
  %v864 = vunpack.c.l.b16 %v118
  %v865 = vunpack.c.h.b16 %v118
  %v866 = vunpack.c.l.b16 %v119
  %v867 = vunpack.c.h.b16 %v119
  %v868 = vunpack.c.l.b16 %v120
  %v869 = vunpack.c.h.b16 %v120
  %v870 = vunpack.c.l.b16 %v121
  %v871 = vunpack.c.h.b16 %v121
  %v872 = vunpack.c.l.b16 %v122
  %v873 = vunpack.c.h.b16 %v122
  %v874 = vunpack.c.l.b16 %v123
  %v875 = vunpack.c.h.b16 %v123
  %v876 = vunpack.c.l.b16 %v124
  %v877 = vunpack.c.h.b16 %v124
  %v878 = vunpack.c.l.b16 %v125
  %v879 = vunpack.c.h.b16 %v125
  %v880 = vunpack.c.l.b16 %v126
  %v881 = vunpack.c.h.b16 %v126
  %v882 = vunpack.c.l.b16 %v127
  %v883 = vunpack.c.h.b16 %v127
  %v884 = vunpack.c.l.b16 %v128
  %v885 = vunpack.c.h.b16 %v128
  %v886 = vunpack.c.l.b16 %v129
  %v887 = vunpack.c.h.b16 %v129
  %v888 = vunpack.c.l.b16 %v130
  %v889 = vunpack.c.h.b16 %v130
  %v890 = vunpack.c.l.b16 %v131
  %v891 = vunpack.c.h.b16 %v131
  %v892 = vunpack.c.l.b16 %v132
  %v893 = vunpack.c.h.b16 %v132
  %v894 = vunpack.c.l.b16 %v133
  %v895 = vunpack.c.h.b16 %v133
  %v896 = vunpack.c.l.b16 %v134
  %v897 = vunpack.c.h.b16 %v134
  %v898 = vunpack.c.l.b16 %v135
  %v899 = vunpack.c.h.b16 %v135
  %v900 = vunpack.c.l.b16 %v136
  %v901 = vunpack.c.h.b16 %v136
  %v902 = vunpack.c.l.b16 %v137
  %v903 = vunpack.c.h.b16 %v137
  %v904 = vunpack.c.l.b16 %v138
  %v905 = vunpack.c.h.b16 %v138
  %v906 = vunpack.c.l.b16 %v139
  %v907 = vunpack.c.h.b16 %v139
  %v908 = vunpack.c.l.b16 %v140
  %v909 = vunpack.c.h.b16 %v140
  %v910 = vunpack.c.l.b16 %v141
  %v911 = vunpack.c.h.b16 %v141
  %v912 = vunpack.c.l.b16 %v142
  %v913 = vunpack.c.h.b16 %v142
  %v914 = vunpack.c.l.b16 %v143
  %v915 = vunpack.c.h.b16 %v143
  %v916 = vunpack.c.l.b16 %v144
  %v917 = vunpack.c.h.b16 %v144
  %v918 = vunpack.c.l.b16 %v145
  %v919 = vunpack.c.h.b16 %v145
  %v920 = vunpack.c.l.b16 %v146
  %v921 = vunpack.c.h.b16 %v146
  %v922 = vunpack.c.l.b16 %v147
  %v923 = vunpack.c.h.b16 %v147
  %v924 = vunpack.c.l.b16 %v148
  %v925 = vunpack.c.h.b16 %v148
  %v926 = vunpack.c.l.b16 %v149
  %v927 = vunpack.c.h.b16 %v149
  %v928 = vunpack.c.l.b16 %v150
  %v929 = vunpack.c.h.b16 %v150
  %v930 = vunpack.c.l.b16 %v151
  %v931 = vunpack.c.h.b16 %v151
  %v932 = vunpack.c.l.b16 %v152
  %v933 = vunpack.c.h.b16 %v152
  %v934 = vunpack.c.l.b16 %v153
  %v935 = vunpack.c.h.b16 %v153
  %v936 = vunpack.c.l.b16 %v154
  %v937 = vunpack.c.h.b16 %v154
  %v938 = vunpack.c.l.b16 %v155
  %v939 = vunpack.c.h.b16 %v155
  %v940 = vunpack.c.l.b16 %v156
  %v941 = vunpack.c.h.b16 %v156
  %v942 = vunpack.c.l.b16 %v157
  %v943 = vunpack.c.h.b16 %v157
  %v944 = vunpack.c.l.b16 %v158
  %v945 = vunpack.c.h.b16 %v158
  %v946 = vunpack.c.l.b16 %v159
  %v947 = vunpack.c.h.b16 %v159
  %v948 = vunpack.c.l.b16 %v160
  %v949 = vunpack.c.h.b16 %v160
  %v950 = vunpack.c.l.b16 %v161
  %v951 = vunpack.c.h.b16 %v161
  %v952 = vunpack.c.l.b16 %v162
  %v953 = vunpack.c.h.b16 %v162
  %v954 = vunpack.c.l.b16 %v163
  %v955 = vunpack.c.h.b16 %v163
  %v956 = vunpack.c.l.b16 %v164
  %v957 = vunpack.c.h.b16 %v164
  %v958 = vunpack.c.l.b16 %v165
  %v959 = vunpack.c.h.b16 %v165
  %v960 = vunpack.c.l.b16 %v166
  %v961 = vunpack.c.h.b16 %v166
  %v962 = vunpack.c.l.b16 %v167
  %v963 = vunpack.c.h.b16 %v167
  %v964 = vunpack.c.l.b16 %v168
  %v965 = vunpack.c.h.b16 %v168
  %v966 = vunpack.c.l.b16 %v169
  %v967 = vunpack.c.h.b16 %v169
  %v968 = vunpack.c.l.b16 %v170
  %v969 = vunpack.c.h.b16 %v170
  %v970 = vunpack.c.l.b16 %v171
  %v971 = vunpack.c.h.b16 %v171
  %v972 = vunpack.c.l.b16 %v172
  %v973 = vunpack.c.h.b16 %v172
  %v974 = vunpack.c.l.b16 %v173
  %v975 = vunpack.c.h.b16 %v173
  %v976 = vunpack.c.l.b16 %v174
  %v977 = vunpack.c.h.b16 %v174
  %v978 = vunpack.c.l.b16 %v175
  %v979 = vunpack.c.h.b16 %v175
  %v980 = vunpack.c.l.b16 %v176
  %v981 = vunpack.c.h.b16 %v176
  %v982 = vunpack.c.l.b16 %v177
  %v983 = vunpack.c.h.b16 %v177
  %v984 = vunpack.c.l.b16 %v178
  %v985 = vunpack.c.h.b16 %v178
  %v986 = vunpack.c.l.b16 %v179
  %v987 = vunpack.c.h.b16 %v179
  %v988 = vunpack.c.l.b16 %v180
  %v989 = vunpack.c.h.b16 %v180
  %v990 = vunpack.c.l.b16 %v181
  %v991 = vunpack.c.h.b16 %v181
  %v992 = vunpack.c.l.b16 %v182
  %v993 = vunpack.c.h.b16 %v182
  %v994 = vunpack.c.l.b16 %v183
  %v995 = vunpack.c.h.b16 %v183
  %v996 = vunpack.c.l.b16 %v184
  %v997 = vunpack.c.h.b16 %v184
  %v998 = vunpack.c.l.b16 %v185
  %v999 = vunpack.c.h.b16 %v185
  %v1000 = vunpack.c.l.b16 %v186
  %v1001 = vunpack.c.h.b16 %v186
  %v1002 = vunpack.c.l.b16 %v187
  %v1003 = vunpack.c.h.b16 %v187
  %v1004 = vunpack.c.l.b16 %v188
  %v1005 = vunpack.c.h.b16 %v188
  %v1006 = vunpack.c.l.b16 %v189
  %v1007 = vunpack.c.h.b16 %v189
  %v1008 = vunpack.c.l.b16 %v190
  %v1009 = vunpack.c.h.b16 %v190
  %v1010 = vunpack.c.l.b16 %v191
  %v1011 = vunpack.c.h.b16 %v191
  %v1012 = vunpack.c.l.b16 %v192
  %v1013 = vunpack.c.h.b16 %v192
  %v1014 = vunpack.c.l.b16 %v193
  %v1015 = vunpack.c.h.b16 %v193
  %v1016 = vunpack.c.l.b16 %v194
  %v1017 = vunpack.c.h.b16 %v194
  %v1018 = vunpack.c.l.b16 %v195
  %v1019 = vunpack.c.h.b16 %v195
  %v1020 = vunpack.c.l.b16 %v196
  %v1021 = vunpack.c.h.b16 %v196
  %v1022 = vunpack.c.l.b16 %v197
  %v1023 = vunpack.c.h.b16 %v197
  %v1024 = vunpack.c.l.b16 %v198
  %v1025 = vunpack.c.h.b16 %v198
  %v1026 = vunpack.c.l.b16 %v199
  %v1027 = vunpack.c.h.b16 %v199
  %v1028 = vunpack.c.l.b16 %v200
  %v1029 = vunpack.c.h.b16 %v200
  %v1030 = vunpack.c.l.b16 %v201
  %v1031 = vunpack.c.h.b16 %v201
  %v1032 = vunpack.c.l.b16 %v202
  %v1033 = vunpack.c.h.b16 %v202
  %v1034 = vunpack.c.l.b16 %v203
  %v1035 = vunpack.c.h.b16 %v203
  %v1036 = vunpack.c.l.b16 %v204
  %v1037 = vunpack.c.h.b16 %v204
  %v1038 = vunpack.c.l.b16 %v205
  %v1039 = vunpack.c.h.b16 %v205
  %v1040 = vunpack.c.l.b16 %v206
  %v1041 = vunpack.c.h.b16 %v206
  %v1042 = vunpack.c.l.b16 %v207
  %v1043 = vunpack.c.h.b16 %v207
  %v1044 = vunpack.c.l.b16 %v208
  %v1045 = vunpack.c.h.b16 %v208
  %v1046 = vunpack.c.l.b16 %v209
  %v1047 = vunpack.c.h.b16 %v209
  %v1048 = vunpack.c.l.b16 %v210
  %v1049 = vunpack.c.h.b16 %v210
  %v1050 = vunpack.c.l.b16 %v211
  %v1051 = vunpack.c.h.b16 %v211
  %v1052 = vunpack.c.l.b16 %v212
  %v1053 = vunpack.c.h.b16 %v212
  %v1054 = vunpack.c.l.b16 %v213
  %v1055 = vunpack.c.h.b16 %v213
  %v1056 = vunpack.c.l.b16 %v214
  %v1057 = vunpack.c.h.b16 %v214
  %v1058 = vunpack.c.l.b16 %v215
  %v1059 = vunpack.c.h.b16 %v215
  %v1060 = vunpack.c.l.b16 %v216
  %v1061 = vunpack.c.h.b16 %v216
  %v1062 = vunpack.c.l.b16 %v217
  %v1063 = vunpack.c.h.b16 %v217
  %v1064 = vunpack.c.l.b16 %v218
  %v1065 = vunpack.c.h.b16 %v218
  %v1066 = vunpack.c.l.b16 %v219
  %v1067 = vunpack.c.h.b16 %v219
  %v1068 = vunpack.c.l.b16 %v220
  %v1069 = vunpack.c.h.b16 %v220
  %v1070 = vunpack.c.l.b16 %v221
  %v1071 = vunpack.c.h.b16 %v221
  %v1072 = vunpack.c.l.b16 %v222
  %v1073 = vunpack.c.h.b16 %v222
  %v1074 = vunpack.c.l.b16 %v223
  %v1075 = vunpack.c.h.b16 %v223
  %v1076 = vunpack.c.l.b16 %v224
  %v1077 = vunpack.c.h.b16 %v224
  %v1078 = vunpack.c.l.b16 %v225
  %v1079 = vunpack.c.h.b16 %v225
  %v1080 = vunpack.c.l.b16 %v226
  %v1081 = vunpack.c.h.b16 %v226
  %v1082 = vunpack.c.l.b16 %v227
  %v1083 = vunpack.c.h.b16 %v227
  %v1084 = vunpack.c.l.b16 %v228
  %v1085 = vunpack.c.h.b16 %v228
  %v1086 = vunpack.c.l.b16 %v229
  %v1087 = vunpack.c.h.b16 %v229
  %v1088 = vunpack.c.l.b16 %v230
  %v1089 = vunpack.c.h.b16 %v230
  %v1090 = vunpack.c.l.b16 %v231
  %v1091 = vunpack.c.h.b16 %v231
  %v1092 = vunpack.c.l.b16 %v232
  %v1093 = vunpack.c.h.b16 %v232
  %v1094 = vunpack.c.l.b16 %v233
  %v1095 = vunpack.c.h.b16 %v233
  %v1096 = vunpack.c.l.b16 %v234
  %v1097 = vunpack.c.h.b16 %v234
  %v1098 = vunpack.c.l.b16 %v235
  %v1099 = vunpack.c.h.b16 %v235
  %v1100 = vunpack.c.l.b16 %v236
  %v1101 = vunpack.c.h.b16 %v236
  %v1102 = vunpack.c.l.b16 %v237
  %v1103 = vunpack.c.h.b16 %v237
  %v1104 = vunpack.c.l.b16 %v238
  %v1105 = vunpack.c.h.b16 %v238
  %v1106 = vunpack.c.l.b16 %v239
  %v1107 = vunpack.c.h.b16 %v239
  %v1108 = vunpack.c.l.b16 %v240
  %v1109 = vunpack.c.h.b16 %v240
  %v1110 = vunpack.c.l.b16 %v241
  %v1111 = vunpack.c.h.b16 %v241
  %v1112 = vunpack.c.l.b16 %v242
  %v1113 = vunpack.c.h.b16 %v242
  %v1114 = vunpack.c.l.b16 %v243
  %v1115 = vunpack.c.h.b16 %v243
  %v1116 = vunpack.c.l.b16 %v244
  %v1117 = vunpack.c.h.b16 %v244
  %v1118 = vunpack.c.l.b16 %v245
  %v1119 = vunpack.c.h.b16 %v245
  %v1120 = vunpack.c.l.b16 %v246
  %v1121 = vunpack.c.h.b16 %v246
  %v1122 = vunpack.c.l.b16 %v247
  %v1123 = vunpack.c.h.b16 %v247
  %v1124 = vunpack.c.l.b16 %v248
  %v1125 = vunpack.c.h.b16 %v248
  %v1126 = vunpack.c.l.b16 %v249
  %v1127 = vunpack.c.h.b16 %v249
  %v1128 = vunpack.c.l.b16 %v250
  %v1129 = vunpack.c.h.b16 %v250
  %v1130 = vunpack.c.l.b16 %v251
  %v1131 = vunpack.c.h.b16 %v251
  %v1132 = vunpack.c.l.b16 %v252
  %v1133 = vunpack.c.h.b16 %v252
  %v1134 = vunpack.c.l.b16 %v253
  %v1135 = vunpack.c.h.b16 %v253
  %v1136 = vunpack.c.l.b16 %v254
  %v1137 = vunpack.c.h.b16 %v254
  %v1138 = vunpack.c.l.b16 %v255
  %v1139 = vunpack.c.h.b16 %v255
  %v1140 = vunpack.c.l.b16 %v256
  %v1141 = vunpack.c.h.b16 %v256
  %v1142 = vunpack.c.l.b16 %v257
  %v1143 = vunpack.c.h.b16 %v257
  %v1144 = vunpack.c.l.b16 %v258
  %v1145 = vunpack.c.h.b16 %v258
  %v1146 = vunpack.c.l.b16 %v259
  %v1147 = vunpack.c.h.b16 %v259
  %v1148 = vunpack.c.l.b16 %v260
  %v1149 = vunpack.c.h.b16 %v260
  %v1150 = vunpack.c.l.b16 %v261
  %v1151 = vunpack.c.h.b16 %v261
  %v1152 = vunpack.c.l.b16 %v262
  %v1153 = vunpack.c.h.b16 %v262
  %v1154 = vunpack.c.l.b16 %v263
  %v1155 = vunpack.c.h.b16 %v263
  %v1156 = vunpack.c.l.b16 %v264
  %v1157 = vunpack.c.h.b16 %v264
  %v1158 = vunpack.c.l.b16 %v265
  %v1159 = vunpack.c.h.b16 %v265
  %v1160 = vunpack.c.l.b16 %v266
  %v1161 = vunpack.c.h.b16 %v266
  %v1162 = vunpack.c.l.b16 %v267
  %v1163 = vunpack.c.h.b16 %v267
  %v1164 = vunpack.c.l.b16 %v268
  %v1165 = vunpack.c.h.b16 %v268
  %v1166 = vunpack.c.l.b16 %v269
  %v1167 = vunpack.c.h.b16 %v269
  %v1168 = vunpack.c.l.b16 %v270
  %v1169 = vunpack.c.h.b16 %v270
  %v1170 = vunpack.c.l.b16 %v271
  %v1171 = vunpack.c.h.b16 %v271
  %v1172 = vunpack.c.l.b16 %v272
  %v1173 = vunpack.c.h.b16 %v272
  %v1174 = vunpack.c.l.b16 %v273
  %v1175 = vunpack.c.h.b16 %v273
  %v1176 = vunpack.c.l.b16 %v274
  %v1177 = vunpack.c.h.b16 %v274
  %v1178 = vunpack.c.l.b16 %v275
  %v1179 = vunpack.c.h.b16 %v275
  %v1180 = vunpack.c.l.b16 %v276
  %v1181 = vunpack.c.h.b16 %v276
  %v1182 = vunpack.c.l.b16 %v277
  %v1183 = vunpack.c.h.b16 %v277
  %v1184 = vunpack.c.l.b16 %v278
  %v1185 = vunpack.c.h.b16 %v278
  %v1186 = vunpack.c.l.b16 %v279
  %v1187 = vunpack.c.h.b16 %v279
  %v1188 = vunpack.c.l.b16 %v280
  %v1189 = vunpack.c.h.b16 %v280
  %v1190 = vunpack.c.l.b16 %v281
  %v1191 = vunpack.c.h.b16 %v281
  %v1192 = vunpack.c.l.b16 %v282
  %v1193 = vunpack.c.h.b16 %v282
  %v1194 = vunpack.c.l.b16 %v283
  %v1195 = vunpack.c.h.b16 %v283
  %v1196 = vunpack.c.l.b16 %v284
  %v1197 = vunpack.c.h.b16 %v284
  %v1198 = vunpack.c.l.b16 %v285
  %v1199 = vunpack.c.h.b16 %v285
  %v1200 = vunpack.c.l.b16 %v286
  %v1201 = vunpack.c.h.b16 %v286
  %v1202 = vunpack.c.l.b16 %v287
  %v1203 = vunpack.c.h.b16 %v287
  %v1204 = vunpack.c.l.b16 %v288
  %v1205 = vunpack.c.h.b16 %v288
  %v1206 = vunpack.c.l.b16 %v289
  %v1207 = vunpack.c.h.b16 %v289
  %v1208 = vunpack.c.l.b16 %v290
  %v1209 = vunpack.c.h.b16 %v290
  %v1210 = vunpack.c.l.b16 %v291
  %v1211 = vunpack.c.h.b16 %v291
  %v1212 = vunpack.c.l.b16 %v292
  %v1213 = vunpack.c.h.b16 %v292
  %v1214 = vunpack.c.l.b16 %v293
  %v1215 = vunpack.c.h.b16 %v293
  %v1216 = vunpack.c.l.b16 %v294
  %v1217 = vunpack.c.h.b16 %v294
  %v1218 = vunpack.c.l.b16 %v295
  %v1219 = vunpack.c.h.b16 %v295
  %v1220 = vunpack.c.l.b16 %v296
  %v1221 = vunpack.c.h.b16 %v296
  %v1222 = vunpack.c.l.b16 %v297
  %v1223 = vunpack.c.h.b16 %v297
  %v1224 = vunpack.c.l.b16 %v298
  %v1225 = vunpack.c.h.b16 %v298
  %v1226 = vunpack.c.l.b16 %v299
  %v1227 = vunpack.c.h.b16 %v299
  %v1228 = vunpack.c.l.b16 %v300
  %v1229 = vunpack.c.h.b16 %v300
  %v1230 = vunpack.c.l.b16 %v301
  %v1231 = vunpack.c.h.b16 %v301
  %v1232 = vunpack.c.l.b16 %v302
  %v1233 = vunpack.c.h.b16 %v302
  %v1234 = vunpack.c.l.b16 %v303
  %v1235 = vunpack.c.h.b16 %v303
  %v1236 = vunpack.c.l.b16 %v304
  %v1237 = vunpack.c.h.b16 %v304
  %v1238 = vunpack.c.l.b16 %v305
  %v1239 = vunpack.c.h.b16 %v305
  %v1240 = vunpack.c.l.b16 %v306
  %v1241 = vunpack.c.h.b16 %v306
  %v1242 = vunpack.c.l.b16 %v307
  %v1243 = vunpack.c.h.b16 %v307
  %v1244 = vunpack.c.l.b16 %v308
  %v1245 = vunpack.c.h.b16 %v308
  %v1246 = vunpack.c.l.b16 %v309
  %v1247 = vunpack.c.h.b16 %v309
  %v1248 = vunpack.c.l.b16 %v310
  %v1249 = vunpack.c.h.b16 %v310
  %v1250 = vpack.c.b16 %v676, %v674
  %v1251 = vpack.c.b16 %v677, %v675
  %v1252 = vpack.c.b16 %v680, %v678
  %v1253 = vpack.c.b16 %v681, %v679
  %v1254 = vpack.c.b16 %v684, %v682
  %v1255 = vpack.c.b16 %v685, %v683
  %v1256 = vpack.c.b16 %v688, %v686
  %v1257 = vpack.c.b16 %v689, %v687
  %v1258 = vpack.c.b16 %v692, %v690
  %v1259 = vpack.c.b16 %v693, %v691
  %v1260 = vpack.c.b16 %v696, %v694
  %v1261 = vpack.c.b16 %v697, %v695
  %v1262 = vpack.c.b16 %v700, %v698
  %v1263 = vpack.c.b16 %v701, %v699
  %v1264 = vpack.c.b16 %v704, %v702
  %v1265 = vpack.c.b16 %v705, %v703
  %v1266 = vpack.c.b16 %v708, %v706
  %v1267 = vpack.c.b16 %v709, %v707
  %v1268 = vpack.c.b16 %v712, %v710
  %v1269 = vpack.c.b16 %v713, %v711
  %v1270 = vpack.c.b16 %v716, %v714
  %v1271 = vpack.c.b16 %v717, %v715
  %v1272 = vpack.c.b16 %v720, %v718
  %v1273 = vpack.c.b16 %v721, %v719
  %v1274 = vpack.c.b16 %v724, %v722
  %v1275 = vpack.c.b16 %v725, %v723
  %v1276 = vpack.c.b16 %v728, %v726
  %v1277 = vpack.c.b16 %v729, %v727
  %v1278 = vpack.c.b16 %v732, %v730
  %v1279 = vpack.c.b16 %v733, %v731
  %v1280 = vpack.c.b16 %v736, %v734
  %v1281 = vpack.c.b16 %v737, %v735
  %v1282 = vpack.c.b16 %v740, %v738
  %v1283 = vpack.c.b16 %v741, %v739
  %v1284 = vpack.c.b16 %v744, %v742
  %v1285 = vpack.c.b16 %v745, %v743
  %v1286 = vpack.c.b16 %v748, %v746
  %v1287 = vpack.c.b16 %v749, %v747
  %v1288 = vpack.c.b16 %v752, %v750
  %v1289 = vpack.c.b16 %v753, %v751
  %v1290 = vpack.c.b16 %v756, %v754
  %v1291 = vpack.c.b16 %v757, %v755
  %v1292 = vpack.c.b16 %v760, %v758
  %v1293 = vpack.c.b16 %v761, %v759
  %v1294 = vpack.c.b16 %v764, %v762
  %v1295 = vpack.c.b16 %v765, %v763
  %v1296 = vpack.c.b16 %v768, %v766
  %v1297 = vpack.c.b16 %v769, %v767
  %v1298 = vpack.c.b16 %v772, %v770
  %v1299 = vpack.c.b16 %v773, %v771
  %v1300 = vpack.c.b16 %v776, %v774
  %v1301 = vpack.c.b16 %v777, %v775
  %v1302 = vpack.c.b16 %v780, %v778
  %v1303 = vpack.c.b16 %v781, %v779
  %v1304 = vpack.c.b16 %v784, %v782
  %v1305 = vpack.c.b16 %v785, %v783
  %v1306 = vpack.c.b16 %v788, %v786
  %v1307 = vpack.c.b16 %v789, %v787
  %v1308 = vpack.c.b16 %v792, %v790
  %v1309 = vpack.c.b16 %v793, %v791
  %v1310 = vpack.c.b16 %v796, %v794
  %v1311 = vpack.c.b16 %v797, %v795
  %v1312 = vpack.c.b16 %v800, %v798
  %v1313 = vpack.c.b16 %v801, %v799
  %v1314 = vpack.c.b16 %v804, %v802
  %v1315 = vpack.c.b16 %v805, %v803
  %v1316 = vpack.c.b16 %v808, %v806
  %v1317 = vpack.c.b16 %v809, %v807
  %v1318 = vpack.c.b16 %v812, %v810
  %v1319 = vpack.c.b16 %v813, %v811
  %v1320 = vpack.c.b16 %v816, %v814
  %v1321 = vpack.c.b16 %v817, %v815
  %v1322 = vpack.c.b16 %v820, %v818
  %v1323 = vpack.c.b16 %v821, %v819
  %v1324 = vpack.c.b16 %v824, %v822
  %v1325 = vpack.c.b16 %v825, %v823
  %v1326 = vpack.c.b16 %v828, %v826
  %v1327 = vpack.c.b16 %v829, %v827
  %v1328 = vpack.c.b16 %v832, %v830
  %v1329 = vpack.c.b16 %v833, %v831
  %v1330 = vpack.c.b16 %v836, %v834
  %v1331 = vpack.c.b16 %v837, %v835
  %v1332 = vpack.c.b16 %v840, %v838
  %v1333 = vpack.c.b16 %v841, %v839
  %v1334 = vpack.c.b16 %v844, %v842
  %v1335 = vpack.c.b16 %v845, %v843
  %v1336 = vpack.c.b16 %v848, %v846
  %v1337 = vpack.c.b16 %v849, %v847
  %v1338 = vpack.c.b16 %v852, %v850
  %v1339 = vpack.c.b16 %v853, %v851
  %v1340 = vpack.c.b16 %v856, %v854
  %v1341 = vpack.c.b16 %v857, %v855
  %v1342 = vpack.c.b16 %v860, %v858
  %v1343 = vpack.c.b16 %v861, %v859
  %v1344 = vpack.c.b16 %v864, %v862
  %v1345 = vpack.c.b16 %v865, %v863
  %v1346 = vpack.c.b16 %v868, %v866
  %v1347 = vpack.c.b16 %v869, %v867
  %v1348 = vpack.c.b16 %v872, %v870
  %v1349 = vpack.c.b16 %v873, %v871
  %v1350 = vpack.c.b16 %v876, %v874
  %v1351 = vpack.c.b16 %v877, %v875
  %v1352 = vpack.c.b16 %v880, %v878
  %v1353 = vpack.c.b16 %v881, %v879
  %v1354 = vpack.c.b16 %v884, %v882
  %v1355 = vpack.c.b16 %v885, %v883
  %v1356 = vpack.c.b16 %v888, %v886
  %v1357 = vpack.c.b16 %v889, %v887
  %v1358 = vpack.c.b16 %v892, %v890
  %v1359 = vpack.c.b16 %v893, %v891
  %v1360 = vpack.c.b16 %v896, %v894
  %v1361 = vpack.c.b16 %v897, %v895
  %v1362 = vpack.c.b16 %v900, %v898
  %v1363 = vpack.c.b16 %v901, %v899
  %v1364 = vpack.c.b16 %v904, %v902
  %v1365 = vpack.c.b16 %v905, %v903
  %v1366 = vpack.c.b16 %v908, %v906
  %v1367 = vpack.c.b16 %v909, %v907
  %v1368 = vpack.c.b16 %v912, %v910
  %v1369 = vpack.c.b16 %v913, %v911
  %v1370 = vpack.c.b16 %v916, %v914
  %v1371 = vpack.c.b16 %v917, %v915
  %v1372 = vpack.c.b16 %v920, %v918
  %v1373 = vpack.c.b16 %v921, %v919
  %v1374 = vpack.c.b16 %v924, %v922
  %v1375 = vpack.c.b16 %v925, %v923
  %v1376 = vpack.c.b16 %v928, %v926
  %v1377 = vpack.c.b16 %v929, %v927
  %v1378 = vpack.c.b16 %v932, %v930
  %v1379 = vpack.c.b16 %v933, %v931
  %v1380 = vpack.c.b16 %v936, %v934
  %v1381 = vpack.c.b16 %v937, %v935
  %v1382 = vpack.c.b16 %v940, %v938
  %v1383 = vpack.c.b16 %v941, %v939
  %v1384 = vpack.c.b16 %v944, %v942
  %v1385 = vpack.c.b16 %v945, %v943
  %v1386 = vpack.c.b16 %v948, %v946
  %v1387 = vpack.c.b16 %v949, %v947
  %v1388 = vpack.c.b16 %v952, %v950
  %v1389 = vpack.c.b16 %v953, %v951
  %v1390 = vpack.c.b16 %v956, %v954
  %v1391 = vpack.c.b16 %v957, %v955
  %v1392 = vpack.c.b16 %v960, %v958
  %v1393 = vpack.c.b16 %v961, %v959
  %v1394 = vpack.c.b16 %v964, %v962
  %v1395 = vpack.c.b16 %v965, %v963
  %v1396 = vpack.c.b16 %v968, %v966
  %v1397 = vpack.c.b16 %v969, %v967
  %v1398 = vpack.c.b16 %v972, %v970
  %v1399 = vpack.c.b16 %v973, %v971
  %v1400 = vpack.c.b16 %v976, %v974
  %v1401 = vpack.c.b16 %v977, %v975
  %v1402 = vpack.c.b16 %v980, %v978
  %v1403 = vpack.c.b16 %v981, %v979
  %v1404 = vpack.c.b16 %v984, %v982
  %v1405 = vpack.c.b16 %v985, %v983
  %v1406 = vpack.c.b16 %v988, %v986
  %v1407 = vpack.c.b16 %v989, %v987
  %v1408 = vpack.c.b16 %v992, %v990
  %v1409 = vpack.c.b16 %v993, %v991
  %v1410 = vpack.c.b16 %v996, %v994
  %v1411 = vpack.c.b16 %v997, %v995
  %v1412 = vpack.c.b16 %v1000, %v998
  %v1413 = vpack.c.b16 %v1001, %v999
  %v1414 = vpack.c.b16 %v1004, %v1002
  %v1415 = vpack.c.b16 %v1005, %v1003
  %v1416 = vpack.c.b16 %v1008, %v1006
  %v1417 = vpack.c.b16 %v1009, %v1007
  %v1418 = vpack.c.b16 %v1012, %v1010
  %v1419 = vpack.c.b16 %v1013, %v1011
  %v1420 = vpack.c.b16 %v1016, %v1014
  %v1421 = vpack.c.b16 %v1017, %v1015
  %v1422 = vpack.c.b16 %v1020, %v1018
  %v1423 = vpack.c.b16 %v1021, %v1019
  %v1424 = vpack.c.b16 %v1024, %v1022
  %v1425 = vpack.c.b16 %v1025, %v1023
  %v1426 = vpack.c.b16 %v1028, %v1026
  %v1427 = vpack.c.b16 %v1029, %v1027
  %v1428 = vpack.c.b16 %v1032, %v1030
  %v1429 = vpack.c.b16 %v1033, %v1031
  %v1430 = vpack.c.b16 %v1036, %v1034
  %v1431 = vpack.c.b16 %v1037, %v1035
  %v1432 = vpack.c.b16 %v1040, %v1038
  %v1433 = vpack.c.b16 %v1041, %v1039
  %v1434 = vpack.c.b16 %v1044, %v1042
  %v1435 = vpack.c.b16 %v1045, %v1043
  %v1436 = vpack.c.b16 %v1048, %v1046
  %v1437 = vpack.c.b16 %v1049, %v1047
  %v1438 = vpack.c.b16 %v1052, %v1050
  %v1439 = vpack.c.b16 %v1053, %v1051
  %v1440 = vpack.c.b16 %v1056, %v1054
  %v1441 = vpack.c.b16 %v1057, %v1055
  %v1442 = vpack.c.b16 %v1060, %v1058
  %v1443 = vpack.c.b16 %v1061, %v1059
  %v1444 = vpack.c.b16 %v1064, %v1062
  %v1445 = vpack.c.b16 %v1065, %v1063
  %v1446 = vpack.c.b16 %v1068, %v1066
  %v1447 = vpack.c.b16 %v1069, %v1067
  %v1448 = vpack.c.b16 %v1072, %v1070
  %v1449 = vpack.c.b16 %v1073, %v1071
  %v1450 = vpack.c.b16 %v1076, %v1074
  %v1451 = vpack.c.b16 %v1077, %v1075
  %v1452 = vpack.c.b16 %v1080, %v1078
  %v1453 = vpack.c.b16 %v1081, %v1079
  %v1454 = vpack.c.b16 %v1084, %v1082
  %v1455 = vpack.c.b16 %v1085, %v1083
  %v1456 = vpack.c.b16 %v1088, %v1086
  %v1457 = vpack.c.b16 %v1089, %v1087
  %v1458 = vpack.c.b16 %v1092, %v1090
  %v1459 = vpack.c.b16 %v1093, %v1091
  %v1460 = vpack.c.b16 %v1096, %v1094
  %v1461 = vpack.c.b16 %v1097, %v1095
  %v1462 = vpack.c.b16 %v1100, %v1098
  %v1463 = vpack.c.b16 %v1101, %v1099
  %v1464 = vpack.c.b16 %v1104, %v1102
  %v1465 = vpack.c.b16 %v1105, %v1103
  %v1466 = vpack.c.b16 %v1108, %v1106
  %v1467 = vpack.c.b16 %v1109, %v1107
  %v1468 = vpack.c.b16 %v1112, %v1110
  %v1469 = vpack.c.b16 %v1113, %v1111
  %v1470 = vpack.c.b16 %v1116, %v1114
  %v1471 = vpack.c.b16 %v1117, %v1115
  %v1472 = vpack.c.b16 %v1120, %v1118
  %v1473 = vpack.c.b16 %v1121, %v1119
  %v1474 = vpack.c.b16 %v1124, %v1122
  %v1475 = vpack.c.b16 %v1125, %v1123
  %v1476 = vpack.c.b16 %v1128, %v1126
  %v1477 = vpack.c.b16 %v1129, %v1127
  %v1478 = vpack.c.b16 %v1132, %v1130
  %v1479 = vpack.c.b16 %v1133, %v1131
  %v1480 = vpack.c.b16 %v1136, %v1134
  %v1481 = vpack.c.b16 %v1137, %v1135
  %v1482 = vpack.c.b16 %v1140, %v1138
  %v1483 = vpack.c.b16 %v1141, %v1139
  %v1484 = vpack.c.b16 %v1144, %v1142
  %v1485 = vpack.c.b16 %v1145, %v1143
  %v1486 = vpack.c.b16 %v1148, %v1146
  %v1487 = vpack.c.b16 %v1149, %v1147
  %v1488 = vpack.c.b16 %v1152, %v1150
  %v1489 = vpack.c.b16 %v1153, %v1151
  %v1490 = vpack.c.b16 %v1156, %v1154
  %v1491 = vpack.c.b16 %v1157, %v1155
  %v1492 = vpack.c.b16 %v1160, %v1158
  %v1493 = vpack.c.b16 %v1161, %v1159
  %v1494 = vpack.c.b16 %v1164, %v1162
  %v1495 = vpack.c.b16 %v1165, %v1163
  %v1496 = vpack.c.b16 %v1168, %v1166
  %v1497 = vpack.c.b16 %v1169, %v1167
  %v1498 = vpack.c.b16 %v1172, %v1170
  %v1499 = vpack.c.b16 %v1173, %v1171
  %v1500 = vpack.c.b16 %v1176, %v1174
  %v1501 = vpack.c.b16 %v1177, %v1175
  %v1502 = vpack.c.b16 %v1180, %v1178
  %v1503 = vpack.c.b16 %v1181, %v1179
  %v1504 = vpack.c.b16 %v1184, %v1182
  %v1505 = vpack.c.b16 %v1185, %v1183
  %v1506 = vpack.c.b16 %v1188, %v1186
  %v1507 = vpack.c.b16 %v1189, %v1187
  %v1508 = vpack.c.b16 %v1192, %v1190
  %v1509 = vpack.c.b16 %v1193, %v1191
  %v1510 = vpack.c.b16 %v1196, %v1194
  %v1511 = vpack.c.b16 %v1197, %v1195
  %v1512 = vpack.c.b16 %v1200, %v1198
  %v1513 = vpack.c.b16 %v1201, %v1199
  %v1514 = vpack.c.b16 %v1204, %v1202
  %v1515 = vpack.c.b16 %v1205, %v1203
  %v1516 = vpack.c.b16 %v1208, %v1206
  %v1517 = vpack.c.b16 %v1209, %v1207
  %v1518 = vpack.c.b16 %v1212, %v1210
  %v1519 = vpack.c.b16 %v1213, %v1211
  %v1520 = vpack.c.b16 %v1216, %v1214
  %v1521 = vpack.c.b16 %v1217, %v1215
  %v1522 = vpack.c.b16 %v1220, %v1218
  %v1523 = vpack.c.b16 %v1221, %v1219
  %v1524 = vpack.c.b16 %v1224, %v1222
  %v1525 = vpack.c.b16 %v1225, %v1223
  %v1526 = vpack.c.b16 %v1228, %v1226
  %v1527 = vpack.c.b16 %v1229, %v1227
  %v1528 = vpack.c.b16 %v1232, %v1230
  %v1529 = vpack.c.b16 %v1233, %v1231
  %v1530 = vpack.c.b16 %v1236, %v1234
  %v1531 = vpack.c.b16 %v1237, %v1235
  %v1532 = vpack.c.b16 %v1240, %v1238
  %v1533 = vpack.c.b16 %v1241, %v1239
  %v1534 = vpack.c.b16 %v1244, %v1242
  %v1535 = vpack.c.b16 %v1245, %v1243
  %v1536 = vpack.c.b16 %v1248, %v1246
  %v1537 = vpack.c.b16 %v1249, %v1247
  %1826 = vmatprep.subr.bf16.mxu0 %v1251
  %1827 = vmatpush1.bf16.msra.mxu0 %v1250
  %1828 = vmatprep.subr.bf16.mxu0 %v1253
  %1829 = vmatpush1.bf16.msra.mxu0 %v1252
  %1830 = vmatprep.subr.bf16.mxu0 %v1255
  %1831 = vmatpush1.bf16.msra.mxu0 %v1254
  %1832 = vmatprep.subr.bf16.mxu0 %v1257
  %1833 = vmatpush1.bf16.msra.mxu0 %v1256
  %1834 = vmatprep.subr.bf16.mxu0 %v1259
  %1835 = vmatpush1.bf16.msra.mxu0 %v1258
  %1836 = vmatprep.subr.bf16.mxu0 %v1261
  %1837 = vmatpush1.bf16.msra.mxu0 %v1260
  %1838 = vmatprep.subr.bf16.mxu0 %v1263
  %1839 = vmatpush1.bf16.msra.mxu0 %v1262
  %1840 = vmatprep.subr.bf16.mxu0 %v1265
  %1841 = vmatpush1.bf16.msra.mxu0 %v1264
  %1842 = vmatprep.subr.bf16.mxu0 %v1267
  %1843 = vmatpush1.bf16.msra.mxu0 %v1266
  %1844 = vmatprep.subr.bf16.mxu0 %v1269
  %1845 = vmatpush1.bf16.msra.mxu0 %v1268
  %1846 = vmatprep.subr.bf16.mxu0 %v1271
  %1847 = vmatpush1.bf16.msra.mxu0 %v1270
  %1848 = vmatprep.subr.bf16.mxu0 %v1273
  %1849 = vmatpush1.bf16.msra.mxu0 %v1272
  %1850 = vmatprep.subr.bf16.mxu0 %v1275
  %1851 = vmatpush1.bf16.msra.mxu0 %v1274
  %1852 = vmatprep.subr.bf16.mxu0 %v1277
  %1853 = vmatpush1.bf16.msra.mxu0 %v1276
  %1854 = vmatprep.subr.bf16.mxu0 %v1279
  %1855 = vmatpush1.bf16.msra.mxu0 %v1278
  %1856 = vmatprep.subr.bf16.mxu0 %v1281
  %1857 = vmatpush1.bf16.msra.mxu0 %v1280
  %1858 = vmatprep.mubr.bf16.mxu0 %v351
  %1859 = vmatmul.mubr.bf16.gmra.mrb[0].mxu0 %v350
  %v1860 = vpop.f32.mrb[0].mxu0
  %v1861 = vadd.f32 %v316, %v1860
  %v1862 = vpop.f32.mrb[0].mxu0
  %v1863 = vadd.f32 %v320, %v1862
  %v1864 = vpop.f32.mrb[0].mxu0
  %v1865 = vpop.f32.mrb[0].mxu0
  %1866 = vdwg.mxu0
  %1867 = vmatprep.subr.bf16.mxu0 %v1283
  %1868 = vmatpush1.bf16.msra.mxu0 %v1282
  %1869 = vmatprep.subr.bf16.mxu0 %v1285
  %1870 = vmatpush1.bf16.msra.mxu0 %v1284
  %1871 = vmatprep.subr.bf16.mxu0 %v1287
  %1872 = vmatpush1.bf16.msra.mxu0 %v1286
  %1873 = vmatprep.subr.bf16.mxu0 %v1289
  %1874 = vmatpush1.bf16.msra.mxu0 %v1288
  %1875 = vmatprep.subr.bf16.mxu0 %v1291
  %1876 = vmatpush1.bf16.msra.mxu0 %v1290
  %1877 = vmatprep.subr.bf16.mxu0 %v1293
  %1878 = vmatpush1.bf16.msra.mxu0 %v1292
  %1879 = vmatprep.subr.bf16.mxu0 %v1295
  %1880 = vmatpush1.bf16.msra.mxu0 %v1294
  %1881 = vmatprep.subr.bf16.mxu0 %v1297
  %1882 = vmatpush1.bf16.msra.mxu0 %v1296
  %1883 = vmatprep.subr.bf16.mxu0 %v1299
  %1884 = vmatpush1.bf16.msra.mxu0 %v1298
  %1885 = vmatprep.subr.bf16.mxu0 %v1301
  %1886 = vmatpush1.bf16.msra.mxu0 %v1300
  %1887 = vmatprep.subr.bf16.mxu0 %v1303
  %1888 = vmatpush1.bf16.msra.mxu0 %v1302
  %1889 = vmatprep.subr.bf16.mxu0 %v1305
  %1890 = vmatpush1.bf16.msra.mxu0 %v1304
  %1891 = vmatprep.subr.bf16.mxu0 %v1307
  %1892 = vmatpush1.bf16.msra.mxu0 %v1306
  %1893 = vmatprep.subr.bf16.mxu0 %v1309
  %1894 = vmatpush1.bf16.msra.mxu0 %v1308
  %1895 = vmatprep.subr.bf16.mxu0 %v1311
  %1896 = vmatpush1.bf16.msra.mxu0 %v1310
  %1897 = vmatprep.subr.bf16.mxu0 %v1313
  %1898 = vmatpush1.bf16.msra.mxu0 %v1312
  %1899 = vmatprep.mubr.bf16.mxu0 %v353
  %1900 = vmatmul.mubr.bf16.gmra.mrb[0].mxu0 %v352
  %v1901 = vpop.f32.mrb[0].mxu0
  %v1902 = vadd.f32 %v1861, %v1901
  %v1903 = vpop.f32.mrb[0].mxu0
  %v1904 = vadd.f32 %v1863, %v1903
  %v1905 = vpop.f32.mrb[0].mxu0
  %v1906 = vpop.f32.mrb[0].mxu0
  %1907 = vdwg.mxu0
  %1908 = vmatprep.subr.bf16.mxu0 %v1315
  %1909 = vmatpush1.bf16.msra.mxu0 %v1314
  %1910 = vmatprep.subr.bf16.mxu0 %v1317
  %1911 = vmatpush1.bf16.msra.mxu0 %v1316
  %1912 = vmatprep.subr.bf16.mxu0 %v1319
  %1913 = vmatpush1.bf16.msra.mxu0 %v1318
  %1914 = vmatprep.subr.bf16.mxu0 %v1321
  %1915 = vmatpush1.bf16.msra.mxu0 %v1320
  %1916 = vmatprep.subr.bf16.mxu0 %v1323
  %1917 = vmatpush1.bf16.msra.mxu0 %v1322
  %1918 = vmatprep.subr.bf16.mxu0 %v1325
  %1919 = vmatpush1.bf16.msra.mxu0 %v1324
  %1920 = vmatprep.subr.bf16.mxu0 %v1327
  %1921 = vmatpush1.bf16.msra.mxu0 %v1326
  %1922 = vmatprep.subr.bf16.mxu0 %v1329
  %1923 = vmatpush1.bf16.msra.mxu0 %v1328
  %1924 = vmatprep.subr.bf16.mxu0 %v1331
  %1925 = vmatpush1.bf16.msra.mxu0 %v1330
  %1926 = vmatprep.subr.bf16.mxu0 %v1333
  %1927 = vmatpush1.bf16.msra.mxu0 %v1332
  %1928 = vmatprep.subr.bf16.mxu0 %v1335
  %1929 = vmatpush1.bf16.msra.mxu0 %v1334
  %1930 = vmatprep.subr.bf16.mxu0 %v1337
  %1931 = vmatpush1.bf16.msra.mxu0 %v1336
  %1932 = vmatprep.subr.bf16.mxu0 %v1339
  %1933 = vmatpush1.bf16.msra.mxu0 %v1338
  %1934 = vmatprep.subr.bf16.mxu0 %v1341
  %1935 = vmatpush1.bf16.msra.mxu0 %v1340
  %1936 = vmatprep.subr.bf16.mxu0 %v1343
  %1937 = vmatpush1.bf16.msra.mxu0 %v1342
  %1938 = vmatprep.subr.bf16.mxu0 %v1345
  %1939 = vmatpush1.bf16.msra.mxu0 %v1344
  %1940 = vmatprep.mubr.bf16.mxu0 %v355
  %1941 = vmatmul.mubr.bf16.gmra.mrb[0].mxu0 %v354
  %v1942 = vpop.f32.mrb[0].mxu0
  %v1943 = vadd.f32 %v1902, %v1942
  %v1944 = vpop.f32.mrb[0].mxu0
  %v1945 = vadd.f32 %v1904, %v1944
  %v1946 = vpop.f32.mrb[0].mxu0
  %v1947 = vpop.f32.mrb[0].mxu0
  %1948 = vdwg.mxu0
  %1949 = vmatprep.subr.bf16.mxu0 %v1347
  %1950 = vmatpush1.bf16.msra.mxu0 %v1346
  %1951 = vmatprep.subr.bf16.mxu0 %v1349
  %1952 = vmatpush1.bf16.msra.mxu0 %v1348
  %1953 = vmatprep.subr.bf16.mxu0 %v1351
  %1954 = vmatpush1.bf16.msra.mxu0 %v1350
  %1955 = vmatprep.subr.bf16.mxu0 %v1353
  %1956 = vmatpush1.bf16.msra.mxu0 %v1352
  %1957 = vmatprep.subr.bf16.mxu0 %v1355
  %1958 = vmatpush1.bf16.msra.mxu0 %v1354
  %1959 = vmatprep.subr.bf16.mxu0 %v1357
  %1960 = vmatpush1.bf16.msra.mxu0 %v1356
  %1961 = vmatprep.subr.bf16.mxu0 %v1359
  %1962 = vmatpush1.bf16.msra.mxu0 %v1358
  %1963 = vmatprep.subr.bf16.mxu0 %v1361
  %1964 = vmatpush1.bf16.msra.mxu0 %v1360
  %1965 = vmatprep.subr.bf16.mxu0 %v1363
  %1966 = vmatpush1.bf16.msra.mxu0 %v1362
  %1967 = vmatprep.subr.bf16.mxu0 %v1365
  %1968 = vmatpush1.bf16.msra.mxu0 %v1364
  %1969 = vmatprep.subr.bf16.mxu0 %v1367
  %1970 = vmatpush1.bf16.msra.mxu0 %v1366
  %1971 = vmatprep.subr.bf16.mxu0 %v1369
  %1972 = vmatpush1.bf16.msra.mxu0 %v1368
  %1973 = vmatprep.subr.bf16.mxu0 %v1371
  %1974 = vmatpush1.bf16.msra.mxu0 %v1370
  %1975 = vmatprep.subr.bf16.mxu0 %v1373
  %1976 = vmatpush1.bf16.msra.mxu0 %v1372
  %1977 = vmatprep.subr.bf16.mxu0 %v1375
  %1978 = vmatpush1.bf16.msra.mxu0 %v1374
  %1979 = vmatprep.subr.bf16.mxu0 %v1377
  %1980 = vmatpush1.bf16.msra.mxu0 %v1376
  %1981 = vmatprep.mubr.bf16.mxu0 %v357
  %1982 = vmatmul.mubr.bf16.gmra.mrb[0].mxu0 %v356
  %v1983 = vpop.f32.mrb[0].mxu0
  %v1984 = vadd.f32 %v1943, %v1983
  %v1985 = vpop.f32.mrb[0].mxu0
  %v1986 = vadd.f32 %v1945, %v1985
  %v1987 = vpop.f32.mrb[0].mxu0
  %v1988 = vpop.f32.mrb[0].mxu0
  %1989 = vdwg.mxu0
  %1990 = vmatprep.subr.bf16.mxu0 %v1379
  %1991 = vmatpush1.bf16.msra.mxu0 %v1378
  %1992 = vmatprep.subr.bf16.mxu0 %v1381
  %1993 = vmatpush1.bf16.msra.mxu0 %v1380
  %1994 = vmatprep.subr.bf16.mxu0 %v1383
  %1995 = vmatpush1.bf16.msra.mxu0 %v1382
  %1996 = vmatprep.subr.bf16.mxu0 %v1385
  %1997 = vmatpush1.bf16.msra.mxu0 %v1384
  %1998 = vmatprep.subr.bf16.mxu0 %v1387
  %1999 = vmatpush1.bf16.msra.mxu0 %v1386
  %2000 = vmatprep.subr.bf16.mxu0 %v1389
  %2001 = vmatpush1.bf16.msra.mxu0 %v1388
  %2002 = vmatprep.subr.bf16.mxu0 %v1391
  %2003 = vmatpush1.bf16.msra.mxu0 %v1390
  %2004 = vmatprep.subr.bf16.mxu0 %v1393
  %2005 = vmatpush1.bf16.msra.mxu0 %v1392
  %2006 = vmatprep.subr.bf16.mxu0 %v1395
  %2007 = vmatpush1.bf16.msra.mxu0 %v1394
  %2008 = vmatprep.subr.bf16.mxu0 %v1397
  %2009 = vmatpush1.bf16.msra.mxu0 %v1396
  %2010 = vmatprep.subr.bf16.mxu0 %v1399
  %2011 = vmatpush1.bf16.msra.mxu0 %v1398
  %2012 = vmatprep.subr.bf16.mxu0 %v1401
  %2013 = vmatpush1.bf16.msra.mxu0 %v1400
  %2014 = vmatprep.subr.bf16.mxu0 %v1403
  %2015 = vmatpush1.bf16.msra.mxu0 %v1402
  %2016 = vmatprep.subr.bf16.mxu0 %v1405
  %2017 = vmatpush1.bf16.msra.mxu0 %v1404
  %2018 = vmatprep.subr.bf16.mxu0 %v1407
  %2019 = vmatpush1.bf16.msra.mxu0 %v1406
  %2020 = vmatprep.subr.bf16.mxu0 %v1409
  %2021 = vmatpush1.bf16.msra.mxu0 %v1408
  %2022 = vmatprep.mubr.bf16.mxu0 %v359
  %2023 = vmatmul.mubr.bf16.gmra.mrb[0].mxu0 %v358
  %v2024 = vpop.f32.mrb[0].mxu0
  %v2025 = vadd.f32 %v1984, %v2024
  %v2026 = vpop.f32.mrb[0].mxu0
  %v2027 = vadd.f32 %v1986, %v2026
  %v2028 = vpop.f32.mrb[0].mxu0
  %v2029 = vpop.f32.mrb[0].mxu0
  %2030 = vdwg.mxu0
  %2031 = vmatprep.subr.bf16.mxu0 %v1411
  %2032 = vmatpush1.bf16.msra.mxu0 %v1410
  %2033 = vmatprep.subr.bf16.mxu0 %v1413
  %2034 = vmatpush1.bf16.msra.mxu0 %v1412
  %2035 = vmatprep.subr.bf16.mxu0 %v1415
  %2036 = vmatpush1.bf16.msra.mxu0 %v1414
  %2037 = vmatprep.subr.bf16.mxu0 %v1417
  %2038 = vmatpush1.bf16.msra.mxu0 %v1416
  %2039 = vmatprep.subr.bf16.mxu0 %v1419
  %2040 = vmatpush1.bf16.msra.mxu0 %v1418
  %2041 = vmatprep.subr.bf16.mxu0 %v1421
  %2042 = vmatpush1.bf16.msra.mxu0 %v1420
  %2043 = vmatprep.subr.bf16.mxu0 %v1423
  %2044 = vmatpush1.bf16.msra.mxu0 %v1422
  %2045 = vmatprep.subr.bf16.mxu0 %v1425
  %2046 = vmatpush1.bf16.msra.mxu0 %v1424
  %2047 = vmatprep.subr.bf16.mxu0 %v1427
  %2048 = vmatpush1.bf16.msra.mxu0 %v1426
  %2049 = vmatprep.subr.bf16.mxu0 %v1429
  %2050 = vmatpush1.bf16.msra.mxu0 %v1428
  %2051 = vmatprep.subr.bf16.mxu0 %v1431
  %2052 = vmatpush1.bf16.msra.mxu0 %v1430
  %2053 = vmatprep.subr.bf16.mxu0 %v1433
  %2054 = vmatpush1.bf16.msra.mxu0 %v1432
  %2055 = vmatprep.subr.bf16.mxu0 %v1435
  %2056 = vmatpush1.bf16.msra.mxu0 %v1434
  %2057 = vmatprep.subr.bf16.mxu0 %v1437
  %2058 = vmatpush1.bf16.msra.mxu0 %v1436
  %2059 = vmatprep.subr.bf16.mxu0 %v1439
  %2060 = vmatpush1.bf16.msra.mxu0 %v1438
  %2061 = vmatprep.subr.bf16.mxu0 %v1441
  %2062 = vmatpush1.bf16.msra.mxu0 %v1440
  %2063 = vmatprep.mubr.bf16.mxu0 %v361
  %2064 = vmatmul.mubr.bf16.gmra.mrb[0].mxu0 %v360
  %v2065 = vpop.f32.mrb[0].mxu0
  %v2066 = vadd.f32 %v2025, %v2065
  %v2067 = vpop.f32.mrb[0].mxu0
  %v2068 = vadd.f32 %v2027, %v2067
  %v2069 = vpop.f32.mrb[0].mxu0
  %v2070 = vpop.f32.mrb[0].mxu0
  %2071 = vdwg.mxu0
  %2072 = vmatprep.subr.bf16.mxu0 %v1443
  %2073 = vmatpush1.bf16.msra.mxu0 %v1442
  %2074 = vmatprep.subr.bf16.mxu0 %v1445
  %2075 = vmatpush1.bf16.msra.mxu0 %v1444
  %2076 = vmatprep.subr.bf16.mxu0 %v1447
  %2077 = vmatpush1.bf16.msra.mxu0 %v1446
  %2078 = vmatprep.subr.bf16.mxu0 %v1449
  %2079 = vmatpush1.bf16.msra.mxu0 %v1448
  %2080 = vmatprep.subr.bf16.mxu0 %v1451
  %2081 = vmatpush1.bf16.msra.mxu0 %v1450
  %2082 = vmatprep.subr.bf16.mxu0 %v1453
  %2083 = vmatpush1.bf16.msra.mxu0 %v1452
  %2084 = vmatprep.subr.bf16.mxu0 %v1455
  %2085 = vmatpush1.bf16.msra.mxu0 %v1454
  %2086 = vmatprep.subr.bf16.mxu0 %v1457
  %2087 = vmatpush1.bf16.msra.mxu0 %v1456
  %2088 = vmatprep.subr.bf16.mxu0 %v1459
  %2089 = vmatpush1.bf16.msra.mxu0 %v1458
  %2090 = vmatprep.subr.bf16.mxu0 %v1461
  %2091 = vmatpush1.bf16.msra.mxu0 %v1460
  %2092 = vmatprep.subr.bf16.mxu0 %v1463
  %2093 = vmatpush1.bf16.msra.mxu0 %v1462
  %2094 = vmatprep.subr.bf16.mxu0 %v1465
  %2095 = vmatpush1.bf16.msra.mxu0 %v1464
  %2096 = vmatprep.subr.bf16.mxu0 %v1467
  %2097 = vmatpush1.bf16.msra.mxu0 %v1466
  %2098 = vmatprep.subr.bf16.mxu0 %v1469
  %2099 = vmatpush1.bf16.msra.mxu0 %v1468
  %2100 = vmatprep.subr.bf16.mxu0 %v1471
  %2101 = vmatpush1.bf16.msra.mxu0 %v1470
  %2102 = vmatprep.subr.bf16.mxu0 %v1473
  %2103 = vmatpush1.bf16.msra.mxu0 %v1472
  %2104 = vmatprep.mubr.bf16.mxu0 %v363
  %2105 = vmatmul.mubr.bf16.gmra.mrb[0].mxu0 %v362
  %v2106 = vpop.f32.mrb[0].mxu0
  %v2107 = vadd.f32 %v2066, %v2106
  %v2108 = vpop.f32.mrb[0].mxu0
  %v2109 = vadd.f32 %v2068, %v2108
  %v2110 = vpop.f32.mrb[0].mxu0
  %v2111 = vpop.f32.mrb[0].mxu0
  %2112 = vdwg.mxu0
  %2113 = vmatprep.subr.bf16.mxu0 %v1475
  %2114 = vmatpush1.bf16.msra.mxu0 %v1474
  %2115 = vmatprep.subr.bf16.mxu0 %v1477
  %2116 = vmatpush1.bf16.msra.mxu0 %v1476
  %2117 = vmatprep.subr.bf16.mxu0 %v1479
  %2118 = vmatpush1.bf16.msra.mxu0 %v1478
  %2119 = vmatprep.subr.bf16.mxu0 %v1481
  %2120 = vmatpush1.bf16.msra.mxu0 %v1480
  %2121 = vmatprep.subr.bf16.mxu0 %v1483
  %2122 = vmatpush1.bf16.msra.mxu0 %v1482
  %2123 = vmatprep.subr.bf16.mxu0 %v1485
  %2124 = vmatpush1.bf16.msra.mxu0 %v1484
  %2125 = vmatprep.subr.bf16.mxu0 %v1487
  %2126 = vmatpush1.bf16.msra.mxu0 %v1486
  %2127 = vmatprep.subr.bf16.mxu0 %v1489
  %2128 = vmatpush1.bf16.msra.mxu0 %v1488
  %2129 = vmatprep.subr.bf16.mxu0 %v1491
  %2130 = vmatpush1.bf16.msra.mxu0 %v1490
  %2131 = vmatprep.subr.bf16.mxu0 %v1493
  %2132 = vmatpush1.bf16.msra.mxu0 %v1492
  %2133 = vmatprep.subr.bf16.mxu0 %v1495
  %2134 = vmatpush1.bf16.msra.mxu0 %v1494
  %2135 = vmatprep.subr.bf16.mxu0 %v1497
  %2136 = vmatpush1.bf16.msra.mxu0 %v1496
  %2137 = vmatprep.subr.bf16.mxu0 %v1499
  %2138 = vmatpush1.bf16.msra.mxu0 %v1498
  %2139 = vmatprep.subr.bf16.mxu0 %v1501
  %2140 = vmatpush1.bf16.msra.mxu0 %v1500
  %2141 = vmatprep.subr.bf16.mxu0 %v1503
  %2142 = vmatpush1.bf16.msra.mxu0 %v1502
  %2143 = vmatprep.subr.bf16.mxu0 %v1505
  %2144 = vmatpush1.bf16.msra.mxu0 %v1504
  %2145 = vmatprep.mubr.bf16.mxu0 %v365
  %2146 = vmatmul.mubr.bf16.gmra.mrb[0].mxu0 %v364
  %v2147 = vpop.f32.mrb[0].mxu0
  %v2148 = vadd.f32 %v2107, %v2147
  %v2149 = vpop.f32.mrb[0].mxu0
  %v2150 = vadd.f32 %v2109, %v2149
  %v2151 = vpop.f32.mrb[0].mxu0
  %v2152 = vpop.f32.mrb[0].mxu0
  %2153 = vdwg.mxu0
  %2154 = vmatprep.subr.bf16.mxu0 %v1507
  %2155 = vmatpush1.bf16.msra.mxu0 %v1506
  %2156 = vmatprep.subr.bf16.mxu0 %v1509
  %2157 = vmatpush1.bf16.msra.mxu0 %v1508
  %2158 = vmatprep.subr.bf16.mxu0 %v1511
  %2159 = vmatpush1.bf16.msra.mxu0 %v1510
  %2160 = vmatprep.subr.bf16.mxu0 %v1513
  %2161 = vmatpush1.bf16.msra.mxu0 %v1512
  %2162 = vmatprep.subr.bf16.mxu0 %v1515
  %2163 = vmatpush1.bf16.msra.mxu0 %v1514
  %2164 = vmatprep.subr.bf16.mxu0 %v1517
  %2165 = vmatpush1.bf16.msra.mxu0 %v1516
  %2166 = vmatprep.subr.bf16.mxu0 %v1519
  %2167 = vmatpush1.bf16.msra.mxu0 %v1518
  %2168 = vmatprep.subr.bf16.mxu0 %v1521
  %2169 = vmatpush1.bf16.msra.mxu0 %v1520
  %2170 = vmatprep.subr.bf16.mxu0 %v1523
  %2171 = vmatpush1.bf16.msra.mxu0 %v1522
  %2172 = vmatprep.subr.bf16.mxu0 %v1525
  %2173 = vmatpush1.bf16.msra.mxu0 %v1524
  %2174 = vmatprep.subr.bf16.mxu0 %v1527
  %2175 = vmatpush1.bf16.msra.mxu0 %v1526
  %2176 = vmatprep.subr.bf16.mxu0 %v1529
  %2177 = vmatpush1.bf16.msra.mxu0 %v1528
  %2178 = vmatprep.subr.bf16.mxu0 %v1531
  %2179 = vmatpush1.bf16.msra.mxu0 %v1530
  %2180 = vmatprep.subr.bf16.mxu0 %v1533
  %2181 = vmatpush1.bf16.msra.mxu0 %v1532
  %2182 = vmatprep.subr.bf16.mxu0 %v1535
  %2183 = vmatpush1.bf16.msra.mxu0 %v1534
  %2184 = vmatprep.subr.bf16.mxu0 %v1537
  %2185 = vmatpush1.bf16.msra.mxu0 %v1536
  %2186 = vmatprep.mubr.bf16.mxu0 %v367
  %2187 = vmatmul.mubr.bf16.gmra.mrb[0].mxu0 %v366
  %v2188 = vpop.f32.mrb[0].mxu0
  %v2189 = vadd.f32 %v2148, %v2188
  %v2190 = vpop.f32.mrb[0].mxu0
  %v2191 = vadd.f32 %v2150, %v2190
  %v2192 = vpop.f32.mrb[0].mxu0
  %v2193 = vpop.f32.mrb[0].mxu0
  %2194 = vdwg.mxu0
  %v2195 = vmax.f32 %v2189, 0.0
  %v2196 = vmax.f32 %v2191, 0.0
  %v2197 = vpack.c.bf16 %v2195, %v2195
  %v2198 = vpack.c.bf16 %v2196, %v2196
  %v2201 = vunpack.c.l.b16 %v2197
  %v2202 = vunpack.c.l.b16 %v2198
  %v2203 = vpack.c.b16 %v2202, %v2201
  %2205 = vst [vmem:[%s3] sm:$0xff] %v2203
  // Predicated region
  $region14: #{resnet_common_branch.22} parent=0 // pred_check
    _
  $region15: #{resnet_common_branch.22} parent=0 // pred_check_branch
    %2207 = sbr.rel (0) target = $region17
  $region16: #{resnet_common_branch.22} parent=0 // pred_region
    _
  $region17: #{resnet_common_branch.22} parent=0 // pred_fallthru
    _
  // Predicated region
  $region18: #{resnet_common_branch.22} parent=0 // pred_check
    _
  $region19: #{resnet_common_branch.22} parent=0 // pred_check_branch
    %2209 = sbr.rel (0) target = $region21
  $region20: #{resnet_common_branch.22} parent=0 // pred_region
    _
  $region21: #{resnet_common_branch.22} parent=0 // pred_fallthru
    _

// kernel: resnet_common_branch.23
$region0: #{resnet_common_branch.23}
  #allocation0 [shape = 'u32[]', space=smem, size = 0x4, offset = 0x4, fixed_abs, tag = 'smem constant byte address 0x4 - core index']
  #allocation1 [shape = 'u32[144,128]{1,0:T(1,128)}', space=vmem, size = 0x12000, scoped, tag = 'internal scratch']
  %s0 = inlined_call_operand.vmem [shape: bf16[8,256], index: 0, kind: input, shape index: {}]
  %s1 = inlined_call_operand.vmem [shape: bf16[256,1024], index: 1, kind: input, shape index: {}]
  %s2 = inlined_call_operand.vmem [shape: bf16[8,512], index: 2, kind: input, shape index: {}]
  %s3 = inlined_call_operand.vmem [shape: bf16[512,1024], index: 3, kind: input, shape index: {}]
  %s4 = inlined_call_operand.vmem [shape: f32[1,1024], index: 4, kind: input, shape index: {}]
  %s5 = inlined_call_operand.vmem [shape: bf16[8,1024], index: 5, kind: output, shape index: {}]
  %s6 = sld [smem:[#allocation0]]
  $region30: #{resnet_common_branch.23} parent=0
    _
  %s8 = ssub.s32 1, %s6
  %s9 = scalar_select 0, %s8, %s6
  // Predicated region
  $region2: #{resnet_common_branch.23} parent=0 // pred_check
    _
  $region3: #{resnet_common_branch.23} parent=0 // pred_check_branch
    %11 = sbr.rel (0) target = $region5
  $region4: #{resnet_common_branch.23} parent=0 // pred_region
    _
  $region5: #{resnet_common_branch.23} parent=0 // pred_fallthru
    _
  // Predicated region
  $region6: #{resnet_common_branch.23} parent=0 // pred_check
    _
  $region7: #{resnet_common_branch.23} parent=0 // pred_check_branch
    %13 = sbr.rel (0) target = $region9
  $region8: #{resnet_common_branch.23} parent=0 // pred_region
    _
  $region9: #{resnet_common_branch.23} parent=0 // pred_fallthru
    _
  // Predicated region
  $region10: #{resnet_common_branch.23} parent=0 // pred_check
    _
  $region11: #{resnet_common_branch.23} parent=0 // pred_check_branch
    %15 = sbr.rel (0) target = $region13
  $region12: #{resnet_common_branch.23} parent=0 // pred_region
    _
  $region13: #{resnet_common_branch.23} parent=0 // pred_fallthru
    _
  // Predicated region
  $region14: #{resnet_common_branch.23} parent=0 // pred_check
    _
  $region15: #{resnet_common_branch.23} parent=0 // pred_check_branch
    %17 = sbr.rel (0) target = $region17
  $region16: #{resnet_common_branch.23} parent=0 // pred_region
    _
  $region17: #{resnet_common_branch.23} parent=0 // pred_fallthru
    _
  // Predicated region
  $region18: #{resnet_common_branch.23} parent=0 // pred_check
    _
  $region19: #{resnet_common_branch.23} parent=0 // pred_check_branch
    %19 = sbr.rel (0) target = $region21
  $region20: #{resnet_common_branch.23} parent=0 // pred_region
    _
  $region21: #{resnet_common_branch.23} parent=0 // pred_fallthru
    _
  %v20 = vld [vmem:[%s0] sm:$0xff]
  %v21 = vld [vmem:[%s1] sm:$0xff]
  %v22 = vld [vmem:[%s1 + $0x8] sm:$0xff]
  %v23 = vld [vmem:[%s1 + $0x10] sm:$0xff]
  %v24 = vld [vmem:[%s1 + $0x18] sm:$0xff]
  %v25 = vld [vmem:[%s1 + $0x20] sm:$0xff]
  %v26 = vld [vmem:[%s1 + $0x28] sm:$0xff]
  %v27 = vld [vmem:[%s1 + $0x30] sm:$0xff]
  %v28 = vld [vmem:[%s1 + $0x38] sm:$0xff]
  %v29 = vld [vmem:[%s1 + $0x40] sm:$0xff]
  %v30 = vld [vmem:[%s1 + $0x48] sm:$0xff]
  %v31 = vld [vmem:[%s1 + $0x50] sm:$0xff]
  %v32 = vld [vmem:[%s1 + $0x58] sm:$0xff]
  %v33 = vld [vmem:[%s1 + $0x60] sm:$0xff]
  %v34 = vld [vmem:[%s1 + $0x68] sm:$0xff]
  %v35 = vld [vmem:[%s1 + $0x70] sm:$0xff]
  %v36 = vld [vmem:[%s1 + $0x78] sm:$0xff]
  %v37 = vld [vmem:[%s1 + $0x80] sm:$0xff]
  %v38 = vld [vmem:[%s1 + $0x88] sm:$0xff]
  %v39 = vld [vmem:[%s1 + $0x90] sm:$0xff]
  %v40 = vld [vmem:[%s1 + $0x98] sm:$0xff]
  %v41 = vld [vmem:[%s1 + $0xa0] sm:$0xff]
  %v42 = vld [vmem:[%s1 + $0xa8] sm:$0xff]
  %v43 = vld [vmem:[%s1 + $0xb0] sm:$0xff]
  %v44 = vld [vmem:[%s1 + $0xb8] sm:$0xff]
  %v45 = vld [vmem:[%s1 + $0xc0] sm:$0xff]
  %v46 = vld [vmem:[%s1 + $0xc8] sm:$0xff]
  %v47 = vld [vmem:[%s1 + $0xd0] sm:$0xff]
  %v48 = vld [vmem:[%s1 + $0xd8] sm:$0xff]
  %v49 = vld [vmem:[%s1 + $0xe0] sm:$0xff]
  %v50 = vld [vmem:[%s1 + $0xe8] sm:$0xff]
  %v51 = vld [vmem:[%s1 + $0xf0] sm:$0xff]
  %v52 = vld [vmem:[%s1 + $0xf8] sm:$0xff]
  %v53 = vld [vmem:[%s1 + $0x100] sm:$0xff]
  %v54 = vld [vmem:[%s1 + $0x108] sm:$0xff]
  %v55 = vld [vmem:[%s1 + $0x110] sm:$0xff]
  %v56 = vld [vmem:[%s1 + $0x118] sm:$0xff]
  %v57 = vld [vmem:[%s1 + $0x120] sm:$0xff]
  %v58 = vld [vmem:[%s1 + $0x128] sm:$0xff]
  %v59 = vld [vmem:[%s1 + $0x130] sm:$0xff]
  %v60 = vld [vmem:[%s1 + $0x138] sm:$0xff]
  %v61 = vld [vmem:[%s1 + $0x140] sm:$0xff]
  %v62 = vld [vmem:[%s1 + $0x148] sm:$0xff]
  %v63 = vld [vmem:[%s1 + $0x150] sm:$0xff]
  %v64 = vld [vmem:[%s1 + $0x158] sm:$0xff]
  %v65 = vld [vmem:[%s1 + $0x160] sm:$0xff]
  %v66 = vld [vmem:[%s1 + $0x168] sm:$0xff]
  %v67 = vld [vmem:[%s1 + $0x170] sm:$0xff]
  %v68 = vld [vmem:[%s1 + $0x178] sm:$0xff]
  %v69 = vld [vmem:[%s1 + $0x180] sm:$0xff]
  %v70 = vld [vmem:[%s1 + $0x188] sm:$0xff]
  %v71 = vld [vmem:[%s1 + $0x190] sm:$0xff]
  %v72 = vld [vmem:[%s1 + $0x198] sm:$0xff]
  %v73 = vld [vmem:[%s1 + $0x1a0] sm:$0xff]
  %v74 = vld [vmem:[%s1 + $0x1a8] sm:$0xff]
  %v75 = vld [vmem:[%s1 + $0x1b0] sm:$0xff]
  %v76 = vld [vmem:[%s1 + $0x1b8] sm:$0xff]
  %v77 = vld [vmem:[%s1 + $0x1c0] sm:$0xff]
  %v78 = vld [vmem:[%s1 + $0x1c8] sm:$0xff]
  %v79 = vld [vmem:[%s1 + $0x1d0] sm:$0xff]
  %v80 = vld [vmem:[%s1 + $0x1d8] sm:$0xff]
  %v81 = vld [vmem:[%s1 + $0x1e0] sm:$0xff]
  %v82 = vld [vmem:[%s1 + $0x1e8] sm:$0xff]
  %v83 = vld [vmem:[%s1 + $0x1f0] sm:$0xff]
  %v84 = vld [vmem:[%s1 + $0x1f8] sm:$0xff]
  %v85 = vld [vmem:[%s1 + $0x200] sm:$0xff]
  %v86 = vld [vmem:[%s1 + $0x208] sm:$0xff]
  %v87 = vld [vmem:[%s1 + $0x210] sm:$0xff]
  %v88 = vld [vmem:[%s1 + $0x218] sm:$0xff]
  %v89 = vld [vmem:[%s1 + $0x220] sm:$0xff]
  %v90 = vld [vmem:[%s1 + $0x228] sm:$0xff]
  %v91 = vld [vmem:[%s1 + $0x230] sm:$0xff]
  %v92 = vld [vmem:[%s1 + $0x238] sm:$0xff]
  %v93 = vld [vmem:[%s1 + $0x240] sm:$0xff]
  %v94 = vld [vmem:[%s1 + $0x248] sm:$0xff]
  %v95 = vld [vmem:[%s1 + $0x250] sm:$0xff]
  %v96 = vld [vmem:[%s1 + $0x258] sm:$0xff]
  %v97 = vld [vmem:[%s1 + $0x260] sm:$0xff]
  %v98 = vld [vmem:[%s1 + $0x268] sm:$0xff]
  %v99 = vld [vmem:[%s1 + $0x270] sm:$0xff]
  %v100 = vld [vmem:[%s1 + $0x278] sm:$0xff]
  %v101 = vld [vmem:[%s1 + $0x280] sm:$0xff]
  %v102 = vld [vmem:[%s1 + $0x288] sm:$0xff]
  %v103 = vld [vmem:[%s1 + $0x290] sm:$0xff]
  %v104 = vld [vmem:[%s1 + $0x298] sm:$0xff]
  %v105 = vld [vmem:[%s1 + $0x2a0] sm:$0xff]
  %v106 = vld [vmem:[%s1 + $0x2a8] sm:$0xff]
  %v107 = vld [vmem:[%s1 + $0x2b0] sm:$0xff]
  %v108 = vld [vmem:[%s1 + $0x2b8] sm:$0xff]
  %v109 = vld [vmem:[%s1 + $0x2c0] sm:$0xff]
  %v110 = vld [vmem:[%s1 + $0x2c8] sm:$0xff]
  %v111 = vld [vmem:[%s1 + $0x2d0] sm:$0xff]
  %v112 = vld [vmem:[%s1 + $0x2d8] sm:$0xff]
  %v113 = vld [vmem:[%s1 + $0x2e0] sm:$0xff]
  %v114 = vld [vmem:[%s1 + $0x2e8] sm:$0xff]
  %v115 = vld [vmem:[%s1 + $0x2f0] sm:$0xff]
  %v116 = vld [vmem:[%s1 + $0x2f8] sm:$0xff]
  %v117 = vld [vmem:[%s1 + $0x300] sm:$0xff]
  %v118 = vld [vmem:[%s1 + $0x308] sm:$0xff]
  %v119 = vld [vmem:[%s1 + $0x310] sm:$0xff]
  %v120 = vld [vmem:[%s1 + $0x318] sm:$0xff]
  %v121 = vld [vmem:[%s1 + $0x320] sm:$0xff]
  %v122 = vld [vmem:[%s1 + $0x328] sm:$0xff]
  %v123 = vld [vmem:[%s1 + $0x330] sm:$0xff]
  %v124 = vld [vmem:[%s1 + $0x338] sm:$0xff]
  %v125 = vld [vmem:[%s1 + $0x340] sm:$0xff]
  %v126 = vld [vmem:[%s1 + $0x348] sm:$0xff]
  %v127 = vld [vmem:[%s1 + $0x350] sm:$0xff]
  %v128 = vld [vmem:[%s1 + $0x358] sm:$0xff]
  %v129 = vld [vmem:[%s1 + $0x360] sm:$0xff]
  %v130 = vld [vmem:[%s1 + $0x368] sm:$0xff]
  %v131 = vld [vmem:[%s1 + $0x370] sm:$0xff]
  %v132 = vld [vmem:[%s1 + $0x378] sm:$0xff]
  %v133 = vld [vmem:[%s1 + $0x380] sm:$0xff]
  %v134 = vld [vmem:[%s1 + $0x388] sm:$0xff]
  %v135 = vld [vmem:[%s1 + $0x390] sm:$0xff]
  %v136 = vld [vmem:[%s1 + $0x398] sm:$0xff]
  %v137 = vld [vmem:[%s1 + $0x3a0] sm:$0xff]
  %v138 = vld [vmem:[%s1 + $0x3a8] sm:$0xff]
  %v139 = vld [vmem:[%s1 + $0x3b0] sm:$0xff]
  %v140 = vld [vmem:[%s1 + $0x3b8] sm:$0xff]
  %v141 = vld [vmem:[%s1 + $0x3c0] sm:$0xff]
  %v142 = vld [vmem:[%s1 + $0x3c8] sm:$0xff]
  %v143 = vld [vmem:[%s1 + $0x3d0] sm:$0xff]
  %v144 = vld [vmem:[%s1 + $0x3d8] sm:$0xff]
  %v145 = vld [vmem:[%s1 + $0x3e0] sm:$0xff]
  %v146 = vld [vmem:[%s1 + $0x3e8] sm:$0xff]
  %v147 = vld [vmem:[%s1 + $0x3f0] sm:$0xff]
  %v148 = vld [vmem:[%s1 + $0x3f8] sm:$0xff]
  %v149 = vld [vmem:[%s2] sm:$0xff]
  %v150 = vld [vmem:[%s2 + $0x8] sm:$0xff]
  %v151 = vld [vmem:[%s3] sm:$0xff]
  %v152 = vld [vmem:[%s3 + $0x8] sm:$0xff]
  %v153 = vld [vmem:[%s3 + $0x10] sm:$0xff]
  %v154 = vld [vmem:[%s3 + $0x18] sm:$0xff]
  %v155 = vld [vmem:[%s3 + $0x20] sm:$0xff]
  %v156 = vld [vmem:[%s3 + $0x28] sm:$0xff]
  %v157 = vld [vmem:[%s3 + $0x30] sm:$0xff]
  %v158 = vld [vmem:[%s3 + $0x38] sm:$0xff]
  %v159 = vld [vmem:[%s3 + $0x40] sm:$0xff]
  %v160 = vld [vmem:[%s3 + $0x48] sm:$0xff]
  %v161 = vld [vmem:[%s3 + $0x50] sm:$0xff]
  %v162 = vld [vmem:[%s3 + $0x58] sm:$0xff]
  %v163 = vld [vmem:[%s3 + $0x60] sm:$0xff]
  %v164 = vld [vmem:[%s3 + $0x68] sm:$0xff]
  %v165 = vld [vmem:[%s3 + $0x70] sm:$0xff]
  %v166 = vld [vmem:[%s3 + $0x78] sm:$0xff]
  %v167 = vld [vmem:[%s3 + $0x80] sm:$0xff]
  %v168 = vld [vmem:[%s3 + $0x88] sm:$0xff]
  %v169 = vld [vmem:[%s3 + $0x90] sm:$0xff]
  %v170 = vld [vmem:[%s3 + $0x98] sm:$0xff]
  %v171 = vld [vmem:[%s3 + $0xa0] sm:$0xff]
  %v172 = vld [vmem:[%s3 + $0xa8] sm:$0xff]
  %v173 = vld [vmem:[%s3 + $0xb0] sm:$0xff]
  %v174 = vld [vmem:[%s3 + $0xb8] sm:$0xff]
  %v175 = vld [vmem:[%s3 + $0xc0] sm:$0xff]
  %v176 = vld [vmem:[%s3 + $0xc8] sm:$0xff]
  %v177 = vld [vmem:[%s3 + $0xd0] sm:$0xff]
  %v178 = vld [vmem:[%s3 + $0xd8] sm:$0xff]
  %v179 = vld [vmem:[%s3 + $0xe0] sm:$0xff]
  %v180 = vld [vmem:[%s3 + $0xe8] sm:$0xff]
  %v181 = vld [vmem:[%s3 + $0xf0] sm:$0xff]
  %v182 = vld [vmem:[%s3 + $0xf8] sm:$0xff]
  %v183 = vld [vmem:[%s3 + $0x100] sm:$0xff]
  %v184 = vld [vmem:[%s3 + $0x108] sm:$0xff]
  %v185 = vld [vmem:[%s3 + $0x110] sm:$0xff]
  %v186 = vld [vmem:[%s3 + $0x118] sm:$0xff]
  %v187 = vld [vmem:[%s3 + $0x120] sm:$0xff]
  %v188 = vld [vmem:[%s3 + $0x128] sm:$0xff]
  %v189 = vld [vmem:[%s3 + $0x130] sm:$0xff]
  %v190 = vld [vmem:[%s3 + $0x138] sm:$0xff]
  %v191 = vld [vmem:[%s3 + $0x140] sm:$0xff]
  %v192 = vld [vmem:[%s3 + $0x148] sm:$0xff]
  %v193 = vld [vmem:[%s3 + $0x150] sm:$0xff]
  %v194 = vld [vmem:[%s3 + $0x158] sm:$0xff]
  %v195 = vld [vmem:[%s3 + $0x160] sm:$0xff]
  %v196 = vld [vmem:[%s3 + $0x168] sm:$0xff]
  %v197 = vld [vmem:[%s3 + $0x170] sm:$0xff]
  %v198 = vld [vmem:[%s3 + $0x178] sm:$0xff]
  %v199 = vld [vmem:[%s3 + $0x180] sm:$0xff]
  %v200 = vld [vmem:[%s3 + $0x188] sm:$0xff]
  %v201 = vld [vmem:[%s3 + $0x190] sm:$0xff]
  %v202 = vld [vmem:[%s3 + $0x198] sm:$0xff]
  %v203 = vld [vmem:[%s3 + $0x1a0] sm:$0xff]
  %v204 = vld [vmem:[%s3 + $0x1a8] sm:$0xff]
  %v205 = vld [vmem:[%s3 + $0x1b0] sm:$0xff]
  %v206 = vld [vmem:[%s3 + $0x1b8] sm:$0xff]
  %v207 = vld [vmem:[%s3 + $0x1c0] sm:$0xff]
  %v208 = vld [vmem:[%s3 + $0x1c8] sm:$0xff]
  %v209 = vld [vmem:[%s3 + $0x1d0] sm:$0xff]
  %v210 = vld [vmem:[%s3 + $0x1d8] sm:$0xff]
  %v211 = vld [vmem:[%s3 + $0x1e0] sm:$0xff]
  %v212 = vld [vmem:[%s3 + $0x1e8] sm:$0xff]
  %v213 = vld [vmem:[%s3 + $0x1f0] sm:$0xff]
  %v214 = vld [vmem:[%s3 + $0x1f8] sm:$0xff]
  %v215 = vld [vmem:[%s3 + $0x200] sm:$0xff]
  %v216 = vld [vmem:[%s3 + $0x208] sm:$0xff]
  %v217 = vld [vmem:[%s3 + $0x210] sm:$0xff]
  %v218 = vld [vmem:[%s3 + $0x218] sm:$0xff]
  %v219 = vld [vmem:[%s3 + $0x220] sm:$0xff]
  %v220 = vld [vmem:[%s3 + $0x228] sm:$0xff]
  %v221 = vld [vmem:[%s3 + $0x230] sm:$0xff]
  %v222 = vld [vmem:[%s3 + $0x238] sm:$0xff]
  %v223 = vld [vmem:[%s3 + $0x240] sm:$0xff]
  %v224 = vld [vmem:[%s3 + $0x248] sm:$0xff]
  %v225 = vld [vmem:[%s3 + $0x250] sm:$0xff]
  %v226 = vld [vmem:[%s3 + $0x258] sm:$0xff]
  %v227 = vld [vmem:[%s3 + $0x260] sm:$0xff]
  %v228 = vld [vmem:[%s3 + $0x268] sm:$0xff]
  %v229 = vld [vmem:[%s3 + $0x270] sm:$0xff]
  %v230 = vld [vmem:[%s3 + $0x278] sm:$0xff]
  %v231 = vld [vmem:[%s3 + $0x280] sm:$0xff]
  %v232 = vld [vmem:[%s3 + $0x288] sm:$0xff]
  %v233 = vld [vmem:[%s3 + $0x290] sm:$0xff]
  %v234 = vld [vmem:[%s3 + $0x298] sm:$0xff]
  %v235 = vld [vmem:[%s3 + $0x2a0] sm:$0xff]
  %v236 = vld [vmem:[%s3 + $0x2a8] sm:$0xff]
  %v237 = vld [vmem:[%s3 + $0x2b0] sm:$0xff]
  %v238 = vld [vmem:[%s3 + $0x2b8] sm:$0xff]
  %v239 = vld [vmem:[%s3 + $0x2c0] sm:$0xff]
  %v240 = vld [vmem:[%s3 + $0x2c8] sm:$0xff]
  %v241 = vld [vmem:[%s3 + $0x2d0] sm:$0xff]
  %v242 = vld [vmem:[%s3 + $0x2d8] sm:$0xff]
  %v243 = vld [vmem:[%s3 + $0x2e0] sm:$0xff]
  %v244 = vld [vmem:[%s3 + $0x2e8] sm:$0xff]
  %v245 = vld [vmem:[%s3 + $0x2f0] sm:$0xff]
  %v246 = vld [vmem:[%s3 + $0x2f8] sm:$0xff]
  %v247 = vld [vmem:[%s3 + $0x300] sm:$0xff]
  %v248 = vld [vmem:[%s3 + $0x308] sm:$0xff]
  %v249 = vld [vmem:[%s3 + $0x310] sm:$0xff]
  %v250 = vld [vmem:[%s3 + $0x318] sm:$0xff]
  %v251 = vld [vmem:[%s3 + $0x320] sm:$0xff]
  %v252 = vld [vmem:[%s3 + $0x328] sm:$0xff]
  %v253 = vld [vmem:[%s3 + $0x330] sm:$0xff]
  %v254 = vld [vmem:[%s3 + $0x338] sm:$0xff]
  %v255 = vld [vmem:[%s3 + $0x340] sm:$0xff]
  %v256 = vld [vmem:[%s3 + $0x348] sm:$0xff]
  %v257 = vld [vmem:[%s3 + $0x350] sm:$0xff]
  %v258 = vld [vmem:[%s3 + $0x358] sm:$0xff]
  %v259 = vld [vmem:[%s3 + $0x360] sm:$0xff]
  %v260 = vld [vmem:[%s3 + $0x368] sm:$0xff]
  %v261 = vld [vmem:[%s3 + $0x370] sm:$0xff]
  %v262 = vld [vmem:[%s3 + $0x378] sm:$0xff]
  %v263 = vld [vmem:[%s3 + $0x380] sm:$0xff]
  %v264 = vld [vmem:[%s3 + $0x388] sm:$0xff]
  %v265 = vld [vmem:[%s3 + $0x390] sm:$0xff]
  %v266 = vld [vmem:[%s3 + $0x398] sm:$0xff]
  %v267 = vld [vmem:[%s3 + $0x3a0] sm:$0xff]
  %v268 = vld [vmem:[%s3 + $0x3a8] sm:$0xff]
  %v269 = vld [vmem:[%s3 + $0x3b0] sm:$0xff]
  %v270 = vld [vmem:[%s3 + $0x3b8] sm:$0xff]
  %v271 = vld [vmem:[%s3 + $0x3c0] sm:$0xff]
  %v272 = vld [vmem:[%s3 + $0x3c8] sm:$0xff]
  %v273 = vld [vmem:[%s3 + $0x3d0] sm:$0xff]
  %v274 = vld [vmem:[%s3 + $0x3d8] sm:$0xff]
  %v275 = vld [vmem:[%s3 + $0x3e0] sm:$0xff]
  %v276 = vld [vmem:[%s3 + $0x3e8] sm:$0xff]
  %v277 = vld [vmem:[%s3 + $0x3f0] sm:$0xff]
  %v278 = vld [vmem:[%s3 + $0x3f8] sm:$0xff]
  %v279 = vld [vmem:[%s3 + $0x400] sm:$0xff]
  %v280 = vld [vmem:[%s3 + $0x408] sm:$0xff]
  %v281 = vld [vmem:[%s3 + $0x410] sm:$0xff]
  %v282 = vld [vmem:[%s3 + $0x418] sm:$0xff]
  %v283 = vld [vmem:[%s3 + $0x420] sm:$0xff]
  %v284 = vld [vmem:[%s3 + $0x428] sm:$0xff]
  %v285 = vld [vmem:[%s3 + $0x430] sm:$0xff]
  %v286 = vld [vmem:[%s3 + $0x438] sm:$0xff]
  %v287 = vld [vmem:[%s3 + $0x440] sm:$0xff]
  %v288 = vld [vmem:[%s3 + $0x448] sm:$0xff]
  %v289 = vld [vmem:[%s3 + $0x450] sm:$0xff]
  %v290 = vld [vmem:[%s3 + $0x458] sm:$0xff]
  %v291 = vld [vmem:[%s3 + $0x460] sm:$0xff]
  %v292 = vld [vmem:[%s3 + $0x468] sm:$0xff]
  %v293 = vld [vmem:[%s3 + $0x470] sm:$0xff]
  %v294 = vld [vmem:[%s3 + $0x478] sm:$0xff]
  %v295 = vld [vmem:[%s3 + $0x480] sm:$0xff]
  %v296 = vld [vmem:[%s3 + $0x488] sm:$0xff]
  %v297 = vld [vmem:[%s3 + $0x490] sm:$0xff]
  %v298 = vld [vmem:[%s3 + $0x498] sm:$0xff]
  %v299 = vld [vmem:[%s3 + $0x4a0] sm:$0xff]
  %v300 = vld [vmem:[%s3 + $0x4a8] sm:$0xff]
  %v301 = vld [vmem:[%s3 + $0x4b0] sm:$0xff]
  %v302 = vld [vmem:[%s3 + $0x4b8] sm:$0xff]
  %v303 = vld [vmem:[%s3 + $0x4c0] sm:$0xff]
  %v304 = vld [vmem:[%s3 + $0x4c8] sm:$0xff]
  %v305 = vld [vmem:[%s3 + $0x4d0] sm:$0xff]
  %v306 = vld [vmem:[%s3 + $0x4d8] sm:$0xff]
  %v307 = vld [vmem:[%s3 + $0x4e0] sm:$0xff]
  %v308 = vld [vmem:[%s3 + $0x4e8] sm:$0xff]
  %v309 = vld [vmem:[%s3 + $0x4f0] sm:$0xff]
  %v310 = vld [vmem:[%s3 + $0x4f8] sm:$0xff]
  %v311 = vld [vmem:[%s3 + $0x500] sm:$0xff]
  %v312 = vld [vmem:[%s3 + $0x508] sm:$0xff]
  %v313 = vld [vmem:[%s3 + $0x510] sm:$0xff]
  %v314 = vld [vmem:[%s3 + $0x518] sm:$0xff]
  %v315 = vld [vmem:[%s3 + $0x520] sm:$0xff]
  %v316 = vld [vmem:[%s3 + $0x528] sm:$0xff]
  %v317 = vld [vmem:[%s3 + $0x530] sm:$0xff]
  %v318 = vld [vmem:[%s3 + $0x538] sm:$0xff]
  %v319 = vld [vmem:[%s3 + $0x540] sm:$0xff]
  %v320 = vld [vmem:[%s3 + $0x548] sm:$0xff]
  %v321 = vld [vmem:[%s3 + $0x550] sm:$0xff]
  %v322 = vld [vmem:[%s3 + $0x558] sm:$0xff]
  %v323 = vld [vmem:[%s3 + $0x560] sm:$0xff]
  %v324 = vld [vmem:[%s3 + $0x568] sm:$0xff]
  %v325 = vld [vmem:[%s3 + $0x570] sm:$0xff]
  %v326 = vld [vmem:[%s3 + $0x578] sm:$0xff]
  %v327 = vld [vmem:[%s3 + $0x580] sm:$0xff]
  %v328 = vld [vmem:[%s3 + $0x588] sm:$0xff]
  %v329 = vld [vmem:[%s3 + $0x590] sm:$0xff]
  %v330 = vld [vmem:[%s3 + $0x598] sm:$0xff]
  %v331 = vld [vmem:[%s3 + $0x5a0] sm:$0xff]
  %v332 = vld [vmem:[%s3 + $0x5a8] sm:$0xff]
  %v333 = vld [vmem:[%s3 + $0x5b0] sm:$0xff]
  %v334 = vld [vmem:[%s3 + $0x5b8] sm:$0xff]
  %v335 = vld [vmem:[%s3 + $0x5c0] sm:$0xff]
  %v336 = vld [vmem:[%s3 + $0x5c8] sm:$0xff]
  %v337 = vld [vmem:[%s3 + $0x5d0] sm:$0xff]
  %v338 = vld [vmem:[%s3 + $0x5d8] sm:$0xff]
  %v339 = vld [vmem:[%s3 + $0x5e0] sm:$0xff]
  %v340 = vld [vmem:[%s3 + $0x5e8] sm:$0xff]
  %v341 = vld [vmem:[%s3 + $0x5f0] sm:$0xff]
  %v342 = vld [vmem:[%s3 + $0x5f8] sm:$0xff]
  %v343 = vld [vmem:[%s3 + $0x600] sm:$0xff]
  %v344 = vld [vmem:[%s3 + $0x608] sm:$0xff]
  %v345 = vld [vmem:[%s3 + $0x610] sm:$0xff]
  %v346 = vld [vmem:[%s3 + $0x618] sm:$0xff]
  %v347 = vld [vmem:[%s3 + $0x620] sm:$0xff]
  %v348 = vld [vmem:[%s3 + $0x628] sm:$0xff]
  %v349 = vld [vmem:[%s3 + $0x630] sm:$0xff]
  %v350 = vld [vmem:[%s3 + $0x638] sm:$0xff]
  %v351 = vld [vmem:[%s3 + $0x640] sm:$0xff]
  %v352 = vld [vmem:[%s3 + $0x648] sm:$0xff]
  %v353 = vld [vmem:[%s3 + $0x650] sm:$0xff]
  %v354 = vld [vmem:[%s3 + $0x658] sm:$0xff]
  %v355 = vld [vmem:[%s3 + $0x660] sm:$0xff]
  %v356 = vld [vmem:[%s3 + $0x668] sm:$0xff]
  %v357 = vld [vmem:[%s3 + $0x670] sm:$0xff]
  %v358 = vld [vmem:[%s3 + $0x678] sm:$0xff]
  %v359 = vld [vmem:[%s3 + $0x680] sm:$0xff]
  %v360 = vld [vmem:[%s3 + $0x688] sm:$0xff]
  %v361 = vld [vmem:[%s3 + $0x690] sm:$0xff]
  %v362 = vld [vmem:[%s3 + $0x698] sm:$0xff]
  %v363 = vld [vmem:[%s3 + $0x6a0] sm:$0xff]
  %v364 = vld [vmem:[%s3 + $0x6a8] sm:$0xff]
  %v365 = vld [vmem:[%s3 + $0x6b0] sm:$0xff]
  %v366 = vld [vmem:[%s3 + $0x6b8] sm:$0xff]
  %v367 = vld [vmem:[%s3 + $0x6c0] sm:$0xff]
  %v368 = vld [vmem:[%s3 + $0x6c8] sm:$0xff]
  %v369 = vld [vmem:[%s3 + $0x6d0] sm:$0xff]
  %v370 = vld [vmem:[%s3 + $0x6d8] sm:$0xff]
  %v371 = vld [vmem:[%s3 + $0x6e0] sm:$0xff]
  %v372 = vld [vmem:[%s3 + $0x6e8] sm:$0xff]
  %v373 = vld [vmem:[%s3 + $0x6f0] sm:$0xff]
  %v374 = vld [vmem:[%s3 + $0x6f8] sm:$0xff]
  %v375 = vld [vmem:[%s3 + $0x700] sm:$0xff]
  %v376 = vld [vmem:[%s3 + $0x708] sm:$0xff]
  %v377 = vld [vmem:[%s3 + $0x710] sm:$0xff]
  %v378 = vld [vmem:[%s3 + $0x718] sm:$0xff]
  %v379 = vld [vmem:[%s3 + $0x720] sm:$0xff]
  %v380 = vld [vmem:[%s3 + $0x728] sm:$0xff]
  %v381 = vld [vmem:[%s3 + $0x730] sm:$0xff]
  %v382 = vld [vmem:[%s3 + $0x738] sm:$0xff]
  %v383 = vld [vmem:[%s3 + $0x740] sm:$0xff]
  %v384 = vld [vmem:[%s3 + $0x748] sm:$0xff]
  %v385 = vld [vmem:[%s3 + $0x750] sm:$0xff]
  %v386 = vld [vmem:[%s3 + $0x758] sm:$0xff]
  %v387 = vld [vmem:[%s3 + $0x760] sm:$0xff]
  %v388 = vld [vmem:[%s3 + $0x768] sm:$0xff]
  %v389 = vld [vmem:[%s3 + $0x770] sm:$0xff]
  %v390 = vld [vmem:[%s3 + $0x778] sm:$0xff]
  %v391 = vld [vmem:[%s3 + $0x780] sm:$0xff]
  %v392 = vld [vmem:[%s3 + $0x788] sm:$0xff]
  %v393 = vld [vmem:[%s3 + $0x790] sm:$0xff]
  %v394 = vld [vmem:[%s3 + $0x798] sm:$0xff]
  %v395 = vld [vmem:[%s3 + $0x7a0] sm:$0xff]
  %v396 = vld [vmem:[%s3 + $0x7a8] sm:$0xff]
  %v397 = vld [vmem:[%s3 + $0x7b0] sm:$0xff]
  %v398 = vld [vmem:[%s3 + $0x7b8] sm:$0xff]
  %v399 = vld [vmem:[%s3 + $0x7c0] sm:$0xff]
  %v400 = vld [vmem:[%s3 + $0x7c8] sm:$0xff]
  %v401 = vld [vmem:[%s3 + $0x7d0] sm:$0xff]
  %v402 = vld [vmem:[%s3 + $0x7d8] sm:$0xff]
  %v403 = vld [vmem:[%s3 + $0x7e0] sm:$0xff]
  %v404 = vld [vmem:[%s3 + $0x7e8] sm:$0xff]
  %v405 = vld [vmem:[%s3 + $0x7f0] sm:$0xff]
  %v406 = vld [vmem:[%s3 + $0x7f8] sm:$0xff]
  %v409 = vunpack.c.l.b16 %v149
  %v410 = vunpack.c.h.b16 %v149
  %v411 = vunpack.c.l.b16 %v150
  %v412 = vunpack.c.h.b16 %v150
  %v413 = vpack.c.b16 %v409, %v409
  %v414 = vpack.c.b16 %v410, %v410
  %v415 = vpack.c.b16 %v411, %v411
  %v416 = vpack.c.b16 %v412, %v412
  %v677 = vunpack.c.l.b16 %v151
  %v678 = vunpack.c.h.b16 %v151
  %v679 = vunpack.c.l.b16 %v152
  %v680 = vunpack.c.h.b16 %v152
  %v681 = vunpack.c.l.b16 %v153
  %v682 = vunpack.c.h.b16 %v153
  %v683 = vunpack.c.l.b16 %v154
  %v684 = vunpack.c.h.b16 %v154
  %v685 = vunpack.c.l.b16 %v155
  %v686 = vunpack.c.h.b16 %v155
  %v687 = vunpack.c.l.b16 %v156
  %v688 = vunpack.c.h.b16 %v156
  %v689 = vunpack.c.l.b16 %v157
  %v690 = vunpack.c.h.b16 %v157
  %v691 = vunpack.c.l.b16 %v158
  %v692 = vunpack.c.h.b16 %v158
  %v693 = vunpack.c.l.b16 %v159
  %v694 = vunpack.c.h.b16 %v159
  %v695 = vunpack.c.l.b16 %v160
  %v696 = vunpack.c.h.b16 %v160
  %v697 = vunpack.c.l.b16 %v161
  %v698 = vunpack.c.h.b16 %v161
  %v699 = vunpack.c.l.b16 %v162
  %v700 = vunpack.c.h.b16 %v162
  %v701 = vunpack.c.l.b16 %v163
  %v702 = vunpack.c.h.b16 %v163
  %v703 = vunpack.c.l.b16 %v164
  %v704 = vunpack.c.h.b16 %v164
  %v705 = vunpack.c.l.b16 %v165
  %v706 = vunpack.c.h.b16 %v165
  %v707 = vunpack.c.l.b16 %v166
  %v708 = vunpack.c.h.b16 %v166
  %v709 = vunpack.c.l.b16 %v167
  %v710 = vunpack.c.h.b16 %v167
  %v711 = vunpack.c.l.b16 %v168
  %v712 = vunpack.c.h.b16 %v168
  %v713 = vunpack.c.l.b16 %v169
  %v714 = vunpack.c.h.b16 %v169
  %v715 = vunpack.c.l.b16 %v170
  %v716 = vunpack.c.h.b16 %v170
  %v717 = vunpack.c.l.b16 %v171
  %v718 = vunpack.c.h.b16 %v171
  %v719 = vunpack.c.l.b16 %v172
  %v720 = vunpack.c.h.b16 %v172
  %v721 = vunpack.c.l.b16 %v173
  %v722 = vunpack.c.h.b16 %v173
  %v723 = vunpack.c.l.b16 %v174
  %v724 = vunpack.c.h.b16 %v174
  %v725 = vunpack.c.l.b16 %v175
  %v726 = vunpack.c.h.b16 %v175
  %v727 = vunpack.c.l.b16 %v176
  %v728 = vunpack.c.h.b16 %v176
  %v729 = vunpack.c.l.b16 %v177
  %v730 = vunpack.c.h.b16 %v177
  %v731 = vunpack.c.l.b16 %v178
  %v732 = vunpack.c.h.b16 %v178
  %v733 = vunpack.c.l.b16 %v179
  %v734 = vunpack.c.h.b16 %v179
  %v735 = vunpack.c.l.b16 %v180
  %v736 = vunpack.c.h.b16 %v180
  %v737 = vunpack.c.l.b16 %v181
  %v738 = vunpack.c.h.b16 %v181
  %v739 = vunpack.c.l.b16 %v182
  %v740 = vunpack.c.h.b16 %v182
  %v741 = vunpack.c.l.b16 %v183
  %v742 = vunpack.c.h.b16 %v183
  %v743 = vunpack.c.l.b16 %v184
  %v744 = vunpack.c.h.b16 %v184
  %v745 = vunpack.c.l.b16 %v185
  %v746 = vunpack.c.h.b16 %v185
  %v747 = vunpack.c.l.b16 %v186
  %v748 = vunpack.c.h.b16 %v186
  %v749 = vunpack.c.l.b16 %v187
  %v750 = vunpack.c.h.b16 %v187
  %v751 = vunpack.c.l.b16 %v188
  %v752 = vunpack.c.h.b16 %v188
  %v753 = vunpack.c.l.b16 %v189
  %v754 = vunpack.c.h.b16 %v189
  %v755 = vunpack.c.l.b16 %v190
  %v756 = vunpack.c.h.b16 %v190
  %v757 = vunpack.c.l.b16 %v191
  %v758 = vunpack.c.h.b16 %v191
  %v759 = vunpack.c.l.b16 %v192
  %v760 = vunpack.c.h.b16 %v192
  %v761 = vunpack.c.l.b16 %v193
  %v762 = vunpack.c.h.b16 %v193
  %v763 = vunpack.c.l.b16 %v194
  %v764 = vunpack.c.h.b16 %v194
  %v765 = vunpack.c.l.b16 %v195
  %v766 = vunpack.c.h.b16 %v195
  %v767 = vunpack.c.l.b16 %v196
  %v768 = vunpack.c.h.b16 %v196
  %v769 = vunpack.c.l.b16 %v197
  %v770 = vunpack.c.h.b16 %v197
  %v771 = vunpack.c.l.b16 %v198
  %v772 = vunpack.c.h.b16 %v198
  %v773 = vunpack.c.l.b16 %v199
  %v774 = vunpack.c.h.b16 %v199
  %v775 = vunpack.c.l.b16 %v200
  %v776 = vunpack.c.h.b16 %v200
  %v777 = vunpack.c.l.b16 %v201
  %v778 = vunpack.c.h.b16 %v201
  %v779 = vunpack.c.l.b16 %v202
  %v780 = vunpack.c.h.b16 %v202
  %v781 = vunpack.c.l.b16 %v203
  %v782 = vunpack.c.h.b16 %v203
  %v783 = vunpack.c.l.b16 %v204
  %v784 = vunpack.c.h.b16 %v204
  %v785 = vunpack.c.l.b16 %v205
  %v786 = vunpack.c.h.b16 %v205
  %v787 = vunpack.c.l.b16 %v206
  %v788 = vunpack.c.h.b16 %v206
  %v789 = vunpack.c.l.b16 %v207
  %v790 = vunpack.c.h.b16 %v207
  %v791 = vunpack.c.l.b16 %v208
  %v792 = vunpack.c.h.b16 %v208
  %v793 = vunpack.c.l.b16 %v209
  %v794 = vunpack.c.h.b16 %v209
  %v795 = vunpack.c.l.b16 %v210
  %v796 = vunpack.c.h.b16 %v210
  %v797 = vunpack.c.l.b16 %v211
  %v798 = vunpack.c.h.b16 %v211
  %v799 = vunpack.c.l.b16 %v212
  %v800 = vunpack.c.h.b16 %v212
  %v801 = vunpack.c.l.b16 %v213
  %v802 = vunpack.c.h.b16 %v213
  %v803 = vunpack.c.l.b16 %v214
  %v804 = vunpack.c.h.b16 %v214
  %v805 = vunpack.c.l.b16 %v215
  %v806 = vunpack.c.h.b16 %v215
  %v807 = vunpack.c.l.b16 %v216
  %v808 = vunpack.c.h.b16 %v216
  %v809 = vunpack.c.l.b16 %v217
  %v810 = vunpack.c.h.b16 %v217
  %v811 = vunpack.c.l.b16 %v218
  %v812 = vunpack.c.h.b16 %v218
  %v813 = vunpack.c.l.b16 %v219
  %v814 = vunpack.c.h.b16 %v219
  %v815 = vunpack.c.l.b16 %v220
  %v816 = vunpack.c.h.b16 %v220
  %v817 = vunpack.c.l.b16 %v221
  %v818 = vunpack.c.h.b16 %v221
  %v819 = vunpack.c.l.b16 %v222
  %v820 = vunpack.c.h.b16 %v222
  %v821 = vunpack.c.l.b16 %v223
  %v822 = vunpack.c.h.b16 %v223
  %v823 = vunpack.c.l.b16 %v224
  %v824 = vunpack.c.h.b16 %v224
  %v825 = vunpack.c.l.b16 %v225
  %v826 = vunpack.c.h.b16 %v225
  %v827 = vunpack.c.l.b16 %v226
  %v828 = vunpack.c.h.b16 %v226
  %v829 = vunpack.c.l.b16 %v227
  %v830 = vunpack.c.h.b16 %v227
  %v831 = vunpack.c.l.b16 %v228
  %v832 = vunpack.c.h.b16 %v228
  %v833 = vunpack.c.l.b16 %v229
  %v834 = vunpack.c.h.b16 %v229
  %v835 = vunpack.c.l.b16 %v230
  %v836 = vunpack.c.h.b16 %v230
  %v837 = vunpack.c.l.b16 %v231
  %v838 = vunpack.c.h.b16 %v231
  %v839 = vunpack.c.l.b16 %v232
  %v840 = vunpack.c.h.b16 %v232
  %v841 = vunpack.c.l.b16 %v233
  %v842 = vunpack.c.h.b16 %v233
  %v843 = vunpack.c.l.b16 %v234
  %v844 = vunpack.c.h.b16 %v234
  %v845 = vunpack.c.l.b16 %v235
  %v846 = vunpack.c.h.b16 %v235
  %v847 = vunpack.c.l.b16 %v236
  %v848 = vunpack.c.h.b16 %v236
  %v849 = vunpack.c.l.b16 %v237
  %v850 = vunpack.c.h.b16 %v237
  %v851 = vunpack.c.l.b16 %v238
  %v852 = vunpack.c.h.b16 %v238
  %v853 = vunpack.c.l.b16 %v239
  %v854 = vunpack.c.h.b16 %v239
  %v855 = vunpack.c.l.b16 %v240
  %v856 = vunpack.c.h.b16 %v240
  %v857 = vunpack.c.l.b16 %v241
  %v858 = vunpack.c.h.b16 %v241
  %v859 = vunpack.c.l.b16 %v242
  %v860 = vunpack.c.h.b16 %v242
  %v861 = vunpack.c.l.b16 %v243
  %v862 = vunpack.c.h.b16 %v243
  %v863 = vunpack.c.l.b16 %v244
  %v864 = vunpack.c.h.b16 %v244
  %v865 = vunpack.c.l.b16 %v245
  %v866 = vunpack.c.h.b16 %v245
  %v867 = vunpack.c.l.b16 %v246
  %v868 = vunpack.c.h.b16 %v246
  %v869 = vunpack.c.l.b16 %v247
  %v870 = vunpack.c.h.b16 %v247
  %v871 = vunpack.c.l.b16 %v248
  %v872 = vunpack.c.h.b16 %v248
  %v873 = vunpack.c.l.b16 %v249
  %v874 = vunpack.c.h.b16 %v249
  %v875 = vunpack.c.l.b16 %v250
  %v876 = vunpack.c.h.b16 %v250
  %v877 = vunpack.c.l.b16 %v251
  %v878 = vunpack.c.h.b16 %v251
  %v879 = vunpack.c.l.b16 %v252
  %v880 = vunpack.c.h.b16 %v252
  %v881 = vunpack.c.l.b16 %v253
  %v882 = vunpack.c.h.b16 %v253
  %v883 = vunpack.c.l.b16 %v254
  %v884 = vunpack.c.h.b16 %v254
  %v885 = vunpack.c.l.b16 %v255
  %v886 = vunpack.c.h.b16 %v255
  %v887 = vunpack.c.l.b16 %v256
  %v888 = vunpack.c.h.b16 %v256
  %v889 = vunpack.c.l.b16 %v257
  %v890 = vunpack.c.h.b16 %v257
  %v891 = vunpack.c.l.b16 %v258
  %v892 = vunpack.c.h.b16 %v258
  %v893 = vunpack.c.l.b16 %v259
  %v894 = vunpack.c.h.b16 %v259
  %v895 = vunpack.c.l.b16 %v260
  %v896 = vunpack.c.h.b16 %v260
  %v897 = vunpack.c.l.b16 %v261
  %v898 = vunpack.c.h.b16 %v261
  %v899 = vunpack.c.l.b16 %v262
  %v900 = vunpack.c.h.b16 %v262
  %v901 = vunpack.c.l.b16 %v263
  %v902 = vunpack.c.h.b16 %v263
  %v903 = vunpack.c.l.b16 %v264
  %v904 = vunpack.c.h.b16 %v264
  %v905 = vunpack.c.l.b16 %v265
  %v906 = vunpack.c.h.b16 %v265
  %v907 = vunpack.c.l.b16 %v266
  %v908 = vunpack.c.h.b16 %v266
  %v909 = vunpack.c.l.b16 %v267
  %v910 = vunpack.c.h.b16 %v267
  %v911 = vunpack.c.l.b16 %v268
  %v912 = vunpack.c.h.b16 %v268
  %v913 = vunpack.c.l.b16 %v269
  %v914 = vunpack.c.h.b16 %v269
  %v915 = vunpack.c.l.b16 %v270
  %v916 = vunpack.c.h.b16 %v270
  %v917 = vunpack.c.l.b16 %v271
  %v918 = vunpack.c.h.b16 %v271
  %v919 = vunpack.c.l.b16 %v272
  %v920 = vunpack.c.h.b16 %v272
  %v921 = vunpack.c.l.b16 %v273
  %v922 = vunpack.c.h.b16 %v273
  %v923 = vunpack.c.l.b16 %v274
  %v924 = vunpack.c.h.b16 %v274
  %v925 = vunpack.c.l.b16 %v275
  %v926 = vunpack.c.h.b16 %v275
  %v927 = vunpack.c.l.b16 %v276
  %v928 = vunpack.c.h.b16 %v276
  %v929 = vunpack.c.l.b16 %v277
  %v930 = vunpack.c.h.b16 %v277
  %v931 = vunpack.c.l.b16 %v278
  %v932 = vunpack.c.h.b16 %v278
  %v933 = vunpack.c.l.b16 %v279
  %v934 = vunpack.c.h.b16 %v279
  %v935 = vunpack.c.l.b16 %v280
  %v936 = vunpack.c.h.b16 %v280
  %v937 = vunpack.c.l.b16 %v281
  %v938 = vunpack.c.h.b16 %v281
  %v939 = vunpack.c.l.b16 %v282
  %v940 = vunpack.c.h.b16 %v282
  %v941 = vunpack.c.l.b16 %v283
  %v942 = vunpack.c.h.b16 %v283
  %v943 = vunpack.c.l.b16 %v284
  %v944 = vunpack.c.h.b16 %v284
  %v945 = vunpack.c.l.b16 %v285
  %v946 = vunpack.c.h.b16 %v285
  %v947 = vunpack.c.l.b16 %v286
  %v948 = vunpack.c.h.b16 %v286
  %v949 = vunpack.c.l.b16 %v287
  %v950 = vunpack.c.h.b16 %v287
  %v951 = vunpack.c.l.b16 %v288
  %v952 = vunpack.c.h.b16 %v288
  %v953 = vunpack.c.l.b16 %v289
  %v954 = vunpack.c.h.b16 %v289
  %v955 = vunpack.c.l.b16 %v290
  %v956 = vunpack.c.h.b16 %v290
  %v957 = vunpack.c.l.b16 %v291
  %v958 = vunpack.c.h.b16 %v291
  %v959 = vunpack.c.l.b16 %v292
  %v960 = vunpack.c.h.b16 %v292
  %v961 = vunpack.c.l.b16 %v293
  %v962 = vunpack.c.h.b16 %v293
  %v963 = vunpack.c.l.b16 %v294
  %v964 = vunpack.c.h.b16 %v294
  %v965 = vunpack.c.l.b16 %v295
  %v966 = vunpack.c.h.b16 %v295
  %v967 = vunpack.c.l.b16 %v296
  %v968 = vunpack.c.h.b16 %v296
  %v969 = vunpack.c.l.b16 %v297
  %v970 = vunpack.c.h.b16 %v297
  %v971 = vunpack.c.l.b16 %v298
  %v972 = vunpack.c.h.b16 %v298
  %v973 = vunpack.c.l.b16 %v299
  %v974 = vunpack.c.h.b16 %v299
  %v975 = vunpack.c.l.b16 %v300
  %v976 = vunpack.c.h.b16 %v300
  %v977 = vunpack.c.l.b16 %v301
  %v978 = vunpack.c.h.b16 %v301
  %v979 = vunpack.c.l.b16 %v302
  %v980 = vunpack.c.h.b16 %v302
  %v981 = vunpack.c.l.b16 %v303
  %v982 = vunpack.c.h.b16 %v303
  %v983 = vunpack.c.l.b16 %v304
  %v984 = vunpack.c.h.b16 %v304
  %v985 = vunpack.c.l.b16 %v305
  %v986 = vunpack.c.h.b16 %v305
  %v987 = vunpack.c.l.b16 %v306
  %v988 = vunpack.c.h.b16 %v306
  %v989 = vunpack.c.l.b16 %v307
  %v990 = vunpack.c.h.b16 %v307
  %v991 = vunpack.c.l.b16 %v308
  %v992 = vunpack.c.h.b16 %v308
  %v993 = vunpack.c.l.b16 %v309
  %v994 = vunpack.c.h.b16 %v309
  %v995 = vunpack.c.l.b16 %v310
  %v996 = vunpack.c.h.b16 %v310
  %v997 = vunpack.c.l.b16 %v311
  %v998 = vunpack.c.h.b16 %v311
  %v999 = vunpack.c.l.b16 %v312
  %v1000 = vunpack.c.h.b16 %v312
  %v1001 = vunpack.c.l.b16 %v313
  %v1002 = vunpack.c.h.b16 %v313
  %v1003 = vunpack.c.l.b16 %v314
  %v1004 = vunpack.c.h.b16 %v314
  %v1005 = vunpack.c.l.b16 %v315
  %v1006 = vunpack.c.h.b16 %v315
  %v1007 = vunpack.c.l.b16 %v316
  %v1008 = vunpack.c.h.b16 %v316
  %v1009 = vunpack.c.l.b16 %v317
  %v1010 = vunpack.c.h.b16 %v317
  %v1011 = vunpack.c.l.b16 %v318
  %v1012 = vunpack.c.h.b16 %v318
  %v1013 = vunpack.c.l.b16 %v319
  %v1014 = vunpack.c.h.b16 %v319
  %v1015 = vunpack.c.l.b16 %v320
  %v1016 = vunpack.c.h.b16 %v320
  %v1017 = vunpack.c.l.b16 %v321
  %v1018 = vunpack.c.h.b16 %v321
  %v1019 = vunpack.c.l.b16 %v322
  %v1020 = vunpack.c.h.b16 %v322
  %v1021 = vunpack.c.l.b16 %v323
  %v1022 = vunpack.c.h.b16 %v323
  %v1023 = vunpack.c.l.b16 %v324
  %v1024 = vunpack.c.h.b16 %v324
  %v1025 = vunpack.c.l.b16 %v325
  %v1026 = vunpack.c.h.b16 %v325
  %v1027 = vunpack.c.l.b16 %v326
  %v1028 = vunpack.c.h.b16 %v326
  %v1029 = vunpack.c.l.b16 %v327
  %v1030 = vunpack.c.h.b16 %v327
  %v1031 = vunpack.c.l.b16 %v328
  %v1032 = vunpack.c.h.b16 %v328
  %v1033 = vunpack.c.l.b16 %v329
  %v1034 = vunpack.c.h.b16 %v329
  %v1035 = vunpack.c.l.b16 %v330
  %v1036 = vunpack.c.h.b16 %v330
  %v1037 = vunpack.c.l.b16 %v331
  %v1038 = vunpack.c.h.b16 %v331
  %v1039 = vunpack.c.l.b16 %v332
  %v1040 = vunpack.c.h.b16 %v332
  %v1041 = vunpack.c.l.b16 %v333
  %v1042 = vunpack.c.h.b16 %v333
  %v1043 = vunpack.c.l.b16 %v334
  %v1044 = vunpack.c.h.b16 %v334
  %v1045 = vunpack.c.l.b16 %v335
  %v1046 = vunpack.c.h.b16 %v335
  %v1047 = vunpack.c.l.b16 %v336
  %v1048 = vunpack.c.h.b16 %v336
  %v1049 = vunpack.c.l.b16 %v337
  %v1050 = vunpack.c.h.b16 %v337
  %v1051 = vunpack.c.l.b16 %v338
  %v1052 = vunpack.c.h.b16 %v338
  %v1053 = vunpack.c.l.b16 %v339
  %v1054 = vunpack.c.h.b16 %v339
  %v1055 = vunpack.c.l.b16 %v340
  %v1056 = vunpack.c.h.b16 %v340
  %v1057 = vunpack.c.l.b16 %v341
  %v1058 = vunpack.c.h.b16 %v341
  %v1059 = vunpack.c.l.b16 %v342
  %v1060 = vunpack.c.h.b16 %v342
  %v1061 = vunpack.c.l.b16 %v343
  %v1062 = vunpack.c.h.b16 %v343
  %v1063 = vunpack.c.l.b16 %v344
  %v1064 = vunpack.c.h.b16 %v344
  %v1065 = vunpack.c.l.b16 %v345
  %v1066 = vunpack.c.h.b16 %v345
  %v1067 = vunpack.c.l.b16 %v346
  %v1068 = vunpack.c.h.b16 %v346
  %v1069 = vunpack.c.l.b16 %v347
  %v1070 = vunpack.c.h.b16 %v347
  %v1071 = vunpack.c.l.b16 %v348
  %v1072 = vunpack.c.h.b16 %v348
  %v1073 = vunpack.c.l.b16 %v349
  %v1074 = vunpack.c.h.b16 %v349
  %v1075 = vunpack.c.l.b16 %v350
  %v1076 = vunpack.c.h.b16 %v350
  %v1077 = vunpack.c.l.b16 %v351
  %v1078 = vunpack.c.h.b16 %v351
  %v1079 = vunpack.c.l.b16 %v352
  %v1080 = vunpack.c.h.b16 %v352
  %v1081 = vunpack.c.l.b16 %v353
  %v1082 = vunpack.c.h.b16 %v353
  %v1083 = vunpack.c.l.b16 %v354
  %v1084 = vunpack.c.h.b16 %v354
  %v1085 = vunpack.c.l.b16 %v355
  %v1086 = vunpack.c.h.b16 %v355
  %v1087 = vunpack.c.l.b16 %v356
  %v1088 = vunpack.c.h.b16 %v356
  %v1089 = vunpack.c.l.b16 %v357
  %v1090 = vunpack.c.h.b16 %v357
  %v1091 = vunpack.c.l.b16 %v358
  %v1092 = vunpack.c.h.b16 %v358
  %v1093 = vunpack.c.l.b16 %v359
  %v1094 = vunpack.c.h.b16 %v359
  %v1095 = vunpack.c.l.b16 %v360
  %v1096 = vunpack.c.h.b16 %v360
  %v1097 = vunpack.c.l.b16 %v361
  %v1098 = vunpack.c.h.b16 %v361
  %v1099 = vunpack.c.l.b16 %v362
  %v1100 = vunpack.c.h.b16 %v362
  %v1101 = vunpack.c.l.b16 %v363
  %v1102 = vunpack.c.h.b16 %v363
  %v1103 = vunpack.c.l.b16 %v364
  %v1104 = vunpack.c.h.b16 %v364
  %v1105 = vunpack.c.l.b16 %v365
  %v1106 = vunpack.c.h.b16 %v365
  %v1107 = vunpack.c.l.b16 %v366
  %v1108 = vunpack.c.h.b16 %v366
  %v1109 = vunpack.c.l.b16 %v367
  %v1110 = vunpack.c.h.b16 %v367
  %v1111 = vunpack.c.l.b16 %v368
  %v1112 = vunpack.c.h.b16 %v368
  %v1113 = vunpack.c.l.b16 %v369
  %v1114 = vunpack.c.h.b16 %v369
  %v1115 = vunpack.c.l.b16 %v370
  %v1116 = vunpack.c.h.b16 %v370
  %v1117 = vunpack.c.l.b16 %v371
  %v1118 = vunpack.c.h.b16 %v371
  %v1119 = vunpack.c.l.b16 %v372
  %v1120 = vunpack.c.h.b16 %v372
  %v1121 = vunpack.c.l.b16 %v373
  %v1122 = vunpack.c.h.b16 %v373
  %v1123 = vunpack.c.l.b16 %v374
  %v1124 = vunpack.c.h.b16 %v374
  %v1125 = vunpack.c.l.b16 %v375
  %v1126 = vunpack.c.h.b16 %v375
  %v1127 = vunpack.c.l.b16 %v376
  %v1128 = vunpack.c.h.b16 %v376
  %v1129 = vunpack.c.l.b16 %v377
  %v1130 = vunpack.c.h.b16 %v377
  %v1131 = vunpack.c.l.b16 %v378
  %v1132 = vunpack.c.h.b16 %v378
  %v1133 = vunpack.c.l.b16 %v379
  %v1134 = vunpack.c.h.b16 %v379
  %v1135 = vunpack.c.l.b16 %v380
  %v1136 = vunpack.c.h.b16 %v380
  %v1137 = vunpack.c.l.b16 %v381
  %v1138 = vunpack.c.h.b16 %v381
  %v1139 = vunpack.c.l.b16 %v382
  %v1140 = vunpack.c.h.b16 %v382
  %v1141 = vunpack.c.l.b16 %v383
  %v1142 = vunpack.c.h.b16 %v383
  %v1143 = vunpack.c.l.b16 %v384
  %v1144 = vunpack.c.h.b16 %v384
  %v1145 = vunpack.c.l.b16 %v385
  %v1146 = vunpack.c.h.b16 %v385
  %v1147 = vunpack.c.l.b16 %v386
  %v1148 = vunpack.c.h.b16 %v386
  %v1149 = vunpack.c.l.b16 %v387
  %v1150 = vunpack.c.h.b16 %v387
  %v1151 = vunpack.c.l.b16 %v388
  %v1152 = vunpack.c.h.b16 %v388
  %v1153 = vunpack.c.l.b16 %v389
  %v1154 = vunpack.c.h.b16 %v389
  %v1155 = vunpack.c.l.b16 %v390
  %v1156 = vunpack.c.h.b16 %v390
  %v1157 = vunpack.c.l.b16 %v391
  %v1158 = vunpack.c.h.b16 %v391
  %v1159 = vunpack.c.l.b16 %v392
  %v1160 = vunpack.c.h.b16 %v392
  %v1161 = vunpack.c.l.b16 %v393
  %v1162 = vunpack.c.h.b16 %v393
  %v1163 = vunpack.c.l.b16 %v394
  %v1164 = vunpack.c.h.b16 %v394
  %v1165 = vunpack.c.l.b16 %v395
  %v1166 = vunpack.c.h.b16 %v395
  %v1167 = vunpack.c.l.b16 %v396
  %v1168 = vunpack.c.h.b16 %v396
  %v1169 = vunpack.c.l.b16 %v397
  %v1170 = vunpack.c.h.b16 %v397
  %v1171 = vunpack.c.l.b16 %v398
  %v1172 = vunpack.c.h.b16 %v398
  %v1173 = vunpack.c.l.b16 %v399
  %v1174 = vunpack.c.h.b16 %v399
  %v1175 = vunpack.c.l.b16 %v400
  %v1176 = vunpack.c.h.b16 %v400
  %v1177 = vunpack.c.l.b16 %v401
  %v1178 = vunpack.c.h.b16 %v401
  %v1179 = vunpack.c.l.b16 %v402
  %v1180 = vunpack.c.h.b16 %v402
  %v1181 = vunpack.c.l.b16 %v403
  %v1182 = vunpack.c.h.b16 %v403
  %v1183 = vunpack.c.l.b16 %v404
  %v1184 = vunpack.c.h.b16 %v404
  %v1185 = vunpack.c.l.b16 %v405
  %v1186 = vunpack.c.h.b16 %v405
  %v1187 = vunpack.c.l.b16 %v406
  %v1188 = vunpack.c.h.b16 %v406
  %v1189 = vpack.c.b16 %v685, %v677
  %v1190 = vpack.c.b16 %v686, %v678
  %v1191 = vpack.c.b16 %v687, %v679
  %v1192 = vpack.c.b16 %v688, %v680
  %v1193 = vpack.c.b16 %v689, %v681
  %v1194 = vpack.c.b16 %v690, %v682
  %v1195 = vpack.c.b16 %v691, %v683
  %v1196 = vpack.c.b16 %v692, %v684
  %v1197 = vpack.c.b16 %v701, %v693
  %v1198 = vpack.c.b16 %v702, %v694
  %v1199 = vpack.c.b16 %v703, %v695
  %v1200 = vpack.c.b16 %v704, %v696
  %v1201 = vpack.c.b16 %v705, %v697
  %v1202 = vpack.c.b16 %v706, %v698
  %v1203 = vpack.c.b16 %v707, %v699
  %v1204 = vpack.c.b16 %v708, %v700
  %v1205 = vpack.c.b16 %v717, %v709
  %v1206 = vpack.c.b16 %v718, %v710
  %v1207 = vpack.c.b16 %v719, %v711
  %v1208 = vpack.c.b16 %v720, %v712
  %v1209 = vpack.c.b16 %v721, %v713
  %v1210 = vpack.c.b16 %v722, %v714
  %v1211 = vpack.c.b16 %v723, %v715
  %v1212 = vpack.c.b16 %v724, %v716
  %v1213 = vpack.c.b16 %v733, %v725
  %v1214 = vpack.c.b16 %v734, %v726
  %v1215 = vpack.c.b16 %v735, %v727
  %v1216 = vpack.c.b16 %v736, %v728
  %v1217 = vpack.c.b16 %v737, %v729
  %v1218 = vpack.c.b16 %v738, %v730
  %v1219 = vpack.c.b16 %v739, %v731
  %v1220 = vpack.c.b16 %v740, %v732
  %v1221 = vpack.c.b16 %v749, %v741
  %v1222 = vpack.c.b16 %v750, %v742
  %v1223 = vpack.c.b16 %v751, %v743
  %v1224 = vpack.c.b16 %v752, %v744
  %v1225 = vpack.c.b16 %v753, %v745
  %v1226 = vpack.c.b16 %v754, %v746
  %v1227 = vpack.c.b16 %v755, %v747
  %v1228 = vpack.c.b16 %v756, %v748
  %v1229 = vpack.c.b16 %v765, %v757
  %v1230 = vpack.c.b16 %v766, %v758
  %v1231 = vpack.c.b16 %v767, %v759
  %v1232 = vpack.c.b16 %v768, %v760
  %v1233 = vpack.c.b16 %v769, %v761
  %v1234 = vpack.c.b16 %v770, %v762
  %v1235 = vpack.c.b16 %v771, %v763
  %v1236 = vpack.c.b16 %v772, %v764
  %v1237 = vpack.c.b16 %v781, %v773
  %v1238 = vpack.c.b16 %v782, %v774
  %v1239 = vpack.c.b16 %v783, %v775
  %v1240 = vpack.c.b16 %v784, %v776
  %v1241 = vpack.c.b16 %v785, %v777
  %v1242 = vpack.c.b16 %v786, %v778
  %v1243 = vpack.c.b16 %v787, %v779
  %v1244 = vpack.c.b16 %v788, %v780
  %v1245 = vpack.c.b16 %v797, %v789
  %v1246 = vpack.c.b16 %v798, %v790
  %v1247 = vpack.c.b16 %v799, %v791
  %v1248 = vpack.c.b16 %v800, %v792
  %v1249 = vpack.c.b16 %v801, %v793
  %v1250 = vpack.c.b16 %v802, %v794
  %v1251 = vpack.c.b16 %v803, %v795
  %v1252 = vpack.c.b16 %v804, %v796
  %v1253 = vpack.c.b16 %v813, %v805
  %v1254 = vpack.c.b16 %v814, %v806
  %v1255 = vpack.c.b16 %v815, %v807
  %v1256 = vpack.c.b16 %v816, %v808
  %v1257 = vpack.c.b16 %v817, %v809
  %v1258 = vpack.c.b16 %v818, %v810
  %v1259 = vpack.c.b16 %v819, %v811
  %v1260 = vpack.c.b16 %v820, %v812
  %v1261 = vpack.c.b16 %v829, %v821
  %v1262 = vpack.c.b16 %v830, %v822
  %v1263 = vpack.c.b16 %v831, %v823
  %v1264 = vpack.c.b16 %v832, %v824
  %v1265 = vpack.c.b16 %v833, %v825
  %v1266 = vpack.c.b16 %v834, %v826
  %v1267 = vpack.c.b16 %v835, %v827
  %v1268 = vpack.c.b16 %v836, %v828
  %v1269 = vpack.c.b16 %v845, %v837
  %v1270 = vpack.c.b16 %v846, %v838
  %v1271 = vpack.c.b16 %v847, %v839
  %v1272 = vpack.c.b16 %v848, %v840
  %v1273 = vpack.c.b16 %v849, %v841
  %v1274 = vpack.c.b16 %v850, %v842
  %v1275 = vpack.c.b16 %v851, %v843
  %v1276 = vpack.c.b16 %v852, %v844
  %v1277 = vpack.c.b16 %v861, %v853
  %v1278 = vpack.c.b16 %v862, %v854
  %v1279 = vpack.c.b16 %v863, %v855
  %v1280 = vpack.c.b16 %v864, %v856
  %v1281 = vpack.c.b16 %v865, %v857
  %v1282 = vpack.c.b16 %v866, %v858
  %v1283 = vpack.c.b16 %v867, %v859
  %v1284 = vpack.c.b16 %v868, %v860
  %v1285 = vpack.c.b16 %v877, %v869
  %v1286 = vpack.c.b16 %v878, %v870
  %v1287 = vpack.c.b16 %v879, %v871
  %v1288 = vpack.c.b16 %v880, %v872
  %v1289 = vpack.c.b16 %v881, %v873
  %v1290 = vpack.c.b16 %v882, %v874
  %v1291 = vpack.c.b16 %v883, %v875
  %v1292 = vpack.c.b16 %v884, %v876
  %v1293 = vpack.c.b16 %v893, %v885
  %v1294 = vpack.c.b16 %v894, %v886
  %v1295 = vpack.c.b16 %v895, %v887
  %v1296 = vpack.c.b16 %v896, %v888
  %v1297 = vpack.c.b16 %v897, %v889
  %v1298 = vpack.c.b16 %v898, %v890
  %v1299 = vpack.c.b16 %v899, %v891
  %v1300 = vpack.c.b16 %v900, %v892
  %v1301 = vpack.c.b16 %v909, %v901
  %v1302 = vpack.c.b16 %v910, %v902
  %v1303 = vpack.c.b16 %v911, %v903
  %v1304 = vpack.c.b16 %v912, %v904
  %v1305 = vpack.c.b16 %v913, %v905
  %v1306 = vpack.c.b16 %v914, %v906
  %v1307 = vpack.c.b16 %v915, %v907
  %v1308 = vpack.c.b16 %v916, %v908
  %v1309 = vpack.c.b16 %v925, %v917
  %v1310 = vpack.c.b16 %v926, %v918
  %v1311 = vpack.c.b16 %v927, %v919
  %v1312 = vpack.c.b16 %v928, %v920
  %v1313 = vpack.c.b16 %v929, %v921
  %v1314 = vpack.c.b16 %v930, %v922
  %v1315 = vpack.c.b16 %v931, %v923
  %v1316 = vpack.c.b16 %v932, %v924
  %v1317 = vpack.c.b16 %v941, %v933
  %v1318 = vpack.c.b16 %v942, %v934
  %v1319 = vpack.c.b16 %v943, %v935
  %v1320 = vpack.c.b16 %v944, %v936
  %v1321 = vpack.c.b16 %v945, %v937
  %v1322 = vpack.c.b16 %v946, %v938
  %v1323 = vpack.c.b16 %v947, %v939
  %v1324 = vpack.c.b16 %v948, %v940
  %v1325 = vpack.c.b16 %v957, %v949
  %v1326 = vpack.c.b16 %v958, %v950
  %v1327 = vpack.c.b16 %v959, %v951
  %v1328 = vpack.c.b16 %v960, %v952
  %v1329 = vpack.c.b16 %v961, %v953
  %v1330 = vpack.c.b16 %v962, %v954
  %v1331 = vpack.c.b16 %v963, %v955
  %v1332 = vpack.c.b16 %v964, %v956
  %v1333 = vpack.c.b16 %v973, %v965
  %v1334 = vpack.c.b16 %v974, %v966
  %v1335 = vpack.c.b16 %v975, %v967
  %v1336 = vpack.c.b16 %v976, %v968
  %v1337 = vpack.c.b16 %v977, %v969
  %v1338 = vpack.c.b16 %v978, %v970
  %v1339 = vpack.c.b16 %v979, %v971
  %v1340 = vpack.c.b16 %v980, %v972
  %v1341 = vpack.c.b16 %v989, %v981
  %v1342 = vpack.c.b16 %v990, %v982
  %v1343 = vpack.c.b16 %v991, %v983
  %v1344 = vpack.c.b16 %v992, %v984
  %v1345 = vpack.c.b16 %v993, %v985
  %v1346 = vpack.c.b16 %v994, %v986
  %v1347 = vpack.c.b16 %v995, %v987
  %v1348 = vpack.c.b16 %v996, %v988
  %v1349 = vpack.c.b16 %v1005, %v997
  %v1350 = vpack.c.b16 %v1006, %v998
  %v1351 = vpack.c.b16 %v1007, %v999
  %v1352 = vpack.c.b16 %v1008, %v1000
  %v1353 = vpack.c.b16 %v1009, %v1001
  %v1354 = vpack.c.b16 %v1010, %v1002
  %v1355 = vpack.c.b16 %v1011, %v1003
  %v1356 = vpack.c.b16 %v1012, %v1004
  %v1357 = vpack.c.b16 %v1021, %v1013
  %v1358 = vpack.c.b16 %v1022, %v1014
  %v1359 = vpack.c.b16 %v1023, %v1015
  %v1360 = vpack.c.b16 %v1024, %v1016
  %v1361 = vpack.c.b16 %v1025, %v1017
  %v1362 = vpack.c.b16 %v1026, %v1018
  %v1363 = vpack.c.b16 %v1027, %v1019
  %v1364 = vpack.c.b16 %v1028, %v1020
  %v1365 = vpack.c.b16 %v1037, %v1029
  %v1366 = vpack.c.b16 %v1038, %v1030
  %v1367 = vpack.c.b16 %v1039, %v1031
  %v1368 = vpack.c.b16 %v1040, %v1032
  %v1369 = vpack.c.b16 %v1041, %v1033
  %v1370 = vpack.c.b16 %v1042, %v1034
  %v1371 = vpack.c.b16 %v1043, %v1035
  %v1372 = vpack.c.b16 %v1044, %v1036
  %v1373 = vpack.c.b16 %v1053, %v1045
  %v1374 = vpack.c.b16 %v1054, %v1046
  %v1375 = vpack.c.b16 %v1055, %v1047
  %v1376 = vpack.c.b16 %v1056, %v1048
  %v1377 = vpack.c.b16 %v1057, %v1049
  %v1378 = vpack.c.b16 %v1058, %v1050
  %v1379 = vpack.c.b16 %v1059, %v1051
  %v1380 = vpack.c.b16 %v1060, %v1052
  %v1381 = vpack.c.b16 %v1069, %v1061
  %v1382 = vpack.c.b16 %v1070, %v1062
  %v1383 = vpack.c.b16 %v1071, %v1063
  %v1384 = vpack.c.b16 %v1072, %v1064
  %v1385 = vpack.c.b16 %v1073, %v1065
  %v1386 = vpack.c.b16 %v1074, %v1066
  %v1387 = vpack.c.b16 %v1075, %v1067
  %v1388 = vpack.c.b16 %v1076, %v1068
  %v1389 = vpack.c.b16 %v1085, %v1077
  %v1390 = vpack.c.b16 %v1086, %v1078
  %v1391 = vpack.c.b16 %v1087, %v1079
  %v1392 = vpack.c.b16 %v1088, %v1080
  %v1393 = vpack.c.b16 %v1089, %v1081
  %v1394 = vpack.c.b16 %v1090, %v1082
  %v1395 = vpack.c.b16 %v1091, %v1083
  %v1396 = vpack.c.b16 %v1092, %v1084
  %v1397 = vpack.c.b16 %v1101, %v1093
  %v1398 = vpack.c.b16 %v1102, %v1094
  %v1399 = vpack.c.b16 %v1103, %v1095
  %v1400 = vpack.c.b16 %v1104, %v1096
  %v1401 = vpack.c.b16 %v1105, %v1097
  %v1402 = vpack.c.b16 %v1106, %v1098
  %v1403 = vpack.c.b16 %v1107, %v1099
  %v1404 = vpack.c.b16 %v1108, %v1100
  %v1405 = vpack.c.b16 %v1117, %v1109
  %v1406 = vpack.c.b16 %v1118, %v1110
  %v1407 = vpack.c.b16 %v1119, %v1111
  %v1408 = vpack.c.b16 %v1120, %v1112
  %v1409 = vpack.c.b16 %v1121, %v1113
  %v1410 = vpack.c.b16 %v1122, %v1114
  %v1411 = vpack.c.b16 %v1123, %v1115
  %v1412 = vpack.c.b16 %v1124, %v1116
  %v1413 = vpack.c.b16 %v1133, %v1125
  %v1414 = vpack.c.b16 %v1134, %v1126
  %v1415 = vpack.c.b16 %v1135, %v1127
  %v1416 = vpack.c.b16 %v1136, %v1128
  %v1417 = vpack.c.b16 %v1137, %v1129
  %v1418 = vpack.c.b16 %v1138, %v1130
  %v1419 = vpack.c.b16 %v1139, %v1131
  %v1420 = vpack.c.b16 %v1140, %v1132
  %v1421 = vpack.c.b16 %v1149, %v1141
  %v1422 = vpack.c.b16 %v1150, %v1142
  %v1423 = vpack.c.b16 %v1151, %v1143
  %v1424 = vpack.c.b16 %v1152, %v1144
  %v1425 = vpack.c.b16 %v1153, %v1145
  %v1426 = vpack.c.b16 %v1154, %v1146
  %v1427 = vpack.c.b16 %v1155, %v1147
  %v1428 = vpack.c.b16 %v1156, %v1148
  %v1429 = vpack.c.b16 %v1165, %v1157
  %v1430 = vpack.c.b16 %v1166, %v1158
  %v1431 = vpack.c.b16 %v1167, %v1159
  %v1432 = vpack.c.b16 %v1168, %v1160
  %v1433 = vpack.c.b16 %v1169, %v1161
  %v1434 = vpack.c.b16 %v1170, %v1162
  %v1435 = vpack.c.b16 %v1171, %v1163
  %v1436 = vpack.c.b16 %v1172, %v1164
  %v1437 = vpack.c.b16 %v1181, %v1173
  %v1438 = vpack.c.b16 %v1182, %v1174
  %v1439 = vpack.c.b16 %v1183, %v1175
  %v1440 = vpack.c.b16 %v1184, %v1176
  %v1441 = vpack.c.b16 %v1185, %v1177
  %v1442 = vpack.c.b16 %v1186, %v1178
  %v1443 = vpack.c.b16 %v1187, %v1179
  %v1444 = vpack.c.b16 %v1188, %v1180
  %1701 = vmatprep.subr.bf16.mxu0 %v1190
  %1702 = vmatpush1.bf16.msra.mxu0 %v1189
  %1703 = vmatprep.subr.bf16.mxu0 %v1198
  %1704 = vmatpush1.bf16.msra.mxu0 %v1197
  %1705 = vmatprep.subr.bf16.mxu0 %v1206
  %1706 = vmatpush1.bf16.msra.mxu0 %v1205
  %1707 = vmatprep.subr.bf16.mxu0 %v1214
  %1708 = vmatpush1.bf16.msra.mxu0 %v1213
  %1709 = vmatprep.subr.bf16.mxu0 %v1222
  %1710 = vmatpush1.bf16.msra.mxu0 %v1221
  %1711 = vmatprep.subr.bf16.mxu0 %v1230
  %1712 = vmatpush1.bf16.msra.mxu0 %v1229
  %1713 = vmatprep.subr.bf16.mxu0 %v1238
  %1714 = vmatpush1.bf16.msra.mxu0 %v1237
  %1715 = vmatprep.subr.bf16.mxu0 %v1246
  %1716 = vmatpush1.bf16.msra.mxu0 %v1245
  %1717 = vmatprep.subr.bf16.mxu0 %v1254
  %1718 = vmatpush1.bf16.msra.mxu0 %v1253
  %1719 = vmatprep.subr.bf16.mxu0 %v1262
  %1720 = vmatpush1.bf16.msra.mxu0 %v1261
  %1721 = vmatprep.subr.bf16.mxu0 %v1270
  %1722 = vmatpush1.bf16.msra.mxu0 %v1269
  %1723 = vmatprep.subr.bf16.mxu0 %v1278
  %1724 = vmatpush1.bf16.msra.mxu0 %v1277
  %1725 = vmatprep.subr.bf16.mxu0 %v1286
  %1726 = vmatpush1.bf16.msra.mxu0 %v1285
  %1727 = vmatprep.subr.bf16.mxu0 %v1294
  %1728 = vmatpush1.bf16.msra.mxu0 %v1293
  %1729 = vmatprep.subr.bf16.mxu0 %v1302
  %1730 = vmatpush1.bf16.msra.mxu0 %v1301
  %1731 = vmatprep.subr.bf16.mxu0 %v1310
  %1732 = vmatpush1.bf16.msra.mxu0 %v1309
  %1733 = vmatprep.mubr.bf16.mxu0 %v414
  %1734 = vmatmul.mubr.bf16.gmra.mrb[0].mxu0 %v413
  %v1735 = vpop.f32.mrb[0].mxu0
  %v1736 = vadd.f32 0.0, %v1735
  %v1737 = vpop.f32.mrb[0].mxu0
  %v1738 = vadd.f32 0.0, %v1737
  %v1739 = vpop.f32.mrb[0].mxu0
  %v1740 = vpop.f32.mrb[0].mxu0
  %1741 = vdwg.mxu0
  %1742 = vmatprep.subr.bf16.mxu0 %v1318
  %1743 = vmatpush1.bf16.msra.mxu0 %v1317
  %1744 = vmatprep.subr.bf16.mxu0 %v1326
  %1745 = vmatpush1.bf16.msra.mxu0 %v1325
  %1746 = vmatprep.subr.bf16.mxu0 %v1334
  %1747 = vmatpush1.bf16.msra.mxu0 %v1333
  %1748 = vmatprep.subr.bf16.mxu0 %v1342
  %1749 = vmatpush1.bf16.msra.mxu0 %v1341
  %1750 = vmatprep.subr.bf16.mxu0 %v1350
  %1751 = vmatpush1.bf16.msra.mxu0 %v1349
  %1752 = vmatprep.subr.bf16.mxu0 %v1358
  %1753 = vmatpush1.bf16.msra.mxu0 %v1357
  %1754 = vmatprep.subr.bf16.mxu0 %v1366
  %1755 = vmatpush1.bf16.msra.mxu0 %v1365
  %1756 = vmatprep.subr.bf16.mxu0 %v1374
  %1757 = vmatpush1.bf16.msra.mxu0 %v1373
  %1758 = vmatprep.subr.bf16.mxu0 %v1382
  %1759 = vmatpush1.bf16.msra.mxu0 %v1381
  %1760 = vmatprep.subr.bf16.mxu0 %v1390
  %1761 = vmatpush1.bf16.msra.mxu0 %v1389
  %1762 = vmatprep.subr.bf16.mxu0 %v1398
  %1763 = vmatpush1.bf16.msra.mxu0 %v1397
  %1764 = vmatprep.subr.bf16.mxu0 %v1406
  %1765 = vmatpush1.bf16.msra.mxu0 %v1405
  %1766 = vmatprep.subr.bf16.mxu0 %v1414
  %1767 = vmatpush1.bf16.msra.mxu0 %v1413
  %1768 = vmatprep.subr.bf16.mxu0 %v1422
  %1769 = vmatpush1.bf16.msra.mxu0 %v1421
  %1770 = vmatprep.subr.bf16.mxu0 %v1430
  %1771 = vmatpush1.bf16.msra.mxu0 %v1429
  %1772 = vmatprep.subr.bf16.mxu0 %v1438
  %1773 = vmatpush1.bf16.msra.mxu0 %v1437
  %1774 = vmatprep.mubr.bf16.mxu0 %v416
  %1775 = vmatmul.mubr.bf16.gmra.mrb[0].mxu0 %v415
  %v1776 = vpop.f32.mrb[0].mxu0
  %v1777 = vadd.f32 %v1736, %v1776
  %v1778 = vpop.f32.mrb[0].mxu0
  %v1779 = vadd.f32 %v1738, %v1778
  %v1780 = vpop.f32.mrb[0].mxu0
  %v1781 = vpop.f32.mrb[0].mxu0
  %1782 = vdwg.mxu0
  %1783 = vmatprep.subr.bf16.mxu0 %v1192
  %1784 = vmatpush1.bf16.msra.mxu0 %v1191
  %1785 = vmatprep.subr.bf16.mxu0 %v1200
  %1786 = vmatpush1.bf16.msra.mxu0 %v1199
  %1787 = vmatprep.subr.bf16.mxu0 %v1208
  %1788 = vmatpush1.bf16.msra.mxu0 %v1207
  %1789 = vmatprep.subr.bf16.mxu0 %v1216
  %1790 = vmatpush1.bf16.msra.mxu0 %v1215
  %1791 = vmatprep.subr.bf16.mxu0 %v1224
  %1792 = vmatpush1.bf16.msra.mxu0 %v1223
  %1793 = vmatprep.subr.bf16.mxu0 %v1232
  %1794 = vmatpush1.bf16.msra.mxu0 %v1231
  %1795 = vmatprep.subr.bf16.mxu0 %v1240
  %1796 = vmatpush1.bf16.msra.mxu0 %v1239
  %1797 = vmatprep.subr.bf16.mxu0 %v1248
  %1798 = vmatpush1.bf16.msra.mxu0 %v1247
  %1799 = vmatprep.subr.bf16.mxu0 %v1256
  %1800 = vmatpush1.bf16.msra.mxu0 %v1255
  %1801 = vmatprep.subr.bf16.mxu0 %v1264
  %1802 = vmatpush1.bf16.msra.mxu0 %v1263
  %1803 = vmatprep.subr.bf16.mxu0 %v1272
  %1804 = vmatpush1.bf16.msra.mxu0 %v1271
  %1805 = vmatprep.subr.bf16.mxu0 %v1280
  %1806 = vmatpush1.bf16.msra.mxu0 %v1279
  %1807 = vmatprep.subr.bf16.mxu0 %v1288
  %1808 = vmatpush1.bf16.msra.mxu0 %v1287
  %1809 = vmatprep.subr.bf16.mxu0 %v1296
  %1810 = vmatpush1.bf16.msra.mxu0 %v1295
  %1811 = vmatprep.subr.bf16.mxu0 %v1304
  %1812 = vmatpush1.bf16.msra.mxu0 %v1303
  %1813 = vmatprep.subr.bf16.mxu0 %v1312
  %1814 = vmatpush1.bf16.msra.mxu0 %v1311
  %1815 = vmatprep.mubr.bf16.mxu0 %v414
  %1816 = vmatmul.mubr.bf16.gmra.mrb[0].mxu0 %v413
  %v1817 = vpop.f32.mrb[0].mxu0
  %v1818 = vadd.f32 0.0, %v1817
  %v1819 = vpop.f32.mrb[0].mxu0
  %v1820 = vadd.f32 0.0, %v1819
  %v1821 = vpop.f32.mrb[0].mxu0
  %v1822 = vpop.f32.mrb[0].mxu0
  %1823 = vdwg.mxu0
  %1824 = vmatprep.subr.bf16.mxu0 %v1320
  %1825 = vmatpush1.bf16.msra.mxu0 %v1319
  %1826 = vmatprep.subr.bf16.mxu0 %v1328
  %1827 = vmatpush1.bf16.msra.mxu0 %v1327
  %1828 = vmatprep.subr.bf16.mxu0 %v1336
  %1829 = vmatpush1.bf16.msra.mxu0 %v1335
  %1830 = vmatprep.subr.bf16.mxu0 %v1344
  %1831 = vmatpush1.bf16.msra.mxu0 %v1343
  %1832 = vmatprep.subr.bf16.mxu0 %v1352
  %1833 = vmatpush1.bf16.msra.mxu0 %v1351
  %1834 = vmatprep.subr.bf16.mxu0 %v1360
  %1835 = vmatpush1.bf16.msra.mxu0 %v1359
  %1836 = vmatprep.subr.bf16.mxu0 %v1368
  %1837 = vmatpush1.bf16.msra.mxu0 %v1367
  %1838 = vmatprep.subr.bf16.mxu0 %v1376
  %1839 = vmatpush1.bf16.msra.mxu0 %v1375
  %1840 = vmatprep.subr.bf16.mxu0 %v1384
  %1841 = vmatpush1.bf16.msra.mxu0 %v1383
  %1842 = vmatprep.subr.bf16.mxu0 %v1392
  %1843 = vmatpush1.bf16.msra.mxu0 %v1391
  %1844 = vmatprep.subr.bf16.mxu0 %v1400
  %1845 = vmatpush1.bf16.msra.mxu0 %v1399
  %1846 = vmatprep.subr.bf16.mxu0 %v1408
  %1847 = vmatpush1.bf16.msra.mxu0 %v1407
  %1848 = vmatprep.subr.bf16.mxu0 %v1416
  %1849 = vmatpush1.bf16.msra.mxu0 %v1415
  %1850 = vmatprep.subr.bf16.mxu0 %v1424
  %1851 = vmatpush1.bf16.msra.mxu0 %v1423
  %1852 = vmatprep.subr.bf16.mxu0 %v1432
  %1853 = vmatpush1.bf16.msra.mxu0 %v1431
  %1854 = vmatprep.subr.bf16.mxu0 %v1440
  %1855 = vmatpush1.bf16.msra.mxu0 %v1439
  %1856 = vmatprep.mubr.bf16.mxu0 %v416
  %1857 = vmatmul.mubr.bf16.gmra.mrb[0].mxu0 %v415
  %v1858 = vpop.f32.mrb[0].mxu0
  %v1859 = vadd.f32 %v1818, %v1858
  %v1860 = vpop.f32.mrb[0].mxu0
  %v1861 = vadd.f32 %v1820, %v1860
  %v1862 = vpop.f32.mrb[0].mxu0
  %v1863 = vpop.f32.mrb[0].mxu0
  %1864 = vdwg.mxu0
  %1865 = vmatprep.subr.bf16.mxu0 %v1194
  %1866 = vmatpush1.bf16.msra.mxu0 %v1193
  %1867 = vmatprep.subr.bf16.mxu0 %v1202
  %1868 = vmatpush1.bf16.msra.mxu0 %v1201
  %1869 = vmatprep.subr.bf16.mxu0 %v1210
  %1870 = vmatpush1.bf16.msra.mxu0 %v1209
  %1871 = vmatprep.subr.bf16.mxu0 %v1218
  %1872 = vmatpush1.bf16.msra.mxu0 %v1217
  %1873 = vmatprep.subr.bf16.mxu0 %v1226
  %1874 = vmatpush1.bf16.msra.mxu0 %v1225
  %1875 = vmatprep.subr.bf16.mxu0 %v1234
  %1876 = vmatpush1.bf16.msra.mxu0 %v1233
  %1877 = vmatprep.subr.bf16.mxu0 %v1242
  %1878 = vmatpush1.bf16.msra.mxu0 %v1241
  %1879 = vmatprep.subr.bf16.mxu0 %v1250
  %1880 = vmatpush1.bf16.msra.mxu0 %v1249
  %1881 = vmatprep.subr.bf16.mxu0 %v1258
  %1882 = vmatpush1.bf16.msra.mxu0 %v1257
  %1883 = vmatprep.subr.bf16.mxu0 %v1266
  %1884 = vmatpush1.bf16.msra.mxu0 %v1265
  %1885 = vmatprep.subr.bf16.mxu0 %v1274
  %1886 = vmatpush1.bf16.msra.mxu0 %v1273
  %1887 = vmatprep.subr.bf16.mxu0 %v1282
  %1888 = vmatpush1.bf16.msra.mxu0 %v1281
  %1889 = vmatprep.subr.bf16.mxu0 %v1290
  %1890 = vmatpush1.bf16.msra.mxu0 %v1289
  %1891 = vmatprep.subr.bf16.mxu0 %v1298
  %1892 = vmatpush1.bf16.msra.mxu0 %v1297
  %1893 = vmatprep.subr.bf16.mxu0 %v1306
  %1894 = vmatpush1.bf16.msra.mxu0 %v1305
  %1895 = vmatprep.subr.bf16.mxu0 %v1314
  %1896 = vmatpush1.bf16.msra.mxu0 %v1313
  %1897 = vmatprep.mubr.bf16.mxu0 %v414
  %1898 = vmatmul.mubr.bf16.gmra.mrb[0].mxu0 %v413
  %v1899 = vpop.f32.mrb[0].mxu0
  %v1900 = vadd.f32 0.0, %v1899
  %v1901 = vpop.f32.mrb[0].mxu0
  %v1902 = vadd.f32 0.0, %v1901
  %v1903 = vpop.f32.mrb[0].mxu0
  %v1904 = vpop.f32.mrb[0].mxu0
  %1905 = vdwg.mxu0
  %1906 = vmatprep.subr.bf16.mxu0 %v1322
  %1907 = vmatpush1.bf16.msra.mxu0 %v1321
  %1908 = vmatprep.subr.bf16.mxu0 %v1330
  %1909 = vmatpush1.bf16.msra.mxu0 %v1329
  %1910 = vmatprep.subr.bf16.mxu0 %v1338
  %1911 = vmatpush1.bf16.msra.mxu0 %v1337
  %1912 = vmatprep.subr.bf16.mxu0 %v1346
  %1913 = vmatpush1.bf16.msra.mxu0 %v1345
  %1914 = vmatprep.subr.bf16.mxu0 %v1354
  %1915 = vmatpush1.bf16.msra.mxu0 %v1353
  %1916 = vmatprep.subr.bf16.mxu0 %v1362
  %1917 = vmatpush1.bf16.msra.mxu0 %v1361
  %1918 = vmatprep.subr.bf16.mxu0 %v1370
  %1919 = vmatpush1.bf16.msra.mxu0 %v1369
  %1920 = vmatprep.subr.bf16.mxu0 %v1378
  %1921 = vmatpush1.bf16.msra.mxu0 %v1377
  %1922 = vmatprep.subr.bf16.mxu0 %v1386
  %1923 = vmatpush1.bf16.msra.mxu0 %v1385
  %1924 = vmatprep.subr.bf16.mxu0 %v1394
  %1925 = vmatpush1.bf16.msra.mxu0 %v1393
  %1926 = vmatprep.subr.bf16.mxu0 %v1402
  %1927 = vmatpush1.bf16.msra.mxu0 %v1401
  %1928 = vmatprep.subr.bf16.mxu0 %v1410
  %1929 = vmatpush1.bf16.msra.mxu0 %v1409
  %1930 = vmatprep.subr.bf16.mxu0 %v1418
  %1931 = vmatpush1.bf16.msra.mxu0 %v1417
  %1932 = vmatprep.subr.bf16.mxu0 %v1426
  %1933 = vmatpush1.bf16.msra.mxu0 %v1425
  %1934 = vmatprep.subr.bf16.mxu0 %v1434
  %1935 = vmatpush1.bf16.msra.mxu0 %v1433
  %1936 = vmatprep.subr.bf16.mxu0 %v1442
  %1937 = vmatpush1.bf16.msra.mxu0 %v1441
  %1938 = vmatprep.mubr.bf16.mxu0 %v416
  %1939 = vmatmul.mubr.bf16.gmra.mrb[0].mxu0 %v415
  %v1940 = vpop.f32.mrb[0].mxu0
  %v1941 = vadd.f32 %v1900, %v1940
  %v1942 = vpop.f32.mrb[0].mxu0
  %v1943 = vadd.f32 %v1902, %v1942
  %v1944 = vpop.f32.mrb[0].mxu0
  %v1945 = vpop.f32.mrb[0].mxu0
  %1946 = vdwg.mxu0
  %1947 = vmatprep.subr.bf16.mxu0 %v1196
  %1948 = vmatpush1.bf16.msra.mxu0 %v1195
  %1949 = vmatprep.subr.bf16.mxu0 %v1204
  %1950 = vmatpush1.bf16.msra.mxu0 %v1203
  %1951 = vmatprep.subr.bf16.mxu0 %v1212
  %1952 = vmatpush1.bf16.msra.mxu0 %v1211
  %1953 = vmatprep.subr.bf16.mxu0 %v1220
  %1954 = vmatpush1.bf16.msra.mxu0 %v1219
  %1955 = vmatprep.subr.bf16.mxu0 %v1228
  %1956 = vmatpush1.bf16.msra.mxu0 %v1227
  %1957 = vmatprep.subr.bf16.mxu0 %v1236
  %1958 = vmatpush1.bf16.msra.mxu0 %v1235
  %1959 = vmatprep.subr.bf16.mxu0 %v1244
  %1960 = vmatpush1.bf16.msra.mxu0 %v1243
  %1961 = vmatprep.subr.bf16.mxu0 %v1252
  %1962 = vmatpush1.bf16.msra.mxu0 %v1251
  %1963 = vmatprep.subr.bf16.mxu0 %v1260
  %1964 = vmatpush1.bf16.msra.mxu0 %v1259
  %1965 = vmatprep.subr.bf16.mxu0 %v1268
  %1966 = vmatpush1.bf16.msra.mxu0 %v1267
  %1967 = vmatprep.subr.bf16.mxu0 %v1276
  %1968 = vmatpush1.bf16.msra.mxu0 %v1275
  %1969 = vmatprep.subr.bf16.mxu0 %v1284
  %1970 = vmatpush1.bf16.msra.mxu0 %v1283
  %1971 = vmatprep.subr.bf16.mxu0 %v1292
  %1972 = vmatpush1.bf16.msra.mxu0 %v1291
  %1973 = vmatprep.subr.bf16.mxu0 %v1300
  %1974 = vmatpush1.bf16.msra.mxu0 %v1299
  %1975 = vmatprep.subr.bf16.mxu0 %v1308
  %1976 = vmatpush1.bf16.msra.mxu0 %v1307
  %1977 = vmatprep.subr.bf16.mxu0 %v1316
  %1978 = vmatpush1.bf16.msra.mxu0 %v1315
  %1979 = vmatprep.mubr.bf16.mxu0 %v414
  %1980 = vmatmul.mubr.bf16.gmra.mrb[0].mxu0 %v413
  %v1981 = vpop.f32.mrb[0].mxu0
  %v1982 = vadd.f32 0.0, %v1981
  %v1983 = vpop.f32.mrb[0].mxu0
  %v1984 = vadd.f32 0.0, %v1983
  %v1985 = vpop.f32.mrb[0].mxu0
  %v1986 = vpop.f32.mrb[0].mxu0
  %1987 = vdwg.mxu0
  %1988 = vmatprep.subr.bf16.mxu0 %v1324
  %1989 = vmatpush1.bf16.msra.mxu0 %v1323
  %1990 = vmatprep.subr.bf16.mxu0 %v1332
  %1991 = vmatpush1.bf16.msra.mxu0 %v1331
  %1992 = vmatprep.subr.bf16.mxu0 %v1340
  %1993 = vmatpush1.bf16.msra.mxu0 %v1339
  %1994 = vmatprep.subr.bf16.mxu0 %v1348
  %1995 = vmatpush1.bf16.msra.mxu0 %v1347
  %1996 = vmatprep.subr.bf16.mxu0 %v1356
  %1997 = vmatpush1.bf16.msra.mxu0 %v1355
  %1998 = vmatprep.subr.bf16.mxu0 %v1364
  %1999 = vmatpush1.bf16.msra.mxu0 %v1363
  %2000 = vmatprep.subr.bf16.mxu0 %v1372
  %2001 = vmatpush1.bf16.msra.mxu0 %v1371
  %2002 = vmatprep.subr.bf16.mxu0 %v1380
  %2003 = vmatpush1.bf16.msra.mxu0 %v1379
  %2004 = vmatprep.subr.bf16.mxu0 %v1388
  %2005 = vmatpush1.bf16.msra.mxu0 %v1387
  %2006 = vmatprep.subr.bf16.mxu0 %v1396
  %2007 = vmatpush1.bf16.msra.mxu0 %v1395
  %2008 = vmatprep.subr.bf16.mxu0 %v1404
  %2009 = vmatpush1.bf16.msra.mxu0 %v1403
  %2010 = vmatprep.subr.bf16.mxu0 %v1412
  %2011 = vmatpush1.bf16.msra.mxu0 %v1411
  %2012 = vmatprep.subr.bf16.mxu0 %v1420
  %2013 = vmatpush1.bf16.msra.mxu0 %v1419
  %2014 = vmatprep.subr.bf16.mxu0 %v1428
  %2015 = vmatpush1.bf16.msra.mxu0 %v1427
  %2016 = vmatprep.subr.bf16.mxu0 %v1436
  %2017 = vmatpush1.bf16.msra.mxu0 %v1435
  %2018 = vmatprep.subr.bf16.mxu0 %v1444
  %2019 = vmatpush1.bf16.msra.mxu0 %v1443
  %2020 = vmatprep.mubr.bf16.mxu0 %v416
  %2021 = vmatmul.mubr.bf16.gmra.mrb[0].mxu0 %v415
  %v2022 = vpop.f32.mrb[0].mxu0
  %v2023 = vadd.f32 %v1982, %v2022
  %v2024 = vpop.f32.mrb[0].mxu0
  %v2025 = vadd.f32 %v1984, %v2024
  %v2026 = vpop.f32.mrb[0].mxu0
  %v2027 = vpop.f32.mrb[0].mxu0
  %2028 = vdwg.mxu0
  %v2030 = vunpack.c.l.b16 %v20
  %v2031 = vunpack.c.h.b16 %v20
  %v2032 = vpack.c.b16 %v2030, %v2030
  %v2033 = vpack.c.b16 %v2031, %v2031
  %v2164 = vunpack.c.l.b16 %v21
  %v2165 = vunpack.c.h.b16 %v21
  %v2166 = vunpack.c.l.b16 %v22
  %v2167 = vunpack.c.h.b16 %v22
  %v2168 = vunpack.c.l.b16 %v23
  %v2169 = vunpack.c.h.b16 %v23
  %v2170 = vunpack.c.l.b16 %v24
  %v2171 = vunpack.c.h.b16 %v24
  %v2172 = vunpack.c.l.b16 %v25
  %v2173 = vunpack.c.h.b16 %v25
  %v2174 = vunpack.c.l.b16 %v26
  %v2175 = vunpack.c.h.b16 %v26
  %v2176 = vunpack.c.l.b16 %v27
  %v2177 = vunpack.c.h.b16 %v27
  %v2178 = vunpack.c.l.b16 %v28
  %v2179 = vunpack.c.h.b16 %v28
  %v2180 = vunpack.c.l.b16 %v29
  %v2181 = vunpack.c.h.b16 %v29
  %v2182 = vunpack.c.l.b16 %v30
  %v2183 = vunpack.c.h.b16 %v30
  %v2184 = vunpack.c.l.b16 %v31
  %v2185 = vunpack.c.h.b16 %v31
  %v2186 = vunpack.c.l.b16 %v32
  %v2187 = vunpack.c.h.b16 %v32
  %v2188 = vunpack.c.l.b16 %v33
  %v2189 = vunpack.c.h.b16 %v33
  %v2190 = vunpack.c.l.b16 %v34
  %v2191 = vunpack.c.h.b16 %v34
  %v2192 = vunpack.c.l.b16 %v35
  %v2193 = vunpack.c.h.b16 %v35
  %v2194 = vunpack.c.l.b16 %v36
  %v2195 = vunpack.c.h.b16 %v36
  %v2196 = vunpack.c.l.b16 %v37
  %v2197 = vunpack.c.h.b16 %v37
  %v2198 = vunpack.c.l.b16 %v38
  %v2199 = vunpack.c.h.b16 %v38
  %v2200 = vunpack.c.l.b16 %v39
  %v2201 = vunpack.c.h.b16 %v39
  %v2202 = vunpack.c.l.b16 %v40
  %v2203 = vunpack.c.h.b16 %v40
  %v2204 = vunpack.c.l.b16 %v41
  %v2205 = vunpack.c.h.b16 %v41
  %v2206 = vunpack.c.l.b16 %v42
  %v2207 = vunpack.c.h.b16 %v42
  %v2208 = vunpack.c.l.b16 %v43
  %v2209 = vunpack.c.h.b16 %v43
  %v2210 = vunpack.c.l.b16 %v44
  %v2211 = vunpack.c.h.b16 %v44
  %v2212 = vunpack.c.l.b16 %v45
  %v2213 = vunpack.c.h.b16 %v45
  %v2214 = vunpack.c.l.b16 %v46
  %v2215 = vunpack.c.h.b16 %v46
  %v2216 = vunpack.c.l.b16 %v47
  %v2217 = vunpack.c.h.b16 %v47
  %v2218 = vunpack.c.l.b16 %v48
  %v2219 = vunpack.c.h.b16 %v48
  %v2220 = vunpack.c.l.b16 %v49
  %v2221 = vunpack.c.h.b16 %v49
  %v2222 = vunpack.c.l.b16 %v50
  %v2223 = vunpack.c.h.b16 %v50
  %v2224 = vunpack.c.l.b16 %v51
  %v2225 = vunpack.c.h.b16 %v51
  %v2226 = vunpack.c.l.b16 %v52
  %v2227 = vunpack.c.h.b16 %v52
  %v2228 = vunpack.c.l.b16 %v53
  %v2229 = vunpack.c.h.b16 %v53
  %v2230 = vunpack.c.l.b16 %v54
  %v2231 = vunpack.c.h.b16 %v54
  %v2232 = vunpack.c.l.b16 %v55
  %v2233 = vunpack.c.h.b16 %v55
  %v2234 = vunpack.c.l.b16 %v56
  %v2235 = vunpack.c.h.b16 %v56
  %v2236 = vunpack.c.l.b16 %v57
  %v2237 = vunpack.c.h.b16 %v57
  %v2238 = vunpack.c.l.b16 %v58
  %v2239 = vunpack.c.h.b16 %v58
  %v2240 = vunpack.c.l.b16 %v59
  %v2241 = vunpack.c.h.b16 %v59
  %v2242 = vunpack.c.l.b16 %v60
  %v2243 = vunpack.c.h.b16 %v60
  %v2244 = vunpack.c.l.b16 %v61
  %v2245 = vunpack.c.h.b16 %v61
  %v2246 = vunpack.c.l.b16 %v62
  %v2247 = vunpack.c.h.b16 %v62
  %v2248 = vunpack.c.l.b16 %v63
  %v2249 = vunpack.c.h.b16 %v63
  %v2250 = vunpack.c.l.b16 %v64
  %v2251 = vunpack.c.h.b16 %v64
  %v2252 = vunpack.c.l.b16 %v65
  %v2253 = vunpack.c.h.b16 %v65
  %v2254 = vunpack.c.l.b16 %v66
  %v2255 = vunpack.c.h.b16 %v66
  %v2256 = vunpack.c.l.b16 %v67
  %v2257 = vunpack.c.h.b16 %v67
  %v2258 = vunpack.c.l.b16 %v68
  %v2259 = vunpack.c.h.b16 %v68
  %v2260 = vunpack.c.l.b16 %v69
  %v2261 = vunpack.c.h.b16 %v69
  %v2262 = vunpack.c.l.b16 %v70
  %v2263 = vunpack.c.h.b16 %v70
  %v2264 = vunpack.c.l.b16 %v71
  %v2265 = vunpack.c.h.b16 %v71
  %v2266 = vunpack.c.l.b16 %v72
  %v2267 = vunpack.c.h.b16 %v72
  %v2268 = vunpack.c.l.b16 %v73
  %v2269 = vunpack.c.h.b16 %v73
  %v2270 = vunpack.c.l.b16 %v74
  %v2271 = vunpack.c.h.b16 %v74
  %v2272 = vunpack.c.l.b16 %v75
  %v2273 = vunpack.c.h.b16 %v75
  %v2274 = vunpack.c.l.b16 %v76
  %v2275 = vunpack.c.h.b16 %v76
  %v2276 = vunpack.c.l.b16 %v77
  %v2277 = vunpack.c.h.b16 %v77
  %v2278 = vunpack.c.l.b16 %v78
  %v2279 = vunpack.c.h.b16 %v78
  %v2280 = vunpack.c.l.b16 %v79
  %v2281 = vunpack.c.h.b16 %v79
  %v2282 = vunpack.c.l.b16 %v80
  %v2283 = vunpack.c.h.b16 %v80
  %v2284 = vunpack.c.l.b16 %v81
  %v2285 = vunpack.c.h.b16 %v81
  %v2286 = vunpack.c.l.b16 %v82
  %v2287 = vunpack.c.h.b16 %v82
  %v2288 = vunpack.c.l.b16 %v83
  %v2289 = vunpack.c.h.b16 %v83
  %v2290 = vunpack.c.l.b16 %v84
  %v2291 = vunpack.c.h.b16 %v84
  %v2292 = vunpack.c.l.b16 %v85
  %v2293 = vunpack.c.h.b16 %v85
  %v2294 = vunpack.c.l.b16 %v86
  %v2295 = vunpack.c.h.b16 %v86
  %v2296 = vunpack.c.l.b16 %v87
  %v2297 = vunpack.c.h.b16 %v87
  %v2298 = vunpack.c.l.b16 %v88
  %v2299 = vunpack.c.h.b16 %v88
  %v2300 = vunpack.c.l.b16 %v89
  %v2301 = vunpack.c.h.b16 %v89
  %v2302 = vunpack.c.l.b16 %v90
  %v2303 = vunpack.c.h.b16 %v90
  %v2304 = vunpack.c.l.b16 %v91
  %v2305 = vunpack.c.h.b16 %v91
  %v2306 = vunpack.c.l.b16 %v92
  %v2307 = vunpack.c.h.b16 %v92
  %v2308 = vunpack.c.l.b16 %v93
  %v2309 = vunpack.c.h.b16 %v93
  %v2310 = vunpack.c.l.b16 %v94
  %v2311 = vunpack.c.h.b16 %v94
  %v2312 = vunpack.c.l.b16 %v95
  %v2313 = vunpack.c.h.b16 %v95
  %v2314 = vunpack.c.l.b16 %v96
  %v2315 = vunpack.c.h.b16 %v96
  %v2316 = vunpack.c.l.b16 %v97
  %v2317 = vunpack.c.h.b16 %v97
  %v2318 = vunpack.c.l.b16 %v98
  %v2319 = vunpack.c.h.b16 %v98
  %v2320 = vunpack.c.l.b16 %v99
  %v2321 = vunpack.c.h.b16 %v99
  %v2322 = vunpack.c.l.b16 %v100
  %v2323 = vunpack.c.h.b16 %v100
  %v2324 = vunpack.c.l.b16 %v101
  %v2325 = vunpack.c.h.b16 %v101
  %v2326 = vunpack.c.l.b16 %v102
  %v2327 = vunpack.c.h.b16 %v102
  %v2328 = vunpack.c.l.b16 %v103
  %v2329 = vunpack.c.h.b16 %v103
  %v2330 = vunpack.c.l.b16 %v104
  %v2331 = vunpack.c.h.b16 %v104
  %v2332 = vunpack.c.l.b16 %v105
  %v2333 = vunpack.c.h.b16 %v105
  %v2334 = vunpack.c.l.b16 %v106
  %v2335 = vunpack.c.h.b16 %v106
  %v2336 = vunpack.c.l.b16 %v107
  %v2337 = vunpack.c.h.b16 %v107
  %v2338 = vunpack.c.l.b16 %v108
  %v2339 = vunpack.c.h.b16 %v108
  %v2340 = vunpack.c.l.b16 %v109
  %v2341 = vunpack.c.h.b16 %v109
  %v2342 = vunpack.c.l.b16 %v110
  %v2343 = vunpack.c.h.b16 %v110
  %v2344 = vunpack.c.l.b16 %v111
  %v2345 = vunpack.c.h.b16 %v111
  %v2346 = vunpack.c.l.b16 %v112
  %v2347 = vunpack.c.h.b16 %v112
  %v2348 = vunpack.c.l.b16 %v113
  %v2349 = vunpack.c.h.b16 %v113
  %v2350 = vunpack.c.l.b16 %v114
  %v2351 = vunpack.c.h.b16 %v114
  %v2352 = vunpack.c.l.b16 %v115
  %v2353 = vunpack.c.h.b16 %v115
  %v2354 = vunpack.c.l.b16 %v116
  %v2355 = vunpack.c.h.b16 %v116
  %v2356 = vunpack.c.l.b16 %v117
  %v2357 = vunpack.c.h.b16 %v117
  %v2358 = vunpack.c.l.b16 %v118
  %v2359 = vunpack.c.h.b16 %v118
  %v2360 = vunpack.c.l.b16 %v119
  %v2361 = vunpack.c.h.b16 %v119
  %v2362 = vunpack.c.l.b16 %v120
  %v2363 = vunpack.c.h.b16 %v120
  %v2364 = vunpack.c.l.b16 %v121
  %v2365 = vunpack.c.h.b16 %v121
  %v2366 = vunpack.c.l.b16 %v122
  %v2367 = vunpack.c.h.b16 %v122
  %v2368 = vunpack.c.l.b16 %v123
  %v2369 = vunpack.c.h.b16 %v123
  %v2370 = vunpack.c.l.b16 %v124
  %v2371 = vunpack.c.h.b16 %v124
  %v2372 = vunpack.c.l.b16 %v125
  %v2373 = vunpack.c.h.b16 %v125
  %v2374 = vunpack.c.l.b16 %v126
  %v2375 = vunpack.c.h.b16 %v126
  %v2376 = vunpack.c.l.b16 %v127
  %v2377 = vunpack.c.h.b16 %v127
  %v2378 = vunpack.c.l.b16 %v128
  %v2379 = vunpack.c.h.b16 %v128
  %v2380 = vunpack.c.l.b16 %v129
  %v2381 = vunpack.c.h.b16 %v129
  %v2382 = vunpack.c.l.b16 %v130
  %v2383 = vunpack.c.h.b16 %v130
  %v2384 = vunpack.c.l.b16 %v131
  %v2385 = vunpack.c.h.b16 %v131
  %v2386 = vunpack.c.l.b16 %v132
  %v2387 = vunpack.c.h.b16 %v132
  %v2388 = vunpack.c.l.b16 %v133
  %v2389 = vunpack.c.h.b16 %v133
  %v2390 = vunpack.c.l.b16 %v134
  %v2391 = vunpack.c.h.b16 %v134
  %v2392 = vunpack.c.l.b16 %v135
  %v2393 = vunpack.c.h.b16 %v135
  %v2394 = vunpack.c.l.b16 %v136
  %v2395 = vunpack.c.h.b16 %v136
  %v2396 = vunpack.c.l.b16 %v137
  %v2397 = vunpack.c.h.b16 %v137
  %v2398 = vunpack.c.l.b16 %v138
  %v2399 = vunpack.c.h.b16 %v138
  %v2400 = vunpack.c.l.b16 %v139
  %v2401 = vunpack.c.h.b16 %v139
  %v2402 = vunpack.c.l.b16 %v140
  %v2403 = vunpack.c.h.b16 %v140
  %v2404 = vunpack.c.l.b16 %v141
  %v2405 = vunpack.c.h.b16 %v141
  %v2406 = vunpack.c.l.b16 %v142
  %v2407 = vunpack.c.h.b16 %v142
  %v2408 = vunpack.c.l.b16 %v143
  %v2409 = vunpack.c.h.b16 %v143
  %v2410 = vunpack.c.l.b16 %v144
  %v2411 = vunpack.c.h.b16 %v144
  %v2412 = vunpack.c.l.b16 %v145
  %v2413 = vunpack.c.h.b16 %v145
  %v2414 = vunpack.c.l.b16 %v146
  %v2415 = vunpack.c.h.b16 %v146
  %v2416 = vunpack.c.l.b16 %v147
  %v2417 = vunpack.c.h.b16 %v147
  %v2418 = vunpack.c.l.b16 %v148
  %v2419 = vunpack.c.h.b16 %v148
  %v2420 = vpack.c.b16 %v2172, %v2164
  %v2421 = vpack.c.b16 %v2173, %v2165
  %v2422 = vpack.c.b16 %v2174, %v2166
  %v2423 = vpack.c.b16 %v2175, %v2167
  %v2424 = vpack.c.b16 %v2176, %v2168
  %v2425 = vpack.c.b16 %v2177, %v2169
  %v2426 = vpack.c.b16 %v2178, %v2170
  %v2427 = vpack.c.b16 %v2179, %v2171
  %v2428 = vpack.c.b16 %v2188, %v2180
  %v2429 = vpack.c.b16 %v2189, %v2181
  %v2430 = vpack.c.b16 %v2190, %v2182
  %v2431 = vpack.c.b16 %v2191, %v2183
  %v2432 = vpack.c.b16 %v2192, %v2184
  %v2433 = vpack.c.b16 %v2193, %v2185
  %v2434 = vpack.c.b16 %v2194, %v2186
  %v2435 = vpack.c.b16 %v2195, %v2187
  %v2436 = vpack.c.b16 %v2204, %v2196
  %v2437 = vpack.c.b16 %v2205, %v2197
  %v2438 = vpack.c.b16 %v2206, %v2198
  %v2439 = vpack.c.b16 %v2207, %v2199
  %v2440 = vpack.c.b16 %v2208, %v2200
  %v2441 = vpack.c.b16 %v2209, %v2201
  %v2442 = vpack.c.b16 %v2210, %v2202
  %v2443 = vpack.c.b16 %v2211, %v2203
  %v2444 = vpack.c.b16 %v2220, %v2212
  %v2445 = vpack.c.b16 %v2221, %v2213
  %v2446 = vpack.c.b16 %v2222, %v2214
  %v2447 = vpack.c.b16 %v2223, %v2215
  %v2448 = vpack.c.b16 %v2224, %v2216
  %v2449 = vpack.c.b16 %v2225, %v2217
  %v2450 = vpack.c.b16 %v2226, %v2218
  %v2451 = vpack.c.b16 %v2227, %v2219
  %v2452 = vpack.c.b16 %v2236, %v2228
  %v2453 = vpack.c.b16 %v2237, %v2229
  %v2454 = vpack.c.b16 %v2238, %v2230
  %v2455 = vpack.c.b16 %v2239, %v2231
  %v2456 = vpack.c.b16 %v2240, %v2232
  %v2457 = vpack.c.b16 %v2241, %v2233
  %v2458 = vpack.c.b16 %v2242, %v2234
  %v2459 = vpack.c.b16 %v2243, %v2235
  %v2460 = vpack.c.b16 %v2252, %v2244
  %v2461 = vpack.c.b16 %v2253, %v2245
  %v2462 = vpack.c.b16 %v2254, %v2246
  %v2463 = vpack.c.b16 %v2255, %v2247
  %v2464 = vpack.c.b16 %v2256, %v2248
  %v2465 = vpack.c.b16 %v2257, %v2249
  %v2466 = vpack.c.b16 %v2258, %v2250
  %v2467 = vpack.c.b16 %v2259, %v2251
  %v2468 = vpack.c.b16 %v2268, %v2260
  %v2469 = vpack.c.b16 %v2269, %v2261
  %v2470 = vpack.c.b16 %v2270, %v2262
  %v2471 = vpack.c.b16 %v2271, %v2263
  %v2472 = vpack.c.b16 %v2272, %v2264
  %v2473 = vpack.c.b16 %v2273, %v2265
  %v2474 = vpack.c.b16 %v2274, %v2266
  %v2475 = vpack.c.b16 %v2275, %v2267
  %v2476 = vpack.c.b16 %v2284, %v2276
  %v2477 = vpack.c.b16 %v2285, %v2277
  %v2478 = vpack.c.b16 %v2286, %v2278
  %v2479 = vpack.c.b16 %v2287, %v2279
  %v2480 = vpack.c.b16 %v2288, %v2280
  %v2481 = vpack.c.b16 %v2289, %v2281
  %v2482 = vpack.c.b16 %v2290, %v2282
  %v2483 = vpack.c.b16 %v2291, %v2283
  %v2484 = vpack.c.b16 %v2300, %v2292
  %v2485 = vpack.c.b16 %v2301, %v2293
  %v2486 = vpack.c.b16 %v2302, %v2294
  %v2487 = vpack.c.b16 %v2303, %v2295
  %v2488 = vpack.c.b16 %v2304, %v2296
  %v2489 = vpack.c.b16 %v2305, %v2297
  %v2490 = vpack.c.b16 %v2306, %v2298
  %v2491 = vpack.c.b16 %v2307, %v2299
  %v2492 = vpack.c.b16 %v2316, %v2308
  %v2493 = vpack.c.b16 %v2317, %v2309
  %v2494 = vpack.c.b16 %v2318, %v2310
  %v2495 = vpack.c.b16 %v2319, %v2311
  %v2496 = vpack.c.b16 %v2320, %v2312
  %v2497 = vpack.c.b16 %v2321, %v2313
  %v2498 = vpack.c.b16 %v2322, %v2314
  %v2499 = vpack.c.b16 %v2323, %v2315
  %v2500 = vpack.c.b16 %v2332, %v2324
  %v2501 = vpack.c.b16 %v2333, %v2325
  %v2502 = vpack.c.b16 %v2334, %v2326
  %v2503 = vpack.c.b16 %v2335, %v2327
  %v2504 = vpack.c.b16 %v2336, %v2328
  %v2505 = vpack.c.b16 %v2337, %v2329
  %v2506 = vpack.c.b16 %v2338, %v2330
  %v2507 = vpack.c.b16 %v2339, %v2331
  %v2508 = vpack.c.b16 %v2348, %v2340
  %v2509 = vpack.c.b16 %v2349, %v2341
  %v2510 = vpack.c.b16 %v2350, %v2342
  %v2511 = vpack.c.b16 %v2351, %v2343
  %v2512 = vpack.c.b16 %v2352, %v2344
  %v2513 = vpack.c.b16 %v2353, %v2345
  %v2514 = vpack.c.b16 %v2354, %v2346
  %v2515 = vpack.c.b16 %v2355, %v2347
  %v2516 = vpack.c.b16 %v2364, %v2356
  %v2517 = vpack.c.b16 %v2365, %v2357
  %v2518 = vpack.c.b16 %v2366, %v2358
  %v2519 = vpack.c.b16 %v2367, %v2359
  %v2520 = vpack.c.b16 %v2368, %v2360
  %v2521 = vpack.c.b16 %v2369, %v2361
  %v2522 = vpack.c.b16 %v2370, %v2362
  %v2523 = vpack.c.b16 %v2371, %v2363
  %v2524 = vpack.c.b16 %v2380, %v2372
  %v2525 = vpack.c.b16 %v2381, %v2373
  %v2526 = vpack.c.b16 %v2382, %v2374
  %v2527 = vpack.c.b16 %v2383, %v2375
  %v2528 = vpack.c.b16 %v2384, %v2376
  %v2529 = vpack.c.b16 %v2385, %v2377
  %v2530 = vpack.c.b16 %v2386, %v2378
  %v2531 = vpack.c.b16 %v2387, %v2379
  %v2532 = vpack.c.b16 %v2396, %v2388
  %v2533 = vpack.c.b16 %v2397, %v2389
  %v2534 = vpack.c.b16 %v2398, %v2390
  %v2535 = vpack.c.b16 %v2399, %v2391
  %v2536 = vpack.c.b16 %v2400, %v2392
  %v2537 = vpack.c.b16 %v2401, %v2393
  %v2538 = vpack.c.b16 %v2402, %v2394
  %v2539 = vpack.c.b16 %v2403, %v2395
  %v2540 = vpack.c.b16 %v2412, %v2404
  %v2541 = vpack.c.b16 %v2413, %v2405
  %v2542 = vpack.c.b16 %v2414, %v2406
  %v2543 = vpack.c.b16 %v2415, %v2407
  %v2544 = vpack.c.b16 %v2416, %v2408
  %v2545 = vpack.c.b16 %v2417, %v2409
  %v2546 = vpack.c.b16 %v2418, %v2410
  %v2547 = vpack.c.b16 %v2419, %v2411
  %2676 = vmatprep.subr.bf16.mxu0 %v2421
  %2677 = vmatpush1.bf16.msra.mxu0 %v2420
  %2678 = vmatprep.subr.bf16.mxu0 %v2429
  %2679 = vmatpush1.bf16.msra.mxu0 %v2428
  %2680 = vmatprep.subr.bf16.mxu0 %v2437
  %2681 = vmatpush1.bf16.msra.mxu0 %v2436
  %2682 = vmatprep.subr.bf16.mxu0 %v2445
  %2683 = vmatpush1.bf16.msra.mxu0 %v2444
  %2684 = vmatprep.subr.bf16.mxu0 %v2453
  %2685 = vmatpush1.bf16.msra.mxu0 %v2452
  %2686 = vmatprep.subr.bf16.mxu0 %v2461
  %2687 = vmatpush1.bf16.msra.mxu0 %v2460
  %2688 = vmatprep.subr.bf16.mxu0 %v2469
  %2689 = vmatpush1.bf16.msra.mxu0 %v2468
  %2690 = vmatprep.subr.bf16.mxu0 %v2477
  %2691 = vmatpush1.bf16.msra.mxu0 %v2476
  %2692 = vmatprep.subr.bf16.mxu0 %v2485
  %2693 = vmatpush1.bf16.msra.mxu0 %v2484
  %2694 = vmatprep.subr.bf16.mxu0 %v2493
  %2695 = vmatpush1.bf16.msra.mxu0 %v2492
  %2696 = vmatprep.subr.bf16.mxu0 %v2501
  %2697 = vmatpush1.bf16.msra.mxu0 %v2500
  %2698 = vmatprep.subr.bf16.mxu0 %v2509
  %2699 = vmatpush1.bf16.msra.mxu0 %v2508
  %2700 = vmatprep.subr.bf16.mxu0 %v2517
  %2701 = vmatpush1.bf16.msra.mxu0 %v2516
  %2702 = vmatprep.subr.bf16.mxu0 %v2525
  %2703 = vmatpush1.bf16.msra.mxu0 %v2524
  %2704 = vmatprep.subr.bf16.mxu0 %v2533
  %2705 = vmatpush1.bf16.msra.mxu0 %v2532
  %2706 = vmatprep.subr.bf16.mxu0 %v2541
  %2707 = vmatpush1.bf16.msra.mxu0 %v2540
  %2708 = vmatprep.mubr.bf16.mxu0 %v2033
  %2709 = vmatmul.mubr.bf16.gmra.mrb[0].mxu0 %v2032
  %v2710 = vpop.f32.mrb[0].mxu0
  %v2711 = vadd.f32 %v1777, %v2710
  %v2712 = vpop.f32.mrb[0].mxu0
  %v2713 = vadd.f32 %v1779, %v2712
  %v2714 = vpop.f32.mrb[0].mxu0
  %v2715 = vpop.f32.mrb[0].mxu0
  %2716 = vdwg.mxu0
  %2717 = vmatprep.subr.bf16.mxu0 %v2423
  %2718 = vmatpush1.bf16.msra.mxu0 %v2422
  %2719 = vmatprep.subr.bf16.mxu0 %v2431
  %2720 = vmatpush1.bf16.msra.mxu0 %v2430
  %2721 = vmatprep.subr.bf16.mxu0 %v2439
  %2722 = vmatpush1.bf16.msra.mxu0 %v2438
  %2723 = vmatprep.subr.bf16.mxu0 %v2447
  %2724 = vmatpush1.bf16.msra.mxu0 %v2446
  %2725 = vmatprep.subr.bf16.mxu0 %v2455
  %2726 = vmatpush1.bf16.msra.mxu0 %v2454
  %2727 = vmatprep.subr.bf16.mxu0 %v2463
  %2728 = vmatpush1.bf16.msra.mxu0 %v2462
  %2729 = vmatprep.subr.bf16.mxu0 %v2471
  %2730 = vmatpush1.bf16.msra.mxu0 %v2470
  %2731 = vmatprep.subr.bf16.mxu0 %v2479
  %2732 = vmatpush1.bf16.msra.mxu0 %v2478
  %2733 = vmatprep.subr.bf16.mxu0 %v2487
  %2734 = vmatpush1.bf16.msra.mxu0 %v2486
  %2735 = vmatprep.subr.bf16.mxu0 %v2495
  %2736 = vmatpush1.bf16.msra.mxu0 %v2494
  %2737 = vmatprep.subr.bf16.mxu0 %v2503
  %2738 = vmatpush1.bf16.msra.mxu0 %v2502
  %2739 = vmatprep.subr.bf16.mxu0 %v2511
  %2740 = vmatpush1.bf16.msra.mxu0 %v2510
  %2741 = vmatprep.subr.bf16.mxu0 %v2519
  %2742 = vmatpush1.bf16.msra.mxu0 %v2518
  %2743 = vmatprep.subr.bf16.mxu0 %v2527
  %2744 = vmatpush1.bf16.msra.mxu0 %v2526
  %2745 = vmatprep.subr.bf16.mxu0 %v2535
  %2746 = vmatpush1.bf16.msra.mxu0 %v2534
  %2747 = vmatprep.subr.bf16.mxu0 %v2543
  %2748 = vmatpush1.bf16.msra.mxu0 %v2542
  %2749 = vmatprep.mubr.bf16.mxu0 %v2033
  %2750 = vmatmul.mubr.bf16.gmra.mrb[0].mxu0 %v2032
  %v2751 = vpop.f32.mrb[0].mxu0
  %v2752 = vadd.f32 %v1859, %v2751
  %v2753 = vpop.f32.mrb[0].mxu0
  %v2754 = vadd.f32 %v1861, %v2753
  %v2755 = vpop.f32.mrb[0].mxu0
  %v2756 = vpop.f32.mrb[0].mxu0
  %2757 = vdwg.mxu0
  %2758 = vmatprep.subr.bf16.mxu0 %v2425
  %2759 = vmatpush1.bf16.msra.mxu0 %v2424
  %2760 = vmatprep.subr.bf16.mxu0 %v2433
  %2761 = vmatpush1.bf16.msra.mxu0 %v2432
  %2762 = vmatprep.subr.bf16.mxu0 %v2441
  %2763 = vmatpush1.bf16.msra.mxu0 %v2440
  %2764 = vmatprep.subr.bf16.mxu0 %v2449
  %2765 = vmatpush1.bf16.msra.mxu0 %v2448
  %2766 = vmatprep.subr.bf16.mxu0 %v2457
  %2767 = vmatpush1.bf16.msra.mxu0 %v2456
  %2768 = vmatprep.subr.bf16.mxu0 %v2465
  %2769 = vmatpush1.bf16.msra.mxu0 %v2464
  %2770 = vmatprep.subr.bf16.mxu0 %v2473
  %2771 = vmatpush1.bf16.msra.mxu0 %v2472
  %2772 = vmatprep.subr.bf16.mxu0 %v2481
  %2773 = vmatpush1.bf16.msra.mxu0 %v2480
  %2774 = vmatprep.subr.bf16.mxu0 %v2489
  %2775 = vmatpush1.bf16.msra.mxu0 %v2488
  %2776 = vmatprep.subr.bf16.mxu0 %v2497
  %2777 = vmatpush1.bf16.msra.mxu0 %v2496
  %2778 = vmatprep.subr.bf16.mxu0 %v2505
  %2779 = vmatpush1.bf16.msra.mxu0 %v2504
  %2780 = vmatprep.subr.bf16.mxu0 %v2513
  %2781 = vmatpush1.bf16.msra.mxu0 %v2512
  %2782 = vmatprep.subr.bf16.mxu0 %v2521
  %2783 = vmatpush1.bf16.msra.mxu0 %v2520
  %2784 = vmatprep.subr.bf16.mxu0 %v2529
  %2785 = vmatpush1.bf16.msra.mxu0 %v2528
  %2786 = vmatprep.subr.bf16.mxu0 %v2537
  %2787 = vmatpush1.bf16.msra.mxu0 %v2536
  %2788 = vmatprep.subr.bf16.mxu0 %v2545
  %2789 = vmatpush1.bf16.msra.mxu0 %v2544
  %2790 = vmatprep.mubr.bf16.mxu0 %v2033
  %2791 = vmatmul.mubr.bf16.gmra.mrb[0].mxu0 %v2032
  %v2792 = vpop.f32.mrb[0].mxu0
  %v2793 = vadd.f32 %v1941, %v2792
  %v2794 = vpop.f32.mrb[0].mxu0
  %v2795 = vadd.f32 %v1943, %v2794
  %v2796 = vpop.f32.mrb[0].mxu0
  %v2797 = vpop.f32.mrb[0].mxu0
  %2798 = vdwg.mxu0
  %2799 = vmatprep.subr.bf16.mxu0 %v2427
  %2800 = vmatpush1.bf16.msra.mxu0 %v2426
  %2801 = vmatprep.subr.bf16.mxu0 %v2435
  %2802 = vmatpush1.bf16.msra.mxu0 %v2434
  %2803 = vmatprep.subr.bf16.mxu0 %v2443
  %2804 = vmatpush1.bf16.msra.mxu0 %v2442
  %2805 = vmatprep.subr.bf16.mxu0 %v2451
  %2806 = vmatpush1.bf16.msra.mxu0 %v2450
  %2807 = vmatprep.subr.bf16.mxu0 %v2459
  %2808 = vmatpush1.bf16.msra.mxu0 %v2458
  %2809 = vmatprep.subr.bf16.mxu0 %v2467
  %2810 = vmatpush1.bf16.msra.mxu0 %v2466
  %2811 = vmatprep.subr.bf16.mxu0 %v2475
  %2812 = vmatpush1.bf16.msra.mxu0 %v2474
  %2813 = vmatprep.subr.bf16.mxu0 %v2483
  %2814 = vmatpush1.bf16.msra.mxu0 %v2482
  %2815 = vmatprep.subr.bf16.mxu0 %v2491
  %2816 = vmatpush1.bf16.msra.mxu0 %v2490
  %2817 = vmatprep.subr.bf16.mxu0 %v2499
  %2818 = vmatpush1.bf16.msra.mxu0 %v2498
  %2819 = vmatprep.subr.bf16.mxu0 %v2507
  %2820 = vmatpush1.bf16.msra.mxu0 %v2506
  %2821 = vmatprep.subr.bf16.mxu0 %v2515
  %2822 = vmatpush1.bf16.msra.mxu0 %v2514
  %2823 = vmatprep.subr.bf16.mxu0 %v2523
  %2824 = vmatpush1.bf16.msra.mxu0 %v2522
  %2825 = vmatprep.subr.bf16.mxu0 %v2531
  %2826 = vmatpush1.bf16.msra.mxu0 %v2530
  %2827 = vmatprep.subr.bf16.mxu0 %v2539
  %2828 = vmatpush1.bf16.msra.mxu0 %v2538
  %2829 = vmatprep.subr.bf16.mxu0 %v2547
  %2830 = vmatpush1.bf16.msra.mxu0 %v2546
  %2831 = vmatprep.mubr.bf16.mxu0 %v2033
  %2832 = vmatmul.mubr.bf16.gmra.mrb[0].mxu0 %v2032
  %v2833 = vpop.f32.mrb[0].mxu0
  %v2834 = vadd.f32 %v2023, %v2833
  %v2835 = vpop.f32.mrb[0].mxu0
  %v2836 = vadd.f32 %v2025, %v2835
  %v2837 = vpop.f32.mrb[0].mxu0
  %v2838 = vpop.f32.mrb[0].mxu0
  %2839 = vdwg.mxu0
  %v2840 = vld [vmem:[%s4] sm:$0xff]
  %v2842 = vlaneseq
  %v2843 = vshrl.u32 %v2842, 7
  %v2844 = vsub.s32 0, %v2843
  %v2845 = vrot.slane %v2840, %v2844
  %v2846 = vlaneseq
  %v2847 = vshrl.u32 %v2846, 7
  %v2848 = vsub.s32 1, %v2847
  %v2849 = vrot.slane %v2840, %v2848
  %v2850 = vlaneseq
  %v2851 = vshrl.u32 %v2850, 7
  %v2852 = vsub.s32 2, %v2851
  %v2853 = vrot.slane %v2840, %v2852
  %v2854 = vlaneseq
  %v2855 = vshrl.u32 %v2854, 7
  %v2856 = vsub.s32 3, %v2855
  %v2857 = vrot.slane %v2840, %v2856
  %v2858 = vlaneseq
  %v2859 = vshrl.u32 %v2858, 7
  %v2860 = vsub.s32 4, %v2859
  %v2861 = vrot.slane %v2840, %v2860
  %v2862 = vlaneseq
  %v2863 = vshrl.u32 %v2862, 7
  %v2864 = vsub.s32 5, %v2863
  %v2865 = vrot.slane %v2840, %v2864
  %v2866 = vlaneseq
  %v2867 = vshrl.u32 %v2866, 7
  %v2868 = vsub.s32 6, %v2867
  %v2869 = vrot.slane %v2840, %v2868
  %v2870 = vlaneseq
  %v2871 = vshrl.u32 %v2870, 7
  %v2872 = vsub.s32 7, %v2871
  %v2873 = vrot.slane %v2840, %v2872
  %v2882 = vadd.f32 %v2711, %v2845
  %v2883 = vadd.f32 %v2713, %v2849
  %v2884 = vadd.f32 %v2752, %v2853
  %v2885 = vadd.f32 %v2754, %v2857
  %v2886 = vadd.f32 %v2793, %v2861
  %v2887 = vadd.f32 %v2795, %v2865
  %v2888 = vadd.f32 %v2834, %v2869
  %v2889 = vadd.f32 %v2836, %v2873
  %v2890 = vmax.f32 %v2882, 0.0
  %v2891 = vmax.f32 %v2883, 0.0
  %v2892 = vmax.f32 %v2884, 0.0
  %v2893 = vmax.f32 %v2885, 0.0
  %v2894 = vmax.f32 %v2886, 0.0
  %v2895 = vmax.f32 %v2887, 0.0
  %v2896 = vmax.f32 %v2888, 0.0
  %v2897 = vmax.f32 %v2889, 0.0
  %v2898 = vpack.c.bf16 %v2890, %v2890
  %v2899 = vpack.c.bf16 %v2891, %v2891
  %v2900 = vpack.c.bf16 %v2892, %v2892
  %v2901 = vpack.c.bf16 %v2893, %v2893
  %v2902 = vpack.c.bf16 %v2894, %v2894
  %v2903 = vpack.c.bf16 %v2895, %v2895
  %v2904 = vpack.c.bf16 %v2896, %v2896
  %v2905 = vpack.c.bf16 %v2897, %v2897
  %v2914 = vunpack.c.l.b16 %v2898
  %v2915 = vunpack.c.l.b16 %v2899
  %v2916 = vunpack.c.l.b16 %v2900
  %v2917 = vunpack.c.l.b16 %v2901
  %v2918 = vunpack.c.l.b16 %v2902
  %v2919 = vunpack.c.l.b16 %v2903
  %v2920 = vunpack.c.l.b16 %v2904
  %v2921 = vunpack.c.l.b16 %v2905
  %v2922 = vpack.c.b16 %v2915, %v2914
  %v2923 = vpack.c.b16 %v2917, %v2916
  %v2924 = vpack.c.b16 %v2919, %v2918
  %v2925 = vpack.c.b16 %v2921, %v2920
  %2930 = vst [vmem:[%s5] sm:$0xff] %v2922
  %2931 = vst [vmem:[%s5 + $0x8] sm:$0xff] %v2923
  %2932 = vst [vmem:[%s5 + $0x10] sm:$0xff] %v2924
  %2933 = vst [vmem:[%s5 + $0x18] sm:$0xff] %v2925
  // Predicated region
  $region22: #{resnet_common_branch.23} parent=0 // pred_check
    _
  $region23: #{resnet_common_branch.23} parent=0 // pred_check_branch
    %2935 = sbr.rel (0) target = $region25
  $region24: #{resnet_common_branch.23} parent=0 // pred_region
    _
  $region25: #{resnet_common_branch.23} parent=0 // pred_fallthru
    _
  // Predicated region
  $region26: #{resnet_common_branch.23} parent=0 // pred_check
    _
  $region27: #{resnet_common_branch.23} parent=0 // pred_check_branch
    %2937 = sbr.rel (0) target = $region29
  $region28: #{resnet_common_branch.23} parent=0 // pred_region
    _
  $region29: #{resnet_common_branch.23} parent=0 // pred_fallthru
    _

</llo_original>
